<compile_context>
chip_gen: v5e
topology: v5e:2x2
jax: 0.10.0
libtpu: 0.0.40
codegen_flags: <defaults>
</compile_context>

<pallas_src>
import jax
import jax.numpy as jnp
from jax.experimental import pallas as pl
from jax.experimental.pallas import tpu as pltpu


def glu_kernel(x_ref, w12_ref, b12_ref, w3_ref, b3_ref, o_ref):
    H = w3_ref.shape[0]

    # In-kernel cast of the activation tile to the matmul dtype (bf16).
    x = x_ref[...].astype(w12_ref.dtype)                              # (tm, D)

    # Fused up-projection: one MXU call for l1 and l2 (f32 accumulation),
    # then f32 bias add on the VPU.
    ab = jnp.dot(x, w12_ref[...], preferred_element_type=jnp.float32) + b12_ref[...]

    # Split at the lane-aligned H boundary (H is a multiple of 128).
    a = jnp.maximum(ab[:, :H], 0.0)                                   # ReLU branch
    b = ab[:, H:]                                                     # gate branch

    # Gated intermediate, cast to matmul dtype for the down-projection.
    h = (a * b).astype(w3_ref.dtype)                                  # (tm, H)

    # Down-projection (+ b3) written directly to the output tile.
    y = jnp.dot(h, w3_ref[...], preferred_element_type=jnp.float32) + b3_ref[...]
    o_ref[...] = y.astype(o_ref.dtype)


def prepare_glu_params(w1, b1, w2, b2, w3, b3, *, compute_dtype=jnp.bfloat16):
    """One-time param prep: fuse W1|W2 and b1|b2, cast weights to bf16.

    Weights are stored as (in, out); biases as (1, out). Do this once, not per
    forward call (avoids a per-call HBM read+write cast pass).
    """
    w12 = jnp.concatenate([w1, w2], axis=1).astype(compute_dtype)     # (D, 2H)
    b12 = jnp.concatenate([b1, b2], axis=1).astype(jnp.float32)       # (1, 2H)
    w3c = w3.astype(compute_dtype)                                    # (H, D)
    b3f = b3.astype(jnp.float32)                                      # (1, D)
    return w12, b12, w3c, b3f


def glu_forward(x, w12, b12, w3, b3, *, tm=256):
    """x: (B, T, D) float32; params from prepare_glu_params()."""
    B, T, D = x.shape
    H2 = w12.shape[1]
    H = H2 // 2

    # Flatten (batch, seq) -> M rows.
    M = B * T

    # Tile heuristic: prefer padding-free 128-row tiles when 256 would pad
    # (also matches v5e's 128-wide MXU); otherwise keep the 256-row default.
    if M % tm != 0 and M % 128 == 0:
        tm = 128

    x2 = x.reshape(M, D)
    n_m = pl.cdiv(M, tm)
    Mp = n_m * tm
    if Mp != M:
        x2 = jnp.pad(x2, ((0, Mp - M), (0, 0)))

    wbytes = jnp.dtype(w12.dtype).itemsize
    xbytes = jnp.dtype(x.dtype).itemsize

    # VMEM budget: double-buffered x/out tiles, weights counted twice (in case
    # Mosaic still double-buffers the constant-index blocks), biases, plus the
    # (tm, 2H) f32 up-projection intermediate. Capped at 48 MiB for v7x safety.
    tile_bytes = (
        2 * tm * D * xbytes            # x tile (f32, double-buffered)
        + 2 * (D * H2 + H * D) * wbytes  # resident weights (x2 safety margin)
        + 2 * (H2 + D) * 4             # biases (f32)
        + 2 * tm * D * 4               # output tile (f32, double-buffered)
        + tm * H2 * 4                  # fused up-projection intermediate (f32)
    )
    vmem_limit = min(max(int(tile_bytes * 2), 32 << 20), 48 << 20)

    # Advisory cost estimate: 2*M*D*2H (up-proj) + 2*M*H*D (down-proj) flops.
    cost = pl.CostEstimate(
        flops=6 * Mp * D * H,
        transcendentals=0,
        bytes_accessed=(Mp * D * xbytes            # x read
                        + (D * H2 + H * D) * wbytes  # weights read
                        + (H2 + D) * 4               # biases read
                        + Mp * D * xbytes),          # output write
    )

    out = pl.pallas_call(
        glu_kernel,
        out_shape=jax.ShapeDtypeStruct((Mp, D), x.dtype),
        grid_spec=pltpu.PrefetchScalarGridSpec(
            num_scalar_prefetch=0,
            grid=(n_m,),
            in_specs=[
                pl.BlockSpec((tm, D), lambda i: (i, 0)),    # x tile
                pl.BlockSpec((D, H2), lambda i: (0, 0)),    # fused W1|W2 (resident)
                pl.BlockSpec((1, H2), lambda i: (0, 0)),    # fused b1|b2 (resident)
                pl.BlockSpec((H, D), lambda i: (0, 0)),     # W3 (resident)
                pl.BlockSpec((1, D), lambda i: (0, 0)),     # b3 (resident)
            ],
            out_specs=pl.BlockSpec((tm, D), lambda i: (i, 0)),
        ),
        compiler_params=pltpu.CompilerParams(
            dimension_semantics=("parallel",),
            vmem_limit_bytes=vmem_limit),
        cost_estimate=cost,
    )(x2, w12, b12, w3, b3)

    return out[:M].reshape(B, T, D)


def reference(x, w1, b1, w2, b2, w3, b3):
    a = jax.nn.relu(x @ w1 + b1)
    b = x @ w2 + b2
    return (a * b) @ w3 + b3


if __name__ == "__main__":
    # Config-consistent small shapes: n_embd=384 (hidden 4*384=1536), seq=192, batch=2.
    B, T, D = 2, 192, 384
    H = 4 * D

    key = jax.random.PRNGKey(0)
    kx, k1, k2, k3, k4, k5, k6 = jax.random.split(key, 7)

    x = jax.random.normal(kx, (B, T, D), dtype=jnp.float32)

    # Deterministic parameter init (uniform, like PyTorch Linear's default range).
    def init_linear(kw, kb, fan_in, fan_out):
        bound = 1.0 / (fan_in ** 0.5)
        w = jax.random.uniform(kw, (fan_in, fan_out), jnp.float32, -bound, bound)
        b = jax.random.uniform(kb, (1, fan_out), jnp.float32, -bound, bound)
        return w, b

    w1, b1 = init_linear(k1, k2, D, H)
    w2, b2 = init_linear(k3, k4, D, H)
    w3, b3 = init_linear(k5, k6, H, D)

    # One-time param prep (fusion + bf16 cast), then the Pallas forward.
    w12, b12, w3c, b3f = prepare_glu_params(w1, b1, w2, b2, w3, b3)
    y = glu_forward(x, w12, b12, w3c, b3f)
    y = jax.block_until_ready(y)

    y_ref = reference(x, w1, b1, w2, b2, w3, b3)
    assert y.shape == (B, T, D)
    # bf16 matmul operands with f32 accumulation vs. all-f32 reference -> loose tolerance.
    assert jnp.allclose(y, y_ref, atol=2e-2, rtol=2e-2), "mismatch vs reference"

    print("KERNEL_OK")
</pallas_src>

<mosaic_0001>
module attributes {stable_mosaic.version = 11 : i64} {
  func.func @glu_kernel(%arg0: i32, %arg1: memref<128x384xf32, #tpu.memory_space<vmem>>, %arg2: memref<384x3072xbf16, #tpu.memory_space<vmem>>, %arg3: memref<1x3072xf32, #tpu.memory_space<vmem>>, %arg4: memref<1536x384xbf16, #tpu.memory_space<vmem>>, %arg5: memref<1x384xf32, #tpu.memory_space<vmem>>, %arg6: memref<128x384xf32, #tpu.memory_space<vmem>>) attributes {dimension_semantics = [#tpu.dimension_semantics<parallel>], iteration_bounds = array<i64: 3>, scalar_prefetch = 0 : i64, scratch_operands = 0 : i64, tpu.core_type = #tpu.core_type<tc>, window_params = [{transform_indices = @transform_0, window_bounds = array<i64: 128, 384>}, {pipeline_mode = #tpu.pipeline_mode<synchronous>, transform_indices = @transform_1, window_bounds = array<i64: 384, 3072>}, {pipeline_mode = #tpu.pipeline_mode<synchronous>, transform_indices = @transform_2, window_bounds = array<i64: 1, 3072>}, {pipeline_mode = #tpu.pipeline_mode<synchronous>, transform_indices = @transform_3, window_bounds = array<i64: 1536, 384>}, {pipeline_mode = #tpu.pipeline_mode<synchronous>, transform_indices = @transform_4, window_bounds = array<i64: 1, 384>}, {transform_indices = @transform_5, window_bounds = array<i64: 128, 384>}]} {
    %c0 = arith.constant 0 : index
    %c0_0 = arith.constant 0 : index
    %0 = vector.load %arg1[%c0, %c0_0] : memref<128x384xf32, #tpu.memory_space<vmem>>, vector<128x384xf32>
    %1 = arith.truncf %0 : vector<128x384xf32> to vector<128x384xbf16>
    %c0_1 = arith.constant 0 : index
    %c0_2 = arith.constant 0 : index
    %2 = vector.load %arg2[%c0_1, %c0_2] : memref<384x3072xbf16, #tpu.memory_space<vmem>>, vector<384x3072xbf16>
    %cst = arith.constant dense<0.000000e+00> : vector<128x3072xf32>
    %3 = tpu.matmul %1, %2, %cst {dimension_numbers = #tpu.dot_dimension_numbers<[1], [0], [0], [1], [0, 0, 1, 1], [], []>} : vector<128x384xbf16>, vector<384x3072xbf16>, vector<128x3072xf32> -> vector<128x3072xf32>
    %c0_3 = arith.constant 0 : index
    %c0_4 = arith.constant 0 : index
    %4 = vector.load %arg3[%c0_3, %c0_4] : memref<1x3072xf32, #tpu.memory_space<vmem>>, vector<1x3072xf32>
    %5 = vector.broadcast %4 : vector<1x3072xf32> to vector<128x3072xf32>
    %6 = arith.addf %3, %5 : vector<128x3072xf32>
    %7 = vector.extract_strided_slice %6 {offsets = [0, 0], sizes = [128, 1536], strides = [1, 1]} : vector<128x3072xf32> to vector<128x1536xf32>
    %cst_5 = arith.constant 0.000000e+00 : f32
    %8 = vector.broadcast %cst_5 : f32 to vector<128x1536xf32>
    %9 = arith.maximumf %7, %8 : vector<128x1536xf32>
    %10 = vector.extract_strided_slice %6 {offsets = [0, 1536], sizes = [128, 1536], strides = [1, 1]} : vector<128x3072xf32> to vector<128x1536xf32>
    %11 = arith.mulf %9, %10 : vector<128x1536xf32>
    %12 = arith.truncf %11 : vector<128x1536xf32> to vector<128x1536xbf16>
    %c0_6 = arith.constant 0 : index
    %c0_7 = arith.constant 0 : index
    %13 = vector.load %arg4[%c0_6, %c0_7] : memref<1536x384xbf16, #tpu.memory_space<vmem>>, vector<1536x384xbf16>
    %cst_8 = arith.constant dense<0.000000e+00> : vector<128x384xf32>
    %14 = tpu.matmul %12, %13, %cst_8 {dimension_numbers = #tpu.dot_dimension_numbers<[1], [0], [0], [1], [0, 0, 1, 1], [], []>} : vector<128x1536xbf16>, vector<1536x384xbf16>, vector<128x384xf32> -> vector<128x384xf32>
    %c0_9 = arith.constant 0 : index
    %c0_10 = arith.constant 0 : index
    %15 = vector.load %arg5[%c0_9, %c0_10] : memref<1x384xf32, #tpu.memory_space<vmem>>, vector<1x384xf32>
    %16 = vector.broadcast %15 : vector<1x384xf32> to vector<128x384xf32>
    %17 = arith.addf %14, %16 : vector<128x384xf32>
    %c0_11 = arith.constant 0 : index
    %c0_12 = arith.constant 0 : index
    %18 = vector.load %arg6[%c0_11, %c0_12] : memref<128x384xf32, #tpu.memory_space<vmem>>, vector<128x384xf32>
    tpu.vector_store %arg6[%c0_11, %c0_12], %17 {strides = array<i32>} : memref<128x384xf32, #tpu.memory_space<vmem>>, vector<128x384xf32>,
    return
  }
  func.func @transform_0(%arg0: i32) -> (i32, i32) {
    %c0_i32 = arith.constant 0 : i32
    %c0_i32_0 = arith.constant 0 : i32
    return %arg0, %c0_i32 : i32, i32
  }
  func.func @transform_1(%arg0: i32) -> (i32, i32) {
    %c0_i32 = arith.constant 0 : i32
    %c0_i32_0 = arith.constant 0 : i32
    %c0_i32_1 = arith.constant 0 : i32
    return %c0_i32, %c0_i32_0 : i32, i32
  }
  func.func @transform_2(%arg0: i32) -> (i32, i32) {
    %c0_i32 = arith.constant 0 : i32
    %c0_i32_0 = arith.constant 0 : i32
    %c0_i32_1 = arith.constant 0 : i32
    return %c0_i32, %c0_i32_0 : i32, i32
  }
  func.func @transform_3(%arg0: i32) -> (i32, i32) {
    %c0_i32 = arith.constant 0 : i32
    %c0_i32_0 = arith.constant 0 : i32
    %c0_i32_1 = arith.constant 0 : i32
    return %c0_i32, %c0_i32_0 : i32, i32
  }
  func.func @transform_4(%arg0: i32) -> (i32, i32) {
    %c0_i32 = arith.constant 0 : i32
    %c0_i32_0 = arith.constant 0 : i32
    %c0_i32_1 = arith.constant 0 : i32
    return %c0_i32, %c0_i32_0 : i32, i32
  }
  func.func @transform_5(%arg0: i32) -> (i32, i32) {
    %c0_i32 = arith.constant 0 : i32
    %c0_i32_0 = arith.constant 0 : i32
    return %arg0, %c0_i32 : i32, i32
  }
}

</mosaic_0001>

<llo_original>
// kernel: tpu_custom_call.1
$region0: #{tpu_custom_call.1}
  #allocation0 [shape = 'u32[]', space=smem, size = 0x4, offset = 0x4, fixed_abs, tag = 'smem constant byte address 0x4 - core index']
  #allocation1 [shape = 'u32[72,128]{1,0:T(1,128)}', space=vmem, size = 0x9000, scoped, tag = 'internal scratch']
  %s0 = inlined_call_operand.hbm [shape: f32[384,384], index: 0, kind: input, shape index: {}]
  %s1 = inlined_call_operand.hbm [shape: bf16[384,3072], index: 1, kind: input, shape index: {}]
  %s2 = inlined_call_operand.hbm [shape: f32[1,3072], index: 2, kind: input, shape index: {}]
  %s3 = inlined_call_operand.hbm [shape: bf16[1536,384], index: 3, kind: input, shape index: {}]
  %s4 = inlined_call_operand.hbm [shape: f32[1,384], index: 4, kind: input, shape index: {}]
  %s5 = inlined_call_operand.hbm [shape: f32[384,384], index: 5, kind: output, shape index: {}]
  %s6 = sld [smem:[#allocation0]]
  $region73: #{tpu_custom_call.1} parent=0
    _
  %s8 = ssub.s32 1, %s6
  %s9 = scalar_select 0, %s8, %s6
  $region1: #{tpu_custom_call.1} parent=0
    #allocation2 [shape = 'u8[393216]{0}', space=vmem, size = 0x60000, scoped, tag = 'input window, operand 0']
    #allocation3 [shape = 's32[2]{0}', space=sflag, size = 0x8, scoped, tag = 'scoped memory for tpu_custom_call.1']
    #allocation4 [shape = 's32[2]{0}', space=sflag, size = 0x8, scoped, tag = 'scoped memory for tpu_custom_call.1']
    #allocation5 [shape = 'u8[2359296]{0}', space=vmem, size = 0x240000, scoped, tag = 'input window, operand 1, single buffered']
    #allocation6 [shape = 's32[1]{0}', space=sflag, size = 0x4, scoped, tag = 'scoped memory for tpu_custom_call.1']
    #allocation7 [shape = 'u8[12288]{0}', space=vmem, size = 0x3000, scoped, tag = 'input window, operand 2, single buffered']
    #allocation8 [shape = 'u8[1179648]{0}', space=vmem, size = 0x120000, scoped, tag = 'input window, operand 3, single buffered']
    #allocation9 [shape = 's32[1]{0}', space=sflag, size = 0x4, scoped, tag = 'scoped memory for tpu_custom_call.1']
    #allocation10 [shape = 'u8[1536]{0}', space=vmem, size = 0x800, scoped, tag = 'input window, operand 4, single buffered']
    #allocation11 [shape = 'u8[393216]{0}', space=vmem, size = 0x60000, scoped, tag = 'output window, operand 0']
    %10 = vsyncpa [#allocation3], 0
    %s11 = scalar_lea.sflag [#allocation3], 1
    %12 = vsyncpa %s11, 0
    %13 = vsyncpa [#allocation6], 0
    %14 = vsyncpa [#allocation9], 0
    %15 = vsyncpa [#allocation4], 0
    %s16 = scalar_lea.sflag [#allocation4], 1
    %17 = vsyncpa %s16, 0
    loop: start=0, step=1, limit=5
    $region2: #{tpu_custom_call.1} parent=1 // loop_pre_header
      _
    $region3: #{tpu_custom_call.1} parent=1 // loop_header
      %s19 = sphi 0, %s23
      %p20 = scmp.ge.s32.totalorder %s19, 5
      %s29 = sphi 0, %s31
      %s32 = sphi 0, %s29
      %s33 = sphi 0, %s32
      %s49 = sphi 0, %s33
      %s53 = sphi 0, %s53
      %s55 = sphi 0, %s53
      %s56 = sphi 0, %s55
      %s70 = sphi 0, %s56
      %s74 = sphi 0, %s74
      %s76 = sphi 0, %s74
      %s77 = sphi 0, %s76
      %s91 = sphi 0, %s77
      %s95 = sphi 0, %s95
      %s97 = sphi 0, %s95
      %s98 = sphi 0, %s97
      %s112 = sphi 0, %s98
      %s116 = sphi 0, %s116
      %s118 = sphi 0, %s116
      %s119 = sphi 0, %s118
      %s133 = sphi 0, %s119
      %s139 = sphi 0, %s141
      %s142 = sphi 0, %s139
      %s143 = sphi 0, %s142
      %s159 = sphi 0, %s143
    $region4: #{tpu_custom_call.1} parent=1 // loop_header_branch
      %22 = sbr.rel (%p20) target = $region8
    $region5: #{tpu_custom_call.1} parent=1 // loop_body
      %s24 = ssub.s32 %s19, 1
      %s25 = ssub.s32 %s19, 2
      %s26 = sadd.s32 %s19, 1
      %s27 = ssub.s32 %s19, %s26
      %p28 = scmp.eq.s32.totalorder %s27, 0
      %s30 = sadd.s32 %s29, 1
      %s31 = scalar_select %p28, %s29, %s30
      %p34 = pneg %p28
      %p35 = scmp.eq.s32.totalorder %s19, 2
      %p36 = por %p34, %p35
      %p37 = scmp.ne.s32.totalorder %s29, %s32
      %p38 = scmp.eq.s32.totalorder %s19, 0
      %p39 = por %p37, %p38
      %p40 = scmp.ne.s32.totalorder %s29, %s32
      %p41 = scmp.eq.s32.totalorder %s24, 2
      %p42 = por %p40, %p41
      %p43 = scmp.ne.s32.totalorder %s32, %s33
      %p44 = scmp.eq.s32.totalorder %s24, 0
      %p45 = por %p43, %p44
      %p46 = scmp.ne.s32.totalorder %s32, %s33
      %p47 = scmp.eq.s32.totalorder %s25, 2
      %p48 = por %p46, %p47
      %p50 = scmp.ne.s32.totalorder %s33, %s49
      %p51 = scmp.eq.s32.totalorder %s25, 0
      %p52 = por %p50, %p51
      %s54 = sadd.s32 %s53, 1
      %p57 = scmp.eq.s32.totalorder %s19, 2
      %p58 = scmp.ne.s32.totalorder %s53, %s55
      %p59 = scmp.eq.s32.totalorder %s19, 0
      %p60 = por %p58, %p59
      %p61 = scmp.ne.s32.totalorder %s53, %s55
      %p62 = scmp.eq.s32.totalorder %s24, 2
      %p63 = por %p61, %p62
      %p64 = scmp.ne.s32.totalorder %s55, %s56
      %p65 = scmp.eq.s32.totalorder %s24, 0
      %p66 = por %p64, %p65
      %p67 = scmp.ne.s32.totalorder %s55, %s56
      %p68 = scmp.eq.s32.totalorder %s25, 2
      %p69 = por %p67, %p68
      %p71 = scmp.ne.s32.totalorder %s56, %s70
      %p72 = scmp.eq.s32.totalorder %s25, 0
      %p73 = por %p71, %p72
      %s75 = sadd.s32 %s74, 1
      %p78 = scmp.eq.s32.totalorder %s19, 2
      %p79 = scmp.ne.s32.totalorder %s74, %s76
      %p80 = scmp.eq.s32.totalorder %s19, 0
      %p81 = por %p79, %p80
      %p82 = scmp.ne.s32.totalorder %s74, %s76
      %p83 = scmp.eq.s32.totalorder %s24, 2
      %p84 = por %p82, %p83
      %p85 = scmp.ne.s32.totalorder %s76, %s77
      %p86 = scmp.eq.s32.totalorder %s24, 0
      %p87 = por %p85, %p86
      %p88 = scmp.ne.s32.totalorder %s76, %s77
      %p89 = scmp.eq.s32.totalorder %s25, 2
      %p90 = por %p88, %p89
      %p92 = scmp.ne.s32.totalorder %s77, %s91
      %p93 = scmp.eq.s32.totalorder %s25, 0
      %p94 = por %p92, %p93
      %s96 = sadd.s32 %s95, 1
      %p99 = scmp.eq.s32.totalorder %s19, 2
      %p100 = scmp.ne.s32.totalorder %s95, %s97
      %p101 = scmp.eq.s32.totalorder %s19, 0
      %p102 = por %p100, %p101
      %p103 = scmp.ne.s32.totalorder %s95, %s97
      %p104 = scmp.eq.s32.totalorder %s24, 2
      %p105 = por %p103, %p104
      %p106 = scmp.ne.s32.totalorder %s97, %s98
      %p107 = scmp.eq.s32.totalorder %s24, 0
      %p108 = por %p106, %p107
      %p109 = scmp.ne.s32.totalorder %s97, %s98
      %p110 = scmp.eq.s32.totalorder %s25, 2
      %p111 = por %p109, %p110
      %p113 = scmp.ne.s32.totalorder %s98, %s112
      %p114 = scmp.eq.s32.totalorder %s25, 0
      %p115 = por %p113, %p114
      %s117 = sadd.s32 %s116, 1
      %p120 = scmp.eq.s32.totalorder %s19, 2
      %p121 = scmp.ne.s32.totalorder %s116, %s118
      %p122 = scmp.eq.s32.totalorder %s19, 0
      %p123 = por %p121, %p122
      %p124 = scmp.ne.s32.totalorder %s116, %s118
      %p125 = scmp.eq.s32.totalorder %s24, 2
      %p126 = por %p124, %p125
      %p127 = scmp.ne.s32.totalorder %s118, %s119
      %p128 = scmp.eq.s32.totalorder %s24, 0
      %p129 = por %p127, %p128
      %p130 = scmp.ne.s32.totalorder %s118, %s119
      %p131 = scmp.eq.s32.totalorder %s25, 2
      %p132 = por %p130, %p131
      %p134 = scmp.ne.s32.totalorder %s119, %s133
      %p135 = scmp.eq.s32.totalorder %s25, 0
      %p136 = por %p134, %p135
      %s137 = ssub.s32 %s19, %s26
      %p138 = scmp.eq.s32.totalorder %s137, 0
      %s140 = sadd.s32 %s139, 1
      %s141 = scalar_select %p138, %s139, %s140
      %p144 = pneg %p138
      %p145 = scmp.eq.s32.totalorder %s19, 2
      %p146 = por %p144, %p145
      %p147 = scmp.ne.s32.totalorder %s139, %s142
      %p148 = scmp.eq.s32.totalorder %s19, 0
      %p149 = por %p147, %p148
      %p150 = scmp.ne.s32.totalorder %s139, %s142
      %p151 = scmp.eq.s32.totalorder %s24, 2
      %p152 = por %p150, %p151
      %p153 = scmp.ne.s32.totalorder %s142, %s143
      %p154 = scmp.eq.s32.totalorder %s24, 0
      %p155 = por %p153, %p154
      %p156 = scmp.ne.s32.totalorder %s142, %s143
      %p157 = scmp.eq.s32.totalorder %s25, 2
      %p158 = por %p156, %p157
      %p160 = scmp.ne.s32.totalorder %s143, %s159
      %p161 = scmp.eq.s32.totalorder %s25, 0
      %p162 = por %p160, %p161
      %p163 = scmp.le.s32.totalorder 1, %s19
      %p164 = scmp.lt.s32.totalorder %s19, 4
      %p165 = pnand %p163, %p164
      %p166 = pneg %p165
      // Predicated region
      $region9: #{tpu_custom_call.1} parent=5 // pred_check
        _
      $region10: #{tpu_custom_call.1} parent=5 // pred_check_branch
        %168 = sbr.rel (%p165) target = $region12
      $region11: #{tpu_custom_call.1} parent=5 // pred_region
        %s169 = ssub.s32 %s19, 1
        // Predicated region
        $region13: #{tpu_custom_call.1} parent=11 // pred_check
          %p170 = pneg %p66
        $region14: #{tpu_custom_call.1} parent=11 // pred_check_branch
          %172 = sbr.rel (%p170) target = $region16
        $region15: #{tpu_custom_call.1} parent=11 // pred_region
          %174 = vsyncadd [#allocation6], 0
          %s175 = sshll.u32 %s1, 4
          %s176 = int_to_ptr.hbm [resolvable:$true] %s175
          %s177 = sshll.u32 [#allocation5], 4
          %s178 = int_to_ptr.vmem [resolvable:$true] %s177
          %183 = dma.hbm_to_vmem [thread:$0]  %s176, 73728, %s178, [#allocation6], 1536, 1536, 96
        $region16: #{tpu_custom_call.1} parent=11 // pred_fallthru
          _
        // Predicated region
        $region17: #{tpu_custom_call.1} parent=11 // pred_check
          %p184 = pneg %p87
        $region18: #{tpu_custom_call.1} parent=11 // pred_check_branch
          %186 = sbr.rel (%p184) target = $region20
        $region19: #{tpu_custom_call.1} parent=11 // pred_region
          %188 = vsyncadd [#allocation6], 0
          %s190 = sshll.u32 %s2, 4
          %s191 = int_to_ptr.hbm [resolvable:$true] %s190
          %s192 = sshll.u32 [#allocation7], 4
          %s193 = int_to_ptr.vmem [resolvable:$true] %s192
          %195 = dma.hbm_to_vmem [thread:$0]  %s191, 384, %s193, [#allocation6]
        $region20: #{tpu_custom_call.1} parent=11 // pred_fallthru
          _
        // Predicated region
        $region21: #{tpu_custom_call.1} parent=11 // pred_check
          %p196 = pneg %p108
        $region22: #{tpu_custom_call.1} parent=11 // pred_check_branch
          %198 = sbr.rel (%p196) target = $region24
        $region23: #{tpu_custom_call.1} parent=11 // pred_region
          %200 = vsyncadd [#allocation9], 0
          %s201 = sshll.u32 %s3, 4
          %s202 = int_to_ptr.hbm [resolvable:$true] %s201
          %s203 = sshll.u32 [#allocation8], 4
          %s204 = int_to_ptr.vmem [resolvable:$true] %s203
          %209 = dma.hbm_to_vmem [thread:$0]  %s202, 36864, %s204, [#allocation9], 192, 192, 12
        $region24: #{tpu_custom_call.1} parent=11 // pred_fallthru
          _
        // Predicated region
        $region25: #{tpu_custom_call.1} parent=11 // pred_check
          %p210 = pneg %p129
        $region26: #{tpu_custom_call.1} parent=11 // pred_check_branch
          %212 = sbr.rel (%p210) target = $region28
        $region27: #{tpu_custom_call.1} parent=11 // pred_region
          %214 = vsyncadd [#allocation9], 0
          %s216 = sshll.u32 %s4, 4
          %s217 = int_to_ptr.hbm [resolvable:$true] %s216
          %s218 = sshll.u32 [#allocation10], 4
          %s219 = int_to_ptr.vmem [resolvable:$true] %s218
          %221 = dma.hbm_to_vmem [thread:$0]  %s217, 48, %s219, [#allocation9]
        $region28: #{tpu_custom_call.1} parent=11 // pred_fallthru
          _
      $region12: #{tpu_custom_call.1} parent=5 // pred_fallthru
        _
      %p222 = scmp.lt.s32.totalorder %s19, 3
      // Predicated region
      $region29: #{tpu_custom_call.1} parent=5 // pred_check
        %p223 = pneg %p222
      $region30: #{tpu_custom_call.1} parent=5 // pred_check_branch
        %225 = sbr.rel (%p223) target = $region32
      $region31: #{tpu_custom_call.1} parent=5 // pred_region
        // Predicated region
        $region33: #{tpu_custom_call.1} parent=31 // pred_check
          %p226 = pneg %p39
        $region34: #{tpu_custom_call.1} parent=31 // pred_check_branch
          %228 = sbr.rel (%p226) target = $region36
        $region35: #{tpu_custom_call.1} parent=31 // pred_region
          %s229 = sand.u32 %s29, 1
          %s230 = scalar_lea.sflag [#allocation3], %s229
          %s231 = sand.u32 %s29, 1
          %s232 = smul.addr %s231, 384
          %s233 = scalar_lea.vmem [#allocation2], %s232
          %s234 = smul.u32 16, %s19
          %236 = vsyncadd %s230, 0
          %s237 = smul.addr %s234, 3
          %s238 = smul.addr %s237, 8
          %s239 = scalar_lea.hbm %s0, %s238
          %s240 = sshll.u32 %s239, 4
          %s241 = int_to_ptr.hbm [resolvable:$true] %s240
          %s242 = sshll.u32 %s233, 4
          %s243 = int_to_ptr.vmem [resolvable:$true] %s242
          %248 = dma.hbm_to_vmem [thread:$0]  %s241, 6144, %s243, %s230, 384, 384, 24
        $region36: #{tpu_custom_call.1} parent=31 // pred_fallthru
          _
      $region32: #{tpu_custom_call.1} parent=5 // pred_fallthru
        _
      %p249 = scmp.le.s32.totalorder 1, %s19
      %p250 = scmp.lt.s32.totalorder %s19, 4
      %p251 = pnand %p249, %p250
      %p252 = pneg %p251
      // Predicated region
      $region37: #{tpu_custom_call.1} parent=5 // pred_check
        _
      $region38: #{tpu_custom_call.1} parent=5 // pred_check_branch
        %254 = sbr.rel (%p251) target = $region40
      $region39: #{tpu_custom_call.1} parent=5 // pred_region
        %s255 = ssub.s32 %s19, 1
        %s256 = sand.u32 %s32, 1
        %s257 = scalar_lea.sflag [#allocation3], %s256
        %s258 = sand.u32 %s32, 1
        %s259 = smul.addr %s258, 384
        %s260 = scalar_lea.vmem [#allocation2], %s259
        // Predicated region
        $region41: #{tpu_custom_call.1} parent=39 // pred_check
          %p261 = pneg %p45
        $region42: #{tpu_custom_call.1} parent=39 // pred_check_branch
          %263 = sbr.rel (%p261) target = $region44
        $region43: #{tpu_custom_call.1} parent=39 // pred_region
          %265 = dma.done %s257, 6144
        $region44: #{tpu_custom_call.1} parent=39 // pred_fallthru
          _
        // Predicated region
        $region45: #{tpu_custom_call.1} parent=39 // pred_check
          %p266 = pneg %p66
        $region46: #{tpu_custom_call.1} parent=39 // pred_check_branch
          %268 = sbr.rel (%p266) target = $region48
        $region47: #{tpu_custom_call.1} parent=39 // pred_region
          %270 = dma.done [#allocation6], 73728
        $region48: #{tpu_custom_call.1} parent=39 // pred_fallthru
          _
        // Predicated region
        $region49: #{tpu_custom_call.1} parent=39 // pred_check
          %p271 = pneg %p87
        $region50: #{tpu_custom_call.1} parent=39 // pred_check_branch
          %273 = sbr.rel (%p271) target = $region52
        $region51: #{tpu_custom_call.1} parent=39 // pred_region
          %275 = dma.done [#allocation6], 384
        $region52: #{tpu_custom_call.1} parent=39 // pred_fallthru
          _
        // Predicated region
        $region53: #{tpu_custom_call.1} parent=39 // pred_check
          %p276 = pneg %p108
        $region54: #{tpu_custom_call.1} parent=39 // pred_check_branch
          %278 = sbr.rel (%p276) target = $region56
        $region55: #{tpu_custom_call.1} parent=39 // pred_region
          %280 = dma.done [#allocation9], 36864
        $region56: #{tpu_custom_call.1} parent=39 // pred_fallthru
          _
        // Predicated region
        $region57: #{tpu_custom_call.1} parent=39 // pred_check
          %p281 = pneg %p129
        $region58: #{tpu_custom_call.1} parent=39 // pred_check_branch
          %283 = sbr.rel (%p281) target = $region60
        $region59: #{tpu_custom_call.1} parent=39 // pred_region
          %285 = dma.done [#allocation9], 48
        $region60: #{tpu_custom_call.1} parent=39 // pred_fallthru
          _
        %s286 = sand.u32 %s32, 1
        %s287 = scalar_lea.sflag [#allocation3], %s286
        %s288 = sand.u32 %s32, 1
        %s289 = smul.addr %s288, 384
        %s290 = scalar_lea.vmem [#allocation2], %s289
        %p291 = pneg %p45
        %p292 = pneg %p42
        %p293 = pneg %p66
        %p294 = pneg %p63
        %p295 = pneg %p87
        %p296 = pneg %p84
        %p297 = pneg %p108
        %p298 = pneg %p105
        %p299 = pneg %p129
        %p300 = pneg %p126
        %p301 = pneg %p155
        %p302 = pneg %p152
        %s303 = sand.u32 %s142, 1
        %s304 = scalar_lea.sflag [#allocation4], %s303
        %s305 = sand.u32 %s142, 1
        %s306 = smul.addr %s305, 384
        %s307 = scalar_lea.vmem [#allocation11], %s306
        %s308 = smul.u32 16, %s24
        %s309 = smul.u32 16, %s24
        %v310 = vld [vmem:[%s260] sm:$0xff]
        %v311 = vld [vmem:[%s260 + $0x8] sm:$0xff]
        %v312 = vld [vmem:[%s260 + $0x10] sm:$0xff]
        %v313 = vld [vmem:[%s260 + $0x18] sm:$0xff]
        %v314 = vld [vmem:[%s260 + $0x20] sm:$0xff]
        %v315 = vld [vmem:[%s260 + $0x28] sm:$0xff]
        %v316 = vld [vmem:[%s260 + $0x30] sm:$0xff]
        %v317 = vld [vmem:[%s260 + $0x38] sm:$0xff]
        %v318 = vld [vmem:[%s260 + $0x40] sm:$0xff]
        %v319 = vld [vmem:[%s260 + $0x48] sm:$0xff]
        %v320 = vld [vmem:[%s260 + $0x50] sm:$0xff]
        %v321 = vld [vmem:[%s260 + $0x58] sm:$0xff]
        %v322 = vld [vmem:[%s260 + $0x60] sm:$0xff]
        %v323 = vld [vmem:[%s260 + $0x68] sm:$0xff]
        %v324 = vld [vmem:[%s260 + $0x70] sm:$0xff]
        %v325 = vld [vmem:[%s260 + $0x78] sm:$0xff]
        %v326 = vld [vmem:[%s260 + $0x80] sm:$0xff]
        %v327 = vld [vmem:[%s260 + $0x88] sm:$0xff]
        %v328 = vld [vmem:[%s260 + $0x90] sm:$0xff]
        %v329 = vld [vmem:[%s260 + $0x98] sm:$0xff]
        %v330 = vld [vmem:[%s260 + $0xa0] sm:$0xff]
        %v331 = vld [vmem:[%s260 + $0xa8] sm:$0xff]
        %v332 = vld [vmem:[%s260 + $0xb0] sm:$0xff]
        %v333 = vld [vmem:[%s260 + $0xb8] sm:$0xff]
        %v334 = vld [vmem:[%s260 + $0xc0] sm:$0xff]
        %v335 = vld [vmem:[%s260 + $0xc8] sm:$0xff]
        %v336 = vld [vmem:[%s260 + $0xd0] sm:$0xff]
        %v337 = vld [vmem:[%s260 + $0xd8] sm:$0xff]
        %v338 = vld [vmem:[%s260 + $0xe0] sm:$0xff]
        %v339 = vld [vmem:[%s260 + $0xe8] sm:$0xff]
        %v340 = vld [vmem:[%s260 + $0xf0] sm:$0xff]
        %v341 = vld [vmem:[%s260 + $0xf8] sm:$0xff]
        %v342 = vld [vmem:[%s260 + $0x100] sm:$0xff]
        %v343 = vld [vmem:[%s260 + $0x108] sm:$0xff]
        %v344 = vld [vmem:[%s260 + $0x110] sm:$0xff]
        %v345 = vld [vmem:[%s260 + $0x118] sm:$0xff]
        %v346 = vld [vmem:[%s260 + $0x120] sm:$0xff]
        %v347 = vld [vmem:[%s260 + $0x128] sm:$0xff]
        %v348 = vld [vmem:[%s260 + $0x130] sm:$0xff]
        %v349 = vld [vmem:[%s260 + $0x138] sm:$0xff]
        %v350 = vld [vmem:[%s260 + $0x140] sm:$0xff]
        %v351 = vld [vmem:[%s260 + $0x148] sm:$0xff]
        %v352 = vld [vmem:[%s260 + $0x150] sm:$0xff]
        %v353 = vld [vmem:[%s260 + $0x158] sm:$0xff]
        %v354 = vld [vmem:[%s260 + $0x160] sm:$0xff]
        %v355 = vld [vmem:[%s260 + $0x168] sm:$0xff]
        %v356 = vld [vmem:[%s260 + $0x170] sm:$0xff]
        %v357 = vld [vmem:[%s260 + $0x178] sm:$0xff]
        %v358 = vpack.c.bf16 %v313, %v310
        %v359 = vpack.c.bf16 %v314, %v311
        %v360 = vpack.c.bf16 %v315, %v312
        %v361 = vpack.c.bf16 %v319, %v316
        %v362 = vpack.c.bf16 %v320, %v317
        %v363 = vpack.c.bf16 %v321, %v318
        %v364 = vpack.c.bf16 %v325, %v322
        %v365 = vpack.c.bf16 %v326, %v323
        %v366 = vpack.c.bf16 %v327, %v324
        %v367 = vpack.c.bf16 %v331, %v328
        %v368 = vpack.c.bf16 %v332, %v329
        %v369 = vpack.c.bf16 %v333, %v330
        %v370 = vpack.c.bf16 %v337, %v334
        %v371 = vpack.c.bf16 %v338, %v335
        %v372 = vpack.c.bf16 %v339, %v336
        %v373 = vpack.c.bf16 %v343, %v340
        %v374 = vpack.c.bf16 %v344, %v341
        %v375 = vpack.c.bf16 %v345, %v342
        %v376 = vpack.c.bf16 %v349, %v346
        %v377 = vpack.c.bf16 %v350, %v347
        %v378 = vpack.c.bf16 %v351, %v348
        %v379 = vpack.c.bf16 %v355, %v352
        %v380 = vpack.c.bf16 %v356, %v353
        %v381 = vpack.c.bf16 %v357, %v354
        %v382 = vld [vmem:[#allocation5] sm:$0xff]
        %v383 = vld [vmem:[#allocation5 + $0x8] sm:$0xff]
        %v384 = vld [vmem:[#allocation5 + $0x10] sm:$0xff]
        %v385 = vld [vmem:[#allocation5 + $0x18] sm:$0xff]
        %v386 = vld [vmem:[#allocation5 + $0x20] sm:$0xff]
        %v387 = vld [vmem:[#allocation5 + $0x28] sm:$0xff]
        %v388 = vld [vmem:[#allocation5 + $0x30] sm:$0xff]
        %v389 = vld [vmem:[#allocation5 + $0x38] sm:$0xff]
        %v390 = vld [vmem:[#allocation5 + $0x40] sm:$0xff]
        %v391 = vld [vmem:[#allocation5 + $0x48] sm:$0xff]
        %v392 = vld [vmem:[#allocation5 + $0x50] sm:$0xff]
        %v393 = vld [vmem:[#allocation5 + $0x58] sm:$0xff]
        %v394 = vld [vmem:[#allocation5 + $0x60] sm:$0xff]
        %v395 = vld [vmem:[#allocation5 + $0x68] sm:$0xff]
        %v396 = vld [vmem:[#allocation5 + $0x70] sm:$0xff]
        %v397 = vld [vmem:[#allocation5 + $0x78] sm:$0xff]
        %v398 = vld [vmem:[#allocation5 + $0x80] sm:$0xff]
        %v399 = vld [vmem:[#allocation5 + $0x88] sm:$0xff]
        %v400 = vld [vmem:[#allocation5 + $0x90] sm:$0xff]
        %v401 = vld [vmem:[#allocation5 + $0x98] sm:$0xff]
        %v402 = vld [vmem:[#allocation5 + $0xa0] sm:$0xff]
        %v403 = vld [vmem:[#allocation5 + $0xa8] sm:$0xff]
        %v404 = vld [vmem:[#allocation5 + $0xb0] sm:$0xff]
        %v405 = vld [vmem:[#allocation5 + $0xb8] sm:$0xff]
        %v406 = vld [vmem:[#allocation5 + $0xc0] sm:$0xff]
        %v407 = vld [vmem:[#allocation5 + $0xc8] sm:$0xff]
        %v408 = vld [vmem:[#allocation5 + $0xd0] sm:$0xff]
        %v409 = vld [vmem:[#allocation5 + $0xd8] sm:$0xff]
        %v410 = vld [vmem:[#allocation5 + $0xe0] sm:$0xff]
        %v411 = vld [vmem:[#allocation5 + $0xe8] sm:$0xff]
        %v412 = vld [vmem:[#allocation5 + $0xf0] sm:$0xff]
        %v413 = vld [vmem:[#allocation5 + $0xf8] sm:$0xff]
        %v414 = vld [vmem:[#allocation5 + $0x100] sm:$0xff]
        %v415 = vld [vmem:[#allocation5 + $0x108] sm:$0xff]
        %v416 = vld [vmem:[#allocation5 + $0x110] sm:$0xff]
        %v417 = vld [vmem:[#allocation5 + $0x118] sm:$0xff]
        %v418 = vld [vmem:[#allocation5 + $0x120] sm:$0xff]
        %v419 = vld [vmem:[#allocation5 + $0x128] sm:$0xff]
        %v420 = vld [vmem:[#allocation5 + $0x130] sm:$0xff]
        %v421 = vld [vmem:[#allocation5 + $0x138] sm:$0xff]
        %v422 = vld [vmem:[#allocation5 + $0x140] sm:$0xff]
        %v423 = vld [vmem:[#allocation5 + $0x148] sm:$0xff]
        %v424 = vld [vmem:[#allocation5 + $0x150] sm:$0xff]
        %v425 = vld [vmem:[#allocation5 + $0x158] sm:$0xff]
        %v426 = vld [vmem:[#allocation5 + $0x160] sm:$0xff]
        %v427 = vld [vmem:[#allocation5 + $0x168] sm:$0xff]
        %v428 = vld [vmem:[#allocation5 + $0x170] sm:$0xff]
        %v429 = vld [vmem:[#allocation5 + $0x178] sm:$0xff]
        %v430 = vld [vmem:[#allocation5 + $0x180] sm:$0xff]
        %v431 = vld [vmem:[#allocation5 + $0x188] sm:$0xff]
        %v432 = vld [vmem:[#allocation5 + $0x190] sm:$0xff]
        %v433 = vld [vmem:[#allocation5 + $0x198] sm:$0xff]
        %v434 = vld [vmem:[#allocation5 + $0x1a0] sm:$0xff]
        %v435 = vld [vmem:[#allocation5 + $0x1a8] sm:$0xff]
        %v436 = vld [vmem:[#allocation5 + $0x1b0] sm:$0xff]
        %v437 = vld [vmem:[#allocation5 + $0x1b8] sm:$0xff]
        %v438 = vld [vmem:[#allocation5 + $0x1c0] sm:$0xff]
        %v439 = vld [vmem:[#allocation5 + $0x1c8] sm:$0xff]
        %v440 = vld [vmem:[#allocation5 + $0x1d0] sm:$0xff]
        %v441 = vld [vmem:[#allocation5 + $0x1d8] sm:$0xff]
        %v442 = vld [vmem:[#allocation5 + $0x1e0] sm:$0xff]
        %v443 = vld [vmem:[#allocation5 + $0x1e8] sm:$0xff]
        %v444 = vld [vmem:[#allocation5 + $0x1f0] sm:$0xff]
        %v445 = vld [vmem:[#allocation5 + $0x1f8] sm:$0xff]
        %v446 = vld [vmem:[#allocation5 + $0x200] sm:$0xff]
        %v447 = vld [vmem:[#allocation5 + $0x208] sm:$0xff]
        %v448 = vld [vmem:[#allocation5 + $0x210] sm:$0xff]
        %v449 = vld [vmem:[#allocation5 + $0x218] sm:$0xff]
        %v450 = vld [vmem:[#allocation5 + $0x220] sm:$0xff]
        %v451 = vld [vmem:[#allocation5 + $0x228] sm:$0xff]
        %v452 = vld [vmem:[#allocation5 + $0x230] sm:$0xff]
        %v453 = vld [vmem:[#allocation5 + $0x238] sm:$0xff]
        %v454 = vld [vmem:[#allocation5 + $0x240] sm:$0xff]
        %v455 = vld [vmem:[#allocation5 + $0x248] sm:$0xff]
        %v456 = vld [vmem:[#allocation5 + $0x250] sm:$0xff]
        %v457 = vld [vmem:[#allocation5 + $0x258] sm:$0xff]
        %v458 = vld [vmem:[#allocation5 + $0x260] sm:$0xff]
        %v459 = vld [vmem:[#allocation5 + $0x268] sm:$0xff]
        %v460 = vld [vmem:[#allocation5 + $0x270] sm:$0xff]
        %v461 = vld [vmem:[#allocation5 + $0x278] sm:$0xff]
        %v462 = vld [vmem:[#allocation5 + $0x280] sm:$0xff]
        %v463 = vld [vmem:[#allocation5 + $0x288] sm:$0xff]
        %v464 = vld [vmem:[#allocation5 + $0x290] sm:$0xff]
        %v465 = vld [vmem:[#allocation5 + $0x298] sm:$0xff]
        %v466 = vld [vmem:[#allocation5 + $0x2a0] sm:$0xff]
        %v467 = vld [vmem:[#allocation5 + $0x2a8] sm:$0xff]
        %v468 = vld [vmem:[#allocation5 + $0x2b0] sm:$0xff]
        %v469 = vld [vmem:[#allocation5 + $0x2b8] sm:$0xff]
        %v470 = vld [vmem:[#allocation5 + $0x2c0] sm:$0xff]
        %v471 = vld [vmem:[#allocation5 + $0x2c8] sm:$0xff]
        %v472 = vld [vmem:[#allocation5 + $0x2d0] sm:$0xff]
        %v473 = vld [vmem:[#allocation5 + $0x2d8] sm:$0xff]
        %v474 = vld [vmem:[#allocation5 + $0x2e0] sm:$0xff]
        %v475 = vld [vmem:[#allocation5 + $0x2e8] sm:$0xff]
        %v476 = vld [vmem:[#allocation5 + $0x2f0] sm:$0xff]
        %v477 = vld [vmem:[#allocation5 + $0x2f8] sm:$0xff]
        %v478 = vld [vmem:[#allocation5 + $0x300] sm:$0xff]
        %v479 = vld [vmem:[#allocation5 + $0x308] sm:$0xff]
        %v480 = vld [vmem:[#allocation5 + $0x310] sm:$0xff]
        %v481 = vld [vmem:[#allocation5 + $0x318] sm:$0xff]
        %v482 = vld [vmem:[#allocation5 + $0x320] sm:$0xff]
        %v483 = vld [vmem:[#allocation5 + $0x328] sm:$0xff]
        %v484 = vld [vmem:[#allocation5 + $0x330] sm:$0xff]
        %v485 = vld [vmem:[#allocation5 + $0x338] sm:$0xff]
        %v486 = vld [vmem:[#allocation5 + $0x340] sm:$0xff]
        %v487 = vld [vmem:[#allocation5 + $0x348] sm:$0xff]
        %v488 = vld [vmem:[#allocation5 + $0x350] sm:$0xff]
        %v489 = vld [vmem:[#allocation5 + $0x358] sm:$0xff]
        %v490 = vld [vmem:[#allocation5 + $0x360] sm:$0xff]
        %v491 = vld [vmem:[#allocation5 + $0x368] sm:$0xff]
        %v492 = vld [vmem:[#allocation5 + $0x370] sm:$0xff]
        %v493 = vld [vmem:[#allocation5 + $0x378] sm:$0xff]
        %v494 = vld [vmem:[#allocation5 + $0x380] sm:$0xff]
        %v495 = vld [vmem:[#allocation5 + $0x388] sm:$0xff]
        %v496 = vld [vmem:[#allocation5 + $0x390] sm:$0xff]
        %v497 = vld [vmem:[#allocation5 + $0x398] sm:$0xff]
        %v498 = vld [vmem:[#allocation5 + $0x3a0] sm:$0xff]
        %v499 = vld [vmem:[#allocation5 + $0x3a8] sm:$0xff]
        %v500 = vld [vmem:[#allocation5 + $0x3b0] sm:$0xff]
        %v501 = vld [vmem:[#allocation5 + $0x3b8] sm:$0xff]
        %v502 = vld [vmem:[#allocation5 + $0x3c0] sm:$0xff]
        %v503 = vld [vmem:[#allocation5 + $0x3c8] sm:$0xff]
        %v504 = vld [vmem:[#allocation5 + $0x3d0] sm:$0xff]
        %v505 = vld [vmem:[#allocation5 + $0x3d8] sm:$0xff]
        %v506 = vld [vmem:[#allocation5 + $0x3e0] sm:$0xff]
        %v507 = vld [vmem:[#allocation5 + $0x3e8] sm:$0xff]
        %v508 = vld [vmem:[#allocation5 + $0x3f0] sm:$0xff]
        %v509 = vld [vmem:[#allocation5 + $0x3f8] sm:$0xff]
        %v510 = vld [vmem:[#allocation5 + $0x400] sm:$0xff]
        %v511 = vld [vmem:[#allocation5 + $0x408] sm:$0xff]
        %v512 = vld [vmem:[#allocation5 + $0x410] sm:$0xff]
        %v513 = vld [vmem:[#allocation5 + $0x418] sm:$0xff]
        %v514 = vld [vmem:[#allocation5 + $0x420] sm:$0xff]
        %v515 = vld [vmem:[#allocation5 + $0x428] sm:$0xff]
        %v516 = vld [vmem:[#allocation5 + $0x430] sm:$0xff]
        %v517 = vld [vmem:[#allocation5 + $0x438] sm:$0xff]
        %v518 = vld [vmem:[#allocation5 + $0x440] sm:$0xff]
        %v519 = vld [vmem:[#allocation5 + $0x448] sm:$0xff]
        %v520 = vld [vmem:[#allocation5 + $0x450] sm:$0xff]
        %v521 = vld [vmem:[#allocation5 + $0x458] sm:$0xff]
        %v522 = vld [vmem:[#allocation5 + $0x460] sm:$0xff]
        %v523 = vld [vmem:[#allocation5 + $0x468] sm:$0xff]
        %v524 = vld [vmem:[#allocation5 + $0x470] sm:$0xff]
        %v525 = vld [vmem:[#allocation5 + $0x478] sm:$0xff]
        %v526 = vld [vmem:[#allocation5 + $0x480] sm:$0xff]
        %v527 = vld [vmem:[#allocation5 + $0x488] sm:$0xff]
        %v528 = vld [vmem:[#allocation5 + $0x490] sm:$0xff]
        %v529 = vld [vmem:[#allocation5 + $0x498] sm:$0xff]
        %v530 = vld [vmem:[#allocation5 + $0x4a0] sm:$0xff]
        %v531 = vld [vmem:[#allocation5 + $0x4a8] sm:$0xff]
        %v532 = vld [vmem:[#allocation5 + $0x4b0] sm:$0xff]
        %v533 = vld [vmem:[#allocation5 + $0x4b8] sm:$0xff]
        %v534 = vld [vmem:[#allocation5 + $0x4c0] sm:$0xff]
        %v535 = vld [vmem:[#allocation5 + $0x4c8] sm:$0xff]
        %v536 = vld [vmem:[#allocation5 + $0x4d0] sm:$0xff]
        %v537 = vld [vmem:[#allocation5 + $0x4d8] sm:$0xff]
        %v538 = vld [vmem:[#allocation5 + $0x4e0] sm:$0xff]
        %v539 = vld [vmem:[#allocation5 + $0x4e8] sm:$0xff]
        %v540 = vld [vmem:[#allocation5 + $0x4f0] sm:$0xff]
        %v541 = vld [vmem:[#allocation5 + $0x4f8] sm:$0xff]
        %v542 = vld [vmem:[#allocation5 + $0x500] sm:$0xff]
        %v543 = vld [vmem:[#allocation5 + $0x508] sm:$0xff]
        %v544 = vld [vmem:[#allocation5 + $0x510] sm:$0xff]
        %v545 = vld [vmem:[#allocation5 + $0x518] sm:$0xff]
        %v546 = vld [vmem:[#allocation5 + $0x520] sm:$0xff]
        %v547 = vld [vmem:[#allocation5 + $0x528] sm:$0xff]
        %v548 = vld [vmem:[#allocation5 + $0x530] sm:$0xff]
        %v549 = vld [vmem:[#allocation5 + $0x538] sm:$0xff]
        %v550 = vld [vmem:[#allocation5 + $0x540] sm:$0xff]
        %v551 = vld [vmem:[#allocation5 + $0x548] sm:$0xff]
        %v552 = vld [vmem:[#allocation5 + $0x550] sm:$0xff]
        %v553 = vld [vmem:[#allocation5 + $0x558] sm:$0xff]
        %v554 = vld [vmem:[#allocation5 + $0x560] sm:$0xff]
        %v555 = vld [vmem:[#allocation5 + $0x568] sm:$0xff]
        %v556 = vld [vmem:[#allocation5 + $0x570] sm:$0xff]
        %v557 = vld [vmem:[#allocation5 + $0x578] sm:$0xff]
        %v558 = vld [vmem:[#allocation5 + $0x580] sm:$0xff]
        %v559 = vld [vmem:[#allocation5 + $0x588] sm:$0xff]
        %v560 = vld [vmem:[#allocation5 + $0x590] sm:$0xff]
        %v561 = vld [vmem:[#allocation5 + $0x598] sm:$0xff]
        %v562 = vld [vmem:[#allocation5 + $0x5a0] sm:$0xff]
        %v563 = vld [vmem:[#allocation5 + $0x5a8] sm:$0xff]
        %v564 = vld [vmem:[#allocation5 + $0x5b0] sm:$0xff]
        %v565 = vld [vmem:[#allocation5 + $0x5b8] sm:$0xff]
        %v566 = vld [vmem:[#allocation5 + $0x5c0] sm:$0xff]
        %v567 = vld [vmem:[#allocation5 + $0x5c8] sm:$0xff]
        %v568 = vld [vmem:[#allocation5 + $0x5d0] sm:$0xff]
        %v569 = vld [vmem:[#allocation5 + $0x5d8] sm:$0xff]
        %v570 = vld [vmem:[#allocation5 + $0x5e0] sm:$0xff]
        %v571 = vld [vmem:[#allocation5 + $0x5e8] sm:$0xff]
        %v572 = vld [vmem:[#allocation5 + $0x5f0] sm:$0xff]
        %v573 = vld [vmem:[#allocation5 + $0x5f8] sm:$0xff]
        %v574 = vld [vmem:[#allocation5 + $0x600] sm:$0xff]
        %v575 = vld [vmem:[#allocation5 + $0x608] sm:$0xff]
        %v576 = vld [vmem:[#allocation5 + $0x610] sm:$0xff]
        %v577 = vld [vmem:[#allocation5 + $0x618] sm:$0xff]
        %v578 = vld [vmem:[#allocation5 + $0x620] sm:$0xff]
        %v579 = vld [vmem:[#allocation5 + $0x628] sm:$0xff]
        %v580 = vld [vmem:[#allocation5 + $0x630] sm:$0xff]
        %v581 = vld [vmem:[#allocation5 + $0x638] sm:$0xff]
        %v582 = vld [vmem:[#allocation5 + $0x640] sm:$0xff]
        %v583 = vld [vmem:[#allocation5 + $0x648] sm:$0xff]
        %v584 = vld [vmem:[#allocation5 + $0x650] sm:$0xff]
        %v585 = vld [vmem:[#allocation5 + $0x658] sm:$0xff]
        %v586 = vld [vmem:[#allocation5 + $0x660] sm:$0xff]
        %v587 = vld [vmem:[#allocation5 + $0x668] sm:$0xff]
        %v588 = vld [vmem:[#allocation5 + $0x670] sm:$0xff]
        %v589 = vld [vmem:[#allocation5 + $0x678] sm:$0xff]
        %v590 = vld [vmem:[#allocation5 + $0x680] sm:$0xff]
        %v591 = vld [vmem:[#allocation5 + $0x688] sm:$0xff]
        %v592 = vld [vmem:[#allocation5 + $0x690] sm:$0xff]
        %v593 = vld [vmem:[#allocation5 + $0x698] sm:$0xff]
        %v594 = vld [vmem:[#allocation5 + $0x6a0] sm:$0xff]
        %v595 = vld [vmem:[#allocation5 + $0x6a8] sm:$0xff]
        %v596 = vld [vmem:[#allocation5 + $0x6b0] sm:$0xff]
        %v597 = vld [vmem:[#allocation5 + $0x6b8] sm:$0xff]
        %v598 = vld [vmem:[#allocation5 + $0x6c0] sm:$0xff]
        %v599 = vld [vmem:[#allocation5 + $0x6c8] sm:$0xff]
        %v600 = vld [vmem:[#allocation5 + $0x6d0] sm:$0xff]
        %v601 = vld [vmem:[#allocation5 + $0x6d8] sm:$0xff]
        %v602 = vld [vmem:[#allocation5 + $0x6e0] sm:$0xff]
        %v603 = vld [vmem:[#allocation5 + $0x6e8] sm:$0xff]
        %v604 = vld [vmem:[#allocation5 + $0x6f0] sm:$0xff]
        %v605 = vld [vmem:[#allocation5 + $0x6f8] sm:$0xff]
        %v606 = vld [vmem:[#allocation5 + $0x700] sm:$0xff]
        %v607 = vld [vmem:[#allocation5 + $0x708] sm:$0xff]
        %v608 = vld [vmem:[#allocation5 + $0x710] sm:$0xff]
        %v609 = vld [vmem:[#allocation5 + $0x718] sm:$0xff]
        %v610 = vld [vmem:[#allocation5 + $0x720] sm:$0xff]
        %v611 = vld [vmem:[#allocation5 + $0x728] sm:$0xff]
        %v612 = vld [vmem:[#allocation5 + $0x730] sm:$0xff]
        %v613 = vld [vmem:[#allocation5 + $0x738] sm:$0xff]
        %v614 = vld [vmem:[#allocation5 + $0x740] sm:$0xff]
        %v615 = vld [vmem:[#allocation5 + $0x748] sm:$0xff]
        %v616 = vld [vmem:[#allocation5 + $0x750] sm:$0xff]
        %v617 = vld [vmem:[#allocation5 + $0x758] sm:$0xff]
        %v618 = vld [vmem:[#allocation5 + $0x760] sm:$0xff]
        %v619 = vld [vmem:[#allocation5 + $0x768] sm:$0xff]
        %v620 = vld [vmem:[#allocation5 + $0x770] sm:$0xff]
        %v621 = vld [vmem:[#allocation5 + $0x778] sm:$0xff]
        %v622 = vld [vmem:[#allocation5 + $0x780] sm:$0xff]
        %v623 = vld [vmem:[#allocation5 + $0x788] sm:$0xff]
        %v624 = vld [vmem:[#allocation5 + $0x790] sm:$0xff]
        %v625 = vld [vmem:[#allocation5 + $0x798] sm:$0xff]
        %v626 = vld [vmem:[#allocation5 + $0x7a0] sm:$0xff]
        %v627 = vld [vmem:[#allocation5 + $0x7a8] sm:$0xff]
        %v628 = vld [vmem:[#allocation5 + $0x7b0] sm:$0xff]
        %v629 = vld [vmem:[#allocation5 + $0x7b8] sm:$0xff]
        %v630 = vld [vmem:[#allocation5 + $0x7c0] sm:$0xff]
        %v631 = vld [vmem:[#allocation5 + $0x7c8] sm:$0xff]
        %v632 = vld [vmem:[#allocation5 + $0x7d0] sm:$0xff]
        %v633 = vld [vmem:[#allocation5 + $0x7d8] sm:$0xff]
        %v634 = vld [vmem:[#allocation5 + $0x7e0] sm:$0xff]
        %v635 = vld [vmem:[#allocation5 + $0x7e8] sm:$0xff]
        %v636 = vld [vmem:[#allocation5 + $0x7f0] sm:$0xff]
        %v637 = vld [vmem:[#allocation5 + $0x7f8] sm:$0xff]
        %v638 = vld [vmem:[#allocation5 + $0x800] sm:$0xff]
        %v639 = vld [vmem:[#allocation5 + $0x808] sm:$0xff]
        %v640 = vld [vmem:[#allocation5 + $0x810] sm:$0xff]
        %v641 = vld [vmem:[#allocation5 + $0x818] sm:$0xff]
        %v642 = vld [vmem:[#allocation5 + $0x820] sm:$0xff]
        %v643 = vld [vmem:[#allocation5 + $0x828] sm:$0xff]
        %v644 = vld [vmem:[#allocation5 + $0x830] sm:$0xff]
        %v645 = vld [vmem:[#allocation5 + $0x838] sm:$0xff]
        %v646 = vld [vmem:[#allocation5 + $0x840] sm:$0xff]
        %v647 = vld [vmem:[#allocation5 + $0x848] sm:$0xff]
        %v648 = vld [vmem:[#allocation5 + $0x850] sm:$0xff]
        %v649 = vld [vmem:[#allocation5 + $0x858] sm:$0xff]
        %v650 = vld [vmem:[#allocation5 + $0x860] sm:$0xff]
        %v651 = vld [vmem:[#allocation5 + $0x868] sm:$0xff]
        %v652 = vld [vmem:[#allocation5 + $0x870] sm:$0xff]
        %v653 = vld [vmem:[#allocation5 + $0x878] sm:$0xff]
        %v654 = vld [vmem:[#allocation5 + $0x880] sm:$0xff]
        %v655 = vld [vmem:[#allocation5 + $0x888] sm:$0xff]
        %v656 = vld [vmem:[#allocation5 + $0x890] sm:$0xff]
        %v657 = vld [vmem:[#allocation5 + $0x898] sm:$0xff]
        %v658 = vld [vmem:[#allocation5 + $0x8a0] sm:$0xff]
        %v659 = vld [vmem:[#allocation5 + $0x8a8] sm:$0xff]
        %v660 = vld [vmem:[#allocation5 + $0x8b0] sm:$0xff]
        %v661 = vld [vmem:[#allocation5 + $0x8b8] sm:$0xff]
        %v662 = vld [vmem:[#allocation5 + $0x8c0] sm:$0xff]
        %v663 = vld [vmem:[#allocation5 + $0x8c8] sm:$0xff]
        %v664 = vld [vmem:[#allocation5 + $0x8d0] sm:$0xff]
        %v665 = vld [vmem:[#allocation5 + $0x8d8] sm:$0xff]
        %v666 = vld [vmem:[#allocation5 + $0x8e0] sm:$0xff]
        %v667 = vld [vmem:[#allocation5 + $0x8e8] sm:$0xff]
        %v668 = vld [vmem:[#allocation5 + $0x8f0] sm:$0xff]
        %v669 = vld [vmem:[#allocation5 + $0x8f8] sm:$0xff]
        %v670 = vld [vmem:[#allocation5 + $0x900] sm:$0xff]
        %v671 = vld [vmem:[#allocation5 + $0x908] sm:$0xff]
        %v672 = vld [vmem:[#allocation5 + $0x910] sm:$0xff]
        %v673 = vld [vmem:[#allocation5 + $0x918] sm:$0xff]
        %v674 = vld [vmem:[#allocation5 + $0x920] sm:$0xff]
        %v675 = vld [vmem:[#allocation5 + $0x928] sm:$0xff]
        %v676 = vld [vmem:[#allocation5 + $0x930] sm:$0xff]
        %v677 = vld [vmem:[#allocation5 + $0x938] sm:$0xff]
        %v678 = vld [vmem:[#allocation5 + $0x940] sm:$0xff]
        %v679 = vld [vmem:[#allocation5 + $0x948] sm:$0xff]
        %v680 = vld [vmem:[#allocation5 + $0x950] sm:$0xff]
        %v681 = vld [vmem:[#allocation5 + $0x958] sm:$0xff]
        %v682 = vld [vmem:[#allocation5 + $0x960] sm:$0xff]
        %v683 = vld [vmem:[#allocation5 + $0x968] sm:$0xff]
        %v684 = vld [vmem:[#allocation5 + $0x970] sm:$0xff]
        %v685 = vld [vmem:[#allocation5 + $0x978] sm:$0xff]
        %v686 = vld [vmem:[#allocation5 + $0x980] sm:$0xff]
        %v687 = vld [vmem:[#allocation5 + $0x988] sm:$0xff]
        %v688 = vld [vmem:[#allocation5 + $0x990] sm:$0xff]
        %v689 = vld [vmem:[#allocation5 + $0x998] sm:$0xff]
        %v690 = vld [vmem:[#allocation5 + $0x9a0] sm:$0xff]
        %v691 = vld [vmem:[#allocation5 + $0x9a8] sm:$0xff]
        %v692 = vld [vmem:[#allocation5 + $0x9b0] sm:$0xff]
        %v693 = vld [vmem:[#allocation5 + $0x9b8] sm:$0xff]
        %v694 = vld [vmem:[#allocation5 + $0x9c0] sm:$0xff]
        %v695 = vld [vmem:[#allocation5 + $0x9c8] sm:$0xff]
        %v696 = vld [vmem:[#allocation5 + $0x9d0] sm:$0xff]
        %v697 = vld [vmem:[#allocation5 + $0x9d8] sm:$0xff]
        %v698 = vld [vmem:[#allocation5 + $0x9e0] sm:$0xff]
        %v699 = vld [vmem:[#allocation5 + $0x9e8] sm:$0xff]
        %v700 = vld [vmem:[#allocation5 + $0x9f0] sm:$0xff]
        %v701 = vld [vmem:[#allocation5 + $0x9f8] sm:$0xff]
        %v702 = vld [vmem:[#allocation5 + $0xa00] sm:$0xff]
        %v703 = vld [vmem:[#allocation5 + $0xa08] sm:$0xff]
        %v704 = vld [vmem:[#allocation5 + $0xa10] sm:$0xff]
        %v705 = vld [vmem:[#allocation5 + $0xa18] sm:$0xff]
        %v706 = vld [vmem:[#allocation5 + $0xa20] sm:$0xff]
        %v707 = vld [vmem:[#allocation5 + $0xa28] sm:$0xff]
        %v708 = vld [vmem:[#allocation5 + $0xa30] sm:$0xff]
        %v709 = vld [vmem:[#allocation5 + $0xa38] sm:$0xff]
        %v710 = vld [vmem:[#allocation5 + $0xa40] sm:$0xff]
        %v711 = vld [vmem:[#allocation5 + $0xa48] sm:$0xff]
        %v712 = vld [vmem:[#allocation5 + $0xa50] sm:$0xff]
        %v713 = vld [vmem:[#allocation5 + $0xa58] sm:$0xff]
        %v714 = vld [vmem:[#allocation5 + $0xa60] sm:$0xff]
        %v715 = vld [vmem:[#allocation5 + $0xa68] sm:$0xff]
        %v716 = vld [vmem:[#allocation5 + $0xa70] sm:$0xff]
        %v717 = vld [vmem:[#allocation5 + $0xa78] sm:$0xff]
        %v718 = vld [vmem:[#allocation5 + $0xa80] sm:$0xff]
        %v719 = vld [vmem:[#allocation5 + $0xa88] sm:$0xff]
        %v720 = vld [vmem:[#allocation5 + $0xa90] sm:$0xff]
        %v721 = vld [vmem:[#allocation5 + $0xa98] sm:$0xff]
        %v722 = vld [vmem:[#allocation5 + $0xaa0] sm:$0xff]
        %v723 = vld [vmem:[#allocation5 + $0xaa8] sm:$0xff]
        %v724 = vld [vmem:[#allocation5 + $0xab0] sm:$0xff]
        %v725 = vld [vmem:[#allocation5 + $0xab8] sm:$0xff]
        %v726 = vld [vmem:[#allocation5 + $0xac0] sm:$0xff]
        %v727 = vld [vmem:[#allocation5 + $0xac8] sm:$0xff]
        %v728 = vld [vmem:[#allocation5 + $0xad0] sm:$0xff]
        %v729 = vld [vmem:[#allocation5 + $0xad8] sm:$0xff]
        %v730 = vld [vmem:[#allocation5 + $0xae0] sm:$0xff]
        %v731 = vld [vmem:[#allocation5 + $0xae8] sm:$0xff]
        %v732 = vld [vmem:[#allocation5 + $0xaf0] sm:$0xff]
        %v733 = vld [vmem:[#allocation5 + $0xaf8] sm:$0xff]
        %v734 = vld [vmem:[#allocation5 + $0xb00] sm:$0xff]
        %v735 = vld [vmem:[#allocation5 + $0xb08] sm:$0xff]
        %v736 = vld [vmem:[#allocation5 + $0xb10] sm:$0xff]
        %v737 = vld [vmem:[#allocation5 + $0xb18] sm:$0xff]
        %v738 = vld [vmem:[#allocation5 + $0xb20] sm:$0xff]
        %v739 = vld [vmem:[#allocation5 + $0xb28] sm:$0xff]
        %v740 = vld [vmem:[#allocation5 + $0xb30] sm:$0xff]
        %v741 = vld [vmem:[#allocation5 + $0xb38] sm:$0xff]
        %v742 = vld [vmem:[#allocation5 + $0xb40] sm:$0xff]
        %v743 = vld [vmem:[#allocation5 + $0xb48] sm:$0xff]
        %v744 = vld [vmem:[#allocation5 + $0xb50] sm:$0xff]
        %v745 = vld [vmem:[#allocation5 + $0xb58] sm:$0xff]
        %v746 = vld [vmem:[#allocation5 + $0xb60] sm:$0xff]
        %v747 = vld [vmem:[#allocation5 + $0xb68] sm:$0xff]
        %v748 = vld [vmem:[#allocation5 + $0xb70] sm:$0xff]
        %v749 = vld [vmem:[#allocation5 + $0xb78] sm:$0xff]
        %v750 = vld [vmem:[#allocation5 + $0xb80] sm:$0xff]
        %v751 = vld [vmem:[#allocation5 + $0xb88] sm:$0xff]
        %v752 = vld [vmem:[#allocation5 + $0xb90] sm:$0xff]
        %v753 = vld [vmem:[#allocation5 + $0xb98] sm:$0xff]
        %v754 = vld [vmem:[#allocation5 + $0xba0] sm:$0xff]
        %v755 = vld [vmem:[#allocation5 + $0xba8] sm:$0xff]
        %v756 = vld [vmem:[#allocation5 + $0xbb0] sm:$0xff]
        %v757 = vld [vmem:[#allocation5 + $0xbb8] sm:$0xff]
        %v758 = vld [vmem:[#allocation5 + $0xbc0] sm:$0xff]
        %v759 = vld [vmem:[#allocation5 + $0xbc8] sm:$0xff]
        %v760 = vld [vmem:[#allocation5 + $0xbd0] sm:$0xff]
        %v761 = vld [vmem:[#allocation5 + $0xbd8] sm:$0xff]
        %v762 = vld [vmem:[#allocation5 + $0xbe0] sm:$0xff]
        %v763 = vld [vmem:[#allocation5 + $0xbe8] sm:$0xff]
        %v764 = vld [vmem:[#allocation5 + $0xbf0] sm:$0xff]
        %v765 = vld [vmem:[#allocation5 + $0xbf8] sm:$0xff]
        %v766 = vld [vmem:[#allocation5 + $0xc00] sm:$0xff]
        %v767 = vld [vmem:[#allocation5 + $0xc08] sm:$0xff]
        %v768 = vld [vmem:[#allocation5 + $0xc10] sm:$0xff]
        %v769 = vld [vmem:[#allocation5 + $0xc18] sm:$0xff]
        %v770 = vld [vmem:[#allocation5 + $0xc20] sm:$0xff]
        %v771 = vld [vmem:[#allocation5 + $0xc28] sm:$0xff]
        %v772 = vld [vmem:[#allocation5 + $0xc30] sm:$0xff]
        %v773 = vld [vmem:[#allocation5 + $0xc38] sm:$0xff]
        %v774 = vld [vmem:[#allocation5 + $0xc40] sm:$0xff]
        %v775 = vld [vmem:[#allocation5 + $0xc48] sm:$0xff]
        %v776 = vld [vmem:[#allocation5 + $0xc50] sm:$0xff]
        %v777 = vld [vmem:[#allocation5 + $0xc58] sm:$0xff]
        %v778 = vld [vmem:[#allocation5 + $0xc60] sm:$0xff]
        %v779 = vld [vmem:[#allocation5 + $0xc68] sm:$0xff]
        %v780 = vld [vmem:[#allocation5 + $0xc70] sm:$0xff]
        %v781 = vld [vmem:[#allocation5 + $0xc78] sm:$0xff]
        %v782 = vld [vmem:[#allocation5 + $0xc80] sm:$0xff]
        %v783 = vld [vmem:[#allocation5 + $0xc88] sm:$0xff]
        %v784 = vld [vmem:[#allocation5 + $0xc90] sm:$0xff]
        %v785 = vld [vmem:[#allocation5 + $0xc98] sm:$0xff]
        %v786 = vld [vmem:[#allocation5 + $0xca0] sm:$0xff]
        %v787 = vld [vmem:[#allocation5 + $0xca8] sm:$0xff]
        %v788 = vld [vmem:[#allocation5 + $0xcb0] sm:$0xff]
        %v789 = vld [vmem:[#allocation5 + $0xcb8] sm:$0xff]
        %v790 = vld [vmem:[#allocation5 + $0xcc0] sm:$0xff]
        %v791 = vld [vmem:[#allocation5 + $0xcc8] sm:$0xff]
        %v792 = vld [vmem:[#allocation5 + $0xcd0] sm:$0xff]
        %v793 = vld [vmem:[#allocation5 + $0xcd8] sm:$0xff]
        %v794 = vld [vmem:[#allocation5 + $0xce0] sm:$0xff]
        %v795 = vld [vmem:[#allocation5 + $0xce8] sm:$0xff]
        %v796 = vld [vmem:[#allocation5 + $0xcf0] sm:$0xff]
        %v797 = vld [vmem:[#allocation5 + $0xcf8] sm:$0xff]
        %v798 = vld [vmem:[#allocation5 + $0xd00] sm:$0xff]
        %v799 = vld [vmem:[#allocation5 + $0xd08] sm:$0xff]
        %v800 = vld [vmem:[#allocation5 + $0xd10] sm:$0xff]
        %v801 = vld [vmem:[#allocation5 + $0xd18] sm:$0xff]
        %v802 = vld [vmem:[#allocation5 + $0xd20] sm:$0xff]
        %v803 = vld [vmem:[#allocation5 + $0xd28] sm:$0xff]
        %v804 = vld [vmem:[#allocation5 + $0xd30] sm:$0xff]
        %v805 = vld [vmem:[#allocation5 + $0xd38] sm:$0xff]
        %v806 = vld [vmem:[#allocation5 + $0xd40] sm:$0xff]
        %v807 = vld [vmem:[#allocation5 + $0xd48] sm:$0xff]
        %v808 = vld [vmem:[#allocation5 + $0xd50] sm:$0xff]
        %v809 = vld [vmem:[#allocation5 + $0xd58] sm:$0xff]
        %v810 = vld [vmem:[#allocation5 + $0xd60] sm:$0xff]
        %v811 = vld [vmem:[#allocation5 + $0xd68] sm:$0xff]
        %v812 = vld [vmem:[#allocation5 + $0xd70] sm:$0xff]
        %v813 = vld [vmem:[#allocation5 + $0xd78] sm:$0xff]
        %v814 = vld [vmem:[#allocation5 + $0xd80] sm:$0xff]
        %v815 = vld [vmem:[#allocation5 + $0xd88] sm:$0xff]
        %v816 = vld [vmem:[#allocation5 + $0xd90] sm:$0xff]
        %v817 = vld [vmem:[#allocation5 + $0xd98] sm:$0xff]
        %v818 = vld [vmem:[#allocation5 + $0xda0] sm:$0xff]
        %v819 = vld [vmem:[#allocation5 + $0xda8] sm:$0xff]
        %v820 = vld [vmem:[#allocation5 + $0xdb0] sm:$0xff]
        %v821 = vld [vmem:[#allocation5 + $0xdb8] sm:$0xff]
        %v822 = vld [vmem:[#allocation5 + $0xdc0] sm:$0xff]
        %v823 = vld [vmem:[#allocation5 + $0xdc8] sm:$0xff]
        %v824 = vld [vmem:[#allocation5 + $0xdd0] sm:$0xff]
        %v825 = vld [vmem:[#allocation5 + $0xdd8] sm:$0xff]
        %v826 = vld [vmem:[#allocation5 + $0xde0] sm:$0xff]
        %v827 = vld [vmem:[#allocation5 + $0xde8] sm:$0xff]
        %v828 = vld [vmem:[#allocation5 + $0xdf0] sm:$0xff]
        %v829 = vld [vmem:[#allocation5 + $0xdf8] sm:$0xff]
        %v830 = vld [vmem:[#allocation5 + $0xe00] sm:$0xff]
        %v831 = vld [vmem:[#allocation5 + $0xe08] sm:$0xff]
        %v832 = vld [vmem:[#allocation5 + $0xe10] sm:$0xff]
        %v833 = vld [vmem:[#allocation5 + $0xe18] sm:$0xff]
        %v834 = vld [vmem:[#allocation5 + $0xe20] sm:$0xff]
        %v835 = vld [vmem:[#allocation5 + $0xe28] sm:$0xff]
        %v836 = vld [vmem:[#allocation5 + $0xe30] sm:$0xff]
        %v837 = vld [vmem:[#allocation5 + $0xe38] sm:$0xff]
        %v838 = vld [vmem:[#allocation5 + $0xe40] sm:$0xff]
        %v839 = vld [vmem:[#allocation5 + $0xe48] sm:$0xff]
        %v840 = vld [vmem:[#allocation5 + $0xe50] sm:$0xff]
        %v841 = vld [vmem:[#allocation5 + $0xe58] sm:$0xff]
        %v842 = vld [vmem:[#allocation5 + $0xe60] sm:$0xff]
        %v843 = vld [vmem:[#allocation5 + $0xe68] sm:$0xff]
        %v844 = vld [vmem:[#allocation5 + $0xe70] sm:$0xff]
        %v845 = vld [vmem:[#allocation5 + $0xe78] sm:$0xff]
        %v846 = vld [vmem:[#allocation5 + $0xe80] sm:$0xff]
        %v847 = vld [vmem:[#allocation5 + $0xe88] sm:$0xff]
        %v848 = vld [vmem:[#allocation5 + $0xe90] sm:$0xff]
        %v849 = vld [vmem:[#allocation5 + $0xe98] sm:$0xff]
        %v850 = vld [vmem:[#allocation5 + $0xea0] sm:$0xff]
        %v851 = vld [vmem:[#allocation5 + $0xea8] sm:$0xff]
        %v852 = vld [vmem:[#allocation5 + $0xeb0] sm:$0xff]
        %v853 = vld [vmem:[#allocation5 + $0xeb8] sm:$0xff]
        %v854 = vld [vmem:[#allocation5 + $0xec0] sm:$0xff]
        %v855 = vld [vmem:[#allocation5 + $0xec8] sm:$0xff]
        %v856 = vld [vmem:[#allocation5 + $0xed0] sm:$0xff]
        %v857 = vld [vmem:[#allocation5 + $0xed8] sm:$0xff]
        %v858 = vld [vmem:[#allocation5 + $0xee0] sm:$0xff]
        %v859 = vld [vmem:[#allocation5 + $0xee8] sm:$0xff]
        %v860 = vld [vmem:[#allocation5 + $0xef0] sm:$0xff]
        %v861 = vld [vmem:[#allocation5 + $0xef8] sm:$0xff]
        %v862 = vld [vmem:[#allocation5 + $0xf00] sm:$0xff]
        %v863 = vld [vmem:[#allocation5 + $0xf08] sm:$0xff]
        %v864 = vld [vmem:[#allocation5 + $0xf10] sm:$0xff]
        %v865 = vld [vmem:[#allocation5 + $0xf18] sm:$0xff]
        %v866 = vld [vmem:[#allocation5 + $0xf20] sm:$0xff]
        %v867 = vld [vmem:[#allocation5 + $0xf28] sm:$0xff]
        %v868 = vld [vmem:[#allocation5 + $0xf30] sm:$0xff]
        %v869 = vld [vmem:[#allocation5 + $0xf38] sm:$0xff]
        %v870 = vld [vmem:[#allocation5 + $0xf40] sm:$0xff]
        %v871 = vld [vmem:[#allocation5 + $0xf48] sm:$0xff]
        %v872 = vld [vmem:[#allocation5 + $0xf50] sm:$0xff]
        %v873 = vld [vmem:[#allocation5 + $0xf58] sm:$0xff]
        %v874 = vld [vmem:[#allocation5 + $0xf60] sm:$0xff]
        %v875 = vld [vmem:[#allocation5 + $0xf68] sm:$0xff]
        %v876 = vld [vmem:[#allocation5 + $0xf70] sm:$0xff]
        %v877 = vld [vmem:[#allocation5 + $0xf78] sm:$0xff]
        %v878 = vld [vmem:[#allocation5 + $0xf80] sm:$0xff]
        %v879 = vld [vmem:[#allocation5 + $0xf88] sm:$0xff]
        %v880 = vld [vmem:[#allocation5 + $0xf90] sm:$0xff]
        %v881 = vld [vmem:[#allocation5 + $0xf98] sm:$0xff]
        %v882 = vld [vmem:[#allocation5 + $0xfa0] sm:$0xff]
        %v883 = vld [vmem:[#allocation5 + $0xfa8] sm:$0xff]
        %v884 = vld [vmem:[#allocation5 + $0xfb0] sm:$0xff]
        %v885 = vld [vmem:[#allocation5 + $0xfb8] sm:$0xff]
        %v886 = vld [vmem:[#allocation5 + $0xfc0] sm:$0xff]
        %v887 = vld [vmem:[#allocation5 + $0xfc8] sm:$0xff]
        %v888 = vld [vmem:[#allocation5 + $0xfd0] sm:$0xff]
        %v889 = vld [vmem:[#allocation5 + $0xfd8] sm:$0xff]
        %v890 = vld [vmem:[#allocation5 + $0xfe0] sm:$0xff]
        %v891 = vld [vmem:[#allocation5 + $0xfe8] sm:$0xff]
        %v892 = vld [vmem:[#allocation5 + $0xff0] sm:$0xff]
        %v893 = vld [vmem:[#allocation5 + $0xff8] sm:$0xff]
        %v894 = vld [vmem:[#allocation5 + $0x1000] sm:$0xff]
        %v895 = vld [vmem:[#allocation5 + $0x1008] sm:$0xff]
        %v896 = vld [vmem:[#allocation5 + $0x1010] sm:$0xff]
        %v897 = vld [vmem:[#allocation5 + $0x1018] sm:$0xff]
        %v898 = vld [vmem:[#allocation5 + $0x1020] sm:$0xff]
        %v899 = vld [vmem:[#allocation5 + $0x1028] sm:$0xff]
        %v900 = vld [vmem:[#allocation5 + $0x1030] sm:$0xff]
        %v901 = vld [vmem:[#allocation5 + $0x1038] sm:$0xff]
        %v902 = vld [vmem:[#allocation5 + $0x1040] sm:$0xff]
        %v903 = vld [vmem:[#allocation5 + $0x1048] sm:$0xff]
        %v904 = vld [vmem:[#allocation5 + $0x1050] sm:$0xff]
        %v905 = vld [vmem:[#allocation5 + $0x1058] sm:$0xff]
        %v906 = vld [vmem:[#allocation5 + $0x1060] sm:$0xff]
        %v907 = vld [vmem:[#allocation5 + $0x1068] sm:$0xff]
        %v908 = vld [vmem:[#allocation5 + $0x1070] sm:$0xff]
        %v909 = vld [vmem:[#allocation5 + $0x1078] sm:$0xff]
        %v910 = vld [vmem:[#allocation5 + $0x1080] sm:$0xff]
        %v911 = vld [vmem:[#allocation5 + $0x1088] sm:$0xff]
        %v912 = vld [vmem:[#allocation5 + $0x1090] sm:$0xff]
        %v913 = vld [vmem:[#allocation5 + $0x1098] sm:$0xff]
        %v914 = vld [vmem:[#allocation5 + $0x10a0] sm:$0xff]
        %v915 = vld [vmem:[#allocation5 + $0x10a8] sm:$0xff]
        %v916 = vld [vmem:[#allocation5 + $0x10b0] sm:$0xff]
        %v917 = vld [vmem:[#allocation5 + $0x10b8] sm:$0xff]
        %v918 = vld [vmem:[#allocation5 + $0x10c0] sm:$0xff]
        %v919 = vld [vmem:[#allocation5 + $0x10c8] sm:$0xff]
        %v920 = vld [vmem:[#allocation5 + $0x10d0] sm:$0xff]
        %v921 = vld [vmem:[#allocation5 + $0x10d8] sm:$0xff]
        %v922 = vld [vmem:[#allocation5 + $0x10e0] sm:$0xff]
        %v923 = vld [vmem:[#allocation5 + $0x10e8] sm:$0xff]
        %v924 = vld [vmem:[#allocation5 + $0x10f0] sm:$0xff]
        %v925 = vld [vmem:[#allocation5 + $0x10f8] sm:$0xff]
        %v926 = vld [vmem:[#allocation5 + $0x1100] sm:$0xff]
        %v927 = vld [vmem:[#allocation5 + $0x1108] sm:$0xff]
        %v928 = vld [vmem:[#allocation5 + $0x1110] sm:$0xff]
        %v929 = vld [vmem:[#allocation5 + $0x1118] sm:$0xff]
        %v930 = vld [vmem:[#allocation5 + $0x1120] sm:$0xff]
        %v931 = vld [vmem:[#allocation5 + $0x1128] sm:$0xff]
        %v932 = vld [vmem:[#allocation5 + $0x1130] sm:$0xff]
        %v933 = vld [vmem:[#allocation5 + $0x1138] sm:$0xff]
        %v934 = vld [vmem:[#allocation5 + $0x1140] sm:$0xff]
        %v935 = vld [vmem:[#allocation5 + $0x1148] sm:$0xff]
        %v936 = vld [vmem:[#allocation5 + $0x1150] sm:$0xff]
        %v937 = vld [vmem:[#allocation5 + $0x1158] sm:$0xff]
        %v938 = vld [vmem:[#allocation5 + $0x1160] sm:$0xff]
        %v939 = vld [vmem:[#allocation5 + $0x1168] sm:$0xff]
        %v940 = vld [vmem:[#allocation5 + $0x1170] sm:$0xff]
        %v941 = vld [vmem:[#allocation5 + $0x1178] sm:$0xff]
        %v942 = vld [vmem:[#allocation5 + $0x1180] sm:$0xff]
        %v943 = vld [vmem:[#allocation5 + $0x1188] sm:$0xff]
        %v944 = vld [vmem:[#allocation5 + $0x1190] sm:$0xff]
        %v945 = vld [vmem:[#allocation5 + $0x1198] sm:$0xff]
        %v946 = vld [vmem:[#allocation5 + $0x11a0] sm:$0xff]
        %v947 = vld [vmem:[#allocation5 + $0x11a8] sm:$0xff]
        %v948 = vld [vmem:[#allocation5 + $0x11b0] sm:$0xff]
        %v949 = vld [vmem:[#allocation5 + $0x11b8] sm:$0xff]
        %v950 = vld [vmem:[#allocation5 + $0x11c0] sm:$0xff]
        %v951 = vld [vmem:[#allocation5 + $0x11c8] sm:$0xff]
        %v952 = vld [vmem:[#allocation5 + $0x11d0] sm:$0xff]
        %v953 = vld [vmem:[#allocation5 + $0x11d8] sm:$0xff]
        %v954 = vld [vmem:[#allocation5 + $0x11e0] sm:$0xff]
        %v955 = vld [vmem:[#allocation5 + $0x11e8] sm:$0xff]
        %v956 = vld [vmem:[#allocation5 + $0x11f0] sm:$0xff]
        %v957 = vld [vmem:[#allocation5 + $0x11f8] sm:$0xff]
        %v958 = vld [vmem:[#allocation7] sm:$0xff]
        %v959 = vld [vmem:[#allocation7 + $0x8] sm:$0xff]
        %v960 = vld [vmem:[#allocation7 + $0x10] sm:$0xff]
        %v964 = vperm.slane %v958, 0
        %v965 = vperm.slane %v958, 1
        %v966 = vperm.slane %v958, 2
        %v967 = vperm.slane %v958, 3
        %v968 = vperm.slane %v958, 4
        %v969 = vperm.slane %v958, 5
        %v970 = vperm.slane %v958, 6
        %v971 = vperm.slane %v958, 7
        %v972 = vperm.slane %v959, 0
        %v973 = vperm.slane %v959, 1
        %v974 = vperm.slane %v959, 2
        %v975 = vperm.slane %v959, 3
        %v976 = vperm.slane %v959, 4
        %v977 = vperm.slane %v959, 5
        %v978 = vperm.slane %v959, 6
        %v979 = vperm.slane %v959, 7
        %v980 = vperm.slane %v960, 0
        %v981 = vperm.slane %v960, 1
        %v982 = vperm.slane %v960, 2
        %v983 = vperm.slane %v960, 3
        %v984 = vperm.slane %v960, 4
        %v985 = vperm.slane %v960, 5
        %v986 = vperm.slane %v960, 6
        %v987 = vperm.slane %v960, 7
        %v1588 = vunpack.c.l.b16 %v382
        %v1589 = vunpack.c.h.b16 %v382
        %v1590 = vunpack.c.l.b16 %v383
        %v1591 = vunpack.c.h.b16 %v383
        %v1592 = vunpack.c.l.b16 %v384
        %v1593 = vunpack.c.h.b16 %v384
        %v1594 = vunpack.c.l.b16 %v385
        %v1595 = vunpack.c.h.b16 %v385
        %v1596 = vunpack.c.l.b16 %v386
        %v1597 = vunpack.c.h.b16 %v386
        %v1598 = vunpack.c.l.b16 %v387
        %v1599 = vunpack.c.h.b16 %v387
        %v1600 = vunpack.c.l.b16 %v388
        %v1601 = vunpack.c.h.b16 %v388
        %v1602 = vunpack.c.l.b16 %v389
        %v1603 = vunpack.c.h.b16 %v389
        %v1604 = vunpack.c.l.b16 %v390
        %v1605 = vunpack.c.h.b16 %v390
        %v1606 = vunpack.c.l.b16 %v391
        %v1607 = vunpack.c.h.b16 %v391
        %v1608 = vunpack.c.l.b16 %v392
        %v1609 = vunpack.c.h.b16 %v392
        %v1610 = vunpack.c.l.b16 %v393
        %v1611 = vunpack.c.h.b16 %v393
        %v1612 = vunpack.c.l.b16 %v394
        %v1613 = vunpack.c.h.b16 %v394
        %v1614 = vunpack.c.l.b16 %v395
        %v1615 = vunpack.c.h.b16 %v395
        %v1616 = vunpack.c.l.b16 %v396
        %v1617 = vunpack.c.h.b16 %v396
        %v1618 = vunpack.c.l.b16 %v397
        %v1619 = vunpack.c.h.b16 %v397
        %v1620 = vunpack.c.l.b16 %v398
        %v1621 = vunpack.c.h.b16 %v398
        %v1622 = vunpack.c.l.b16 %v399
        %v1623 = vunpack.c.h.b16 %v399
        %v1624 = vunpack.c.l.b16 %v400
        %v1625 = vunpack.c.h.b16 %v400
        %v1626 = vunpack.c.l.b16 %v401
        %v1627 = vunpack.c.h.b16 %v401
        %v1628 = vunpack.c.l.b16 %v402
        %v1629 = vunpack.c.h.b16 %v402
        %v1630 = vunpack.c.l.b16 %v403
        %v1631 = vunpack.c.h.b16 %v403
        %v1632 = vunpack.c.l.b16 %v404
        %v1633 = vunpack.c.h.b16 %v404
        %v1634 = vunpack.c.l.b16 %v405
        %v1635 = vunpack.c.h.b16 %v405
        %v1636 = vunpack.c.l.b16 %v406
        %v1637 = vunpack.c.h.b16 %v406
        %v1638 = vunpack.c.l.b16 %v407
        %v1639 = vunpack.c.h.b16 %v407
        %v1640 = vunpack.c.l.b16 %v408
        %v1641 = vunpack.c.h.b16 %v408
        %v1642 = vunpack.c.l.b16 %v409
        %v1643 = vunpack.c.h.b16 %v409
        %v1644 = vunpack.c.l.b16 %v410
        %v1645 = vunpack.c.h.b16 %v410
        %v1646 = vunpack.c.l.b16 %v411
        %v1647 = vunpack.c.h.b16 %v411
        %v1648 = vunpack.c.l.b16 %v412
        %v1649 = vunpack.c.h.b16 %v412
        %v1650 = vunpack.c.l.b16 %v413
        %v1651 = vunpack.c.h.b16 %v413
        %v1652 = vunpack.c.l.b16 %v414
        %v1653 = vunpack.c.h.b16 %v414
        %v1654 = vunpack.c.l.b16 %v415
        %v1655 = vunpack.c.h.b16 %v415
        %v1656 = vunpack.c.l.b16 %v416
        %v1657 = vunpack.c.h.b16 %v416
        %v1658 = vunpack.c.l.b16 %v417
        %v1659 = vunpack.c.h.b16 %v417
        %v1660 = vunpack.c.l.b16 %v418
        %v1661 = vunpack.c.h.b16 %v418
        %v1662 = vunpack.c.l.b16 %v419
        %v1663 = vunpack.c.h.b16 %v419
        %v1664 = vunpack.c.l.b16 %v420
        %v1665 = vunpack.c.h.b16 %v420
        %v1666 = vunpack.c.l.b16 %v421
        %v1667 = vunpack.c.h.b16 %v421
        %v1668 = vunpack.c.l.b16 %v422
        %v1669 = vunpack.c.h.b16 %v422
        %v1670 = vunpack.c.l.b16 %v423
        %v1671 = vunpack.c.h.b16 %v423
        %v1672 = vunpack.c.l.b16 %v424
        %v1673 = vunpack.c.h.b16 %v424
        %v1674 = vunpack.c.l.b16 %v425
        %v1675 = vunpack.c.h.b16 %v425
        %v1676 = vunpack.c.l.b16 %v426
        %v1677 = vunpack.c.h.b16 %v426
        %v1678 = vunpack.c.l.b16 %v427
        %v1679 = vunpack.c.h.b16 %v427
        %v1680 = vunpack.c.l.b16 %v428
        %v1681 = vunpack.c.h.b16 %v428
        %v1682 = vunpack.c.l.b16 %v429
        %v1683 = vunpack.c.h.b16 %v429
        %v1684 = vunpack.c.l.b16 %v430
        %v1685 = vunpack.c.h.b16 %v430
        %v1686 = vunpack.c.l.b16 %v431
        %v1687 = vunpack.c.h.b16 %v431
        %v1688 = vunpack.c.l.b16 %v432
        %v1689 = vunpack.c.h.b16 %v432
        %v1690 = vunpack.c.l.b16 %v433
        %v1691 = vunpack.c.h.b16 %v433
        %v1692 = vunpack.c.l.b16 %v434
        %v1693 = vunpack.c.h.b16 %v434
        %v1694 = vunpack.c.l.b16 %v435
        %v1695 = vunpack.c.h.b16 %v435
        %v1696 = vunpack.c.l.b16 %v436
        %v1697 = vunpack.c.h.b16 %v436
        %v1698 = vunpack.c.l.b16 %v437
        %v1699 = vunpack.c.h.b16 %v437
        %v1700 = vunpack.c.l.b16 %v438
        %v1701 = vunpack.c.h.b16 %v438
        %v1702 = vunpack.c.l.b16 %v439
        %v1703 = vunpack.c.h.b16 %v439
        %v1704 = vunpack.c.l.b16 %v440
        %v1705 = vunpack.c.h.b16 %v440
        %v1706 = vunpack.c.l.b16 %v441
        %v1707 = vunpack.c.h.b16 %v441
        %v1708 = vunpack.c.l.b16 %v442
        %v1709 = vunpack.c.h.b16 %v442
        %v1710 = vunpack.c.l.b16 %v443
        %v1711 = vunpack.c.h.b16 %v443
        %v1712 = vunpack.c.l.b16 %v444
        %v1713 = vunpack.c.h.b16 %v444
        %v1714 = vunpack.c.l.b16 %v445
        %v1715 = vunpack.c.h.b16 %v445
        %v1716 = vunpack.c.l.b16 %v446
        %v1717 = vunpack.c.h.b16 %v446
        %v1718 = vunpack.c.l.b16 %v447
        %v1719 = vunpack.c.h.b16 %v447
        %v1720 = vunpack.c.l.b16 %v448
        %v1721 = vunpack.c.h.b16 %v448
        %v1722 = vunpack.c.l.b16 %v449
        %v1723 = vunpack.c.h.b16 %v449
        %v1724 = vunpack.c.l.b16 %v450
        %v1725 = vunpack.c.h.b16 %v450
        %v1726 = vunpack.c.l.b16 %v451
        %v1727 = vunpack.c.h.b16 %v451
        %v1728 = vunpack.c.l.b16 %v452
        %v1729 = vunpack.c.h.b16 %v452
        %v1730 = vunpack.c.l.b16 %v453
        %v1731 = vunpack.c.h.b16 %v453
        %v1732 = vunpack.c.l.b16 %v454
        %v1733 = vunpack.c.h.b16 %v454
        %v1734 = vunpack.c.l.b16 %v455
        %v1735 = vunpack.c.h.b16 %v455
        %v1736 = vunpack.c.l.b16 %v456
        %v1737 = vunpack.c.h.b16 %v456
        %v1738 = vunpack.c.l.b16 %v457
        %v1739 = vunpack.c.h.b16 %v457
        %v1740 = vunpack.c.l.b16 %v458
        %v1741 = vunpack.c.h.b16 %v458
        %v1742 = vunpack.c.l.b16 %v459
        %v1743 = vunpack.c.h.b16 %v459
        %v1744 = vunpack.c.l.b16 %v460
        %v1745 = vunpack.c.h.b16 %v460
        %v1746 = vunpack.c.l.b16 %v461
        %v1747 = vunpack.c.h.b16 %v461
        %v1748 = vunpack.c.l.b16 %v462
        %v1749 = vunpack.c.h.b16 %v462
        %v1750 = vunpack.c.l.b16 %v463
        %v1751 = vunpack.c.h.b16 %v463
        %v1752 = vunpack.c.l.b16 %v464
        %v1753 = vunpack.c.h.b16 %v464
        %v1754 = vunpack.c.l.b16 %v465
        %v1755 = vunpack.c.h.b16 %v465
        %v1756 = vunpack.c.l.b16 %v466
        %v1757 = vunpack.c.h.b16 %v466
        %v1758 = vunpack.c.l.b16 %v467
        %v1759 = vunpack.c.h.b16 %v467
        %v1760 = vunpack.c.l.b16 %v468
        %v1761 = vunpack.c.h.b16 %v468
        %v1762 = vunpack.c.l.b16 %v469
        %v1763 = vunpack.c.h.b16 %v469
        %v1764 = vunpack.c.l.b16 %v470
        %v1765 = vunpack.c.h.b16 %v470
        %v1766 = vunpack.c.l.b16 %v471
        %v1767 = vunpack.c.h.b16 %v471
        %v1768 = vunpack.c.l.b16 %v472
        %v1769 = vunpack.c.h.b16 %v472
        %v1770 = vunpack.c.l.b16 %v473
        %v1771 = vunpack.c.h.b16 %v473
        %v1772 = vunpack.c.l.b16 %v474
        %v1773 = vunpack.c.h.b16 %v474
        %v1774 = vunpack.c.l.b16 %v475
        %v1775 = vunpack.c.h.b16 %v475
        %v1776 = vunpack.c.l.b16 %v476
        %v1777 = vunpack.c.h.b16 %v476
        %v1778 = vunpack.c.l.b16 %v477
        %v1779 = vunpack.c.h.b16 %v477
        %v1780 = vunpack.c.l.b16 %v478
        %v1781 = vunpack.c.h.b16 %v478
        %v1782 = vunpack.c.l.b16 %v479
        %v1783 = vunpack.c.h.b16 %v479
        %v1784 = vunpack.c.l.b16 %v480
        %v1785 = vunpack.c.h.b16 %v480
        %v1786 = vunpack.c.l.b16 %v481
        %v1787 = vunpack.c.h.b16 %v481
        %v1788 = vunpack.c.l.b16 %v482
        %v1789 = vunpack.c.h.b16 %v482
        %v1790 = vunpack.c.l.b16 %v483
        %v1791 = vunpack.c.h.b16 %v483
        %v1792 = vunpack.c.l.b16 %v484
        %v1793 = vunpack.c.h.b16 %v484
        %v1794 = vunpack.c.l.b16 %v485
        %v1795 = vunpack.c.h.b16 %v485
        %v1796 = vunpack.c.l.b16 %v486
        %v1797 = vunpack.c.h.b16 %v486
        %v1798 = vunpack.c.l.b16 %v487
        %v1799 = vunpack.c.h.b16 %v487
        %v1800 = vunpack.c.l.b16 %v488
        %v1801 = vunpack.c.h.b16 %v488
        %v1802 = vunpack.c.l.b16 %v489
        %v1803 = vunpack.c.h.b16 %v489
        %v1804 = vunpack.c.l.b16 %v490
        %v1805 = vunpack.c.h.b16 %v490
        %v1806 = vunpack.c.l.b16 %v491
        %v1807 = vunpack.c.h.b16 %v491
        %v1808 = vunpack.c.l.b16 %v492
        %v1809 = vunpack.c.h.b16 %v492
        %v1810 = vunpack.c.l.b16 %v493
        %v1811 = vunpack.c.h.b16 %v493
        %v1812 = vunpack.c.l.b16 %v494
        %v1813 = vunpack.c.h.b16 %v494
        %v1814 = vunpack.c.l.b16 %v495
        %v1815 = vunpack.c.h.b16 %v495
        %v1816 = vunpack.c.l.b16 %v496
        %v1817 = vunpack.c.h.b16 %v496
        %v1818 = vunpack.c.l.b16 %v497
        %v1819 = vunpack.c.h.b16 %v497
        %v1820 = vunpack.c.l.b16 %v498
        %v1821 = vunpack.c.h.b16 %v498
        %v1822 = vunpack.c.l.b16 %v499
        %v1823 = vunpack.c.h.b16 %v499
        %v1824 = vunpack.c.l.b16 %v500
        %v1825 = vunpack.c.h.b16 %v500
        %v1826 = vunpack.c.l.b16 %v501
        %v1827 = vunpack.c.h.b16 %v501
        %v1828 = vunpack.c.l.b16 %v502
        %v1829 = vunpack.c.h.b16 %v502
        %v1830 = vunpack.c.l.b16 %v503
        %v1831 = vunpack.c.h.b16 %v503
        %v1832 = vunpack.c.l.b16 %v504
        %v1833 = vunpack.c.h.b16 %v504
        %v1834 = vunpack.c.l.b16 %v505
        %v1835 = vunpack.c.h.b16 %v505
        %v1836 = vunpack.c.l.b16 %v506
        %v1837 = vunpack.c.h.b16 %v506
        %v1838 = vunpack.c.l.b16 %v507
        %v1839 = vunpack.c.h.b16 %v507
        %v1840 = vunpack.c.l.b16 %v508
        %v1841 = vunpack.c.h.b16 %v508
        %v1842 = vunpack.c.l.b16 %v509
        %v1843 = vunpack.c.h.b16 %v509
        %v1844 = vunpack.c.l.b16 %v510
        %v1845 = vunpack.c.h.b16 %v510
        %v1846 = vunpack.c.l.b16 %v511
        %v1847 = vunpack.c.h.b16 %v511
        %v1848 = vunpack.c.l.b16 %v512
        %v1849 = vunpack.c.h.b16 %v512
        %v1850 = vunpack.c.l.b16 %v513
        %v1851 = vunpack.c.h.b16 %v513
        %v1852 = vunpack.c.l.b16 %v514
        %v1853 = vunpack.c.h.b16 %v514
        %v1854 = vunpack.c.l.b16 %v515
        %v1855 = vunpack.c.h.b16 %v515
        %v1856 = vunpack.c.l.b16 %v516
        %v1857 = vunpack.c.h.b16 %v516
        %v1858 = vunpack.c.l.b16 %v517
        %v1859 = vunpack.c.h.b16 %v517
        %v1860 = vunpack.c.l.b16 %v518
        %v1861 = vunpack.c.h.b16 %v518
        %v1862 = vunpack.c.l.b16 %v519
        %v1863 = vunpack.c.h.b16 %v519
        %v1864 = vunpack.c.l.b16 %v520
        %v1865 = vunpack.c.h.b16 %v520
        %v1866 = vunpack.c.l.b16 %v521
        %v1867 = vunpack.c.h.b16 %v521
        %v1868 = vunpack.c.l.b16 %v522
        %v1869 = vunpack.c.h.b16 %v522
        %v1870 = vunpack.c.l.b16 %v523
        %v1871 = vunpack.c.h.b16 %v523
        %v1872 = vunpack.c.l.b16 %v524
        %v1873 = vunpack.c.h.b16 %v524
        %v1874 = vunpack.c.l.b16 %v525
        %v1875 = vunpack.c.h.b16 %v525
        %v1876 = vunpack.c.l.b16 %v526
        %v1877 = vunpack.c.h.b16 %v526
        %v1878 = vunpack.c.l.b16 %v527
        %v1879 = vunpack.c.h.b16 %v527
        %v1880 = vunpack.c.l.b16 %v528
        %v1881 = vunpack.c.h.b16 %v528
        %v1882 = vunpack.c.l.b16 %v529
        %v1883 = vunpack.c.h.b16 %v529
        %v1884 = vunpack.c.l.b16 %v530
        %v1885 = vunpack.c.h.b16 %v530
        %v1886 = vunpack.c.l.b16 %v531
        %v1887 = vunpack.c.h.b16 %v531
        %v1888 = vunpack.c.l.b16 %v532
        %v1889 = vunpack.c.h.b16 %v532
        %v1890 = vunpack.c.l.b16 %v533
        %v1891 = vunpack.c.h.b16 %v533
        %v1892 = vunpack.c.l.b16 %v534
        %v1893 = vunpack.c.h.b16 %v534
        %v1894 = vunpack.c.l.b16 %v535
        %v1895 = vunpack.c.h.b16 %v535
        %v1896 = vunpack.c.l.b16 %v536
        %v1897 = vunpack.c.h.b16 %v536
        %v1898 = vunpack.c.l.b16 %v537
        %v1899 = vunpack.c.h.b16 %v537
        %v1900 = vunpack.c.l.b16 %v538
        %v1901 = vunpack.c.h.b16 %v538
        %v1902 = vunpack.c.l.b16 %v539
        %v1903 = vunpack.c.h.b16 %v539
        %v1904 = vunpack.c.l.b16 %v540
        %v1905 = vunpack.c.h.b16 %v540
        %v1906 = vunpack.c.l.b16 %v541
        %v1907 = vunpack.c.h.b16 %v541
        %v1908 = vunpack.c.l.b16 %v542
        %v1909 = vunpack.c.h.b16 %v542
        %v1910 = vunpack.c.l.b16 %v543
        %v1911 = vunpack.c.h.b16 %v543
        %v1912 = vunpack.c.l.b16 %v544
        %v1913 = vunpack.c.h.b16 %v544
        %v1914 = vunpack.c.l.b16 %v545
        %v1915 = vunpack.c.h.b16 %v545
        %v1916 = vunpack.c.l.b16 %v546
        %v1917 = vunpack.c.h.b16 %v546
        %v1918 = vunpack.c.l.b16 %v547
        %v1919 = vunpack.c.h.b16 %v547
        %v1920 = vunpack.c.l.b16 %v548
        %v1921 = vunpack.c.h.b16 %v548
        %v1922 = vunpack.c.l.b16 %v549
        %v1923 = vunpack.c.h.b16 %v549
        %v1924 = vunpack.c.l.b16 %v550
        %v1925 = vunpack.c.h.b16 %v550
        %v1926 = vunpack.c.l.b16 %v551
        %v1927 = vunpack.c.h.b16 %v551
        %v1928 = vunpack.c.l.b16 %v552
        %v1929 = vunpack.c.h.b16 %v552
        %v1930 = vunpack.c.l.b16 %v553
        %v1931 = vunpack.c.h.b16 %v553
        %v1932 = vunpack.c.l.b16 %v554
        %v1933 = vunpack.c.h.b16 %v554
        %v1934 = vunpack.c.l.b16 %v555
        %v1935 = vunpack.c.h.b16 %v555
        %v1936 = vunpack.c.l.b16 %v556
        %v1937 = vunpack.c.h.b16 %v556
        %v1938 = vunpack.c.l.b16 %v557
        %v1939 = vunpack.c.h.b16 %v557
        %v1940 = vunpack.c.l.b16 %v558
        %v1941 = vunpack.c.h.b16 %v558
        %v1942 = vunpack.c.l.b16 %v559
        %v1943 = vunpack.c.h.b16 %v559
        %v1944 = vunpack.c.l.b16 %v560
        %v1945 = vunpack.c.h.b16 %v560
        %v1946 = vunpack.c.l.b16 %v561
        %v1947 = vunpack.c.h.b16 %v561
        %v1948 = vunpack.c.l.b16 %v562
        %v1949 = vunpack.c.h.b16 %v562
        %v1950 = vunpack.c.l.b16 %v563
        %v1951 = vunpack.c.h.b16 %v563
        %v1952 = vunpack.c.l.b16 %v564
        %v1953 = vunpack.c.h.b16 %v564
        %v1954 = vunpack.c.l.b16 %v565
        %v1955 = vunpack.c.h.b16 %v565
        %v1956 = vunpack.c.l.b16 %v566
        %v1957 = vunpack.c.h.b16 %v566
        %v1958 = vunpack.c.l.b16 %v567
        %v1959 = vunpack.c.h.b16 %v567
        %v1960 = vunpack.c.l.b16 %v568
        %v1961 = vunpack.c.h.b16 %v568
        %v1962 = vunpack.c.l.b16 %v569
        %v1963 = vunpack.c.h.b16 %v569
        %v1964 = vunpack.c.l.b16 %v570
        %v1965 = vunpack.c.h.b16 %v570
        %v1966 = vunpack.c.l.b16 %v571
        %v1967 = vunpack.c.h.b16 %v571
        %v1968 = vunpack.c.l.b16 %v572
        %v1969 = vunpack.c.h.b16 %v572
        %v1970 = vunpack.c.l.b16 %v573
        %v1971 = vunpack.c.h.b16 %v573
        %v1972 = vunpack.c.l.b16 %v574
        %v1973 = vunpack.c.h.b16 %v574
        %v1974 = vunpack.c.l.b16 %v575
        %v1975 = vunpack.c.h.b16 %v575
        %v1976 = vunpack.c.l.b16 %v576
        %v1977 = vunpack.c.h.b16 %v576
        %v1978 = vunpack.c.l.b16 %v577
        %v1979 = vunpack.c.h.b16 %v577
        %v1980 = vunpack.c.l.b16 %v578
        %v1981 = vunpack.c.h.b16 %v578
        %v1982 = vunpack.c.l.b16 %v579
        %v1983 = vunpack.c.h.b16 %v579
        %v1984 = vunpack.c.l.b16 %v580
        %v1985 = vunpack.c.h.b16 %v580
        %v1986 = vunpack.c.l.b16 %v581
        %v1987 = vunpack.c.h.b16 %v581
        %v1988 = vunpack.c.l.b16 %v582
        %v1989 = vunpack.c.h.b16 %v582
        %v1990 = vunpack.c.l.b16 %v583
        %v1991 = vunpack.c.h.b16 %v583
        %v1992 = vunpack.c.l.b16 %v584
        %v1993 = vunpack.c.h.b16 %v584
        %v1994 = vunpack.c.l.b16 %v585
        %v1995 = vunpack.c.h.b16 %v585
        %v1996 = vunpack.c.l.b16 %v586
        %v1997 = vunpack.c.h.b16 %v586
        %v1998 = vunpack.c.l.b16 %v587
        %v1999 = vunpack.c.h.b16 %v587
        %v2000 = vunpack.c.l.b16 %v588
        %v2001 = vunpack.c.h.b16 %v588
        %v2002 = vunpack.c.l.b16 %v589
        %v2003 = vunpack.c.h.b16 %v589
        %v2004 = vunpack.c.l.b16 %v590
        %v2005 = vunpack.c.h.b16 %v590
        %v2006 = vunpack.c.l.b16 %v591
        %v2007 = vunpack.c.h.b16 %v591
        %v2008 = vunpack.c.l.b16 %v592
        %v2009 = vunpack.c.h.b16 %v592
        %v2010 = vunpack.c.l.b16 %v593
        %v2011 = vunpack.c.h.b16 %v593
        %v2012 = vunpack.c.l.b16 %v594
        %v2013 = vunpack.c.h.b16 %v594
        %v2014 = vunpack.c.l.b16 %v595
        %v2015 = vunpack.c.h.b16 %v595
        %v2016 = vunpack.c.l.b16 %v596
        %v2017 = vunpack.c.h.b16 %v596
        %v2018 = vunpack.c.l.b16 %v597
        %v2019 = vunpack.c.h.b16 %v597
        %v2020 = vunpack.c.l.b16 %v598
        %v2021 = vunpack.c.h.b16 %v598
        %v2022 = vunpack.c.l.b16 %v599
        %v2023 = vunpack.c.h.b16 %v599
        %v2024 = vunpack.c.l.b16 %v600
        %v2025 = vunpack.c.h.b16 %v600
        %v2026 = vunpack.c.l.b16 %v601
        %v2027 = vunpack.c.h.b16 %v601
        %v2028 = vunpack.c.l.b16 %v602
        %v2029 = vunpack.c.h.b16 %v602
        %v2030 = vunpack.c.l.b16 %v603
        %v2031 = vunpack.c.h.b16 %v603
        %v2032 = vunpack.c.l.b16 %v604
        %v2033 = vunpack.c.h.b16 %v604
        %v2034 = vunpack.c.l.b16 %v605
        %v2035 = vunpack.c.h.b16 %v605
        %v2036 = vunpack.c.l.b16 %v606
        %v2037 = vunpack.c.h.b16 %v606
        %v2038 = vunpack.c.l.b16 %v607
        %v2039 = vunpack.c.h.b16 %v607
        %v2040 = vunpack.c.l.b16 %v608
        %v2041 = vunpack.c.h.b16 %v608
        %v2042 = vunpack.c.l.b16 %v609
        %v2043 = vunpack.c.h.b16 %v609
        %v2044 = vunpack.c.l.b16 %v610
        %v2045 = vunpack.c.h.b16 %v610
        %v2046 = vunpack.c.l.b16 %v611
        %v2047 = vunpack.c.h.b16 %v611
        %v2048 = vunpack.c.l.b16 %v612
        %v2049 = vunpack.c.h.b16 %v612
        %v2050 = vunpack.c.l.b16 %v613
        %v2051 = vunpack.c.h.b16 %v613
        %v2052 = vunpack.c.l.b16 %v614
        %v2053 = vunpack.c.h.b16 %v614
        %v2054 = vunpack.c.l.b16 %v615
        %v2055 = vunpack.c.h.b16 %v615
        %v2056 = vunpack.c.l.b16 %v616
        %v2057 = vunpack.c.h.b16 %v616
        %v2058 = vunpack.c.l.b16 %v617
        %v2059 = vunpack.c.h.b16 %v617
        %v2060 = vunpack.c.l.b16 %v618
        %v2061 = vunpack.c.h.b16 %v618
        %v2062 = vunpack.c.l.b16 %v619
        %v2063 = vunpack.c.h.b16 %v619
        %v2064 = vunpack.c.l.b16 %v620
        %v2065 = vunpack.c.h.b16 %v620
        %v2066 = vunpack.c.l.b16 %v621
        %v2067 = vunpack.c.h.b16 %v621
        %v2068 = vunpack.c.l.b16 %v622
        %v2069 = vunpack.c.h.b16 %v622
        %v2070 = vunpack.c.l.b16 %v623
        %v2071 = vunpack.c.h.b16 %v623
        %v2072 = vunpack.c.l.b16 %v624
        %v2073 = vunpack.c.h.b16 %v624
        %v2074 = vunpack.c.l.b16 %v625
        %v2075 = vunpack.c.h.b16 %v625
        %v2076 = vunpack.c.l.b16 %v626
        %v2077 = vunpack.c.h.b16 %v626
        %v2078 = vunpack.c.l.b16 %v627
        %v2079 = vunpack.c.h.b16 %v627
        %v2080 = vunpack.c.l.b16 %v628
        %v2081 = vunpack.c.h.b16 %v628
        %v2082 = vunpack.c.l.b16 %v629
        %v2083 = vunpack.c.h.b16 %v629
        %v2084 = vunpack.c.l.b16 %v630
        %v2085 = vunpack.c.h.b16 %v630
        %v2086 = vunpack.c.l.b16 %v631
        %v2087 = vunpack.c.h.b16 %v631
        %v2088 = vunpack.c.l.b16 %v632
        %v2089 = vunpack.c.h.b16 %v632
        %v2090 = vunpack.c.l.b16 %v633
        %v2091 = vunpack.c.h.b16 %v633
        %v2092 = vunpack.c.l.b16 %v634
        %v2093 = vunpack.c.h.b16 %v634
        %v2094 = vunpack.c.l.b16 %v635
        %v2095 = vunpack.c.h.b16 %v635
        %v2096 = vunpack.c.l.b16 %v636
        %v2097 = vunpack.c.h.b16 %v636
        %v2098 = vunpack.c.l.b16 %v637
        %v2099 = vunpack.c.h.b16 %v637
        %v2100 = vunpack.c.l.b16 %v638
        %v2101 = vunpack.c.h.b16 %v638
        %v2102 = vunpack.c.l.b16 %v639
        %v2103 = vunpack.c.h.b16 %v639
        %v2104 = vunpack.c.l.b16 %v640
        %v2105 = vunpack.c.h.b16 %v640
        %v2106 = vunpack.c.l.b16 %v641
        %v2107 = vunpack.c.h.b16 %v641
        %v2108 = vunpack.c.l.b16 %v642
        %v2109 = vunpack.c.h.b16 %v642
        %v2110 = vunpack.c.l.b16 %v643
        %v2111 = vunpack.c.h.b16 %v643
        %v2112 = vunpack.c.l.b16 %v644
        %v2113 = vunpack.c.h.b16 %v644
        %v2114 = vunpack.c.l.b16 %v645
        %v2115 = vunpack.c.h.b16 %v645
        %v2116 = vunpack.c.l.b16 %v646
        %v2117 = vunpack.c.h.b16 %v646
        %v2118 = vunpack.c.l.b16 %v647
        %v2119 = vunpack.c.h.b16 %v647
        %v2120 = vunpack.c.l.b16 %v648
        %v2121 = vunpack.c.h.b16 %v648
        %v2122 = vunpack.c.l.b16 %v649
        %v2123 = vunpack.c.h.b16 %v649
        %v2124 = vunpack.c.l.b16 %v650
        %v2125 = vunpack.c.h.b16 %v650
        %v2126 = vunpack.c.l.b16 %v651
        %v2127 = vunpack.c.h.b16 %v651
        %v2128 = vunpack.c.l.b16 %v652
        %v2129 = vunpack.c.h.b16 %v652
        %v2130 = vunpack.c.l.b16 %v653
        %v2131 = vunpack.c.h.b16 %v653
        %v2132 = vunpack.c.l.b16 %v654
        %v2133 = vunpack.c.h.b16 %v654
        %v2134 = vunpack.c.l.b16 %v655
        %v2135 = vunpack.c.h.b16 %v655
        %v2136 = vunpack.c.l.b16 %v656
        %v2137 = vunpack.c.h.b16 %v656
        %v2138 = vunpack.c.l.b16 %v657
        %v2139 = vunpack.c.h.b16 %v657
        %v2140 = vunpack.c.l.b16 %v658
        %v2141 = vunpack.c.h.b16 %v658
        %v2142 = vunpack.c.l.b16 %v659
        %v2143 = vunpack.c.h.b16 %v659
        %v2144 = vunpack.c.l.b16 %v660
        %v2145 = vunpack.c.h.b16 %v660
        %v2146 = vunpack.c.l.b16 %v661
        %v2147 = vunpack.c.h.b16 %v661
        %v2148 = vunpack.c.l.b16 %v662
        %v2149 = vunpack.c.h.b16 %v662
        %v2150 = vunpack.c.l.b16 %v663
        %v2151 = vunpack.c.h.b16 %v663
        %v2152 = vunpack.c.l.b16 %v664
        %v2153 = vunpack.c.h.b16 %v664
        %v2154 = vunpack.c.l.b16 %v665
        %v2155 = vunpack.c.h.b16 %v665
        %v2156 = vunpack.c.l.b16 %v666
        %v2157 = vunpack.c.h.b16 %v666
        %v2158 = vunpack.c.l.b16 %v667
        %v2159 = vunpack.c.h.b16 %v667
        %v2160 = vunpack.c.l.b16 %v668
        %v2161 = vunpack.c.h.b16 %v668
        %v2162 = vunpack.c.l.b16 %v669
        %v2163 = vunpack.c.h.b16 %v669
        %v2164 = vunpack.c.l.b16 %v670
        %v2165 = vunpack.c.h.b16 %v670
        %v2166 = vunpack.c.l.b16 %v671
        %v2167 = vunpack.c.h.b16 %v671
        %v2168 = vunpack.c.l.b16 %v672
        %v2169 = vunpack.c.h.b16 %v672
        %v2170 = vunpack.c.l.b16 %v673
        %v2171 = vunpack.c.h.b16 %v673
        %v2172 = vunpack.c.l.b16 %v674
        %v2173 = vunpack.c.h.b16 %v674
        %v2174 = vunpack.c.l.b16 %v675
        %v2175 = vunpack.c.h.b16 %v675
        %v2176 = vunpack.c.l.b16 %v676
        %v2177 = vunpack.c.h.b16 %v676
        %v2178 = vunpack.c.l.b16 %v677
        %v2179 = vunpack.c.h.b16 %v677
        %v2180 = vunpack.c.l.b16 %v678
        %v2181 = vunpack.c.h.b16 %v678
        %v2182 = vunpack.c.l.b16 %v679
        %v2183 = vunpack.c.h.b16 %v679
        %v2184 = vunpack.c.l.b16 %v680
        %v2185 = vunpack.c.h.b16 %v680
        %v2186 = vunpack.c.l.b16 %v681
        %v2187 = vunpack.c.h.b16 %v681
        %v2188 = vunpack.c.l.b16 %v682
        %v2189 = vunpack.c.h.b16 %v682
        %v2190 = vunpack.c.l.b16 %v683
        %v2191 = vunpack.c.h.b16 %v683
        %v2192 = vunpack.c.l.b16 %v684
        %v2193 = vunpack.c.h.b16 %v684
        %v2194 = vunpack.c.l.b16 %v685
        %v2195 = vunpack.c.h.b16 %v685
        %v2196 = vunpack.c.l.b16 %v686
        %v2197 = vunpack.c.h.b16 %v686
        %v2198 = vunpack.c.l.b16 %v687
        %v2199 = vunpack.c.h.b16 %v687
        %v2200 = vunpack.c.l.b16 %v688
        %v2201 = vunpack.c.h.b16 %v688
        %v2202 = vunpack.c.l.b16 %v689
        %v2203 = vunpack.c.h.b16 %v689
        %v2204 = vunpack.c.l.b16 %v690
        %v2205 = vunpack.c.h.b16 %v690
        %v2206 = vunpack.c.l.b16 %v691
        %v2207 = vunpack.c.h.b16 %v691
        %v2208 = vunpack.c.l.b16 %v692
        %v2209 = vunpack.c.h.b16 %v692
        %v2210 = vunpack.c.l.b16 %v693
        %v2211 = vunpack.c.h.b16 %v693
        %v2212 = vunpack.c.l.b16 %v694
        %v2213 = vunpack.c.h.b16 %v694
        %v2214 = vunpack.c.l.b16 %v695
        %v2215 = vunpack.c.h.b16 %v695
        %v2216 = vunpack.c.l.b16 %v696
        %v2217 = vunpack.c.h.b16 %v696
        %v2218 = vunpack.c.l.b16 %v697
        %v2219 = vunpack.c.h.b16 %v697
        %v2220 = vunpack.c.l.b16 %v698
        %v2221 = vunpack.c.h.b16 %v698
        %v2222 = vunpack.c.l.b16 %v699
        %v2223 = vunpack.c.h.b16 %v699
        %v2224 = vunpack.c.l.b16 %v700
        %v2225 = vunpack.c.h.b16 %v700
        %v2226 = vunpack.c.l.b16 %v701
        %v2227 = vunpack.c.h.b16 %v701
        %v2228 = vunpack.c.l.b16 %v702
        %v2229 = vunpack.c.h.b16 %v702
        %v2230 = vunpack.c.l.b16 %v703
        %v2231 = vunpack.c.h.b16 %v703
        %v2232 = vunpack.c.l.b16 %v704
        %v2233 = vunpack.c.h.b16 %v704
        %v2234 = vunpack.c.l.b16 %v705
        %v2235 = vunpack.c.h.b16 %v705
        %v2236 = vunpack.c.l.b16 %v706
        %v2237 = vunpack.c.h.b16 %v706
        %v2238 = vunpack.c.l.b16 %v707
        %v2239 = vunpack.c.h.b16 %v707
        %v2240 = vunpack.c.l.b16 %v708
        %v2241 = vunpack.c.h.b16 %v708
        %v2242 = vunpack.c.l.b16 %v709
        %v2243 = vunpack.c.h.b16 %v709
        %v2244 = vunpack.c.l.b16 %v710
        %v2245 = vunpack.c.h.b16 %v710
        %v2246 = vunpack.c.l.b16 %v711
        %v2247 = vunpack.c.h.b16 %v711
        %v2248 = vunpack.c.l.b16 %v712
        %v2249 = vunpack.c.h.b16 %v712
        %v2250 = vunpack.c.l.b16 %v713
        %v2251 = vunpack.c.h.b16 %v713
        %v2252 = vunpack.c.l.b16 %v714
        %v2253 = vunpack.c.h.b16 %v714
        %v2254 = vunpack.c.l.b16 %v715
        %v2255 = vunpack.c.h.b16 %v715
        %v2256 = vunpack.c.l.b16 %v716
        %v2257 = vunpack.c.h.b16 %v716
        %v2258 = vunpack.c.l.b16 %v717
        %v2259 = vunpack.c.h.b16 %v717
        %v2260 = vunpack.c.l.b16 %v718
        %v2261 = vunpack.c.h.b16 %v718
        %v2262 = vunpack.c.l.b16 %v719
        %v2263 = vunpack.c.h.b16 %v719
        %v2264 = vunpack.c.l.b16 %v720
        %v2265 = vunpack.c.h.b16 %v720
        %v2266 = vunpack.c.l.b16 %v721
        %v2267 = vunpack.c.h.b16 %v721
        %v2268 = vunpack.c.l.b16 %v722
        %v2269 = vunpack.c.h.b16 %v722
        %v2270 = vunpack.c.l.b16 %v723
        %v2271 = vunpack.c.h.b16 %v723
        %v2272 = vunpack.c.l.b16 %v724
        %v2273 = vunpack.c.h.b16 %v724
        %v2274 = vunpack.c.l.b16 %v725
        %v2275 = vunpack.c.h.b16 %v725
        %v2276 = vunpack.c.l.b16 %v726
        %v2277 = vunpack.c.h.b16 %v726
        %v2278 = vunpack.c.l.b16 %v727
        %v2279 = vunpack.c.h.b16 %v727
        %v2280 = vunpack.c.l.b16 %v728
        %v2281 = vunpack.c.h.b16 %v728
        %v2282 = vunpack.c.l.b16 %v729
        %v2283 = vunpack.c.h.b16 %v729
        %v2284 = vunpack.c.l.b16 %v730
        %v2285 = vunpack.c.h.b16 %v730
        %v2286 = vunpack.c.l.b16 %v731
        %v2287 = vunpack.c.h.b16 %v731
        %v2288 = vunpack.c.l.b16 %v732
        %v2289 = vunpack.c.h.b16 %v732
        %v2290 = vunpack.c.l.b16 %v733
        %v2291 = vunpack.c.h.b16 %v733
        %v2292 = vunpack.c.l.b16 %v734
        %v2293 = vunpack.c.h.b16 %v734
        %v2294 = vunpack.c.l.b16 %v735
        %v2295 = vunpack.c.h.b16 %v735
        %v2296 = vunpack.c.l.b16 %v736
        %v2297 = vunpack.c.h.b16 %v736
        %v2298 = vunpack.c.l.b16 %v737
        %v2299 = vunpack.c.h.b16 %v737
        %v2300 = vunpack.c.l.b16 %v738
        %v2301 = vunpack.c.h.b16 %v738
        %v2302 = vunpack.c.l.b16 %v739
        %v2303 = vunpack.c.h.b16 %v739
        %v2304 = vunpack.c.l.b16 %v740
        %v2305 = vunpack.c.h.b16 %v740
        %v2306 = vunpack.c.l.b16 %v741
        %v2307 = vunpack.c.h.b16 %v741
        %v2308 = vunpack.c.l.b16 %v742
        %v2309 = vunpack.c.h.b16 %v742
        %v2310 = vunpack.c.l.b16 %v743
        %v2311 = vunpack.c.h.b16 %v743
        %v2312 = vunpack.c.l.b16 %v744
        %v2313 = vunpack.c.h.b16 %v744
        %v2314 = vunpack.c.l.b16 %v745
        %v2315 = vunpack.c.h.b16 %v745
        %v2316 = vunpack.c.l.b16 %v746
        %v2317 = vunpack.c.h.b16 %v746
        %v2318 = vunpack.c.l.b16 %v747
        %v2319 = vunpack.c.h.b16 %v747
        %v2320 = vunpack.c.l.b16 %v748
        %v2321 = vunpack.c.h.b16 %v748
        %v2322 = vunpack.c.l.b16 %v749
        %v2323 = vunpack.c.h.b16 %v749
        %v2324 = vunpack.c.l.b16 %v750
        %v2325 = vunpack.c.h.b16 %v750
        %v2326 = vunpack.c.l.b16 %v751
        %v2327 = vunpack.c.h.b16 %v751
        %v2328 = vunpack.c.l.b16 %v752
        %v2329 = vunpack.c.h.b16 %v752
        %v2330 = vunpack.c.l.b16 %v753
        %v2331 = vunpack.c.h.b16 %v753
        %v2332 = vunpack.c.l.b16 %v754
        %v2333 = vunpack.c.h.b16 %v754
        %v2334 = vunpack.c.l.b16 %v755
        %v2335 = vunpack.c.h.b16 %v755
        %v2336 = vunpack.c.l.b16 %v756
        %v2337 = vunpack.c.h.b16 %v756
        %v2338 = vunpack.c.l.b16 %v757
        %v2339 = vunpack.c.h.b16 %v757
        %v2340 = vunpack.c.l.b16 %v758
        %v2341 = vunpack.c.h.b16 %v758
        %v2342 = vunpack.c.l.b16 %v759
        %v2343 = vunpack.c.h.b16 %v759
        %v2344 = vunpack.c.l.b16 %v760
        %v2345 = vunpack.c.h.b16 %v760
        %v2346 = vunpack.c.l.b16 %v761
        %v2347 = vunpack.c.h.b16 %v761
        %v2348 = vunpack.c.l.b16 %v762
        %v2349 = vunpack.c.h.b16 %v762
        %v2350 = vunpack.c.l.b16 %v763
        %v2351 = vunpack.c.h.b16 %v763
        %v2352 = vunpack.c.l.b16 %v764
        %v2353 = vunpack.c.h.b16 %v764
        %v2354 = vunpack.c.l.b16 %v765
        %v2355 = vunpack.c.h.b16 %v765
        %v2356 = vunpack.c.l.b16 %v766
        %v2357 = vunpack.c.h.b16 %v766
        %v2358 = vunpack.c.l.b16 %v767
        %v2359 = vunpack.c.h.b16 %v767
        %v2360 = vunpack.c.l.b16 %v768
        %v2361 = vunpack.c.h.b16 %v768
        %v2362 = vunpack.c.l.b16 %v769
        %v2363 = vunpack.c.h.b16 %v769
        %v2364 = vunpack.c.l.b16 %v770
        %v2365 = vunpack.c.h.b16 %v770
        %v2366 = vunpack.c.l.b16 %v771
        %v2367 = vunpack.c.h.b16 %v771
        %v2368 = vunpack.c.l.b16 %v772
        %v2369 = vunpack.c.h.b16 %v772
        %v2370 = vunpack.c.l.b16 %v773
        %v2371 = vunpack.c.h.b16 %v773
        %v2372 = vunpack.c.l.b16 %v774
        %v2373 = vunpack.c.h.b16 %v774
        %v2374 = vunpack.c.l.b16 %v775
        %v2375 = vunpack.c.h.b16 %v775
        %v2376 = vunpack.c.l.b16 %v776
        %v2377 = vunpack.c.h.b16 %v776
        %v2378 = vunpack.c.l.b16 %v777
        %v2379 = vunpack.c.h.b16 %v777
        %v2380 = vunpack.c.l.b16 %v778
        %v2381 = vunpack.c.h.b16 %v778
        %v2382 = vunpack.c.l.b16 %v779
        %v2383 = vunpack.c.h.b16 %v779
        %v2384 = vunpack.c.l.b16 %v780
        %v2385 = vunpack.c.h.b16 %v780
        %v2386 = vunpack.c.l.b16 %v781
        %v2387 = vunpack.c.h.b16 %v781
        %v2388 = vunpack.c.l.b16 %v782
        %v2389 = vunpack.c.h.b16 %v782
        %v2390 = vunpack.c.l.b16 %v783
        %v2391 = vunpack.c.h.b16 %v783
        %v2392 = vunpack.c.l.b16 %v784
        %v2393 = vunpack.c.h.b16 %v784
        %v2394 = vunpack.c.l.b16 %v785
        %v2395 = vunpack.c.h.b16 %v785
        %v2396 = vunpack.c.l.b16 %v786
        %v2397 = vunpack.c.h.b16 %v786
        %v2398 = vunpack.c.l.b16 %v787
        %v2399 = vunpack.c.h.b16 %v787
        %v2400 = vunpack.c.l.b16 %v788
        %v2401 = vunpack.c.h.b16 %v788
        %v2402 = vunpack.c.l.b16 %v789
        %v2403 = vunpack.c.h.b16 %v789
        %v2404 = vunpack.c.l.b16 %v790
        %v2405 = vunpack.c.h.b16 %v790
        %v2406 = vunpack.c.l.b16 %v791
        %v2407 = vunpack.c.h.b16 %v791
        %v2408 = vunpack.c.l.b16 %v792
        %v2409 = vunpack.c.h.b16 %v792
        %v2410 = vunpack.c.l.b16 %v793
        %v2411 = vunpack.c.h.b16 %v793
        %v2412 = vunpack.c.l.b16 %v794
        %v2413 = vunpack.c.h.b16 %v794
        %v2414 = vunpack.c.l.b16 %v795
        %v2415 = vunpack.c.h.b16 %v795
        %v2416 = vunpack.c.l.b16 %v796
        %v2417 = vunpack.c.h.b16 %v796
        %v2418 = vunpack.c.l.b16 %v797
        %v2419 = vunpack.c.h.b16 %v797
        %v2420 = vunpack.c.l.b16 %v798
        %v2421 = vunpack.c.h.b16 %v798
        %v2422 = vunpack.c.l.b16 %v799
        %v2423 = vunpack.c.h.b16 %v799
        %v2424 = vunpack.c.l.b16 %v800
        %v2425 = vunpack.c.h.b16 %v800
        %v2426 = vunpack.c.l.b16 %v801
        %v2427 = vunpack.c.h.b16 %v801
        %v2428 = vunpack.c.l.b16 %v802
        %v2429 = vunpack.c.h.b16 %v802
        %v2430 = vunpack.c.l.b16 %v803
        %v2431 = vunpack.c.h.b16 %v803
        %v2432 = vunpack.c.l.b16 %v804
        %v2433 = vunpack.c.h.b16 %v804
        %v2434 = vunpack.c.l.b16 %v805
        %v2435 = vunpack.c.h.b16 %v805
        %v2436 = vunpack.c.l.b16 %v806
        %v2437 = vunpack.c.h.b16 %v806
        %v2438 = vunpack.c.l.b16 %v807
        %v2439 = vunpack.c.h.b16 %v807
        %v2440 = vunpack.c.l.b16 %v808
        %v2441 = vunpack.c.h.b16 %v808
        %v2442 = vunpack.c.l.b16 %v809
        %v2443 = vunpack.c.h.b16 %v809
        %v2444 = vunpack.c.l.b16 %v810
        %v2445 = vunpack.c.h.b16 %v810
        %v2446 = vunpack.c.l.b16 %v811
        %v2447 = vunpack.c.h.b16 %v811
        %v2448 = vunpack.c.l.b16 %v812
        %v2449 = vunpack.c.h.b16 %v812
        %v2450 = vunpack.c.l.b16 %v813
        %v2451 = vunpack.c.h.b16 %v813
        %v2452 = vunpack.c.l.b16 %v814
        %v2453 = vunpack.c.h.b16 %v814
        %v2454 = vunpack.c.l.b16 %v815
        %v2455 = vunpack.c.h.b16 %v815
        %v2456 = vunpack.c.l.b16 %v816
        %v2457 = vunpack.c.h.b16 %v816
        %v2458 = vunpack.c.l.b16 %v817
        %v2459 = vunpack.c.h.b16 %v817
        %v2460 = vunpack.c.l.b16 %v818
        %v2461 = vunpack.c.h.b16 %v818
        %v2462 = vunpack.c.l.b16 %v819
        %v2463 = vunpack.c.h.b16 %v819
        %v2464 = vunpack.c.l.b16 %v820
        %v2465 = vunpack.c.h.b16 %v820
        %v2466 = vunpack.c.l.b16 %v821
        %v2467 = vunpack.c.h.b16 %v821
        %v2468 = vunpack.c.l.b16 %v822
        %v2469 = vunpack.c.h.b16 %v822
        %v2470 = vunpack.c.l.b16 %v823
        %v2471 = vunpack.c.h.b16 %v823
        %v2472 = vunpack.c.l.b16 %v824
        %v2473 = vunpack.c.h.b16 %v824
        %v2474 = vunpack.c.l.b16 %v825
        %v2475 = vunpack.c.h.b16 %v825
        %v2476 = vunpack.c.l.b16 %v826
        %v2477 = vunpack.c.h.b16 %v826
        %v2478 = vunpack.c.l.b16 %v827
        %v2479 = vunpack.c.h.b16 %v827
        %v2480 = vunpack.c.l.b16 %v828
        %v2481 = vunpack.c.h.b16 %v828
        %v2482 = vunpack.c.l.b16 %v829
        %v2483 = vunpack.c.h.b16 %v829
        %v2484 = vunpack.c.l.b16 %v830
        %v2485 = vunpack.c.h.b16 %v830
        %v2486 = vunpack.c.l.b16 %v831
        %v2487 = vunpack.c.h.b16 %v831
        %v2488 = vunpack.c.l.b16 %v832
        %v2489 = vunpack.c.h.b16 %v832
        %v2490 = vunpack.c.l.b16 %v833
        %v2491 = vunpack.c.h.b16 %v833
        %v2492 = vunpack.c.l.b16 %v834
        %v2493 = vunpack.c.h.b16 %v834
        %v2494 = vunpack.c.l.b16 %v835
        %v2495 = vunpack.c.h.b16 %v835
        %v2496 = vunpack.c.l.b16 %v836
        %v2497 = vunpack.c.h.b16 %v836
        %v2498 = vunpack.c.l.b16 %v837
        %v2499 = vunpack.c.h.b16 %v837
        %v2500 = vunpack.c.l.b16 %v838
        %v2501 = vunpack.c.h.b16 %v838
        %v2502 = vunpack.c.l.b16 %v839
        %v2503 = vunpack.c.h.b16 %v839
        %v2504 = vunpack.c.l.b16 %v840
        %v2505 = vunpack.c.h.b16 %v840
        %v2506 = vunpack.c.l.b16 %v841
        %v2507 = vunpack.c.h.b16 %v841
        %v2508 = vunpack.c.l.b16 %v842
        %v2509 = vunpack.c.h.b16 %v842
        %v2510 = vunpack.c.l.b16 %v843
        %v2511 = vunpack.c.h.b16 %v843
        %v2512 = vunpack.c.l.b16 %v844
        %v2513 = vunpack.c.h.b16 %v844
        %v2514 = vunpack.c.l.b16 %v845
        %v2515 = vunpack.c.h.b16 %v845
        %v2516 = vunpack.c.l.b16 %v846
        %v2517 = vunpack.c.h.b16 %v846
        %v2518 = vunpack.c.l.b16 %v847
        %v2519 = vunpack.c.h.b16 %v847
        %v2520 = vunpack.c.l.b16 %v848
        %v2521 = vunpack.c.h.b16 %v848
        %v2522 = vunpack.c.l.b16 %v849
        %v2523 = vunpack.c.h.b16 %v849
        %v2524 = vunpack.c.l.b16 %v850
        %v2525 = vunpack.c.h.b16 %v850
        %v2526 = vunpack.c.l.b16 %v851
        %v2527 = vunpack.c.h.b16 %v851
        %v2528 = vunpack.c.l.b16 %v852
        %v2529 = vunpack.c.h.b16 %v852
        %v2530 = vunpack.c.l.b16 %v853
        %v2531 = vunpack.c.h.b16 %v853
        %v2532 = vunpack.c.l.b16 %v854
        %v2533 = vunpack.c.h.b16 %v854
        %v2534 = vunpack.c.l.b16 %v855
        %v2535 = vunpack.c.h.b16 %v855
        %v2536 = vunpack.c.l.b16 %v856
        %v2537 = vunpack.c.h.b16 %v856
        %v2538 = vunpack.c.l.b16 %v857
        %v2539 = vunpack.c.h.b16 %v857
        %v2540 = vunpack.c.l.b16 %v858
        %v2541 = vunpack.c.h.b16 %v858
        %v2542 = vunpack.c.l.b16 %v859
        %v2543 = vunpack.c.h.b16 %v859
        %v2544 = vunpack.c.l.b16 %v860
        %v2545 = vunpack.c.h.b16 %v860
        %v2546 = vunpack.c.l.b16 %v861
        %v2547 = vunpack.c.h.b16 %v861
        %v2548 = vunpack.c.l.b16 %v862
        %v2549 = vunpack.c.h.b16 %v862
        %v2550 = vunpack.c.l.b16 %v863
        %v2551 = vunpack.c.h.b16 %v863
        %v2552 = vunpack.c.l.b16 %v864
        %v2553 = vunpack.c.h.b16 %v864
        %v2554 = vunpack.c.l.b16 %v865
        %v2555 = vunpack.c.h.b16 %v865
        %v2556 = vunpack.c.l.b16 %v866
        %v2557 = vunpack.c.h.b16 %v866
        %v2558 = vunpack.c.l.b16 %v867
        %v2559 = vunpack.c.h.b16 %v867
        %v2560 = vunpack.c.l.b16 %v868
        %v2561 = vunpack.c.h.b16 %v868
        %v2562 = vunpack.c.l.b16 %v869
        %v2563 = vunpack.c.h.b16 %v869
        %v2564 = vunpack.c.l.b16 %v870
        %v2565 = vunpack.c.h.b16 %v870
        %v2566 = vunpack.c.l.b16 %v871
        %v2567 = vunpack.c.h.b16 %v871
        %v2568 = vunpack.c.l.b16 %v872
        %v2569 = vunpack.c.h.b16 %v872
        %v2570 = vunpack.c.l.b16 %v873
        %v2571 = vunpack.c.h.b16 %v873
        %v2572 = vunpack.c.l.b16 %v874
        %v2573 = vunpack.c.h.b16 %v874
        %v2574 = vunpack.c.l.b16 %v875
        %v2575 = vunpack.c.h.b16 %v875
        %v2576 = vunpack.c.l.b16 %v876
        %v2577 = vunpack.c.h.b16 %v876
        %v2578 = vunpack.c.l.b16 %v877
        %v2579 = vunpack.c.h.b16 %v877
        %v2580 = vunpack.c.l.b16 %v878
        %v2581 = vunpack.c.h.b16 %v878
        %v2582 = vunpack.c.l.b16 %v879
        %v2583 = vunpack.c.h.b16 %v879
        %v2584 = vunpack.c.l.b16 %v880
        %v2585 = vunpack.c.h.b16 %v880
        %v2586 = vunpack.c.l.b16 %v881
        %v2587 = vunpack.c.h.b16 %v881
        %v2588 = vunpack.c.l.b16 %v882
        %v2589 = vunpack.c.h.b16 %v882
        %v2590 = vunpack.c.l.b16 %v883
        %v2591 = vunpack.c.h.b16 %v883
        %v2592 = vunpack.c.l.b16 %v884
        %v2593 = vunpack.c.h.b16 %v884
        %v2594 = vunpack.c.l.b16 %v885
        %v2595 = vunpack.c.h.b16 %v885
        %v2596 = vunpack.c.l.b16 %v886
        %v2597 = vunpack.c.h.b16 %v886
        %v2598 = vunpack.c.l.b16 %v887
        %v2599 = vunpack.c.h.b16 %v887
        %v2600 = vunpack.c.l.b16 %v888
        %v2601 = vunpack.c.h.b16 %v888
        %v2602 = vunpack.c.l.b16 %v889
        %v2603 = vunpack.c.h.b16 %v889
        %v2604 = vunpack.c.l.b16 %v890
        %v2605 = vunpack.c.h.b16 %v890
        %v2606 = vunpack.c.l.b16 %v891
        %v2607 = vunpack.c.h.b16 %v891
        %v2608 = vunpack.c.l.b16 %v892
        %v2609 = vunpack.c.h.b16 %v892
        %v2610 = vunpack.c.l.b16 %v893
        %v2611 = vunpack.c.h.b16 %v893
        %v2612 = vunpack.c.l.b16 %v894
        %v2613 = vunpack.c.h.b16 %v894
        %v2614 = vunpack.c.l.b16 %v895
        %v2615 = vunpack.c.h.b16 %v895
        %v2616 = vunpack.c.l.b16 %v896
        %v2617 = vunpack.c.h.b16 %v896
        %v2618 = vunpack.c.l.b16 %v897
        %v2619 = vunpack.c.h.b16 %v897
        %v2620 = vunpack.c.l.b16 %v898
        %v2621 = vunpack.c.h.b16 %v898
        %v2622 = vunpack.c.l.b16 %v899
        %v2623 = vunpack.c.h.b16 %v899
        %v2624 = vunpack.c.l.b16 %v900
        %v2625 = vunpack.c.h.b16 %v900
        %v2626 = vunpack.c.l.b16 %v901
        %v2627 = vunpack.c.h.b16 %v901
        %v2628 = vunpack.c.l.b16 %v902
        %v2629 = vunpack.c.h.b16 %v902
        %v2630 = vunpack.c.l.b16 %v903
        %v2631 = vunpack.c.h.b16 %v903
        %v2632 = vunpack.c.l.b16 %v904
        %v2633 = vunpack.c.h.b16 %v904
        %v2634 = vunpack.c.l.b16 %v905
        %v2635 = vunpack.c.h.b16 %v905
        %v2636 = vunpack.c.l.b16 %v906
        %v2637 = vunpack.c.h.b16 %v906
        %v2638 = vunpack.c.l.b16 %v907
        %v2639 = vunpack.c.h.b16 %v907
        %v2640 = vunpack.c.l.b16 %v908
        %v2641 = vunpack.c.h.b16 %v908
        %v2642 = vunpack.c.l.b16 %v909
        %v2643 = vunpack.c.h.b16 %v909
        %v2644 = vunpack.c.l.b16 %v910
        %v2645 = vunpack.c.h.b16 %v910
        %v2646 = vunpack.c.l.b16 %v911
        %v2647 = vunpack.c.h.b16 %v911
        %v2648 = vunpack.c.l.b16 %v912
        %v2649 = vunpack.c.h.b16 %v912
        %v2650 = vunpack.c.l.b16 %v913
        %v2651 = vunpack.c.h.b16 %v913
        %v2652 = vunpack.c.l.b16 %v914
        %v2653 = vunpack.c.h.b16 %v914
        %v2654 = vunpack.c.l.b16 %v915
        %v2655 = vunpack.c.h.b16 %v915
        %v2656 = vunpack.c.l.b16 %v916
        %v2657 = vunpack.c.h.b16 %v916
        %v2658 = vunpack.c.l.b16 %v917
        %v2659 = vunpack.c.h.b16 %v917
        %v2660 = vunpack.c.l.b16 %v918
        %v2661 = vunpack.c.h.b16 %v918
        %v2662 = vunpack.c.l.b16 %v919
        %v2663 = vunpack.c.h.b16 %v919
        %v2664 = vunpack.c.l.b16 %v920
        %v2665 = vunpack.c.h.b16 %v920
        %v2666 = vunpack.c.l.b16 %v921
        %v2667 = vunpack.c.h.b16 %v921
        %v2668 = vunpack.c.l.b16 %v922
        %v2669 = vunpack.c.h.b16 %v922
        %v2670 = vunpack.c.l.b16 %v923
        %v2671 = vunpack.c.h.b16 %v923
        %v2672 = vunpack.c.l.b16 %v924
        %v2673 = vunpack.c.h.b16 %v924
        %v2674 = vunpack.c.l.b16 %v925
        %v2675 = vunpack.c.h.b16 %v925
        %v2676 = vunpack.c.l.b16 %v926
        %v2677 = vunpack.c.h.b16 %v926
        %v2678 = vunpack.c.l.b16 %v927
        %v2679 = vunpack.c.h.b16 %v927
        %v2680 = vunpack.c.l.b16 %v928
        %v2681 = vunpack.c.h.b16 %v928
        %v2682 = vunpack.c.l.b16 %v929
        %v2683 = vunpack.c.h.b16 %v929
        %v2684 = vunpack.c.l.b16 %v930
        %v2685 = vunpack.c.h.b16 %v930
        %v2686 = vunpack.c.l.b16 %v931
        %v2687 = vunpack.c.h.b16 %v931
        %v2688 = vunpack.c.l.b16 %v932
        %v2689 = vunpack.c.h.b16 %v932
        %v2690 = vunpack.c.l.b16 %v933
        %v2691 = vunpack.c.h.b16 %v933
        %v2692 = vunpack.c.l.b16 %v934
        %v2693 = vunpack.c.h.b16 %v934
        %v2694 = vunpack.c.l.b16 %v935
        %v2695 = vunpack.c.h.b16 %v935
        %v2696 = vunpack.c.l.b16 %v936
        %v2697 = vunpack.c.h.b16 %v936
        %v2698 = vunpack.c.l.b16 %v937
        %v2699 = vunpack.c.h.b16 %v937
        %v2700 = vunpack.c.l.b16 %v938
        %v2701 = vunpack.c.h.b16 %v938
        %v2702 = vunpack.c.l.b16 %v939
        %v2703 = vunpack.c.h.b16 %v939
        %v2704 = vunpack.c.l.b16 %v940
        %v2705 = vunpack.c.h.b16 %v940
        %v2706 = vunpack.c.l.b16 %v941
        %v2707 = vunpack.c.h.b16 %v941
        %v2708 = vunpack.c.l.b16 %v942
        %v2709 = vunpack.c.h.b16 %v942
        %v2710 = vunpack.c.l.b16 %v943
        %v2711 = vunpack.c.h.b16 %v943
        %v2712 = vunpack.c.l.b16 %v944
        %v2713 = vunpack.c.h.b16 %v944
        %v2714 = vunpack.c.l.b16 %v945
        %v2715 = vunpack.c.h.b16 %v945
        %v2716 = vunpack.c.l.b16 %v946
        %v2717 = vunpack.c.h.b16 %v946
        %v2718 = vunpack.c.l.b16 %v947
        %v2719 = vunpack.c.h.b16 %v947
        %v2720 = vunpack.c.l.b16 %v948
        %v2721 = vunpack.c.h.b16 %v948
        %v2722 = vunpack.c.l.b16 %v949
        %v2723 = vunpack.c.h.b16 %v949
        %v2724 = vunpack.c.l.b16 %v950
        %v2725 = vunpack.c.h.b16 %v950
        %v2726 = vunpack.c.l.b16 %v951
        %v2727 = vunpack.c.h.b16 %v951
        %v2728 = vunpack.c.l.b16 %v952
        %v2729 = vunpack.c.h.b16 %v952
        %v2730 = vunpack.c.l.b16 %v953
        %v2731 = vunpack.c.h.b16 %v953
        %v2732 = vunpack.c.l.b16 %v954
        %v2733 = vunpack.c.h.b16 %v954
        %v2734 = vunpack.c.l.b16 %v955
        %v2735 = vunpack.c.h.b16 %v955
        %v2736 = vunpack.c.l.b16 %v956
        %v2737 = vunpack.c.h.b16 %v956
        %v2738 = vunpack.c.l.b16 %v957
        %v2739 = vunpack.c.h.b16 %v957
        %v2740 = vpack.c.b16 %v1612, %v1588
        %v2741 = vpack.c.b16 %v1613, %v1589
        %v2742 = vpack.c.b16 %v1614, %v1590
        %v2743 = vpack.c.b16 %v1615, %v1591
        %v2744 = vpack.c.b16 %v1616, %v1592
        %v2745 = vpack.c.b16 %v1617, %v1593
        %v2746 = vpack.c.b16 %v1618, %v1594
        %v2747 = vpack.c.b16 %v1619, %v1595
        %v2748 = vpack.c.b16 %v1620, %v1596
        %v2749 = vpack.c.b16 %v1621, %v1597
        %v2750 = vpack.c.b16 %v1622, %v1598
        %v2751 = vpack.c.b16 %v1623, %v1599
        %v2752 = vpack.c.b16 %v1624, %v1600
        %v2753 = vpack.c.b16 %v1625, %v1601
        %v2754 = vpack.c.b16 %v1626, %v1602
        %v2755 = vpack.c.b16 %v1627, %v1603
        %v2756 = vpack.c.b16 %v1628, %v1604
        %v2757 = vpack.c.b16 %v1629, %v1605
        %v2758 = vpack.c.b16 %v1630, %v1606
        %v2759 = vpack.c.b16 %v1631, %v1607
        %v2760 = vpack.c.b16 %v1632, %v1608
        %v2761 = vpack.c.b16 %v1633, %v1609
        %v2762 = vpack.c.b16 %v1634, %v1610
        %v2763 = vpack.c.b16 %v1635, %v1611
        %v2764 = vpack.c.b16 %v1660, %v1636
        %v2765 = vpack.c.b16 %v1661, %v1637
        %v2766 = vpack.c.b16 %v1662, %v1638
        %v2767 = vpack.c.b16 %v1663, %v1639
        %v2768 = vpack.c.b16 %v1664, %v1640
        %v2769 = vpack.c.b16 %v1665, %v1641
        %v2770 = vpack.c.b16 %v1666, %v1642
        %v2771 = vpack.c.b16 %v1667, %v1643
        %v2772 = vpack.c.b16 %v1668, %v1644
        %v2773 = vpack.c.b16 %v1669, %v1645
        %v2774 = vpack.c.b16 %v1670, %v1646
        %v2775 = vpack.c.b16 %v1671, %v1647
        %v2776 = vpack.c.b16 %v1672, %v1648
        %v2777 = vpack.c.b16 %v1673, %v1649
        %v2778 = vpack.c.b16 %v1674, %v1650
        %v2779 = vpack.c.b16 %v1675, %v1651
        %v2780 = vpack.c.b16 %v1676, %v1652
        %v2781 = vpack.c.b16 %v1677, %v1653
        %v2782 = vpack.c.b16 %v1678, %v1654
        %v2783 = vpack.c.b16 %v1679, %v1655
        %v2784 = vpack.c.b16 %v1680, %v1656
        %v2785 = vpack.c.b16 %v1681, %v1657
        %v2786 = vpack.c.b16 %v1682, %v1658
        %v2787 = vpack.c.b16 %v1683, %v1659
        %v2788 = vpack.c.b16 %v1708, %v1684
        %v2789 = vpack.c.b16 %v1709, %v1685
        %v2790 = vpack.c.b16 %v1710, %v1686
        %v2791 = vpack.c.b16 %v1711, %v1687
        %v2792 = vpack.c.b16 %v1712, %v1688
        %v2793 = vpack.c.b16 %v1713, %v1689
        %v2794 = vpack.c.b16 %v1714, %v1690
        %v2795 = vpack.c.b16 %v1715, %v1691
        %v2796 = vpack.c.b16 %v1716, %v1692
        %v2797 = vpack.c.b16 %v1717, %v1693
        %v2798 = vpack.c.b16 %v1718, %v1694
        %v2799 = vpack.c.b16 %v1719, %v1695
        %v2800 = vpack.c.b16 %v1720, %v1696
        %v2801 = vpack.c.b16 %v1721, %v1697
        %v2802 = vpack.c.b16 %v1722, %v1698
        %v2803 = vpack.c.b16 %v1723, %v1699
        %v2804 = vpack.c.b16 %v1724, %v1700
        %v2805 = vpack.c.b16 %v1725, %v1701
        %v2806 = vpack.c.b16 %v1726, %v1702
        %v2807 = vpack.c.b16 %v1727, %v1703
        %v2808 = vpack.c.b16 %v1728, %v1704
        %v2809 = vpack.c.b16 %v1729, %v1705
        %v2810 = vpack.c.b16 %v1730, %v1706
        %v2811 = vpack.c.b16 %v1731, %v1707
        %v2812 = vpack.c.b16 %v1756, %v1732
        %v2813 = vpack.c.b16 %v1757, %v1733
        %v2814 = vpack.c.b16 %v1758, %v1734
        %v2815 = vpack.c.b16 %v1759, %v1735
        %v2816 = vpack.c.b16 %v1760, %v1736
        %v2817 = vpack.c.b16 %v1761, %v1737
        %v2818 = vpack.c.b16 %v1762, %v1738
        %v2819 = vpack.c.b16 %v1763, %v1739
        %v2820 = vpack.c.b16 %v1764, %v1740
        %v2821 = vpack.c.b16 %v1765, %v1741
        %v2822 = vpack.c.b16 %v1766, %v1742
        %v2823 = vpack.c.b16 %v1767, %v1743
        %v2824 = vpack.c.b16 %v1768, %v1744
        %v2825 = vpack.c.b16 %v1769, %v1745
        %v2826 = vpack.c.b16 %v1770, %v1746
        %v2827 = vpack.c.b16 %v1771, %v1747
        %v2828 = vpack.c.b16 %v1772, %v1748
        %v2829 = vpack.c.b16 %v1773, %v1749
        %v2830 = vpack.c.b16 %v1774, %v1750
        %v2831 = vpack.c.b16 %v1775, %v1751
        %v2832 = vpack.c.b16 %v1776, %v1752
        %v2833 = vpack.c.b16 %v1777, %v1753
        %v2834 = vpack.c.b16 %v1778, %v1754
        %v2835 = vpack.c.b16 %v1779, %v1755
        %v2836 = vpack.c.b16 %v1804, %v1780
        %v2837 = vpack.c.b16 %v1805, %v1781
        %v2838 = vpack.c.b16 %v1806, %v1782
        %v2839 = vpack.c.b16 %v1807, %v1783
        %v2840 = vpack.c.b16 %v1808, %v1784
        %v2841 = vpack.c.b16 %v1809, %v1785
        %v2842 = vpack.c.b16 %v1810, %v1786
        %v2843 = vpack.c.b16 %v1811, %v1787
        %v2844 = vpack.c.b16 %v1812, %v1788
        %v2845 = vpack.c.b16 %v1813, %v1789
        %v2846 = vpack.c.b16 %v1814, %v1790
        %v2847 = vpack.c.b16 %v1815, %v1791
        %v2848 = vpack.c.b16 %v1816, %v1792
        %v2849 = vpack.c.b16 %v1817, %v1793
        %v2850 = vpack.c.b16 %v1818, %v1794
        %v2851 = vpack.c.b16 %v1819, %v1795
        %v2852 = vpack.c.b16 %v1820, %v1796
        %v2853 = vpack.c.b16 %v1821, %v1797
        %v2854 = vpack.c.b16 %v1822, %v1798
        %v2855 = vpack.c.b16 %v1823, %v1799
        %v2856 = vpack.c.b16 %v1824, %v1800
        %v2857 = vpack.c.b16 %v1825, %v1801
        %v2858 = vpack.c.b16 %v1826, %v1802
        %v2859 = vpack.c.b16 %v1827, %v1803
        %v2860 = vpack.c.b16 %v1852, %v1828
        %v2861 = vpack.c.b16 %v1853, %v1829
        %v2862 = vpack.c.b16 %v1854, %v1830
        %v2863 = vpack.c.b16 %v1855, %v1831
        %v2864 = vpack.c.b16 %v1856, %v1832
        %v2865 = vpack.c.b16 %v1857, %v1833
        %v2866 = vpack.c.b16 %v1858, %v1834
        %v2867 = vpack.c.b16 %v1859, %v1835
        %v2868 = vpack.c.b16 %v1860, %v1836
        %v2869 = vpack.c.b16 %v1861, %v1837
        %v2870 = vpack.c.b16 %v1862, %v1838
        %v2871 = vpack.c.b16 %v1863, %v1839
        %v2872 = vpack.c.b16 %v1864, %v1840
        %v2873 = vpack.c.b16 %v1865, %v1841
        %v2874 = vpack.c.b16 %v1866, %v1842
        %v2875 = vpack.c.b16 %v1867, %v1843
        %v2876 = vpack.c.b16 %v1868, %v1844
        %v2877 = vpack.c.b16 %v1869, %v1845
        %v2878 = vpack.c.b16 %v1870, %v1846
        %v2879 = vpack.c.b16 %v1871, %v1847
        %v2880 = vpack.c.b16 %v1872, %v1848
        %v2881 = vpack.c.b16 %v1873, %v1849
        %v2882 = vpack.c.b16 %v1874, %v1850
        %v2883 = vpack.c.b16 %v1875, %v1851
        %v2884 = vpack.c.b16 %v1900, %v1876
        %v2885 = vpack.c.b16 %v1901, %v1877
        %v2886 = vpack.c.b16 %v1902, %v1878
        %v2887 = vpack.c.b16 %v1903, %v1879
        %v2888 = vpack.c.b16 %v1904, %v1880
        %v2889 = vpack.c.b16 %v1905, %v1881
        %v2890 = vpack.c.b16 %v1906, %v1882
        %v2891 = vpack.c.b16 %v1907, %v1883
        %v2892 = vpack.c.b16 %v1908, %v1884
        %v2893 = vpack.c.b16 %v1909, %v1885
        %v2894 = vpack.c.b16 %v1910, %v1886
        %v2895 = vpack.c.b16 %v1911, %v1887
        %v2896 = vpack.c.b16 %v1912, %v1888
        %v2897 = vpack.c.b16 %v1913, %v1889
        %v2898 = vpack.c.b16 %v1914, %v1890
        %v2899 = vpack.c.b16 %v1915, %v1891
        %v2900 = vpack.c.b16 %v1916, %v1892
        %v2901 = vpack.c.b16 %v1917, %v1893
        %v2902 = vpack.c.b16 %v1918, %v1894
        %v2903 = vpack.c.b16 %v1919, %v1895
        %v2904 = vpack.c.b16 %v1920, %v1896
        %v2905 = vpack.c.b16 %v1921, %v1897
        %v2906 = vpack.c.b16 %v1922, %v1898
        %v2907 = vpack.c.b16 %v1923, %v1899
        %v2908 = vpack.c.b16 %v1948, %v1924
        %v2909 = vpack.c.b16 %v1949, %v1925
        %v2910 = vpack.c.b16 %v1950, %v1926
        %v2911 = vpack.c.b16 %v1951, %v1927
        %v2912 = vpack.c.b16 %v1952, %v1928
        %v2913 = vpack.c.b16 %v1953, %v1929
        %v2914 = vpack.c.b16 %v1954, %v1930
        %v2915 = vpack.c.b16 %v1955, %v1931
        %v2916 = vpack.c.b16 %v1956, %v1932
        %v2917 = vpack.c.b16 %v1957, %v1933
        %v2918 = vpack.c.b16 %v1958, %v1934
        %v2919 = vpack.c.b16 %v1959, %v1935
        %v2920 = vpack.c.b16 %v1960, %v1936
        %v2921 = vpack.c.b16 %v1961, %v1937
        %v2922 = vpack.c.b16 %v1962, %v1938
        %v2923 = vpack.c.b16 %v1963, %v1939
        %v2924 = vpack.c.b16 %v1964, %v1940
        %v2925 = vpack.c.b16 %v1965, %v1941
        %v2926 = vpack.c.b16 %v1966, %v1942
        %v2927 = vpack.c.b16 %v1967, %v1943
        %v2928 = vpack.c.b16 %v1968, %v1944
        %v2929 = vpack.c.b16 %v1969, %v1945
        %v2930 = vpack.c.b16 %v1970, %v1946
        %v2931 = vpack.c.b16 %v1971, %v1947
        %v2932 = vpack.c.b16 %v1996, %v1972
        %v2933 = vpack.c.b16 %v1997, %v1973
        %v2934 = vpack.c.b16 %v1998, %v1974
        %v2935 = vpack.c.b16 %v1999, %v1975
        %v2936 = vpack.c.b16 %v2000, %v1976
        %v2937 = vpack.c.b16 %v2001, %v1977
        %v2938 = vpack.c.b16 %v2002, %v1978
        %v2939 = vpack.c.b16 %v2003, %v1979
        %v2940 = vpack.c.b16 %v2004, %v1980
        %v2941 = vpack.c.b16 %v2005, %v1981
        %v2942 = vpack.c.b16 %v2006, %v1982
        %v2943 = vpack.c.b16 %v2007, %v1983
        %v2944 = vpack.c.b16 %v2008, %v1984
        %v2945 = vpack.c.b16 %v2009, %v1985
        %v2946 = vpack.c.b16 %v2010, %v1986
        %v2947 = vpack.c.b16 %v2011, %v1987
        %v2948 = vpack.c.b16 %v2012, %v1988
        %v2949 = vpack.c.b16 %v2013, %v1989
        %v2950 = vpack.c.b16 %v2014, %v1990
        %v2951 = vpack.c.b16 %v2015, %v1991
        %v2952 = vpack.c.b16 %v2016, %v1992
        %v2953 = vpack.c.b16 %v2017, %v1993
        %v2954 = vpack.c.b16 %v2018, %v1994
        %v2955 = vpack.c.b16 %v2019, %v1995
        %v2956 = vpack.c.b16 %v2044, %v2020
        %v2957 = vpack.c.b16 %v2045, %v2021
        %v2958 = vpack.c.b16 %v2046, %v2022
        %v2959 = vpack.c.b16 %v2047, %v2023
        %v2960 = vpack.c.b16 %v2048, %v2024
        %v2961 = vpack.c.b16 %v2049, %v2025
        %v2962 = vpack.c.b16 %v2050, %v2026
        %v2963 = vpack.c.b16 %v2051, %v2027
        %v2964 = vpack.c.b16 %v2052, %v2028
        %v2965 = vpack.c.b16 %v2053, %v2029
        %v2966 = vpack.c.b16 %v2054, %v2030
        %v2967 = vpack.c.b16 %v2055, %v2031
        %v2968 = vpack.c.b16 %v2056, %v2032
        %v2969 = vpack.c.b16 %v2057, %v2033
        %v2970 = vpack.c.b16 %v2058, %v2034
        %v2971 = vpack.c.b16 %v2059, %v2035
        %v2972 = vpack.c.b16 %v2060, %v2036
        %v2973 = vpack.c.b16 %v2061, %v2037
        %v2974 = vpack.c.b16 %v2062, %v2038
        %v2975 = vpack.c.b16 %v2063, %v2039
        %v2976 = vpack.c.b16 %v2064, %v2040
        %v2977 = vpack.c.b16 %v2065, %v2041
        %v2978 = vpack.c.b16 %v2066, %v2042
        %v2979 = vpack.c.b16 %v2067, %v2043
        %v2980 = vpack.c.b16 %v2092, %v2068
        %v2981 = vpack.c.b16 %v2093, %v2069
        %v2982 = vpack.c.b16 %v2094, %v2070
        %v2983 = vpack.c.b16 %v2095, %v2071
        %v2984 = vpack.c.b16 %v2096, %v2072
        %v2985 = vpack.c.b16 %v2097, %v2073
        %v2986 = vpack.c.b16 %v2098, %v2074
        %v2987 = vpack.c.b16 %v2099, %v2075
        %v2988 = vpack.c.b16 %v2100, %v2076
        %v2989 = vpack.c.b16 %v2101, %v2077
        %v2990 = vpack.c.b16 %v2102, %v2078
        %v2991 = vpack.c.b16 %v2103, %v2079
        %v2992 = vpack.c.b16 %v2104, %v2080
        %v2993 = vpack.c.b16 %v2105, %v2081
        %v2994 = vpack.c.b16 %v2106, %v2082
        %v2995 = vpack.c.b16 %v2107, %v2083
        %v2996 = vpack.c.b16 %v2108, %v2084
        %v2997 = vpack.c.b16 %v2109, %v2085
        %v2998 = vpack.c.b16 %v2110, %v2086
        %v2999 = vpack.c.b16 %v2111, %v2087
        %v3000 = vpack.c.b16 %v2112, %v2088
        %v3001 = vpack.c.b16 %v2113, %v2089
        %v3002 = vpack.c.b16 %v2114, %v2090
        %v3003 = vpack.c.b16 %v2115, %v2091
        %v3004 = vpack.c.b16 %v2140, %v2116
        %v3005 = vpack.c.b16 %v2141, %v2117
        %v3006 = vpack.c.b16 %v2142, %v2118
        %v3007 = vpack.c.b16 %v2143, %v2119
        %v3008 = vpack.c.b16 %v2144, %v2120
        %v3009 = vpack.c.b16 %v2145, %v2121
        %v3010 = vpack.c.b16 %v2146, %v2122
        %v3011 = vpack.c.b16 %v2147, %v2123
        %v3012 = vpack.c.b16 %v2148, %v2124
        %v3013 = vpack.c.b16 %v2149, %v2125
        %v3014 = vpack.c.b16 %v2150, %v2126
        %v3015 = vpack.c.b16 %v2151, %v2127
        %v3016 = vpack.c.b16 %v2152, %v2128
        %v3017 = vpack.c.b16 %v2153, %v2129
        %v3018 = vpack.c.b16 %v2154, %v2130
        %v3019 = vpack.c.b16 %v2155, %v2131
        %v3020 = vpack.c.b16 %v2156, %v2132
        %v3021 = vpack.c.b16 %v2157, %v2133
        %v3022 = vpack.c.b16 %v2158, %v2134
        %v3023 = vpack.c.b16 %v2159, %v2135
        %v3024 = vpack.c.b16 %v2160, %v2136
        %v3025 = vpack.c.b16 %v2161, %v2137
        %v3026 = vpack.c.b16 %v2162, %v2138
        %v3027 = vpack.c.b16 %v2163, %v2139
        %v3028 = vpack.c.b16 %v2188, %v2164
        %v3029 = vpack.c.b16 %v2189, %v2165
        %v3030 = vpack.c.b16 %v2190, %v2166
        %v3031 = vpack.c.b16 %v2191, %v2167
        %v3032 = vpack.c.b16 %v2192, %v2168
        %v3033 = vpack.c.b16 %v2193, %v2169
        %v3034 = vpack.c.b16 %v2194, %v2170
        %v3035 = vpack.c.b16 %v2195, %v2171
        %v3036 = vpack.c.b16 %v2196, %v2172
        %v3037 = vpack.c.b16 %v2197, %v2173
        %v3038 = vpack.c.b16 %v2198, %v2174
        %v3039 = vpack.c.b16 %v2199, %v2175
        %v3040 = vpack.c.b16 %v2200, %v2176
        %v3041 = vpack.c.b16 %v2201, %v2177
        %v3042 = vpack.c.b16 %v2202, %v2178
        %v3043 = vpack.c.b16 %v2203, %v2179
        %v3044 = vpack.c.b16 %v2204, %v2180
        %v3045 = vpack.c.b16 %v2205, %v2181
        %v3046 = vpack.c.b16 %v2206, %v2182
        %v3047 = vpack.c.b16 %v2207, %v2183
        %v3048 = vpack.c.b16 %v2208, %v2184
        %v3049 = vpack.c.b16 %v2209, %v2185
        %v3050 = vpack.c.b16 %v2210, %v2186
        %v3051 = vpack.c.b16 %v2211, %v2187
        %v3052 = vpack.c.b16 %v2236, %v2212
        %v3053 = vpack.c.b16 %v2237, %v2213
        %v3054 = vpack.c.b16 %v2238, %v2214
        %v3055 = vpack.c.b16 %v2239, %v2215
        %v3056 = vpack.c.b16 %v2240, %v2216
        %v3057 = vpack.c.b16 %v2241, %v2217
        %v3058 = vpack.c.b16 %v2242, %v2218
        %v3059 = vpack.c.b16 %v2243, %v2219
        %v3060 = vpack.c.b16 %v2244, %v2220
        %v3061 = vpack.c.b16 %v2245, %v2221
        %v3062 = vpack.c.b16 %v2246, %v2222
        %v3063 = vpack.c.b16 %v2247, %v2223
        %v3064 = vpack.c.b16 %v2248, %v2224
        %v3065 = vpack.c.b16 %v2249, %v2225
        %v3066 = vpack.c.b16 %v2250, %v2226
        %v3067 = vpack.c.b16 %v2251, %v2227
        %v3068 = vpack.c.b16 %v2252, %v2228
        %v3069 = vpack.c.b16 %v2253, %v2229
        %v3070 = vpack.c.b16 %v2254, %v2230
        %v3071 = vpack.c.b16 %v2255, %v2231
        %v3072 = vpack.c.b16 %v2256, %v2232
        %v3073 = vpack.c.b16 %v2257, %v2233
        %v3074 = vpack.c.b16 %v2258, %v2234
        %v3075 = vpack.c.b16 %v2259, %v2235
        %v3076 = vpack.c.b16 %v2284, %v2260
        %v3077 = vpack.c.b16 %v2285, %v2261
        %v3078 = vpack.c.b16 %v2286, %v2262
        %v3079 = vpack.c.b16 %v2287, %v2263
        %v3080 = vpack.c.b16 %v2288, %v2264
        %v3081 = vpack.c.b16 %v2289, %v2265
        %v3082 = vpack.c.b16 %v2290, %v2266
        %v3083 = vpack.c.b16 %v2291, %v2267
        %v3084 = vpack.c.b16 %v2292, %v2268
        %v3085 = vpack.c.b16 %v2293, %v2269
        %v3086 = vpack.c.b16 %v2294, %v2270
        %v3087 = vpack.c.b16 %v2295, %v2271
        %v3088 = vpack.c.b16 %v2296, %v2272
        %v3089 = vpack.c.b16 %v2297, %v2273
        %v3090 = vpack.c.b16 %v2298, %v2274
        %v3091 = vpack.c.b16 %v2299, %v2275
        %v3092 = vpack.c.b16 %v2300, %v2276
        %v3093 = vpack.c.b16 %v2301, %v2277
        %v3094 = vpack.c.b16 %v2302, %v2278
        %v3095 = vpack.c.b16 %v2303, %v2279
        %v3096 = vpack.c.b16 %v2304, %v2280
        %v3097 = vpack.c.b16 %v2305, %v2281
        %v3098 = vpack.c.b16 %v2306, %v2282
        %v3099 = vpack.c.b16 %v2307, %v2283
        %v3100 = vpack.c.b16 %v2332, %v2308
        %v3101 = vpack.c.b16 %v2333, %v2309
        %v3102 = vpack.c.b16 %v2334, %v2310
        %v3103 = vpack.c.b16 %v2335, %v2311
        %v3104 = vpack.c.b16 %v2336, %v2312
        %v3105 = vpack.c.b16 %v2337, %v2313
        %v3106 = vpack.c.b16 %v2338, %v2314
        %v3107 = vpack.c.b16 %v2339, %v2315
        %v3108 = vpack.c.b16 %v2340, %v2316
        %v3109 = vpack.c.b16 %v2341, %v2317
        %v3110 = vpack.c.b16 %v2342, %v2318
        %v3111 = vpack.c.b16 %v2343, %v2319
        %v3112 = vpack.c.b16 %v2344, %v2320
        %v3113 = vpack.c.b16 %v2345, %v2321
        %v3114 = vpack.c.b16 %v2346, %v2322
        %v3115 = vpack.c.b16 %v2347, %v2323
        %v3116 = vpack.c.b16 %v2348, %v2324
        %v3117 = vpack.c.b16 %v2349, %v2325
        %v3118 = vpack.c.b16 %v2350, %v2326
        %v3119 = vpack.c.b16 %v2351, %v2327
        %v3120 = vpack.c.b16 %v2352, %v2328
        %v3121 = vpack.c.b16 %v2353, %v2329
        %v3122 = vpack.c.b16 %v2354, %v2330
        %v3123 = vpack.c.b16 %v2355, %v2331
        %v3124 = vpack.c.b16 %v2380, %v2356
        %v3125 = vpack.c.b16 %v2381, %v2357
        %v3126 = vpack.c.b16 %v2382, %v2358
        %v3127 = vpack.c.b16 %v2383, %v2359
        %v3128 = vpack.c.b16 %v2384, %v2360
        %v3129 = vpack.c.b16 %v2385, %v2361
        %v3130 = vpack.c.b16 %v2386, %v2362
        %v3131 = vpack.c.b16 %v2387, %v2363
        %v3132 = vpack.c.b16 %v2388, %v2364
        %v3133 = vpack.c.b16 %v2389, %v2365
        %v3134 = vpack.c.b16 %v2390, %v2366
        %v3135 = vpack.c.b16 %v2391, %v2367
        %v3136 = vpack.c.b16 %v2392, %v2368
        %v3137 = vpack.c.b16 %v2393, %v2369
        %v3138 = vpack.c.b16 %v2394, %v2370
        %v3139 = vpack.c.b16 %v2395, %v2371
        %v3140 = vpack.c.b16 %v2396, %v2372
        %v3141 = vpack.c.b16 %v2397, %v2373
        %v3142 = vpack.c.b16 %v2398, %v2374
        %v3143 = vpack.c.b16 %v2399, %v2375
        %v3144 = vpack.c.b16 %v2400, %v2376
        %v3145 = vpack.c.b16 %v2401, %v2377
        %v3146 = vpack.c.b16 %v2402, %v2378
        %v3147 = vpack.c.b16 %v2403, %v2379
        %v3148 = vpack.c.b16 %v2428, %v2404
        %v3149 = vpack.c.b16 %v2429, %v2405
        %v3150 = vpack.c.b16 %v2430, %v2406
        %v3151 = vpack.c.b16 %v2431, %v2407
        %v3152 = vpack.c.b16 %v2432, %v2408
        %v3153 = vpack.c.b16 %v2433, %v2409
        %v3154 = vpack.c.b16 %v2434, %v2410
        %v3155 = vpack.c.b16 %v2435, %v2411
        %v3156 = vpack.c.b16 %v2436, %v2412
        %v3157 = vpack.c.b16 %v2437, %v2413
        %v3158 = vpack.c.b16 %v2438, %v2414
        %v3159 = vpack.c.b16 %v2439, %v2415
        %v3160 = vpack.c.b16 %v2440, %v2416
        %v3161 = vpack.c.b16 %v2441, %v2417
        %v3162 = vpack.c.b16 %v2442, %v2418
        %v3163 = vpack.c.b16 %v2443, %v2419
        %v3164 = vpack.c.b16 %v2444, %v2420
        %v3165 = vpack.c.b16 %v2445, %v2421
        %v3166 = vpack.c.b16 %v2446, %v2422
        %v3167 = vpack.c.b16 %v2447, %v2423
        %v3168 = vpack.c.b16 %v2448, %v2424
        %v3169 = vpack.c.b16 %v2449, %v2425
        %v3170 = vpack.c.b16 %v2450, %v2426
        %v3171 = vpack.c.b16 %v2451, %v2427
        %v3172 = vpack.c.b16 %v2476, %v2452
        %v3173 = vpack.c.b16 %v2477, %v2453
        %v3174 = vpack.c.b16 %v2478, %v2454
        %v3175 = vpack.c.b16 %v2479, %v2455
        %v3176 = vpack.c.b16 %v2480, %v2456
        %v3177 = vpack.c.b16 %v2481, %v2457
        %v3178 = vpack.c.b16 %v2482, %v2458
        %v3179 = vpack.c.b16 %v2483, %v2459
        %v3180 = vpack.c.b16 %v2484, %v2460
        %v3181 = vpack.c.b16 %v2485, %v2461
        %v3182 = vpack.c.b16 %v2486, %v2462
        %v3183 = vpack.c.b16 %v2487, %v2463
        %v3184 = vpack.c.b16 %v2488, %v2464
        %v3185 = vpack.c.b16 %v2489, %v2465
        %v3186 = vpack.c.b16 %v2490, %v2466
        %v3187 = vpack.c.b16 %v2491, %v2467
        %v3188 = vpack.c.b16 %v2492, %v2468
        %v3189 = vpack.c.b16 %v2493, %v2469
        %v3190 = vpack.c.b16 %v2494, %v2470
        %v3191 = vpack.c.b16 %v2495, %v2471
        %v3192 = vpack.c.b16 %v2496, %v2472
        %v3193 = vpack.c.b16 %v2497, %v2473
        %v3194 = vpack.c.b16 %v2498, %v2474
        %v3195 = vpack.c.b16 %v2499, %v2475
        %v3196 = vpack.c.b16 %v2524, %v2500
        %v3197 = vpack.c.b16 %v2525, %v2501
        %v3198 = vpack.c.b16 %v2526, %v2502
        %v3199 = vpack.c.b16 %v2527, %v2503
        %v3200 = vpack.c.b16 %v2528, %v2504
        %v3201 = vpack.c.b16 %v2529, %v2505
        %v3202 = vpack.c.b16 %v2530, %v2506
        %v3203 = vpack.c.b16 %v2531, %v2507
        %v3204 = vpack.c.b16 %v2532, %v2508
        %v3205 = vpack.c.b16 %v2533, %v2509
        %v3206 = vpack.c.b16 %v2534, %v2510
        %v3207 = vpack.c.b16 %v2535, %v2511
        %v3208 = vpack.c.b16 %v2536, %v2512
        %v3209 = vpack.c.b16 %v2537, %v2513
        %v3210 = vpack.c.b16 %v2538, %v2514
        %v3211 = vpack.c.b16 %v2539, %v2515
        %v3212 = vpack.c.b16 %v2540, %v2516
        %v3213 = vpack.c.b16 %v2541, %v2517
        %v3214 = vpack.c.b16 %v2542, %v2518
        %v3215 = vpack.c.b16 %v2543, %v2519
        %v3216 = vpack.c.b16 %v2544, %v2520
        %v3217 = vpack.c.b16 %v2545, %v2521
        %v3218 = vpack.c.b16 %v2546, %v2522
        %v3219 = vpack.c.b16 %v2547, %v2523
        %v3220 = vpack.c.b16 %v2572, %v2548
        %v3221 = vpack.c.b16 %v2573, %v2549
        %v3222 = vpack.c.b16 %v2574, %v2550
        %v3223 = vpack.c.b16 %v2575, %v2551
        %v3224 = vpack.c.b16 %v2576, %v2552
        %v3225 = vpack.c.b16 %v2577, %v2553
        %v3226 = vpack.c.b16 %v2578, %v2554
        %v3227 = vpack.c.b16 %v2579, %v2555
        %v3228 = vpack.c.b16 %v2580, %v2556
        %v3229 = vpack.c.b16 %v2581, %v2557
        %v3230 = vpack.c.b16 %v2582, %v2558
        %v3231 = vpack.c.b16 %v2583, %v2559
        %v3232 = vpack.c.b16 %v2584, %v2560
        %v3233 = vpack.c.b16 %v2585, %v2561
        %v3234 = vpack.c.b16 %v2586, %v2562
        %v3235 = vpack.c.b16 %v2587, %v2563
        %v3236 = vpack.c.b16 %v2588, %v2564
        %v3237 = vpack.c.b16 %v2589, %v2565
        %v3238 = vpack.c.b16 %v2590, %v2566
        %v3239 = vpack.c.b16 %v2591, %v2567
        %v3240 = vpack.c.b16 %v2592, %v2568
        %v3241 = vpack.c.b16 %v2593, %v2569
        %v3242 = vpack.c.b16 %v2594, %v2570
        %v3243 = vpack.c.b16 %v2595, %v2571
        %v3244 = vpack.c.b16 %v2620, %v2596
        %v3245 = vpack.c.b16 %v2621, %v2597
        %v3246 = vpack.c.b16 %v2622, %v2598
        %v3247 = vpack.c.b16 %v2623, %v2599
        %v3248 = vpack.c.b16 %v2624, %v2600
        %v3249 = vpack.c.b16 %v2625, %v2601
        %v3250 = vpack.c.b16 %v2626, %v2602
        %v3251 = vpack.c.b16 %v2627, %v2603
        %v3252 = vpack.c.b16 %v2628, %v2604
        %v3253 = vpack.c.b16 %v2629, %v2605
        %v3254 = vpack.c.b16 %v2630, %v2606
        %v3255 = vpack.c.b16 %v2631, %v2607
        %v3256 = vpack.c.b16 %v2632, %v2608
        %v3257 = vpack.c.b16 %v2633, %v2609
        %v3258 = vpack.c.b16 %v2634, %v2610
        %v3259 = vpack.c.b16 %v2635, %v2611
        %v3260 = vpack.c.b16 %v2636, %v2612
        %v3261 = vpack.c.b16 %v2637, %v2613
        %v3262 = vpack.c.b16 %v2638, %v2614
        %v3263 = vpack.c.b16 %v2639, %v2615
        %v3264 = vpack.c.b16 %v2640, %v2616
        %v3265 = vpack.c.b16 %v2641, %v2617
        %v3266 = vpack.c.b16 %v2642, %v2618
        %v3267 = vpack.c.b16 %v2643, %v2619
        %v3268 = vpack.c.b16 %v2668, %v2644
        %v3269 = vpack.c.b16 %v2669, %v2645
        %v3270 = vpack.c.b16 %v2670, %v2646
        %v3271 = vpack.c.b16 %v2671, %v2647
        %v3272 = vpack.c.b16 %v2672, %v2648
        %v3273 = vpack.c.b16 %v2673, %v2649
        %v3274 = vpack.c.b16 %v2674, %v2650
        %v3275 = vpack.c.b16 %v2675, %v2651
        %v3276 = vpack.c.b16 %v2676, %v2652
        %v3277 = vpack.c.b16 %v2677, %v2653
        %v3278 = vpack.c.b16 %v2678, %v2654
        %v3279 = vpack.c.b16 %v2679, %v2655
        %v3280 = vpack.c.b16 %v2680, %v2656
        %v3281 = vpack.c.b16 %v2681, %v2657
        %v3282 = vpack.c.b16 %v2682, %v2658
        %v3283 = vpack.c.b16 %v2683, %v2659
        %v3284 = vpack.c.b16 %v2684, %v2660
        %v3285 = vpack.c.b16 %v2685, %v2661
        %v3286 = vpack.c.b16 %v2686, %v2662
        %v3287 = vpack.c.b16 %v2687, %v2663
        %v3288 = vpack.c.b16 %v2688, %v2664
        %v3289 = vpack.c.b16 %v2689, %v2665
        %v3290 = vpack.c.b16 %v2690, %v2666
        %v3291 = vpack.c.b16 %v2691, %v2667
        %v3292 = vpack.c.b16 %v2716, %v2692
        %v3293 = vpack.c.b16 %v2717, %v2693
        %v3294 = vpack.c.b16 %v2718, %v2694
        %v3295 = vpack.c.b16 %v2719, %v2695
        %v3296 = vpack.c.b16 %v2720, %v2696
        %v3297 = vpack.c.b16 %v2721, %v2697
        %v3298 = vpack.c.b16 %v2722, %v2698
        %v3299 = vpack.c.b16 %v2723, %v2699
        %v3300 = vpack.c.b16 %v2724, %v2700
        %v3301 = vpack.c.b16 %v2725, %v2701
        %v3302 = vpack.c.b16 %v2726, %v2702
        %v3303 = vpack.c.b16 %v2727, %v2703
        %v3304 = vpack.c.b16 %v2728, %v2704
        %v3305 = vpack.c.b16 %v2729, %v2705
        %v3306 = vpack.c.b16 %v2730, %v2706
        %v3307 = vpack.c.b16 %v2731, %v2707
        %v3308 = vpack.c.b16 %v2732, %v2708
        %v3309 = vpack.c.b16 %v2733, %v2709
        %v3310 = vpack.c.b16 %v2734, %v2710
        %v3311 = vpack.c.b16 %v2735, %v2711
        %v3312 = vpack.c.b16 %v2736, %v2712
        %v3313 = vpack.c.b16 %v2737, %v2713
        %v3314 = vpack.c.b16 %v2738, %v2714
        %v3315 = vpack.c.b16 %v2739, %v2715
        %3892 = vmatpush.bf16.msra.mxu0 %v2908
        %3893 = vmatpush.bf16.msra.mxu0 %v2884
        %3894 = vmatpush.bf16.msra.mxu0 %v2860
        %3895 = vmatpush.bf16.msra.mxu0 %v2836
        %3896 = vmatpush.bf16.msra.mxu0 %v2812
        %3897 = vmatpush.bf16.msra.mxu0 %v2788
        %3898 = vmatpush.bf16.msra.mxu0 %v2764
        %3899 = vmatpush.bf16.msra.mxu0 %v2740
        %3900 = vmatmul.bf16.gmra.mxu0 %v358
        %v3901 = vpop.f32.mrf.mxu0
        %v3902 = vadd.f32 %v964, %v3901
        %v3903 = vpop.f32.mrf.mxu0
        %v3904 = vadd.f32 %v964, %v3903
        %3905 = vmatmul.bf16.gmra.mxu0 %v361
        %v3906 = vpop.f32.mrf.mxu0
        %v3907 = vadd.f32 %v964, %v3906
        %v3908 = vpop.f32.mrf.mxu0
        %v3909 = vadd.f32 %v964, %v3908
        %3910 = vmatmul.bf16.gmra.mxu0 %v364
        %v3911 = vpop.f32.mrf.mxu0
        %v3912 = vadd.f32 %v964, %v3911
        %v3913 = vpop.f32.mrf.mxu0
        %v3914 = vadd.f32 %v964, %v3913
        %3915 = vmatmul.bf16.gmra.mxu0 %v367
        %v3916 = vpop.f32.mrf.mxu0
        %v3917 = vadd.f32 %v964, %v3916
        %v3918 = vpop.f32.mrf.mxu0
        %v3919 = vadd.f32 %v964, %v3918
        %3920 = vmatmul.bf16.gmra.mxu0 %v370
        %v3921 = vpop.f32.mrf.mxu0
        %v3922 = vadd.f32 %v964, %v3921
        %v3923 = vpop.f32.mrf.mxu0
        %v3924 = vadd.f32 %v964, %v3923
        %3925 = vmatmul.bf16.gmra.mxu0 %v373
        %v3926 = vpop.f32.mrf.mxu0
        %v3927 = vadd.f32 %v964, %v3926
        %v3928 = vpop.f32.mrf.mxu0
        %v3929 = vadd.f32 %v964, %v3928
        %3930 = vmatmul.bf16.gmra.mxu0 %v376
        %v3931 = vpop.f32.mrf.mxu0
        %v3932 = vadd.f32 %v964, %v3931
        %v3933 = vpop.f32.mrf.mxu0
        %v3934 = vadd.f32 %v964, %v3933
        %3935 = vmatmul.bf16.gmra.mxu0 %v379
        %v3936 = vpop.f32.mrf.mxu0
        %v3937 = vadd.f32 %v964, %v3936
        %v3938 = vpop.f32.mrf.mxu0
        %v3939 = vadd.f32 %v964, %v3938
        %3940 = vdwg.mxu0
        %3941 = vmatpush.bf16.msra.mxu0 %v3100
        %3942 = vmatpush.bf16.msra.mxu0 %v3076
        %3943 = vmatpush.bf16.msra.mxu0 %v3052
        %3944 = vmatpush.bf16.msra.mxu0 %v3028
        %3945 = vmatpush.bf16.msra.mxu0 %v3004
        %3946 = vmatpush.bf16.msra.mxu0 %v2980
        %3947 = vmatpush.bf16.msra.mxu0 %v2956
        %3948 = vmatpush.bf16.msra.mxu0 %v2932
        %3949 = vmatmul.bf16.gmra.mxu0 %v359
        %v3950 = vpop.f32.mrf.mxu0
        %v3951 = vadd.f32 %v3902, %v3950
        %v3952 = vpop.f32.mrf.mxu0
        %v3953 = vadd.f32 %v3904, %v3952
        %3954 = vmatmul.bf16.gmra.mxu0 %v362
        %v3955 = vpop.f32.mrf.mxu0
        %v3956 = vadd.f32 %v3907, %v3955
        %v3957 = vpop.f32.mrf.mxu0
        %v3958 = vadd.f32 %v3909, %v3957
        %3959 = vmatmul.bf16.gmra.mxu0 %v365
        %v3960 = vpop.f32.mrf.mxu0
        %v3961 = vadd.f32 %v3912, %v3960
        %v3962 = vpop.f32.mrf.mxu0
        %v3963 = vadd.f32 %v3914, %v3962
        %3964 = vmatmul.bf16.gmra.mxu0 %v368
        %v3965 = vpop.f32.mrf.mxu0
        %v3966 = vadd.f32 %v3917, %v3965
        %v3967 = vpop.f32.mrf.mxu0
        %v3968 = vadd.f32 %v3919, %v3967
        %3969 = vmatmul.bf16.gmra.mxu0 %v371
        %v3970 = vpop.f32.mrf.mxu0
        %v3971 = vadd.f32 %v3922, %v3970
        %v3972 = vpop.f32.mrf.mxu0
        %v3973 = vadd.f32 %v3924, %v3972
        %3974 = vmatmul.bf16.gmra.mxu0 %v374
        %v3975 = vpop.f32.mrf.mxu0
        %v3976 = vadd.f32 %v3927, %v3975
        %v3977 = vpop.f32.mrf.mxu0
        %v3978 = vadd.f32 %v3929, %v3977
        %3979 = vmatmul.bf16.gmra.mxu0 %v377
        %v3980 = vpop.f32.mrf.mxu0
        %v3981 = vadd.f32 %v3932, %v3980
        %v3982 = vpop.f32.mrf.mxu0
        %v3983 = vadd.f32 %v3934, %v3982
        %3984 = vmatmul.bf16.gmra.mxu0 %v380
        %v3985 = vpop.f32.mrf.mxu0
        %v3986 = vadd.f32 %v3937, %v3985
        %v3987 = vpop.f32.mrf.mxu0
        %v3988 = vadd.f32 %v3939, %v3987
        %3989 = vdwg.mxu0
        %3990 = vmatpush.bf16.msra.mxu0 %v3292
        %3991 = vmatpush.bf16.msra.mxu0 %v3268
        %3992 = vmatpush.bf16.msra.mxu0 %v3244
        %3993 = vmatpush.bf16.msra.mxu0 %v3220
        %3994 = vmatpush.bf16.msra.mxu0 %v3196
        %3995 = vmatpush.bf16.msra.mxu0 %v3172
        %3996 = vmatpush.bf16.msra.mxu0 %v3148
        %3997 = vmatpush.bf16.msra.mxu0 %v3124
        %3998 = vmatmul.bf16.gmra.mxu0 %v360
        %v3999 = vpop.f32.mrf.mxu0
        %v4000 = vadd.f32 %v3951, %v3999
        %v4001 = vpop.f32.mrf.mxu0
        %v4002 = vadd.f32 %v3953, %v4001
        %4003 = vmatmul.bf16.gmra.mxu0 %v363
        %v4004 = vpop.f32.mrf.mxu0
        %v4005 = vadd.f32 %v3956, %v4004
        %v4006 = vpop.f32.mrf.mxu0
        %v4007 = vadd.f32 %v3958, %v4006
        %4008 = vmatmul.bf16.gmra.mxu0 %v366
        %v4009 = vpop.f32.mrf.mxu0
        %v4010 = vadd.f32 %v3961, %v4009
        %v4011 = vpop.f32.mrf.mxu0
        %v4012 = vadd.f32 %v3963, %v4011
        %4013 = vmatmul.bf16.gmra.mxu0 %v369
        %v4014 = vpop.f32.mrf.mxu0
        %v4015 = vadd.f32 %v3966, %v4014
        %v4016 = vpop.f32.mrf.mxu0
        %v4017 = vadd.f32 %v3968, %v4016
        %4018 = vmatmul.bf16.gmra.mxu0 %v372
        %v4019 = vpop.f32.mrf.mxu0
        %v4020 = vadd.f32 %v3971, %v4019
        %v4021 = vpop.f32.mrf.mxu0
        %v4022 = vadd.f32 %v3973, %v4021
        %4023 = vmatmul.bf16.gmra.mxu0 %v375
        %v4024 = vpop.f32.mrf.mxu0
        %v4025 = vadd.f32 %v3976, %v4024
        %v4026 = vpop.f32.mrf.mxu0
        %v4027 = vadd.f32 %v3978, %v4026
        %4028 = vmatmul.bf16.gmra.mxu0 %v378
        %v4029 = vpop.f32.mrf.mxu0
        %v4030 = vadd.f32 %v3981, %v4029
        %v4031 = vpop.f32.mrf.mxu0
        %v4032 = vadd.f32 %v3983, %v4031
        %4033 = vmatmul.bf16.gmra.mxu0 %v381
        %v4034 = vpop.f32.mrf.mxu0
        %v4035 = vadd.f32 %v3986, %v4034
        %v4036 = vpop.f32.mrf.mxu0
        %v4037 = vadd.f32 %v3988, %v4036
        %4038 = vdwg.mxu0
        %4039 = vmatpush.bf16.msra.mxu0 %v2909
        %4040 = vmatpush.bf16.msra.mxu0 %v2885
        %4041 = vmatpush.bf16.msra.mxu0 %v2861
        %4042 = vmatpush.bf16.msra.mxu0 %v2837
        %4043 = vmatpush.bf16.msra.mxu0 %v2813
        %4044 = vmatpush.bf16.msra.mxu0 %v2789
        %4045 = vmatpush.bf16.msra.mxu0 %v2765
        %4046 = vmatpush.bf16.msra.mxu0 %v2741
        %4047 = vmatmul.bf16.gmra.mxu0 %v358
        %v4048 = vpop.f32.mrf.mxu0
        %v4049 = vadd.f32 %v965, %v4048
        %v4050 = vpop.f32.mrf.mxu0
        %v4051 = vadd.f32 %v965, %v4050
        %4052 = vmatmul.bf16.gmra.mxu0 %v361
        %v4053 = vpop.f32.mrf.mxu0
        %v4054 = vadd.f32 %v965, %v4053
        %v4055 = vpop.f32.mrf.mxu0
        %v4056 = vadd.f32 %v965, %v4055
        %4057 = vmatmul.bf16.gmra.mxu0 %v364
        %v4058 = vpop.f32.mrf.mxu0
        %v4059 = vadd.f32 %v965, %v4058
        %v4060 = vpop.f32.mrf.mxu0
        %v4061 = vadd.f32 %v965, %v4060
        %4062 = vmatmul.bf16.gmra.mxu0 %v367
        %v4063 = vpop.f32.mrf.mxu0
        %v4064 = vadd.f32 %v965, %v4063
        %v4065 = vpop.f32.mrf.mxu0
        %v4066 = vadd.f32 %v965, %v4065
        %4067 = vmatmul.bf16.gmra.mxu0 %v370
        %v4068 = vpop.f32.mrf.mxu0
        %v4069 = vadd.f32 %v965, %v4068
        %v4070 = vpop.f32.mrf.mxu0
        %v4071 = vadd.f32 %v965, %v4070
        %4072 = vmatmul.bf16.gmra.mxu0 %v373
        %v4073 = vpop.f32.mrf.mxu0
        %v4074 = vadd.f32 %v965, %v4073
        %v4075 = vpop.f32.mrf.mxu0
        %v4076 = vadd.f32 %v965, %v4075
        %4077 = vmatmul.bf16.gmra.mxu0 %v376
        %v4078 = vpop.f32.mrf.mxu0
        %v4079 = vadd.f32 %v965, %v4078
        %v4080 = vpop.f32.mrf.mxu0
        %v4081 = vadd.f32 %v965, %v4080
        %4082 = vmatmul.bf16.gmra.mxu0 %v379
        %v4083 = vpop.f32.mrf.mxu0
        %v4084 = vadd.f32 %v965, %v4083
        %v4085 = vpop.f32.mrf.mxu0
        %v4086 = vadd.f32 %v965, %v4085
        %4087 = vdwg.mxu0
        %4088 = vmatpush.bf16.msra.mxu0 %v3101
        %4089 = vmatpush.bf16.msra.mxu0 %v3077
        %4090 = vmatpush.bf16.msra.mxu0 %v3053
        %4091 = vmatpush.bf16.msra.mxu0 %v3029
        %4092 = vmatpush.bf16.msra.mxu0 %v3005
        %4093 = vmatpush.bf16.msra.mxu0 %v2981
        %4094 = vmatpush.bf16.msra.mxu0 %v2957
        %4095 = vmatpush.bf16.msra.mxu0 %v2933
        %4096 = vmatmul.bf16.gmra.mxu0 %v359
        %v4097 = vpop.f32.mrf.mxu0
        %v4098 = vadd.f32 %v4049, %v4097
        %v4099 = vpop.f32.mrf.mxu0
        %v4100 = vadd.f32 %v4051, %v4099
        %4101 = vmatmul.bf16.gmra.mxu0 %v362
        %v4102 = vpop.f32.mrf.mxu0
        %v4103 = vadd.f32 %v4054, %v4102
        %v4104 = vpop.f32.mrf.mxu0
        %v4105 = vadd.f32 %v4056, %v4104
        %4106 = vmatmul.bf16.gmra.mxu0 %v365
        %v4107 = vpop.f32.mrf.mxu0
        %v4108 = vadd.f32 %v4059, %v4107
        %v4109 = vpop.f32.mrf.mxu0
        %v4110 = vadd.f32 %v4061, %v4109
        %4111 = vmatmul.bf16.gmra.mxu0 %v368
        %v4112 = vpop.f32.mrf.mxu0
        %v4113 = vadd.f32 %v4064, %v4112
        %v4114 = vpop.f32.mrf.mxu0
        %v4115 = vadd.f32 %v4066, %v4114
        %4116 = vmatmul.bf16.gmra.mxu0 %v371
        %v4117 = vpop.f32.mrf.mxu0
        %v4118 = vadd.f32 %v4069, %v4117
        %v4119 = vpop.f32.mrf.mxu0
        %v4120 = vadd.f32 %v4071, %v4119
        %4121 = vmatmul.bf16.gmra.mxu0 %v374
        %v4122 = vpop.f32.mrf.mxu0
        %v4123 = vadd.f32 %v4074, %v4122
        %v4124 = vpop.f32.mrf.mxu0
        %v4125 = vadd.f32 %v4076, %v4124
        %4126 = vmatmul.bf16.gmra.mxu0 %v377
        %v4127 = vpop.f32.mrf.mxu0
        %v4128 = vadd.f32 %v4079, %v4127
        %v4129 = vpop.f32.mrf.mxu0
        %v4130 = vadd.f32 %v4081, %v4129
        %4131 = vmatmul.bf16.gmra.mxu0 %v380
        %v4132 = vpop.f32.mrf.mxu0
        %v4133 = vadd.f32 %v4084, %v4132
        %v4134 = vpop.f32.mrf.mxu0
        %v4135 = vadd.f32 %v4086, %v4134
        %4136 = vdwg.mxu0
        %4137 = vmatpush.bf16.msra.mxu0 %v3293
        %4138 = vmatpush.bf16.msra.mxu0 %v3269
        %4139 = vmatpush.bf16.msra.mxu0 %v3245
        %4140 = vmatpush.bf16.msra.mxu0 %v3221
        %4141 = vmatpush.bf16.msra.mxu0 %v3197
        %4142 = vmatpush.bf16.msra.mxu0 %v3173
        %4143 = vmatpush.bf16.msra.mxu0 %v3149
        %4144 = vmatpush.bf16.msra.mxu0 %v3125
        %4145 = vmatmul.bf16.gmra.mxu0 %v360
        %v4146 = vpop.f32.mrf.mxu0
        %v4147 = vadd.f32 %v4098, %v4146
        %v4148 = vpop.f32.mrf.mxu0
        %v4149 = vadd.f32 %v4100, %v4148
        %4150 = vmatmul.bf16.gmra.mxu0 %v363
        %v4151 = vpop.f32.mrf.mxu0
        %v4152 = vadd.f32 %v4103, %v4151
        %v4153 = vpop.f32.mrf.mxu0
        %v4154 = vadd.f32 %v4105, %v4153
        %4155 = vmatmul.bf16.gmra.mxu0 %v366
        %v4156 = vpop.f32.mrf.mxu0
        %v4157 = vadd.f32 %v4108, %v4156
        %v4158 = vpop.f32.mrf.mxu0
        %v4159 = vadd.f32 %v4110, %v4158
        %4160 = vmatmul.bf16.gmra.mxu0 %v369
        %v4161 = vpop.f32.mrf.mxu0
        %v4162 = vadd.f32 %v4113, %v4161
        %v4163 = vpop.f32.mrf.mxu0
        %v4164 = vadd.f32 %v4115, %v4163
        %4165 = vmatmul.bf16.gmra.mxu0 %v372
        %v4166 = vpop.f32.mrf.mxu0
        %v4167 = vadd.f32 %v4118, %v4166
        %v4168 = vpop.f32.mrf.mxu0
        %v4169 = vadd.f32 %v4120, %v4168
        %4170 = vmatmul.bf16.gmra.mxu0 %v375
        %v4171 = vpop.f32.mrf.mxu0
        %v4172 = vadd.f32 %v4123, %v4171
        %v4173 = vpop.f32.mrf.mxu0
        %v4174 = vadd.f32 %v4125, %v4173
        %4175 = vmatmul.bf16.gmra.mxu0 %v378
        %v4176 = vpop.f32.mrf.mxu0
        %v4177 = vadd.f32 %v4128, %v4176
        %v4178 = vpop.f32.mrf.mxu0
        %v4179 = vadd.f32 %v4130, %v4178
        %4180 = vmatmul.bf16.gmra.mxu0 %v381
        %v4181 = vpop.f32.mrf.mxu0
        %v4182 = vadd.f32 %v4133, %v4181
        %v4183 = vpop.f32.mrf.mxu0
        %v4184 = vadd.f32 %v4135, %v4183
        %4185 = vdwg.mxu0
        %4186 = vmatpush.bf16.msra.mxu0 %v2910
        %4187 = vmatpush.bf16.msra.mxu0 %v2886
        %4188 = vmatpush.bf16.msra.mxu0 %v2862
        %4189 = vmatpush.bf16.msra.mxu0 %v2838
        %4190 = vmatpush.bf16.msra.mxu0 %v2814
        %4191 = vmatpush.bf16.msra.mxu0 %v2790
        %4192 = vmatpush.bf16.msra.mxu0 %v2766
        %4193 = vmatpush.bf16.msra.mxu0 %v2742
        %4194 = vmatmul.bf16.gmra.mxu0 %v358
        %v4195 = vpop.f32.mrf.mxu0
        %v4196 = vadd.f32 %v966, %v4195
        %v4197 = vpop.f32.mrf.mxu0
        %v4198 = vadd.f32 %v966, %v4197
        %4199 = vmatmul.bf16.gmra.mxu0 %v361
        %v4200 = vpop.f32.mrf.mxu0
        %v4201 = vadd.f32 %v966, %v4200
        %v4202 = vpop.f32.mrf.mxu0
        %v4203 = vadd.f32 %v966, %v4202
        %4204 = vmatmul.bf16.gmra.mxu0 %v364
        %v4205 = vpop.f32.mrf.mxu0
        %v4206 = vadd.f32 %v966, %v4205
        %v4207 = vpop.f32.mrf.mxu0
        %v4208 = vadd.f32 %v966, %v4207
        %4209 = vmatmul.bf16.gmra.mxu0 %v367
        %v4210 = vpop.f32.mrf.mxu0
        %v4211 = vadd.f32 %v966, %v4210
        %v4212 = vpop.f32.mrf.mxu0
        %v4213 = vadd.f32 %v966, %v4212
        %4214 = vmatmul.bf16.gmra.mxu0 %v370
        %v4215 = vpop.f32.mrf.mxu0
        %v4216 = vadd.f32 %v966, %v4215
        %v4217 = vpop.f32.mrf.mxu0
        %v4218 = vadd.f32 %v966, %v4217
        %4219 = vmatmul.bf16.gmra.mxu0 %v373
        %v4220 = vpop.f32.mrf.mxu0
        %v4221 = vadd.f32 %v966, %v4220
        %v4222 = vpop.f32.mrf.mxu0
        %v4223 = vadd.f32 %v966, %v4222
        %4224 = vmatmul.bf16.gmra.mxu0 %v376
        %v4225 = vpop.f32.mrf.mxu0
        %v4226 = vadd.f32 %v966, %v4225
        %v4227 = vpop.f32.mrf.mxu0
        %v4228 = vadd.f32 %v966, %v4227
        %4229 = vmatmul.bf16.gmra.mxu0 %v379
        %v4230 = vpop.f32.mrf.mxu0
        %v4231 = vadd.f32 %v966, %v4230
        %v4232 = vpop.f32.mrf.mxu0
        %v4233 = vadd.f32 %v966, %v4232
        %4234 = vdwg.mxu0
        %4235 = vmatpush.bf16.msra.mxu0 %v3102
        %4236 = vmatpush.bf16.msra.mxu0 %v3078
        %4237 = vmatpush.bf16.msra.mxu0 %v3054
        %4238 = vmatpush.bf16.msra.mxu0 %v3030
        %4239 = vmatpush.bf16.msra.mxu0 %v3006
        %4240 = vmatpush.bf16.msra.mxu0 %v2982
        %4241 = vmatpush.bf16.msra.mxu0 %v2958
        %4242 = vmatpush.bf16.msra.mxu0 %v2934
        %4243 = vmatmul.bf16.gmra.mxu0 %v359
        %v4244 = vpop.f32.mrf.mxu0
        %v4245 = vadd.f32 %v4196, %v4244
        %v4246 = vpop.f32.mrf.mxu0
        %v4247 = vadd.f32 %v4198, %v4246
        %4248 = vmatmul.bf16.gmra.mxu0 %v362
        %v4249 = vpop.f32.mrf.mxu0
        %v4250 = vadd.f32 %v4201, %v4249
        %v4251 = vpop.f32.mrf.mxu0
        %v4252 = vadd.f32 %v4203, %v4251
        %4253 = vmatmul.bf16.gmra.mxu0 %v365
        %v4254 = vpop.f32.mrf.mxu0
        %v4255 = vadd.f32 %v4206, %v4254
        %v4256 = vpop.f32.mrf.mxu0
        %v4257 = vadd.f32 %v4208, %v4256
        %4258 = vmatmul.bf16.gmra.mxu0 %v368
        %v4259 = vpop.f32.mrf.mxu0
        %v4260 = vadd.f32 %v4211, %v4259
        %v4261 = vpop.f32.mrf.mxu0
        %v4262 = vadd.f32 %v4213, %v4261
        %4263 = vmatmul.bf16.gmra.mxu0 %v371
        %v4264 = vpop.f32.mrf.mxu0
        %v4265 = vadd.f32 %v4216, %v4264
        %v4266 = vpop.f32.mrf.mxu0
        %v4267 = vadd.f32 %v4218, %v4266
        %4268 = vmatmul.bf16.gmra.mxu0 %v374
        %v4269 = vpop.f32.mrf.mxu0
        %v4270 = vadd.f32 %v4221, %v4269
        %v4271 = vpop.f32.mrf.mxu0
        %v4272 = vadd.f32 %v4223, %v4271
        %4273 = vmatmul.bf16.gmra.mxu0 %v377
        %v4274 = vpop.f32.mrf.mxu0
        %v4275 = vadd.f32 %v4226, %v4274
        %v4276 = vpop.f32.mrf.mxu0
        %v4277 = vadd.f32 %v4228, %v4276
        %4278 = vmatmul.bf16.gmra.mxu0 %v380
        %v4279 = vpop.f32.mrf.mxu0
        %v4280 = vadd.f32 %v4231, %v4279
        %v4281 = vpop.f32.mrf.mxu0
        %v4282 = vadd.f32 %v4233, %v4281
        %4283 = vdwg.mxu0
        %4284 = vmatpush.bf16.msra.mxu0 %v3294
        %4285 = vmatpush.bf16.msra.mxu0 %v3270
        %4286 = vmatpush.bf16.msra.mxu0 %v3246
        %4287 = vmatpush.bf16.msra.mxu0 %v3222
        %4288 = vmatpush.bf16.msra.mxu0 %v3198
        %4289 = vmatpush.bf16.msra.mxu0 %v3174
        %4290 = vmatpush.bf16.msra.mxu0 %v3150
        %4291 = vmatpush.bf16.msra.mxu0 %v3126
        %4292 = vmatmul.bf16.gmra.mxu0 %v360
        %v4293 = vpop.f32.mrf.mxu0
        %v4294 = vadd.f32 %v4245, %v4293
        %v4295 = vpop.f32.mrf.mxu0
        %v4296 = vadd.f32 %v4247, %v4295
        %4297 = vmatmul.bf16.gmra.mxu0 %v363
        %v4298 = vpop.f32.mrf.mxu0
        %v4299 = vadd.f32 %v4250, %v4298
        %v4300 = vpop.f32.mrf.mxu0
        %v4301 = vadd.f32 %v4252, %v4300
        %4302 = vmatmul.bf16.gmra.mxu0 %v366
        %v4303 = vpop.f32.mrf.mxu0
        %v4304 = vadd.f32 %v4255, %v4303
        %v4305 = vpop.f32.mrf.mxu0
        %v4306 = vadd.f32 %v4257, %v4305
        %4307 = vmatmul.bf16.gmra.mxu0 %v369
        %v4308 = vpop.f32.mrf.mxu0
        %v4309 = vadd.f32 %v4260, %v4308
        %v4310 = vpop.f32.mrf.mxu0
        %v4311 = vadd.f32 %v4262, %v4310
        %4312 = vmatmul.bf16.gmra.mxu0 %v372
        %v4313 = vpop.f32.mrf.mxu0
        %v4314 = vadd.f32 %v4265, %v4313
        %v4315 = vpop.f32.mrf.mxu0
        %v4316 = vadd.f32 %v4267, %v4315
        %4317 = vmatmul.bf16.gmra.mxu0 %v375
        %v4318 = vpop.f32.mrf.mxu0
        %v4319 = vadd.f32 %v4270, %v4318
        %v4320 = vpop.f32.mrf.mxu0
        %v4321 = vadd.f32 %v4272, %v4320
        %4322 = vmatmul.bf16.gmra.mxu0 %v378
        %v4323 = vpop.f32.mrf.mxu0
        %v4324 = vadd.f32 %v4275, %v4323
        %v4325 = vpop.f32.mrf.mxu0
        %v4326 = vadd.f32 %v4277, %v4325
        %4327 = vmatmul.bf16.gmra.mxu0 %v381
        %v4328 = vpop.f32.mrf.mxu0
        %v4329 = vadd.f32 %v4280, %v4328
        %v4330 = vpop.f32.mrf.mxu0
        %v4331 = vadd.f32 %v4282, %v4330
        %4332 = vdwg.mxu0
        %4333 = vmatpush.bf16.msra.mxu0 %v2911
        %4334 = vmatpush.bf16.msra.mxu0 %v2887
        %4335 = vmatpush.bf16.msra.mxu0 %v2863
        %4336 = vmatpush.bf16.msra.mxu0 %v2839
        %4337 = vmatpush.bf16.msra.mxu0 %v2815
        %4338 = vmatpush.bf16.msra.mxu0 %v2791
        %4339 = vmatpush.bf16.msra.mxu0 %v2767
        %4340 = vmatpush.bf16.msra.mxu0 %v2743
        %4341 = vmatmul.bf16.gmra.mxu0 %v358
        %v4342 = vpop.f32.mrf.mxu0
        %v4343 = vadd.f32 %v967, %v4342
        %v4344 = vpop.f32.mrf.mxu0
        %v4345 = vadd.f32 %v967, %v4344
        %4346 = vmatmul.bf16.gmra.mxu0 %v361
        %v4347 = vpop.f32.mrf.mxu0
        %v4348 = vadd.f32 %v967, %v4347
        %v4349 = vpop.f32.mrf.mxu0
        %v4350 = vadd.f32 %v967, %v4349
        %4351 = vmatmul.bf16.gmra.mxu0 %v364
        %v4352 = vpop.f32.mrf.mxu0
        %v4353 = vadd.f32 %v967, %v4352
        %v4354 = vpop.f32.mrf.mxu0
        %v4355 = vadd.f32 %v967, %v4354
        %4356 = vmatmul.bf16.gmra.mxu0 %v367
        %v4357 = vpop.f32.mrf.mxu0
        %v4358 = vadd.f32 %v967, %v4357
        %v4359 = vpop.f32.mrf.mxu0
        %v4360 = vadd.f32 %v967, %v4359
        %4361 = vmatmul.bf16.gmra.mxu0 %v370
        %v4362 = vpop.f32.mrf.mxu0
        %v4363 = vadd.f32 %v967, %v4362
        %v4364 = vpop.f32.mrf.mxu0
        %v4365 = vadd.f32 %v967, %v4364
        %4366 = vmatmul.bf16.gmra.mxu0 %v373
        %v4367 = vpop.f32.mrf.mxu0
        %v4368 = vadd.f32 %v967, %v4367
        %v4369 = vpop.f32.mrf.mxu0
        %v4370 = vadd.f32 %v967, %v4369
        %4371 = vmatmul.bf16.gmra.mxu0 %v376
        %v4372 = vpop.f32.mrf.mxu0
        %v4373 = vadd.f32 %v967, %v4372
        %v4374 = vpop.f32.mrf.mxu0
        %v4375 = vadd.f32 %v967, %v4374
        %4376 = vmatmul.bf16.gmra.mxu0 %v379
        %v4377 = vpop.f32.mrf.mxu0
        %v4378 = vadd.f32 %v967, %v4377
        %v4379 = vpop.f32.mrf.mxu0
        %v4380 = vadd.f32 %v967, %v4379
        %4381 = vdwg.mxu0
        %4382 = vmatpush.bf16.msra.mxu0 %v3103
        %4383 = vmatpush.bf16.msra.mxu0 %v3079
        %4384 = vmatpush.bf16.msra.mxu0 %v3055
        %4385 = vmatpush.bf16.msra.mxu0 %v3031
        %4386 = vmatpush.bf16.msra.mxu0 %v3007
        %4387 = vmatpush.bf16.msra.mxu0 %v2983
        %4388 = vmatpush.bf16.msra.mxu0 %v2959
        %4389 = vmatpush.bf16.msra.mxu0 %v2935
        %4390 = vmatmul.bf16.gmra.mxu0 %v359
        %v4391 = vpop.f32.mrf.mxu0
        %v4392 = vadd.f32 %v4343, %v4391
        %v4393 = vpop.f32.mrf.mxu0
        %v4394 = vadd.f32 %v4345, %v4393
        %4395 = vmatmul.bf16.gmra.mxu0 %v362
        %v4396 = vpop.f32.mrf.mxu0
        %v4397 = vadd.f32 %v4348, %v4396
        %v4398 = vpop.f32.mrf.mxu0
        %v4399 = vadd.f32 %v4350, %v4398
        %4400 = vmatmul.bf16.gmra.mxu0 %v365
        %v4401 = vpop.f32.mrf.mxu0
        %v4402 = vadd.f32 %v4353, %v4401
        %v4403 = vpop.f32.mrf.mxu0
        %v4404 = vadd.f32 %v4355, %v4403
        %4405 = vmatmul.bf16.gmra.mxu0 %v368
        %v4406 = vpop.f32.mrf.mxu0
        %v4407 = vadd.f32 %v4358, %v4406
        %v4408 = vpop.f32.mrf.mxu0
        %v4409 = vadd.f32 %v4360, %v4408
        %4410 = vmatmul.bf16.gmra.mxu0 %v371
        %v4411 = vpop.f32.mrf.mxu0
        %v4412 = vadd.f32 %v4363, %v4411
        %v4413 = vpop.f32.mrf.mxu0
        %v4414 = vadd.f32 %v4365, %v4413
        %4415 = vmatmul.bf16.gmra.mxu0 %v374
        %v4416 = vpop.f32.mrf.mxu0
        %v4417 = vadd.f32 %v4368, %v4416
        %v4418 = vpop.f32.mrf.mxu0
        %v4419 = vadd.f32 %v4370, %v4418
        %4420 = vmatmul.bf16.gmra.mxu0 %v377
        %v4421 = vpop.f32.mrf.mxu0
        %v4422 = vadd.f32 %v4373, %v4421
        %v4423 = vpop.f32.mrf.mxu0
        %v4424 = vadd.f32 %v4375, %v4423
        %4425 = vmatmul.bf16.gmra.mxu0 %v380
        %v4426 = vpop.f32.mrf.mxu0
        %v4427 = vadd.f32 %v4378, %v4426
        %v4428 = vpop.f32.mrf.mxu0
        %v4429 = vadd.f32 %v4380, %v4428
        %4430 = vdwg.mxu0
        %4431 = vmatpush.bf16.msra.mxu0 %v3295
        %4432 = vmatpush.bf16.msra.mxu0 %v3271
        %4433 = vmatpush.bf16.msra.mxu0 %v3247
        %4434 = vmatpush.bf16.msra.mxu0 %v3223
        %4435 = vmatpush.bf16.msra.mxu0 %v3199
        %4436 = vmatpush.bf16.msra.mxu0 %v3175
        %4437 = vmatpush.bf16.msra.mxu0 %v3151
        %4438 = vmatpush.bf16.msra.mxu0 %v3127
        %4439 = vmatmul.bf16.gmra.mxu0 %v360
        %v4440 = vpop.f32.mrf.mxu0
        %v4441 = vadd.f32 %v4392, %v4440
        %v4442 = vpop.f32.mrf.mxu0
        %v4443 = vadd.f32 %v4394, %v4442
        %4444 = vmatmul.bf16.gmra.mxu0 %v363
        %v4445 = vpop.f32.mrf.mxu0
        %v4446 = vadd.f32 %v4397, %v4445
        %v4447 = vpop.f32.mrf.mxu0
        %v4448 = vadd.f32 %v4399, %v4447
        %4449 = vmatmul.bf16.gmra.mxu0 %v366
        %v4450 = vpop.f32.mrf.mxu0
        %v4451 = vadd.f32 %v4402, %v4450
        %v4452 = vpop.f32.mrf.mxu0
        %v4453 = vadd.f32 %v4404, %v4452
        %4454 = vmatmul.bf16.gmra.mxu0 %v369
        %v4455 = vpop.f32.mrf.mxu0
        %v4456 = vadd.f32 %v4407, %v4455
        %v4457 = vpop.f32.mrf.mxu0
        %v4458 = vadd.f32 %v4409, %v4457
        %4459 = vmatmul.bf16.gmra.mxu0 %v372
        %v4460 = vpop.f32.mrf.mxu0
        %v4461 = vadd.f32 %v4412, %v4460
        %v4462 = vpop.f32.mrf.mxu0
        %v4463 = vadd.f32 %v4414, %v4462
        %4464 = vmatmul.bf16.gmra.mxu0 %v375
        %v4465 = vpop.f32.mrf.mxu0
        %v4466 = vadd.f32 %v4417, %v4465
        %v4467 = vpop.f32.mrf.mxu0
        %v4468 = vadd.f32 %v4419, %v4467
        %4469 = vmatmul.bf16.gmra.mxu0 %v378
        %v4470 = vpop.f32.mrf.mxu0
        %v4471 = vadd.f32 %v4422, %v4470
        %v4472 = vpop.f32.mrf.mxu0
        %v4473 = vadd.f32 %v4424, %v4472
        %4474 = vmatmul.bf16.gmra.mxu0 %v381
        %v4475 = vpop.f32.mrf.mxu0
        %v4476 = vadd.f32 %v4427, %v4475
        %v4477 = vpop.f32.mrf.mxu0
        %v4478 = vadd.f32 %v4429, %v4477
        %4479 = vdwg.mxu0
        %4480 = vmatpush.bf16.msra.mxu0 %v2912
        %4481 = vmatpush.bf16.msra.mxu0 %v2888
        %4482 = vmatpush.bf16.msra.mxu0 %v2864
        %4483 = vmatpush.bf16.msra.mxu0 %v2840
        %4484 = vmatpush.bf16.msra.mxu0 %v2816
        %4485 = vmatpush.bf16.msra.mxu0 %v2792
        %4486 = vmatpush.bf16.msra.mxu0 %v2768
        %4487 = vmatpush.bf16.msra.mxu0 %v2744
        %4488 = vmatmul.bf16.gmra.mxu0 %v358
        %v4489 = vpop.f32.mrf.mxu0
        %v4490 = vadd.f32 %v968, %v4489
        %v4491 = vpop.f32.mrf.mxu0
        %v4492 = vadd.f32 %v968, %v4491
        %4493 = vmatmul.bf16.gmra.mxu0 %v361
        %v4494 = vpop.f32.mrf.mxu0
        %v4495 = vadd.f32 %v968, %v4494
        %v4496 = vpop.f32.mrf.mxu0
        %v4497 = vadd.f32 %v968, %v4496
        %4498 = vmatmul.bf16.gmra.mxu0 %v364
        %v4499 = vpop.f32.mrf.mxu0
        %v4500 = vadd.f32 %v968, %v4499
        %v4501 = vpop.f32.mrf.mxu0
        %v4502 = vadd.f32 %v968, %v4501
        %4503 = vmatmul.bf16.gmra.mxu0 %v367
        %v4504 = vpop.f32.mrf.mxu0
        %v4505 = vadd.f32 %v968, %v4504
        %v4506 = vpop.f32.mrf.mxu0
        %v4507 = vadd.f32 %v968, %v4506
        %4508 = vmatmul.bf16.gmra.mxu0 %v370
        %v4509 = vpop.f32.mrf.mxu0
        %v4510 = vadd.f32 %v968, %v4509
        %v4511 = vpop.f32.mrf.mxu0
        %v4512 = vadd.f32 %v968, %v4511
        %4513 = vmatmul.bf16.gmra.mxu0 %v373
        %v4514 = vpop.f32.mrf.mxu0
        %v4515 = vadd.f32 %v968, %v4514
        %v4516 = vpop.f32.mrf.mxu0
        %v4517 = vadd.f32 %v968, %v4516
        %4518 = vmatmul.bf16.gmra.mxu0 %v376
        %v4519 = vpop.f32.mrf.mxu0
        %v4520 = vadd.f32 %v968, %v4519
        %v4521 = vpop.f32.mrf.mxu0
        %v4522 = vadd.f32 %v968, %v4521
        %4523 = vmatmul.bf16.gmra.mxu0 %v379
        %v4524 = vpop.f32.mrf.mxu0
        %v4525 = vadd.f32 %v968, %v4524
        %v4526 = vpop.f32.mrf.mxu0
        %v4527 = vadd.f32 %v968, %v4526
        %4528 = vdwg.mxu0
        %4529 = vmatpush.bf16.msra.mxu0 %v3104
        %4530 = vmatpush.bf16.msra.mxu0 %v3080
        %4531 = vmatpush.bf16.msra.mxu0 %v3056
        %4532 = vmatpush.bf16.msra.mxu0 %v3032
        %4533 = vmatpush.bf16.msra.mxu0 %v3008
        %4534 = vmatpush.bf16.msra.mxu0 %v2984
        %4535 = vmatpush.bf16.msra.mxu0 %v2960
        %4536 = vmatpush.bf16.msra.mxu0 %v2936
        %4537 = vmatmul.bf16.gmra.mxu0 %v359
        %v4538 = vpop.f32.mrf.mxu0
        %v4539 = vadd.f32 %v4490, %v4538
        %v4540 = vpop.f32.mrf.mxu0
        %v4541 = vadd.f32 %v4492, %v4540
        %4542 = vmatmul.bf16.gmra.mxu0 %v362
        %v4543 = vpop.f32.mrf.mxu0
        %v4544 = vadd.f32 %v4495, %v4543
        %v4545 = vpop.f32.mrf.mxu0
        %v4546 = vadd.f32 %v4497, %v4545
        %4547 = vmatmul.bf16.gmra.mxu0 %v365
        %v4548 = vpop.f32.mrf.mxu0
        %v4549 = vadd.f32 %v4500, %v4548
        %v4550 = vpop.f32.mrf.mxu0
        %v4551 = vadd.f32 %v4502, %v4550
        %4552 = vmatmul.bf16.gmra.mxu0 %v368
        %v4553 = vpop.f32.mrf.mxu0
        %v4554 = vadd.f32 %v4505, %v4553
        %v4555 = vpop.f32.mrf.mxu0
        %v4556 = vadd.f32 %v4507, %v4555
        %4557 = vmatmul.bf16.gmra.mxu0 %v371
        %v4558 = vpop.f32.mrf.mxu0
        %v4559 = vadd.f32 %v4510, %v4558
        %v4560 = vpop.f32.mrf.mxu0
        %v4561 = vadd.f32 %v4512, %v4560
        %4562 = vmatmul.bf16.gmra.mxu0 %v374
        %v4563 = vpop.f32.mrf.mxu0
        %v4564 = vadd.f32 %v4515, %v4563
        %v4565 = vpop.f32.mrf.mxu0
        %v4566 = vadd.f32 %v4517, %v4565
        %4567 = vmatmul.bf16.gmra.mxu0 %v377
        %v4568 = vpop.f32.mrf.mxu0
        %v4569 = vadd.f32 %v4520, %v4568
        %v4570 = vpop.f32.mrf.mxu0
        %v4571 = vadd.f32 %v4522, %v4570
        %4572 = vmatmul.bf16.gmra.mxu0 %v380
        %v4573 = vpop.f32.mrf.mxu0
        %v4574 = vadd.f32 %v4525, %v4573
        %v4575 = vpop.f32.mrf.mxu0
        %v4576 = vadd.f32 %v4527, %v4575
        %4577 = vdwg.mxu0
        %4578 = vmatpush.bf16.msra.mxu0 %v3296
        %4579 = vmatpush.bf16.msra.mxu0 %v3272
        %4580 = vmatpush.bf16.msra.mxu0 %v3248
        %4581 = vmatpush.bf16.msra.mxu0 %v3224
        %4582 = vmatpush.bf16.msra.mxu0 %v3200
        %4583 = vmatpush.bf16.msra.mxu0 %v3176
        %4584 = vmatpush.bf16.msra.mxu0 %v3152
        %4585 = vmatpush.bf16.msra.mxu0 %v3128
        %4586 = vmatmul.bf16.gmra.mxu0 %v360
        %v4587 = vpop.f32.mrf.mxu0
        %v4588 = vadd.f32 %v4539, %v4587
        %v4589 = vpop.f32.mrf.mxu0
        %v4590 = vadd.f32 %v4541, %v4589
        %4591 = vmatmul.bf16.gmra.mxu0 %v363
        %v4592 = vpop.f32.mrf.mxu0
        %v4593 = vadd.f32 %v4544, %v4592
        %v4594 = vpop.f32.mrf.mxu0
        %v4595 = vadd.f32 %v4546, %v4594
        %4596 = vmatmul.bf16.gmra.mxu0 %v366
        %v4597 = vpop.f32.mrf.mxu0
        %v4598 = vadd.f32 %v4549, %v4597
        %v4599 = vpop.f32.mrf.mxu0
        %v4600 = vadd.f32 %v4551, %v4599
        %4601 = vmatmul.bf16.gmra.mxu0 %v369
        %v4602 = vpop.f32.mrf.mxu0
        %v4603 = vadd.f32 %v4554, %v4602
        %v4604 = vpop.f32.mrf.mxu0
        %v4605 = vadd.f32 %v4556, %v4604
        %4606 = vmatmul.bf16.gmra.mxu0 %v372
        %v4607 = vpop.f32.mrf.mxu0
        %v4608 = vadd.f32 %v4559, %v4607
        %v4609 = vpop.f32.mrf.mxu0
        %v4610 = vadd.f32 %v4561, %v4609
        %4611 = vmatmul.bf16.gmra.mxu0 %v375
        %v4612 = vpop.f32.mrf.mxu0
        %v4613 = vadd.f32 %v4564, %v4612
        %v4614 = vpop.f32.mrf.mxu0
        %v4615 = vadd.f32 %v4566, %v4614
        %4616 = vmatmul.bf16.gmra.mxu0 %v378
        %v4617 = vpop.f32.mrf.mxu0
        %v4618 = vadd.f32 %v4569, %v4617
        %v4619 = vpop.f32.mrf.mxu0
        %v4620 = vadd.f32 %v4571, %v4619
        %4621 = vmatmul.bf16.gmra.mxu0 %v381
        %v4622 = vpop.f32.mrf.mxu0
        %v4623 = vadd.f32 %v4574, %v4622
        %v4624 = vpop.f32.mrf.mxu0
        %v4625 = vadd.f32 %v4576, %v4624
        %4626 = vdwg.mxu0
        %4627 = vmatpush.bf16.msra.mxu0 %v2913
        %4628 = vmatpush.bf16.msra.mxu0 %v2889
        %4629 = vmatpush.bf16.msra.mxu0 %v2865
        %4630 = vmatpush.bf16.msra.mxu0 %v2841
        %4631 = vmatpush.bf16.msra.mxu0 %v2817
        %4632 = vmatpush.bf16.msra.mxu0 %v2793
        %4633 = vmatpush.bf16.msra.mxu0 %v2769
        %4634 = vmatpush.bf16.msra.mxu0 %v2745
        %4635 = vmatmul.bf16.gmra.mxu0 %v358
        %v4636 = vpop.f32.mrf.mxu0
        %v4637 = vadd.f32 %v969, %v4636
        %v4638 = vpop.f32.mrf.mxu0
        %v4639 = vadd.f32 %v969, %v4638
        %4640 = vmatmul.bf16.gmra.mxu0 %v361
        %v4641 = vpop.f32.mrf.mxu0
        %v4642 = vadd.f32 %v969, %v4641
        %v4643 = vpop.f32.mrf.mxu0
        %v4644 = vadd.f32 %v969, %v4643
        %4645 = vmatmul.bf16.gmra.mxu0 %v364
        %v4646 = vpop.f32.mrf.mxu0
        %v4647 = vadd.f32 %v969, %v4646
        %v4648 = vpop.f32.mrf.mxu0
        %v4649 = vadd.f32 %v969, %v4648
        %4650 = vmatmul.bf16.gmra.mxu0 %v367
        %v4651 = vpop.f32.mrf.mxu0
        %v4652 = vadd.f32 %v969, %v4651
        %v4653 = vpop.f32.mrf.mxu0
        %v4654 = vadd.f32 %v969, %v4653
        %4655 = vmatmul.bf16.gmra.mxu0 %v370
        %v4656 = vpop.f32.mrf.mxu0
        %v4657 = vadd.f32 %v969, %v4656
        %v4658 = vpop.f32.mrf.mxu0
        %v4659 = vadd.f32 %v969, %v4658
        %4660 = vmatmul.bf16.gmra.mxu0 %v373
        %v4661 = vpop.f32.mrf.mxu0
        %v4662 = vadd.f32 %v969, %v4661
        %v4663 = vpop.f32.mrf.mxu0
        %v4664 = vadd.f32 %v969, %v4663
        %4665 = vmatmul.bf16.gmra.mxu0 %v376
        %v4666 = vpop.f32.mrf.mxu0
        %v4667 = vadd.f32 %v969, %v4666
        %v4668 = vpop.f32.mrf.mxu0
        %v4669 = vadd.f32 %v969, %v4668
        %4670 = vmatmul.bf16.gmra.mxu0 %v379
        %v4671 = vpop.f32.mrf.mxu0
        %v4672 = vadd.f32 %v969, %v4671
        %v4673 = vpop.f32.mrf.mxu0
        %v4674 = vadd.f32 %v969, %v4673
        %4675 = vdwg.mxu0
        %4676 = vmatpush.bf16.msra.mxu0 %v3105
        %4677 = vmatpush.bf16.msra.mxu0 %v3081
        %4678 = vmatpush.bf16.msra.mxu0 %v3057
        %4679 = vmatpush.bf16.msra.mxu0 %v3033
        %4680 = vmatpush.bf16.msra.mxu0 %v3009
        %4681 = vmatpush.bf16.msra.mxu0 %v2985
        %4682 = vmatpush.bf16.msra.mxu0 %v2961
        %4683 = vmatpush.bf16.msra.mxu0 %v2937
        %4684 = vmatmul.bf16.gmra.mxu0 %v359
        %v4685 = vpop.f32.mrf.mxu0
        %v4686 = vadd.f32 %v4637, %v4685
        %v4687 = vpop.f32.mrf.mxu0
        %v4688 = vadd.f32 %v4639, %v4687
        %4689 = vmatmul.bf16.gmra.mxu0 %v362
        %v4690 = vpop.f32.mrf.mxu0
        %v4691 = vadd.f32 %v4642, %v4690
        %v4692 = vpop.f32.mrf.mxu0
        %v4693 = vadd.f32 %v4644, %v4692
        %4694 = vmatmul.bf16.gmra.mxu0 %v365
        %v4695 = vpop.f32.mrf.mxu0
        %v4696 = vadd.f32 %v4647, %v4695
        %v4697 = vpop.f32.mrf.mxu0
        %v4698 = vadd.f32 %v4649, %v4697
        %4699 = vmatmul.bf16.gmra.mxu0 %v368
        %v4700 = vpop.f32.mrf.mxu0
        %v4701 = vadd.f32 %v4652, %v4700
        %v4702 = vpop.f32.mrf.mxu0
        %v4703 = vadd.f32 %v4654, %v4702
        %4704 = vmatmul.bf16.gmra.mxu0 %v371
        %v4705 = vpop.f32.mrf.mxu0
        %v4706 = vadd.f32 %v4657, %v4705
        %v4707 = vpop.f32.mrf.mxu0
        %v4708 = vadd.f32 %v4659, %v4707
        %4709 = vmatmul.bf16.gmra.mxu0 %v374
        %v4710 = vpop.f32.mrf.mxu0
        %v4711 = vadd.f32 %v4662, %v4710
        %v4712 = vpop.f32.mrf.mxu0
        %v4713 = vadd.f32 %v4664, %v4712
        %4714 = vmatmul.bf16.gmra.mxu0 %v377
        %v4715 = vpop.f32.mrf.mxu0
        %v4716 = vadd.f32 %v4667, %v4715
        %v4717 = vpop.f32.mrf.mxu0
        %v4718 = vadd.f32 %v4669, %v4717
        %4719 = vmatmul.bf16.gmra.mxu0 %v380
        %v4720 = vpop.f32.mrf.mxu0
        %v4721 = vadd.f32 %v4672, %v4720
        %v4722 = vpop.f32.mrf.mxu0
        %v4723 = vadd.f32 %v4674, %v4722
        %4724 = vdwg.mxu0
        %4725 = vmatpush.bf16.msra.mxu0 %v3297
        %4726 = vmatpush.bf16.msra.mxu0 %v3273
        %4727 = vmatpush.bf16.msra.mxu0 %v3249
        %4728 = vmatpush.bf16.msra.mxu0 %v3225
        %4729 = vmatpush.bf16.msra.mxu0 %v3201
        %4730 = vmatpush.bf16.msra.mxu0 %v3177
        %4731 = vmatpush.bf16.msra.mxu0 %v3153
        %4732 = vmatpush.bf16.msra.mxu0 %v3129
        %4733 = vmatmul.bf16.gmra.mxu0 %v360
        %v4734 = vpop.f32.mrf.mxu0
        %v4735 = vadd.f32 %v4686, %v4734
        %v4736 = vpop.f32.mrf.mxu0
        %v4737 = vadd.f32 %v4688, %v4736
        %4738 = vmatmul.bf16.gmra.mxu0 %v363
        %v4739 = vpop.f32.mrf.mxu0
        %v4740 = vadd.f32 %v4691, %v4739
        %v4741 = vpop.f32.mrf.mxu0
        %v4742 = vadd.f32 %v4693, %v4741
        %4743 = vmatmul.bf16.gmra.mxu0 %v366
        %v4744 = vpop.f32.mrf.mxu0
        %v4745 = vadd.f32 %v4696, %v4744
        %v4746 = vpop.f32.mrf.mxu0
        %v4747 = vadd.f32 %v4698, %v4746
        %4748 = vmatmul.bf16.gmra.mxu0 %v369
        %v4749 = vpop.f32.mrf.mxu0
        %v4750 = vadd.f32 %v4701, %v4749
        %v4751 = vpop.f32.mrf.mxu0
        %v4752 = vadd.f32 %v4703, %v4751
        %4753 = vmatmul.bf16.gmra.mxu0 %v372
        %v4754 = vpop.f32.mrf.mxu0
        %v4755 = vadd.f32 %v4706, %v4754
        %v4756 = vpop.f32.mrf.mxu0
        %v4757 = vadd.f32 %v4708, %v4756
        %4758 = vmatmul.bf16.gmra.mxu0 %v375
        %v4759 = vpop.f32.mrf.mxu0
        %v4760 = vadd.f32 %v4711, %v4759
        %v4761 = vpop.f32.mrf.mxu0
        %v4762 = vadd.f32 %v4713, %v4761
        %4763 = vmatmul.bf16.gmra.mxu0 %v378
        %v4764 = vpop.f32.mrf.mxu0
        %v4765 = vadd.f32 %v4716, %v4764
        %v4766 = vpop.f32.mrf.mxu0
        %v4767 = vadd.f32 %v4718, %v4766
        %4768 = vmatmul.bf16.gmra.mxu0 %v381
        %v4769 = vpop.f32.mrf.mxu0
        %v4770 = vadd.f32 %v4721, %v4769
        %v4771 = vpop.f32.mrf.mxu0
        %v4772 = vadd.f32 %v4723, %v4771
        %4773 = vdwg.mxu0
        %4774 = vmatpush.bf16.msra.mxu0 %v2914
        %4775 = vmatpush.bf16.msra.mxu0 %v2890
        %4776 = vmatpush.bf16.msra.mxu0 %v2866
        %4777 = vmatpush.bf16.msra.mxu0 %v2842
        %4778 = vmatpush.bf16.msra.mxu0 %v2818
        %4779 = vmatpush.bf16.msra.mxu0 %v2794
        %4780 = vmatpush.bf16.msra.mxu0 %v2770
        %4781 = vmatpush.bf16.msra.mxu0 %v2746
        %4782 = vmatmul.bf16.gmra.mxu0 %v358
        %v4783 = vpop.f32.mrf.mxu0
        %v4784 = vadd.f32 %v970, %v4783
        %v4785 = vpop.f32.mrf.mxu0
        %v4786 = vadd.f32 %v970, %v4785
        %4787 = vmatmul.bf16.gmra.mxu0 %v361
        %v4788 = vpop.f32.mrf.mxu0
        %v4789 = vadd.f32 %v970, %v4788
        %v4790 = vpop.f32.mrf.mxu0
        %v4791 = vadd.f32 %v970, %v4790
        %4792 = vmatmul.bf16.gmra.mxu0 %v364
        %v4793 = vpop.f32.mrf.mxu0
        %v4794 = vadd.f32 %v970, %v4793
        %v4795 = vpop.f32.mrf.mxu0
        %v4796 = vadd.f32 %v970, %v4795
        %4797 = vmatmul.bf16.gmra.mxu0 %v367
        %v4798 = vpop.f32.mrf.mxu0
        %v4799 = vadd.f32 %v970, %v4798
        %v4800 = vpop.f32.mrf.mxu0
        %v4801 = vadd.f32 %v970, %v4800
        %4802 = vmatmul.bf16.gmra.mxu0 %v370
        %v4803 = vpop.f32.mrf.mxu0
        %v4804 = vadd.f32 %v970, %v4803
        %v4805 = vpop.f32.mrf.mxu0
        %v4806 = vadd.f32 %v970, %v4805
        %4807 = vmatmul.bf16.gmra.mxu0 %v373
        %v4808 = vpop.f32.mrf.mxu0
        %v4809 = vadd.f32 %v970, %v4808
        %v4810 = vpop.f32.mrf.mxu0
        %v4811 = vadd.f32 %v970, %v4810
        %4812 = vmatmul.bf16.gmra.mxu0 %v376
        %v4813 = vpop.f32.mrf.mxu0
        %v4814 = vadd.f32 %v970, %v4813
        %v4815 = vpop.f32.mrf.mxu0
        %v4816 = vadd.f32 %v970, %v4815
        %4817 = vmatmul.bf16.gmra.mxu0 %v379
        %v4818 = vpop.f32.mrf.mxu0
        %v4819 = vadd.f32 %v970, %v4818
        %v4820 = vpop.f32.mrf.mxu0
        %v4821 = vadd.f32 %v970, %v4820
        %4822 = vdwg.mxu0
        %4823 = vmatpush.bf16.msra.mxu0 %v3106
        %4824 = vmatpush.bf16.msra.mxu0 %v3082
        %4825 = vmatpush.bf16.msra.mxu0 %v3058
        %4826 = vmatpush.bf16.msra.mxu0 %v3034
        %4827 = vmatpush.bf16.msra.mxu0 %v3010
        %4828 = vmatpush.bf16.msra.mxu0 %v2986
        %4829 = vmatpush.bf16.msra.mxu0 %v2962
        %4830 = vmatpush.bf16.msra.mxu0 %v2938
        %4831 = vmatmul.bf16.gmra.mxu0 %v359
        %v4832 = vpop.f32.mrf.mxu0
        %v4833 = vadd.f32 %v4784, %v4832
        %v4834 = vpop.f32.mrf.mxu0
        %v4835 = vadd.f32 %v4786, %v4834
        %4836 = vmatmul.bf16.gmra.mxu0 %v362
        %v4837 = vpop.f32.mrf.mxu0
        %v4838 = vadd.f32 %v4789, %v4837
        %v4839 = vpop.f32.mrf.mxu0
        %v4840 = vadd.f32 %v4791, %v4839
        %4841 = vmatmul.bf16.gmra.mxu0 %v365
        %v4842 = vpop.f32.mrf.mxu0
        %v4843 = vadd.f32 %v4794, %v4842
        %v4844 = vpop.f32.mrf.mxu0
        %v4845 = vadd.f32 %v4796, %v4844
        %4846 = vmatmul.bf16.gmra.mxu0 %v368
        %v4847 = vpop.f32.mrf.mxu0
        %v4848 = vadd.f32 %v4799, %v4847
        %v4849 = vpop.f32.mrf.mxu0
        %v4850 = vadd.f32 %v4801, %v4849
        %4851 = vmatmul.bf16.gmra.mxu0 %v371
        %v4852 = vpop.f32.mrf.mxu0
        %v4853 = vadd.f32 %v4804, %v4852
        %v4854 = vpop.f32.mrf.mxu0
        %v4855 = vadd.f32 %v4806, %v4854
        %4856 = vmatmul.bf16.gmra.mxu0 %v374
        %v4857 = vpop.f32.mrf.mxu0
        %v4858 = vadd.f32 %v4809, %v4857
        %v4859 = vpop.f32.mrf.mxu0
        %v4860 = vadd.f32 %v4811, %v4859
        %4861 = vmatmul.bf16.gmra.mxu0 %v377
        %v4862 = vpop.f32.mrf.mxu0
        %v4863 = vadd.f32 %v4814, %v4862
        %v4864 = vpop.f32.mrf.mxu0
        %v4865 = vadd.f32 %v4816, %v4864
        %4866 = vmatmul.bf16.gmra.mxu0 %v380
        %v4867 = vpop.f32.mrf.mxu0
        %v4868 = vadd.f32 %v4819, %v4867
        %v4869 = vpop.f32.mrf.mxu0
        %v4870 = vadd.f32 %v4821, %v4869
        %4871 = vdwg.mxu0
        %4872 = vmatpush.bf16.msra.mxu0 %v3298
        %4873 = vmatpush.bf16.msra.mxu0 %v3274
        %4874 = vmatpush.bf16.msra.mxu0 %v3250
        %4875 = vmatpush.bf16.msra.mxu0 %v3226
        %4876 = vmatpush.bf16.msra.mxu0 %v3202
        %4877 = vmatpush.bf16.msra.mxu0 %v3178
        %4878 = vmatpush.bf16.msra.mxu0 %v3154
        %4879 = vmatpush.bf16.msra.mxu0 %v3130
        %4880 = vmatmul.bf16.gmra.mxu0 %v360
        %v4881 = vpop.f32.mrf.mxu0
        %v4882 = vadd.f32 %v4833, %v4881
        %v4883 = vpop.f32.mrf.mxu0
        %v4884 = vadd.f32 %v4835, %v4883
        %4885 = vmatmul.bf16.gmra.mxu0 %v363
        %v4886 = vpop.f32.mrf.mxu0
        %v4887 = vadd.f32 %v4838, %v4886
        %v4888 = vpop.f32.mrf.mxu0
        %v4889 = vadd.f32 %v4840, %v4888
        %4890 = vmatmul.bf16.gmra.mxu0 %v366
        %v4891 = vpop.f32.mrf.mxu0
        %v4892 = vadd.f32 %v4843, %v4891
        %v4893 = vpop.f32.mrf.mxu0
        %v4894 = vadd.f32 %v4845, %v4893
        %4895 = vmatmul.bf16.gmra.mxu0 %v369
        %v4896 = vpop.f32.mrf.mxu0
        %v4897 = vadd.f32 %v4848, %v4896
        %v4898 = vpop.f32.mrf.mxu0
        %v4899 = vadd.f32 %v4850, %v4898
        %4900 = vmatmul.bf16.gmra.mxu0 %v372
        %v4901 = vpop.f32.mrf.mxu0
        %v4902 = vadd.f32 %v4853, %v4901
        %v4903 = vpop.f32.mrf.mxu0
        %v4904 = vadd.f32 %v4855, %v4903
        %4905 = vmatmul.bf16.gmra.mxu0 %v375
        %v4906 = vpop.f32.mrf.mxu0
        %v4907 = vadd.f32 %v4858, %v4906
        %v4908 = vpop.f32.mrf.mxu0
        %v4909 = vadd.f32 %v4860, %v4908
        %4910 = vmatmul.bf16.gmra.mxu0 %v378
        %v4911 = vpop.f32.mrf.mxu0
        %v4912 = vadd.f32 %v4863, %v4911
        %v4913 = vpop.f32.mrf.mxu0
        %v4914 = vadd.f32 %v4865, %v4913
        %4915 = vmatmul.bf16.gmra.mxu0 %v381
        %v4916 = vpop.f32.mrf.mxu0
        %v4917 = vadd.f32 %v4868, %v4916
        %v4918 = vpop.f32.mrf.mxu0
        %v4919 = vadd.f32 %v4870, %v4918
        %4920 = vdwg.mxu0
        %4921 = vmatpush.bf16.msra.mxu0 %v2915
        %4922 = vmatpush.bf16.msra.mxu0 %v2891
        %4923 = vmatpush.bf16.msra.mxu0 %v2867
        %4924 = vmatpush.bf16.msra.mxu0 %v2843
        %4925 = vmatpush.bf16.msra.mxu0 %v2819
        %4926 = vmatpush.bf16.msra.mxu0 %v2795
        %4927 = vmatpush.bf16.msra.mxu0 %v2771
        %4928 = vmatpush.bf16.msra.mxu0 %v2747
        %4929 = vmatmul.bf16.gmra.mxu0 %v358
        %v4930 = vpop.f32.mrf.mxu0
        %v4931 = vadd.f32 %v971, %v4930
        %v4932 = vpop.f32.mrf.mxu0
        %v4933 = vadd.f32 %v971, %v4932
        %4934 = vmatmul.bf16.gmra.mxu0 %v361
        %v4935 = vpop.f32.mrf.mxu0
        %v4936 = vadd.f32 %v971, %v4935
        %v4937 = vpop.f32.mrf.mxu0
        %v4938 = vadd.f32 %v971, %v4937
        %4939 = vmatmul.bf16.gmra.mxu0 %v364
        %v4940 = vpop.f32.mrf.mxu0
        %v4941 = vadd.f32 %v971, %v4940
        %v4942 = vpop.f32.mrf.mxu0
        %v4943 = vadd.f32 %v971, %v4942
        %4944 = vmatmul.bf16.gmra.mxu0 %v367
        %v4945 = vpop.f32.mrf.mxu0
        %v4946 = vadd.f32 %v971, %v4945
        %v4947 = vpop.f32.mrf.mxu0
        %v4948 = vadd.f32 %v971, %v4947
        %4949 = vmatmul.bf16.gmra.mxu0 %v370
        %v4950 = vpop.f32.mrf.mxu0
        %v4951 = vadd.f32 %v971, %v4950
        %v4952 = vpop.f32.mrf.mxu0
        %v4953 = vadd.f32 %v971, %v4952
        %4954 = vmatmul.bf16.gmra.mxu0 %v373
        %v4955 = vpop.f32.mrf.mxu0
        %v4956 = vadd.f32 %v971, %v4955
        %v4957 = vpop.f32.mrf.mxu0
        %v4958 = vadd.f32 %v971, %v4957
        %4959 = vmatmul.bf16.gmra.mxu0 %v376
        %v4960 = vpop.f32.mrf.mxu0
        %v4961 = vadd.f32 %v971, %v4960
        %v4962 = vpop.f32.mrf.mxu0
        %v4963 = vadd.f32 %v971, %v4962
        %4964 = vmatmul.bf16.gmra.mxu0 %v379
        %v4965 = vpop.f32.mrf.mxu0
        %v4966 = vadd.f32 %v971, %v4965
        %v4967 = vpop.f32.mrf.mxu0
        %v4968 = vadd.f32 %v971, %v4967
        %4969 = vdwg.mxu0
        %4970 = vmatpush.bf16.msra.mxu0 %v3107
        %4971 = vmatpush.bf16.msra.mxu0 %v3083
        %4972 = vmatpush.bf16.msra.mxu0 %v3059
        %4973 = vmatpush.bf16.msra.mxu0 %v3035
        %4974 = vmatpush.bf16.msra.mxu0 %v3011
        %4975 = vmatpush.bf16.msra.mxu0 %v2987
        %4976 = vmatpush.bf16.msra.mxu0 %v2963
        %4977 = vmatpush.bf16.msra.mxu0 %v2939
        %4978 = vmatmul.bf16.gmra.mxu0 %v359
        %v4979 = vpop.f32.mrf.mxu0
        %v4980 = vadd.f32 %v4931, %v4979
        %v4981 = vpop.f32.mrf.mxu0
        %v4982 = vadd.f32 %v4933, %v4981
        %4983 = vmatmul.bf16.gmra.mxu0 %v362
        %v4984 = vpop.f32.mrf.mxu0
        %v4985 = vadd.f32 %v4936, %v4984
        %v4986 = vpop.f32.mrf.mxu0
        %v4987 = vadd.f32 %v4938, %v4986
        %4988 = vmatmul.bf16.gmra.mxu0 %v365
        %v4989 = vpop.f32.mrf.mxu0
        %v4990 = vadd.f32 %v4941, %v4989
        %v4991 = vpop.f32.mrf.mxu0
        %v4992 = vadd.f32 %v4943, %v4991
        %4993 = vmatmul.bf16.gmra.mxu0 %v368
        %v4994 = vpop.f32.mrf.mxu0
        %v4995 = vadd.f32 %v4946, %v4994
        %v4996 = vpop.f32.mrf.mxu0
        %v4997 = vadd.f32 %v4948, %v4996
        %4998 = vmatmul.bf16.gmra.mxu0 %v371
        %v4999 = vpop.f32.mrf.mxu0
        %v5000 = vadd.f32 %v4951, %v4999
        %v5001 = vpop.f32.mrf.mxu0
        %v5002 = vadd.f32 %v4953, %v5001
        %5003 = vmatmul.bf16.gmra.mxu0 %v374
        %v5004 = vpop.f32.mrf.mxu0
        %v5005 = vadd.f32 %v4956, %v5004
        %v5006 = vpop.f32.mrf.mxu0
        %v5007 = vadd.f32 %v4958, %v5006
        %5008 = vmatmul.bf16.gmra.mxu0 %v377
        %v5009 = vpop.f32.mrf.mxu0
        %v5010 = vadd.f32 %v4961, %v5009
        %v5011 = vpop.f32.mrf.mxu0
        %v5012 = vadd.f32 %v4963, %v5011
        %5013 = vmatmul.bf16.gmra.mxu0 %v380
        %v5014 = vpop.f32.mrf.mxu0
        %v5015 = vadd.f32 %v4966, %v5014
        %v5016 = vpop.f32.mrf.mxu0
        %v5017 = vadd.f32 %v4968, %v5016
        %5018 = vdwg.mxu0
        %5019 = vmatpush.bf16.msra.mxu0 %v3299
        %5020 = vmatpush.bf16.msra.mxu0 %v3275
        %5021 = vmatpush.bf16.msra.mxu0 %v3251
        %5022 = vmatpush.bf16.msra.mxu0 %v3227
        %5023 = vmatpush.bf16.msra.mxu0 %v3203
        %5024 = vmatpush.bf16.msra.mxu0 %v3179
        %5025 = vmatpush.bf16.msra.mxu0 %v3155
        %5026 = vmatpush.bf16.msra.mxu0 %v3131
        %5027 = vmatmul.bf16.gmra.mxu0 %v360
        %v5028 = vpop.f32.mrf.mxu0
        %v5029 = vadd.f32 %v4980, %v5028
        %v5030 = vpop.f32.mrf.mxu0
        %v5031 = vadd.f32 %v4982, %v5030
        %5032 = vmatmul.bf16.gmra.mxu0 %v363
        %v5033 = vpop.f32.mrf.mxu0
        %v5034 = vadd.f32 %v4985, %v5033
        %v5035 = vpop.f32.mrf.mxu0
        %v5036 = vadd.f32 %v4987, %v5035
        %5037 = vmatmul.bf16.gmra.mxu0 %v366
        %v5038 = vpop.f32.mrf.mxu0
        %v5039 = vadd.f32 %v4990, %v5038
        %v5040 = vpop.f32.mrf.mxu0
        %v5041 = vadd.f32 %v4992, %v5040
        %5042 = vmatmul.bf16.gmra.mxu0 %v369
        %v5043 = vpop.f32.mrf.mxu0
        %v5044 = vadd.f32 %v4995, %v5043
        %v5045 = vpop.f32.mrf.mxu0
        %v5046 = vadd.f32 %v4997, %v5045
        %5047 = vmatmul.bf16.gmra.mxu0 %v372
        %v5048 = vpop.f32.mrf.mxu0
        %v5049 = vadd.f32 %v5000, %v5048
        %v5050 = vpop.f32.mrf.mxu0
        %v5051 = vadd.f32 %v5002, %v5050
        %5052 = vmatmul.bf16.gmra.mxu0 %v375
        %v5053 = vpop.f32.mrf.mxu0
        %v5054 = vadd.f32 %v5005, %v5053
        %v5055 = vpop.f32.mrf.mxu0
        %v5056 = vadd.f32 %v5007, %v5055
        %5057 = vmatmul.bf16.gmra.mxu0 %v378
        %v5058 = vpop.f32.mrf.mxu0
        %v5059 = vadd.f32 %v5010, %v5058
        %v5060 = vpop.f32.mrf.mxu0
        %v5061 = vadd.f32 %v5012, %v5060
        %5062 = vmatmul.bf16.gmra.mxu0 %v381
        %v5063 = vpop.f32.mrf.mxu0
        %v5064 = vadd.f32 %v5015, %v5063
        %v5065 = vpop.f32.mrf.mxu0
        %v5066 = vadd.f32 %v5017, %v5065
        %5067 = vdwg.mxu0
        %5068 = vmatpush.bf16.msra.mxu0 %v2916
        %5069 = vmatpush.bf16.msra.mxu0 %v2892
        %5070 = vmatpush.bf16.msra.mxu0 %v2868
        %5071 = vmatpush.bf16.msra.mxu0 %v2844
        %5072 = vmatpush.bf16.msra.mxu0 %v2820
        %5073 = vmatpush.bf16.msra.mxu0 %v2796
        %5074 = vmatpush.bf16.msra.mxu0 %v2772
        %5075 = vmatpush.bf16.msra.mxu0 %v2748
        %5076 = vmatmul.bf16.gmra.mxu0 %v358
        %v5077 = vpop.f32.mrf.mxu0
        %v5078 = vadd.f32 %v972, %v5077
        %v5079 = vpop.f32.mrf.mxu0
        %v5080 = vadd.f32 %v972, %v5079
        %5081 = vmatmul.bf16.gmra.mxu0 %v361
        %v5082 = vpop.f32.mrf.mxu0
        %v5083 = vadd.f32 %v972, %v5082
        %v5084 = vpop.f32.mrf.mxu0
        %v5085 = vadd.f32 %v972, %v5084
        %5086 = vmatmul.bf16.gmra.mxu0 %v364
        %v5087 = vpop.f32.mrf.mxu0
        %v5088 = vadd.f32 %v972, %v5087
        %v5089 = vpop.f32.mrf.mxu0
        %v5090 = vadd.f32 %v972, %v5089
        %5091 = vmatmul.bf16.gmra.mxu0 %v367
        %v5092 = vpop.f32.mrf.mxu0
        %v5093 = vadd.f32 %v972, %v5092
        %v5094 = vpop.f32.mrf.mxu0
        %v5095 = vadd.f32 %v972, %v5094
        %5096 = vmatmul.bf16.gmra.mxu0 %v370
        %v5097 = vpop.f32.mrf.mxu0
        %v5098 = vadd.f32 %v972, %v5097
        %v5099 = vpop.f32.mrf.mxu0
        %v5100 = vadd.f32 %v972, %v5099
        %5101 = vmatmul.bf16.gmra.mxu0 %v373
        %v5102 = vpop.f32.mrf.mxu0
        %v5103 = vadd.f32 %v972, %v5102
        %v5104 = vpop.f32.mrf.mxu0
        %v5105 = vadd.f32 %v972, %v5104
        %5106 = vmatmul.bf16.gmra.mxu0 %v376
        %v5107 = vpop.f32.mrf.mxu0
        %v5108 = vadd.f32 %v972, %v5107
        %v5109 = vpop.f32.mrf.mxu0
        %v5110 = vadd.f32 %v972, %v5109
        %5111 = vmatmul.bf16.gmra.mxu0 %v379
        %v5112 = vpop.f32.mrf.mxu0
        %v5113 = vadd.f32 %v972, %v5112
        %v5114 = vpop.f32.mrf.mxu0
        %v5115 = vadd.f32 %v972, %v5114
        %5116 = vdwg.mxu0
        %5117 = vmatpush.bf16.msra.mxu0 %v3108
        %5118 = vmatpush.bf16.msra.mxu0 %v3084
        %5119 = vmatpush.bf16.msra.mxu0 %v3060
        %5120 = vmatpush.bf16.msra.mxu0 %v3036
        %5121 = vmatpush.bf16.msra.mxu0 %v3012
        %5122 = vmatpush.bf16.msra.mxu0 %v2988
        %5123 = vmatpush.bf16.msra.mxu0 %v2964
        %5124 = vmatpush.bf16.msra.mxu0 %v2940
        %5125 = vmatmul.bf16.gmra.mxu0 %v359
        %v5126 = vpop.f32.mrf.mxu0
        %v5127 = vadd.f32 %v5078, %v5126
        %v5128 = vpop.f32.mrf.mxu0
        %v5129 = vadd.f32 %v5080, %v5128
        %5130 = vmatmul.bf16.gmra.mxu0 %v362
        %v5131 = vpop.f32.mrf.mxu0
        %v5132 = vadd.f32 %v5083, %v5131
        %v5133 = vpop.f32.mrf.mxu0
        %v5134 = vadd.f32 %v5085, %v5133
        %5135 = vmatmul.bf16.gmra.mxu0 %v365
        %v5136 = vpop.f32.mrf.mxu0
        %v5137 = vadd.f32 %v5088, %v5136
        %v5138 = vpop.f32.mrf.mxu0
        %v5139 = vadd.f32 %v5090, %v5138
        %5140 = vmatmul.bf16.gmra.mxu0 %v368
        %v5141 = vpop.f32.mrf.mxu0
        %v5142 = vadd.f32 %v5093, %v5141
        %v5143 = vpop.f32.mrf.mxu0
        %v5144 = vadd.f32 %v5095, %v5143
        %5145 = vmatmul.bf16.gmra.mxu0 %v371
        %v5146 = vpop.f32.mrf.mxu0
        %v5147 = vadd.f32 %v5098, %v5146
        %v5148 = vpop.f32.mrf.mxu0
        %v5149 = vadd.f32 %v5100, %v5148
        %5150 = vmatmul.bf16.gmra.mxu0 %v374
        %v5151 = vpop.f32.mrf.mxu0
        %v5152 = vadd.f32 %v5103, %v5151
        %v5153 = vpop.f32.mrf.mxu0
        %v5154 = vadd.f32 %v5105, %v5153
        %5155 = vmatmul.bf16.gmra.mxu0 %v377
        %v5156 = vpop.f32.mrf.mxu0
        %v5157 = vadd.f32 %v5108, %v5156
        %v5158 = vpop.f32.mrf.mxu0
        %v5159 = vadd.f32 %v5110, %v5158
        %5160 = vmatmul.bf16.gmra.mxu0 %v380
        %v5161 = vpop.f32.mrf.mxu0
        %v5162 = vadd.f32 %v5113, %v5161
        %v5163 = vpop.f32.mrf.mxu0
        %v5164 = vadd.f32 %v5115, %v5163
        %5165 = vdwg.mxu0
        %5166 = vmatpush.bf16.msra.mxu0 %v3300
        %5167 = vmatpush.bf16.msra.mxu0 %v3276
        %5168 = vmatpush.bf16.msra.mxu0 %v3252
        %5169 = vmatpush.bf16.msra.mxu0 %v3228
        %5170 = vmatpush.bf16.msra.mxu0 %v3204
        %5171 = vmatpush.bf16.msra.mxu0 %v3180
        %5172 = vmatpush.bf16.msra.mxu0 %v3156
        %5173 = vmatpush.bf16.msra.mxu0 %v3132
        %5174 = vmatmul.bf16.gmra.mxu0 %v360
        %v5175 = vpop.f32.mrf.mxu0
        %v5176 = vadd.f32 %v5127, %v5175
        %v5177 = vpop.f32.mrf.mxu0
        %v5178 = vadd.f32 %v5129, %v5177
        %5179 = vmatmul.bf16.gmra.mxu0 %v363
        %v5180 = vpop.f32.mrf.mxu0
        %v5181 = vadd.f32 %v5132, %v5180
        %v5182 = vpop.f32.mrf.mxu0
        %v5183 = vadd.f32 %v5134, %v5182
        %5184 = vmatmul.bf16.gmra.mxu0 %v366
        %v5185 = vpop.f32.mrf.mxu0
        %v5186 = vadd.f32 %v5137, %v5185
        %v5187 = vpop.f32.mrf.mxu0
        %v5188 = vadd.f32 %v5139, %v5187
        %5189 = vmatmul.bf16.gmra.mxu0 %v369
        %v5190 = vpop.f32.mrf.mxu0
        %v5191 = vadd.f32 %v5142, %v5190
        %v5192 = vpop.f32.mrf.mxu0
        %v5193 = vadd.f32 %v5144, %v5192
        %5194 = vmatmul.bf16.gmra.mxu0 %v372
        %v5195 = vpop.f32.mrf.mxu0
        %v5196 = vadd.f32 %v5147, %v5195
        %v5197 = vpop.f32.mrf.mxu0
        %v5198 = vadd.f32 %v5149, %v5197
        %5199 = vmatmul.bf16.gmra.mxu0 %v375
        %v5200 = vpop.f32.mrf.mxu0
        %v5201 = vadd.f32 %v5152, %v5200
        %v5202 = vpop.f32.mrf.mxu0
        %v5203 = vadd.f32 %v5154, %v5202
        %5204 = vmatmul.bf16.gmra.mxu0 %v378
        %v5205 = vpop.f32.mrf.mxu0
        %v5206 = vadd.f32 %v5157, %v5205
        %v5207 = vpop.f32.mrf.mxu0
        %v5208 = vadd.f32 %v5159, %v5207
        %5209 = vmatmul.bf16.gmra.mxu0 %v381
        %v5210 = vpop.f32.mrf.mxu0
        %v5211 = vadd.f32 %v5162, %v5210
        %v5212 = vpop.f32.mrf.mxu0
        %v5213 = vadd.f32 %v5164, %v5212
        %5214 = vdwg.mxu0
        %5215 = vmatpush.bf16.msra.mxu0 %v2917
        %5216 = vmatpush.bf16.msra.mxu0 %v2893
        %5217 = vmatpush.bf16.msra.mxu0 %v2869
        %5218 = vmatpush.bf16.msra.mxu0 %v2845
        %5219 = vmatpush.bf16.msra.mxu0 %v2821
        %5220 = vmatpush.bf16.msra.mxu0 %v2797
        %5221 = vmatpush.bf16.msra.mxu0 %v2773
        %5222 = vmatpush.bf16.msra.mxu0 %v2749
        %5223 = vmatmul.bf16.gmra.mxu0 %v358
        %v5224 = vpop.f32.mrf.mxu0
        %v5225 = vadd.f32 %v973, %v5224
        %v5226 = vpop.f32.mrf.mxu0
        %v5227 = vadd.f32 %v973, %v5226
        %5228 = vmatmul.bf16.gmra.mxu0 %v361
        %v5229 = vpop.f32.mrf.mxu0
        %v5230 = vadd.f32 %v973, %v5229
        %v5231 = vpop.f32.mrf.mxu0
        %v5232 = vadd.f32 %v973, %v5231
        %5233 = vmatmul.bf16.gmra.mxu0 %v364
        %v5234 = vpop.f32.mrf.mxu0
        %v5235 = vadd.f32 %v973, %v5234
        %v5236 = vpop.f32.mrf.mxu0
        %v5237 = vadd.f32 %v973, %v5236
        %5238 = vmatmul.bf16.gmra.mxu0 %v367
        %v5239 = vpop.f32.mrf.mxu0
        %v5240 = vadd.f32 %v973, %v5239
        %v5241 = vpop.f32.mrf.mxu0
        %v5242 = vadd.f32 %v973, %v5241
        %5243 = vmatmul.bf16.gmra.mxu0 %v370
        %v5244 = vpop.f32.mrf.mxu0
        %v5245 = vadd.f32 %v973, %v5244
        %v5246 = vpop.f32.mrf.mxu0
        %v5247 = vadd.f32 %v973, %v5246
        %5248 = vmatmul.bf16.gmra.mxu0 %v373
        %v5249 = vpop.f32.mrf.mxu0
        %v5250 = vadd.f32 %v973, %v5249
        %v5251 = vpop.f32.mrf.mxu0
        %v5252 = vadd.f32 %v973, %v5251
        %5253 = vmatmul.bf16.gmra.mxu0 %v376
        %v5254 = vpop.f32.mrf.mxu0
        %v5255 = vadd.f32 %v973, %v5254
        %v5256 = vpop.f32.mrf.mxu0
        %v5257 = vadd.f32 %v973, %v5256
        %5258 = vmatmul.bf16.gmra.mxu0 %v379
        %v5259 = vpop.f32.mrf.mxu0
        %v5260 = vadd.f32 %v973, %v5259
        %v5261 = vpop.f32.mrf.mxu0
        %v5262 = vadd.f32 %v973, %v5261
        %5263 = vdwg.mxu0
        %5264 = vmatpush.bf16.msra.mxu0 %v3109
        %5265 = vmatpush.bf16.msra.mxu0 %v3085
        %5266 = vmatpush.bf16.msra.mxu0 %v3061
        %5267 = vmatpush.bf16.msra.mxu0 %v3037
        %5268 = vmatpush.bf16.msra.mxu0 %v3013
        %5269 = vmatpush.bf16.msra.mxu0 %v2989
        %5270 = vmatpush.bf16.msra.mxu0 %v2965
        %5271 = vmatpush.bf16.msra.mxu0 %v2941
        %5272 = vmatmul.bf16.gmra.mxu0 %v359
        %v5273 = vpop.f32.mrf.mxu0
        %v5274 = vadd.f32 %v5225, %v5273
        %v5275 = vpop.f32.mrf.mxu0
        %v5276 = vadd.f32 %v5227, %v5275
        %5277 = vmatmul.bf16.gmra.mxu0 %v362
        %v5278 = vpop.f32.mrf.mxu0
        %v5279 = vadd.f32 %v5230, %v5278
        %v5280 = vpop.f32.mrf.mxu0
        %v5281 = vadd.f32 %v5232, %v5280
        %5282 = vmatmul.bf16.gmra.mxu0 %v365
        %v5283 = vpop.f32.mrf.mxu0
        %v5284 = vadd.f32 %v5235, %v5283
        %v5285 = vpop.f32.mrf.mxu0
        %v5286 = vadd.f32 %v5237, %v5285
        %5287 = vmatmul.bf16.gmra.mxu0 %v368
        %v5288 = vpop.f32.mrf.mxu0
        %v5289 = vadd.f32 %v5240, %v5288
        %v5290 = vpop.f32.mrf.mxu0
        %v5291 = vadd.f32 %v5242, %v5290
        %5292 = vmatmul.bf16.gmra.mxu0 %v371
        %v5293 = vpop.f32.mrf.mxu0
        %v5294 = vadd.f32 %v5245, %v5293
        %v5295 = vpop.f32.mrf.mxu0
        %v5296 = vadd.f32 %v5247, %v5295
        %5297 = vmatmul.bf16.gmra.mxu0 %v374
        %v5298 = vpop.f32.mrf.mxu0
        %v5299 = vadd.f32 %v5250, %v5298
        %v5300 = vpop.f32.mrf.mxu0
        %v5301 = vadd.f32 %v5252, %v5300
        %5302 = vmatmul.bf16.gmra.mxu0 %v377
        %v5303 = vpop.f32.mrf.mxu0
        %v5304 = vadd.f32 %v5255, %v5303
        %v5305 = vpop.f32.mrf.mxu0
        %v5306 = vadd.f32 %v5257, %v5305
        %5307 = vmatmul.bf16.gmra.mxu0 %v380
        %v5308 = vpop.f32.mrf.mxu0
        %v5309 = vadd.f32 %v5260, %v5308
        %v5310 = vpop.f32.mrf.mxu0
        %v5311 = vadd.f32 %v5262, %v5310
        %5312 = vdwg.mxu0
        %5313 = vmatpush.bf16.msra.mxu0 %v3301
        %5314 = vmatpush.bf16.msra.mxu0 %v3277
        %5315 = vmatpush.bf16.msra.mxu0 %v3253
        %5316 = vmatpush.bf16.msra.mxu0 %v3229
        %5317 = vmatpush.bf16.msra.mxu0 %v3205
        %5318 = vmatpush.bf16.msra.mxu0 %v3181
        %5319 = vmatpush.bf16.msra.mxu0 %v3157
        %5320 = vmatpush.bf16.msra.mxu0 %v3133
        %5321 = vmatmul.bf16.gmra.mxu0 %v360
        %v5322 = vpop.f32.mrf.mxu0
        %v5323 = vadd.f32 %v5274, %v5322
        %v5324 = vpop.f32.mrf.mxu0
        %v5325 = vadd.f32 %v5276, %v5324
        %5326 = vmatmul.bf16.gmra.mxu0 %v363
        %v5327 = vpop.f32.mrf.mxu0
        %v5328 = vadd.f32 %v5279, %v5327
        %v5329 = vpop.f32.mrf.mxu0
        %v5330 = vadd.f32 %v5281, %v5329
        %5331 = vmatmul.bf16.gmra.mxu0 %v366
        %v5332 = vpop.f32.mrf.mxu0
        %v5333 = vadd.f32 %v5284, %v5332
        %v5334 = vpop.f32.mrf.mxu0
        %v5335 = vadd.f32 %v5286, %v5334
        %5336 = vmatmul.bf16.gmra.mxu0 %v369
        %v5337 = vpop.f32.mrf.mxu0
        %v5338 = vadd.f32 %v5289, %v5337
        %v5339 = vpop.f32.mrf.mxu0
        %v5340 = vadd.f32 %v5291, %v5339
        %5341 = vmatmul.bf16.gmra.mxu0 %v372
        %v5342 = vpop.f32.mrf.mxu0
        %v5343 = vadd.f32 %v5294, %v5342
        %v5344 = vpop.f32.mrf.mxu0
        %v5345 = vadd.f32 %v5296, %v5344
        %5346 = vmatmul.bf16.gmra.mxu0 %v375
        %v5347 = vpop.f32.mrf.mxu0
        %v5348 = vadd.f32 %v5299, %v5347
        %v5349 = vpop.f32.mrf.mxu0
        %v5350 = vadd.f32 %v5301, %v5349
        %5351 = vmatmul.bf16.gmra.mxu0 %v378
        %v5352 = vpop.f32.mrf.mxu0
        %v5353 = vadd.f32 %v5304, %v5352
        %v5354 = vpop.f32.mrf.mxu0
        %v5355 = vadd.f32 %v5306, %v5354
        %5356 = vmatmul.bf16.gmra.mxu0 %v381
        %v5357 = vpop.f32.mrf.mxu0
        %v5358 = vadd.f32 %v5309, %v5357
        %v5359 = vpop.f32.mrf.mxu0
        %v5360 = vadd.f32 %v5311, %v5359
        %5361 = vdwg.mxu0
        %5362 = vmatpush.bf16.msra.mxu0 %v2918
        %5363 = vmatpush.bf16.msra.mxu0 %v2894
        %5364 = vmatpush.bf16.msra.mxu0 %v2870
        %5365 = vmatpush.bf16.msra.mxu0 %v2846
        %5366 = vmatpush.bf16.msra.mxu0 %v2822
        %5367 = vmatpush.bf16.msra.mxu0 %v2798
        %5368 = vmatpush.bf16.msra.mxu0 %v2774
        %5369 = vmatpush.bf16.msra.mxu0 %v2750
        %5370 = vmatmul.bf16.gmra.mxu0 %v358
        %v5371 = vpop.f32.mrf.mxu0
        %v5372 = vadd.f32 %v974, %v5371
        %v5373 = vpop.f32.mrf.mxu0
        %v5374 = vadd.f32 %v974, %v5373
        %5375 = vmatmul.bf16.gmra.mxu0 %v361
        %v5376 = vpop.f32.mrf.mxu0
        %v5377 = vadd.f32 %v974, %v5376
        %v5378 = vpop.f32.mrf.mxu0
        %v5379 = vadd.f32 %v974, %v5378
        %5380 = vmatmul.bf16.gmra.mxu0 %v364
        %v5381 = vpop.f32.mrf.mxu0
        %v5382 = vadd.f32 %v974, %v5381
        %v5383 = vpop.f32.mrf.mxu0
        %v5384 = vadd.f32 %v974, %v5383
        %5385 = vmatmul.bf16.gmra.mxu0 %v367
        %v5386 = vpop.f32.mrf.mxu0
        %v5387 = vadd.f32 %v974, %v5386
        %v5388 = vpop.f32.mrf.mxu0
        %v5389 = vadd.f32 %v974, %v5388
        %5390 = vmatmul.bf16.gmra.mxu0 %v370
        %v5391 = vpop.f32.mrf.mxu0
        %v5392 = vadd.f32 %v974, %v5391
        %v5393 = vpop.f32.mrf.mxu0
        %v5394 = vadd.f32 %v974, %v5393
        %5395 = vmatmul.bf16.gmra.mxu0 %v373
        %v5396 = vpop.f32.mrf.mxu0
        %v5397 = vadd.f32 %v974, %v5396
        %v5398 = vpop.f32.mrf.mxu0
        %v5399 = vadd.f32 %v974, %v5398
        %5400 = vmatmul.bf16.gmra.mxu0 %v376
        %v5401 = vpop.f32.mrf.mxu0
        %v5402 = vadd.f32 %v974, %v5401
        %v5403 = vpop.f32.mrf.mxu0
        %v5404 = vadd.f32 %v974, %v5403
        %5405 = vmatmul.bf16.gmra.mxu0 %v379
        %v5406 = vpop.f32.mrf.mxu0
        %v5407 = vadd.f32 %v974, %v5406
        %v5408 = vpop.f32.mrf.mxu0
        %v5409 = vadd.f32 %v974, %v5408
        %5410 = vdwg.mxu0
        %5411 = vmatpush.bf16.msra.mxu0 %v3110
        %5412 = vmatpush.bf16.msra.mxu0 %v3086
        %5413 = vmatpush.bf16.msra.mxu0 %v3062
        %5414 = vmatpush.bf16.msra.mxu0 %v3038
        %5415 = vmatpush.bf16.msra.mxu0 %v3014
        %5416 = vmatpush.bf16.msra.mxu0 %v2990
        %5417 = vmatpush.bf16.msra.mxu0 %v2966
        %5418 = vmatpush.bf16.msra.mxu0 %v2942
        %5419 = vmatmul.bf16.gmra.mxu0 %v359
        %v5420 = vpop.f32.mrf.mxu0
        %v5421 = vadd.f32 %v5372, %v5420
        %v5422 = vpop.f32.mrf.mxu0
        %v5423 = vadd.f32 %v5374, %v5422
        %5424 = vmatmul.bf16.gmra.mxu0 %v362
        %v5425 = vpop.f32.mrf.mxu0
        %v5426 = vadd.f32 %v5377, %v5425
        %v5427 = vpop.f32.mrf.mxu0
        %v5428 = vadd.f32 %v5379, %v5427
        %5429 = vmatmul.bf16.gmra.mxu0 %v365
        %v5430 = vpop.f32.mrf.mxu0
        %v5431 = vadd.f32 %v5382, %v5430
        %v5432 = vpop.f32.mrf.mxu0
        %v5433 = vadd.f32 %v5384, %v5432
        %5434 = vmatmul.bf16.gmra.mxu0 %v368
        %v5435 = vpop.f32.mrf.mxu0
        %v5436 = vadd.f32 %v5387, %v5435
        %v5437 = vpop.f32.mrf.mxu0
        %v5438 = vadd.f32 %v5389, %v5437
        %5439 = vmatmul.bf16.gmra.mxu0 %v371
        %v5440 = vpop.f32.mrf.mxu0
        %v5441 = vadd.f32 %v5392, %v5440
        %v5442 = vpop.f32.mrf.mxu0
        %v5443 = vadd.f32 %v5394, %v5442
        %5444 = vmatmul.bf16.gmra.mxu0 %v374
        %v5445 = vpop.f32.mrf.mxu0
        %v5446 = vadd.f32 %v5397, %v5445
        %v5447 = vpop.f32.mrf.mxu0
        %v5448 = vadd.f32 %v5399, %v5447
        %5449 = vmatmul.bf16.gmra.mxu0 %v377
        %v5450 = vpop.f32.mrf.mxu0
        %v5451 = vadd.f32 %v5402, %v5450
        %v5452 = vpop.f32.mrf.mxu0
        %v5453 = vadd.f32 %v5404, %v5452
        %5454 = vmatmul.bf16.gmra.mxu0 %v380
        %v5455 = vpop.f32.mrf.mxu0
        %v5456 = vadd.f32 %v5407, %v5455
        %v5457 = vpop.f32.mrf.mxu0
        %v5458 = vadd.f32 %v5409, %v5457
        %5459 = vdwg.mxu0
        %5460 = vmatpush.bf16.msra.mxu0 %v3302
        %5461 = vmatpush.bf16.msra.mxu0 %v3278
        %5462 = vmatpush.bf16.msra.mxu0 %v3254
        %5463 = vmatpush.bf16.msra.mxu0 %v3230
        %5464 = vmatpush.bf16.msra.mxu0 %v3206
        %5465 = vmatpush.bf16.msra.mxu0 %v3182
        %5466 = vmatpush.bf16.msra.mxu0 %v3158
        %5467 = vmatpush.bf16.msra.mxu0 %v3134
        %5468 = vmatmul.bf16.gmra.mxu0 %v360
        %v5469 = vpop.f32.mrf.mxu0
        %v5470 = vadd.f32 %v5421, %v5469
        %v5471 = vpop.f32.mrf.mxu0
        %v5472 = vadd.f32 %v5423, %v5471
        %5473 = vmatmul.bf16.gmra.mxu0 %v363
        %v5474 = vpop.f32.mrf.mxu0
        %v5475 = vadd.f32 %v5426, %v5474
        %v5476 = vpop.f32.mrf.mxu0
        %v5477 = vadd.f32 %v5428, %v5476
        %5478 = vmatmul.bf16.gmra.mxu0 %v366
        %v5479 = vpop.f32.mrf.mxu0
        %v5480 = vadd.f32 %v5431, %v5479
        %v5481 = vpop.f32.mrf.mxu0
        %v5482 = vadd.f32 %v5433, %v5481
        %5483 = vmatmul.bf16.gmra.mxu0 %v369
        %v5484 = vpop.f32.mrf.mxu0
        %v5485 = vadd.f32 %v5436, %v5484
        %v5486 = vpop.f32.mrf.mxu0
        %v5487 = vadd.f32 %v5438, %v5486
        %5488 = vmatmul.bf16.gmra.mxu0 %v372
        %v5489 = vpop.f32.mrf.mxu0
        %v5490 = vadd.f32 %v5441, %v5489
        %v5491 = vpop.f32.mrf.mxu0
        %v5492 = vadd.f32 %v5443, %v5491
        %5493 = vmatmul.bf16.gmra.mxu0 %v375
        %v5494 = vpop.f32.mrf.mxu0
        %v5495 = vadd.f32 %v5446, %v5494
        %v5496 = vpop.f32.mrf.mxu0
        %v5497 = vadd.f32 %v5448, %v5496
        %5498 = vmatmul.bf16.gmra.mxu0 %v378
        %v5499 = vpop.f32.mrf.mxu0
        %v5500 = vadd.f32 %v5451, %v5499
        %v5501 = vpop.f32.mrf.mxu0
        %v5502 = vadd.f32 %v5453, %v5501
        %5503 = vmatmul.bf16.gmra.mxu0 %v381
        %v5504 = vpop.f32.mrf.mxu0
        %v5505 = vadd.f32 %v5456, %v5504
        %v5506 = vpop.f32.mrf.mxu0
        %v5507 = vadd.f32 %v5458, %v5506
        %5508 = vdwg.mxu0
        %5509 = vmatpush.bf16.msra.mxu0 %v2919
        %5510 = vmatpush.bf16.msra.mxu0 %v2895
        %5511 = vmatpush.bf16.msra.mxu0 %v2871
        %5512 = vmatpush.bf16.msra.mxu0 %v2847
        %5513 = vmatpush.bf16.msra.mxu0 %v2823
        %5514 = vmatpush.bf16.msra.mxu0 %v2799
        %5515 = vmatpush.bf16.msra.mxu0 %v2775
        %5516 = vmatpush.bf16.msra.mxu0 %v2751
        %5517 = vmatmul.bf16.gmra.mxu0 %v358
        %v5518 = vpop.f32.mrf.mxu0
        %v5519 = vadd.f32 %v975, %v5518
        %v5520 = vpop.f32.mrf.mxu0
        %v5521 = vadd.f32 %v975, %v5520
        %5522 = vmatmul.bf16.gmra.mxu0 %v361
        %v5523 = vpop.f32.mrf.mxu0
        %v5524 = vadd.f32 %v975, %v5523
        %v5525 = vpop.f32.mrf.mxu0
        %v5526 = vadd.f32 %v975, %v5525
        %5527 = vmatmul.bf16.gmra.mxu0 %v364
        %v5528 = vpop.f32.mrf.mxu0
        %v5529 = vadd.f32 %v975, %v5528
        %v5530 = vpop.f32.mrf.mxu0
        %v5531 = vadd.f32 %v975, %v5530
        %5532 = vmatmul.bf16.gmra.mxu0 %v367
        %v5533 = vpop.f32.mrf.mxu0
        %v5534 = vadd.f32 %v975, %v5533
        %v5535 = vpop.f32.mrf.mxu0
        %v5536 = vadd.f32 %v975, %v5535
        %5537 = vmatmul.bf16.gmra.mxu0 %v370
        %v5538 = vpop.f32.mrf.mxu0
        %v5539 = vadd.f32 %v975, %v5538
        %v5540 = vpop.f32.mrf.mxu0
        %v5541 = vadd.f32 %v975, %v5540
        %5542 = vmatmul.bf16.gmra.mxu0 %v373
        %v5543 = vpop.f32.mrf.mxu0
        %v5544 = vadd.f32 %v975, %v5543
        %v5545 = vpop.f32.mrf.mxu0
        %v5546 = vadd.f32 %v975, %v5545
        %5547 = vmatmul.bf16.gmra.mxu0 %v376
        %v5548 = vpop.f32.mrf.mxu0
        %v5549 = vadd.f32 %v975, %v5548
        %v5550 = vpop.f32.mrf.mxu0
        %v5551 = vadd.f32 %v975, %v5550
        %5552 = vmatmul.bf16.gmra.mxu0 %v379
        %v5553 = vpop.f32.mrf.mxu0
        %v5554 = vadd.f32 %v975, %v5553
        %v5555 = vpop.f32.mrf.mxu0
        %v5556 = vadd.f32 %v975, %v5555
        %5557 = vdwg.mxu0
        %5558 = vmatpush.bf16.msra.mxu0 %v3111
        %5559 = vmatpush.bf16.msra.mxu0 %v3087
        %5560 = vmatpush.bf16.msra.mxu0 %v3063
        %5561 = vmatpush.bf16.msra.mxu0 %v3039
        %5562 = vmatpush.bf16.msra.mxu0 %v3015
        %5563 = vmatpush.bf16.msra.mxu0 %v2991
        %5564 = vmatpush.bf16.msra.mxu0 %v2967
        %5565 = vmatpush.bf16.msra.mxu0 %v2943
        %5566 = vmatmul.bf16.gmra.mxu0 %v359
        %v5567 = vpop.f32.mrf.mxu0
        %v5568 = vadd.f32 %v5519, %v5567
        %v5569 = vpop.f32.mrf.mxu0
        %v5570 = vadd.f32 %v5521, %v5569
        %5571 = vmatmul.bf16.gmra.mxu0 %v362
        %v5572 = vpop.f32.mrf.mxu0
        %v5573 = vadd.f32 %v5524, %v5572
        %v5574 = vpop.f32.mrf.mxu0
        %v5575 = vadd.f32 %v5526, %v5574
        %5576 = vmatmul.bf16.gmra.mxu0 %v365
        %v5577 = vpop.f32.mrf.mxu0
        %v5578 = vadd.f32 %v5529, %v5577
        %v5579 = vpop.f32.mrf.mxu0
        %v5580 = vadd.f32 %v5531, %v5579
        %5581 = vmatmul.bf16.gmra.mxu0 %v368
        %v5582 = vpop.f32.mrf.mxu0
        %v5583 = vadd.f32 %v5534, %v5582
        %v5584 = vpop.f32.mrf.mxu0
        %v5585 = vadd.f32 %v5536, %v5584
        %5586 = vmatmul.bf16.gmra.mxu0 %v371
        %v5587 = vpop.f32.mrf.mxu0
        %v5588 = vadd.f32 %v5539, %v5587
        %v5589 = vpop.f32.mrf.mxu0
        %v5590 = vadd.f32 %v5541, %v5589
        %5591 = vmatmul.bf16.gmra.mxu0 %v374
        %v5592 = vpop.f32.mrf.mxu0
        %v5593 = vadd.f32 %v5544, %v5592
        %v5594 = vpop.f32.mrf.mxu0
        %v5595 = vadd.f32 %v5546, %v5594
        %5596 = vmatmul.bf16.gmra.mxu0 %v377
        %v5597 = vpop.f32.mrf.mxu0
        %v5598 = vadd.f32 %v5549, %v5597
        %v5599 = vpop.f32.mrf.mxu0
        %v5600 = vadd.f32 %v5551, %v5599
        %5601 = vmatmul.bf16.gmra.mxu0 %v380
        %v5602 = vpop.f32.mrf.mxu0
        %v5603 = vadd.f32 %v5554, %v5602
        %v5604 = vpop.f32.mrf.mxu0
        %v5605 = vadd.f32 %v5556, %v5604
        %5606 = vdwg.mxu0
        %5607 = vmatpush.bf16.msra.mxu0 %v3303
        %5608 = vmatpush.bf16.msra.mxu0 %v3279
        %5609 = vmatpush.bf16.msra.mxu0 %v3255
        %5610 = vmatpush.bf16.msra.mxu0 %v3231
        %5611 = vmatpush.bf16.msra.mxu0 %v3207
        %5612 = vmatpush.bf16.msra.mxu0 %v3183
        %5613 = vmatpush.bf16.msra.mxu0 %v3159
        %5614 = vmatpush.bf16.msra.mxu0 %v3135
        %5615 = vmatmul.bf16.gmra.mxu0 %v360
        %v5616 = vpop.f32.mrf.mxu0
        %v5617 = vadd.f32 %v5568, %v5616
        %v5618 = vpop.f32.mrf.mxu0
        %v5619 = vadd.f32 %v5570, %v5618
        %5620 = vmatmul.bf16.gmra.mxu0 %v363
        %v5621 = vpop.f32.mrf.mxu0
        %v5622 = vadd.f32 %v5573, %v5621
        %v5623 = vpop.f32.mrf.mxu0
        %v5624 = vadd.f32 %v5575, %v5623
        %5625 = vmatmul.bf16.gmra.mxu0 %v366
        %v5626 = vpop.f32.mrf.mxu0
        %v5627 = vadd.f32 %v5578, %v5626
        %v5628 = vpop.f32.mrf.mxu0
        %v5629 = vadd.f32 %v5580, %v5628
        %5630 = vmatmul.bf16.gmra.mxu0 %v369
        %v5631 = vpop.f32.mrf.mxu0
        %v5632 = vadd.f32 %v5583, %v5631
        %v5633 = vpop.f32.mrf.mxu0
        %v5634 = vadd.f32 %v5585, %v5633
        %5635 = vmatmul.bf16.gmra.mxu0 %v372
        %v5636 = vpop.f32.mrf.mxu0
        %v5637 = vadd.f32 %v5588, %v5636
        %v5638 = vpop.f32.mrf.mxu0
        %v5639 = vadd.f32 %v5590, %v5638
        %5640 = vmatmul.bf16.gmra.mxu0 %v375
        %v5641 = vpop.f32.mrf.mxu0
        %v5642 = vadd.f32 %v5593, %v5641
        %v5643 = vpop.f32.mrf.mxu0
        %v5644 = vadd.f32 %v5595, %v5643
        %5645 = vmatmul.bf16.gmra.mxu0 %v378
        %v5646 = vpop.f32.mrf.mxu0
        %v5647 = vadd.f32 %v5598, %v5646
        %v5648 = vpop.f32.mrf.mxu0
        %v5649 = vadd.f32 %v5600, %v5648
        %5650 = vmatmul.bf16.gmra.mxu0 %v381
        %v5651 = vpop.f32.mrf.mxu0
        %v5652 = vadd.f32 %v5603, %v5651
        %v5653 = vpop.f32.mrf.mxu0
        %v5654 = vadd.f32 %v5605, %v5653
        %5655 = vdwg.mxu0
        %5656 = vmatpush.bf16.msra.mxu0 %v2920
        %5657 = vmatpush.bf16.msra.mxu0 %v2896
        %5658 = vmatpush.bf16.msra.mxu0 %v2872
        %5659 = vmatpush.bf16.msra.mxu0 %v2848
        %5660 = vmatpush.bf16.msra.mxu0 %v2824
        %5661 = vmatpush.bf16.msra.mxu0 %v2800
        %5662 = vmatpush.bf16.msra.mxu0 %v2776
        %5663 = vmatpush.bf16.msra.mxu0 %v2752
        %5664 = vmatmul.bf16.gmra.mxu0 %v358
        %v5665 = vpop.f32.mrf.mxu0
        %v5666 = vadd.f32 %v976, %v5665
        %v5667 = vpop.f32.mrf.mxu0
        %v5668 = vadd.f32 %v976, %v5667
        %5669 = vmatmul.bf16.gmra.mxu0 %v361
        %v5670 = vpop.f32.mrf.mxu0
        %v5671 = vadd.f32 %v976, %v5670
        %v5672 = vpop.f32.mrf.mxu0
        %v5673 = vadd.f32 %v976, %v5672
        %5674 = vmatmul.bf16.gmra.mxu0 %v364
        %v5675 = vpop.f32.mrf.mxu0
        %v5676 = vadd.f32 %v976, %v5675
        %v5677 = vpop.f32.mrf.mxu0
        %v5678 = vadd.f32 %v976, %v5677
        %5679 = vmatmul.bf16.gmra.mxu0 %v367
        %v5680 = vpop.f32.mrf.mxu0
        %v5681 = vadd.f32 %v976, %v5680
        %v5682 = vpop.f32.mrf.mxu0
        %v5683 = vadd.f32 %v976, %v5682
        %5684 = vmatmul.bf16.gmra.mxu0 %v370
        %v5685 = vpop.f32.mrf.mxu0
        %v5686 = vadd.f32 %v976, %v5685
        %v5687 = vpop.f32.mrf.mxu0
        %v5688 = vadd.f32 %v976, %v5687
        %5689 = vmatmul.bf16.gmra.mxu0 %v373
        %v5690 = vpop.f32.mrf.mxu0
        %v5691 = vadd.f32 %v976, %v5690
        %v5692 = vpop.f32.mrf.mxu0
        %v5693 = vadd.f32 %v976, %v5692
        %5694 = vmatmul.bf16.gmra.mxu0 %v376
        %v5695 = vpop.f32.mrf.mxu0
        %v5696 = vadd.f32 %v976, %v5695
        %v5697 = vpop.f32.mrf.mxu0
        %v5698 = vadd.f32 %v976, %v5697
        %5699 = vmatmul.bf16.gmra.mxu0 %v379
        %v5700 = vpop.f32.mrf.mxu0
        %v5701 = vadd.f32 %v976, %v5700
        %v5702 = vpop.f32.mrf.mxu0
        %v5703 = vadd.f32 %v976, %v5702
        %5704 = vdwg.mxu0
        %5705 = vmatpush.bf16.msra.mxu0 %v3112
        %5706 = vmatpush.bf16.msra.mxu0 %v3088
        %5707 = vmatpush.bf16.msra.mxu0 %v3064
        %5708 = vmatpush.bf16.msra.mxu0 %v3040
        %5709 = vmatpush.bf16.msra.mxu0 %v3016
        %5710 = vmatpush.bf16.msra.mxu0 %v2992
        %5711 = vmatpush.bf16.msra.mxu0 %v2968
        %5712 = vmatpush.bf16.msra.mxu0 %v2944
        %5713 = vmatmul.bf16.gmra.mxu0 %v359
        %v5714 = vpop.f32.mrf.mxu0
        %v5715 = vadd.f32 %v5666, %v5714
        %v5716 = vpop.f32.mrf.mxu0
        %v5717 = vadd.f32 %v5668, %v5716
        %5718 = vmatmul.bf16.gmra.mxu0 %v362
        %v5719 = vpop.f32.mrf.mxu0
        %v5720 = vadd.f32 %v5671, %v5719
        %v5721 = vpop.f32.mrf.mxu0
        %v5722 = vadd.f32 %v5673, %v5721
        %5723 = vmatmul.bf16.gmra.mxu0 %v365
        %v5724 = vpop.f32.mrf.mxu0
        %v5725 = vadd.f32 %v5676, %v5724
        %v5726 = vpop.f32.mrf.mxu0
        %v5727 = vadd.f32 %v5678, %v5726
        %5728 = vmatmul.bf16.gmra.mxu0 %v368
        %v5729 = vpop.f32.mrf.mxu0
        %v5730 = vadd.f32 %v5681, %v5729
        %v5731 = vpop.f32.mrf.mxu0
        %v5732 = vadd.f32 %v5683, %v5731
        %5733 = vmatmul.bf16.gmra.mxu0 %v371
        %v5734 = vpop.f32.mrf.mxu0
        %v5735 = vadd.f32 %v5686, %v5734
        %v5736 = vpop.f32.mrf.mxu0
        %v5737 = vadd.f32 %v5688, %v5736
        %5738 = vmatmul.bf16.gmra.mxu0 %v374
        %v5739 = vpop.f32.mrf.mxu0
        %v5740 = vadd.f32 %v5691, %v5739
        %v5741 = vpop.f32.mrf.mxu0
        %v5742 = vadd.f32 %v5693, %v5741
        %5743 = vmatmul.bf16.gmra.mxu0 %v377
        %v5744 = vpop.f32.mrf.mxu0
        %v5745 = vadd.f32 %v5696, %v5744
        %v5746 = vpop.f32.mrf.mxu0
        %v5747 = vadd.f32 %v5698, %v5746
        %5748 = vmatmul.bf16.gmra.mxu0 %v380
        %v5749 = vpop.f32.mrf.mxu0
        %v5750 = vadd.f32 %v5701, %v5749
        %v5751 = vpop.f32.mrf.mxu0
        %v5752 = vadd.f32 %v5703, %v5751
        %5753 = vdwg.mxu0
        %5754 = vmatpush.bf16.msra.mxu0 %v3304
        %5755 = vmatpush.bf16.msra.mxu0 %v3280
        %5756 = vmatpush.bf16.msra.mxu0 %v3256
        %5757 = vmatpush.bf16.msra.mxu0 %v3232
        %5758 = vmatpush.bf16.msra.mxu0 %v3208
        %5759 = vmatpush.bf16.msra.mxu0 %v3184
        %5760 = vmatpush.bf16.msra.mxu0 %v3160
        %5761 = vmatpush.bf16.msra.mxu0 %v3136
        %5762 = vmatmul.bf16.gmra.mxu0 %v360
        %v5763 = vpop.f32.mrf.mxu0
        %v5764 = vadd.f32 %v5715, %v5763
        %v5765 = vpop.f32.mrf.mxu0
        %v5766 = vadd.f32 %v5717, %v5765
        %5767 = vmatmul.bf16.gmra.mxu0 %v363
        %v5768 = vpop.f32.mrf.mxu0
        %v5769 = vadd.f32 %v5720, %v5768
        %v5770 = vpop.f32.mrf.mxu0
        %v5771 = vadd.f32 %v5722, %v5770
        %5772 = vmatmul.bf16.gmra.mxu0 %v366
        %v5773 = vpop.f32.mrf.mxu0
        %v5774 = vadd.f32 %v5725, %v5773
        %v5775 = vpop.f32.mrf.mxu0
        %v5776 = vadd.f32 %v5727, %v5775
        %5777 = vmatmul.bf16.gmra.mxu0 %v369
        %v5778 = vpop.f32.mrf.mxu0
        %v5779 = vadd.f32 %v5730, %v5778
        %v5780 = vpop.f32.mrf.mxu0
        %v5781 = vadd.f32 %v5732, %v5780
        %5782 = vmatmul.bf16.gmra.mxu0 %v372
        %v5783 = vpop.f32.mrf.mxu0
        %v5784 = vadd.f32 %v5735, %v5783
        %v5785 = vpop.f32.mrf.mxu0
        %v5786 = vadd.f32 %v5737, %v5785
        %5787 = vmatmul.bf16.gmra.mxu0 %v375
        %v5788 = vpop.f32.mrf.mxu0
        %v5789 = vadd.f32 %v5740, %v5788
        %v5790 = vpop.f32.mrf.mxu0
        %v5791 = vadd.f32 %v5742, %v5790
        %5792 = vmatmul.bf16.gmra.mxu0 %v378
        %v5793 = vpop.f32.mrf.mxu0
        %v5794 = vadd.f32 %v5745, %v5793
        %v5795 = vpop.f32.mrf.mxu0
        %v5796 = vadd.f32 %v5747, %v5795
        %5797 = vmatmul.bf16.gmra.mxu0 %v381
        %v5798 = vpop.f32.mrf.mxu0
        %v5799 = vadd.f32 %v5750, %v5798
        %v5800 = vpop.f32.mrf.mxu0
        %v5801 = vadd.f32 %v5752, %v5800
        %5802 = vdwg.mxu0
        %5803 = vmatpush.bf16.msra.mxu0 %v2921
        %5804 = vmatpush.bf16.msra.mxu0 %v2897
        %5805 = vmatpush.bf16.msra.mxu0 %v2873
        %5806 = vmatpush.bf16.msra.mxu0 %v2849
        %5807 = vmatpush.bf16.msra.mxu0 %v2825
        %5808 = vmatpush.bf16.msra.mxu0 %v2801
        %5809 = vmatpush.bf16.msra.mxu0 %v2777
        %5810 = vmatpush.bf16.msra.mxu0 %v2753
        %5811 = vmatmul.bf16.gmra.mxu0 %v358
        %v5812 = vpop.f32.mrf.mxu0
        %v5813 = vadd.f32 %v977, %v5812
        %v5814 = vpop.f32.mrf.mxu0
        %v5815 = vadd.f32 %v977, %v5814
        %5816 = vmatmul.bf16.gmra.mxu0 %v361
        %v5817 = vpop.f32.mrf.mxu0
        %v5818 = vadd.f32 %v977, %v5817
        %v5819 = vpop.f32.mrf.mxu0
        %v5820 = vadd.f32 %v977, %v5819
        %5821 = vmatmul.bf16.gmra.mxu0 %v364
        %v5822 = vpop.f32.mrf.mxu0
        %v5823 = vadd.f32 %v977, %v5822
        %v5824 = vpop.f32.mrf.mxu0
        %v5825 = vadd.f32 %v977, %v5824
        %5826 = vmatmul.bf16.gmra.mxu0 %v367
        %v5827 = vpop.f32.mrf.mxu0
        %v5828 = vadd.f32 %v977, %v5827
        %v5829 = vpop.f32.mrf.mxu0
        %v5830 = vadd.f32 %v977, %v5829
        %5831 = vmatmul.bf16.gmra.mxu0 %v370
        %v5832 = vpop.f32.mrf.mxu0
        %v5833 = vadd.f32 %v977, %v5832
        %v5834 = vpop.f32.mrf.mxu0
        %v5835 = vadd.f32 %v977, %v5834
        %5836 = vmatmul.bf16.gmra.mxu0 %v373
        %v5837 = vpop.f32.mrf.mxu0
        %v5838 = vadd.f32 %v977, %v5837
        %v5839 = vpop.f32.mrf.mxu0
        %v5840 = vadd.f32 %v977, %v5839
        %5841 = vmatmul.bf16.gmra.mxu0 %v376
        %v5842 = vpop.f32.mrf.mxu0
        %v5843 = vadd.f32 %v977, %v5842
        %v5844 = vpop.f32.mrf.mxu0
        %v5845 = vadd.f32 %v977, %v5844
        %5846 = vmatmul.bf16.gmra.mxu0 %v379
        %v5847 = vpop.f32.mrf.mxu0
        %v5848 = vadd.f32 %v977, %v5847
        %v5849 = vpop.f32.mrf.mxu0
        %v5850 = vadd.f32 %v977, %v5849
        %5851 = vdwg.mxu0
        %5852 = vmatpush.bf16.msra.mxu0 %v3113
        %5853 = vmatpush.bf16.msra.mxu0 %v3089
        %5854 = vmatpush.bf16.msra.mxu0 %v3065
        %5855 = vmatpush.bf16.msra.mxu0 %v3041
        %5856 = vmatpush.bf16.msra.mxu0 %v3017
        %5857 = vmatpush.bf16.msra.mxu0 %v2993
        %5858 = vmatpush.bf16.msra.mxu0 %v2969
        %5859 = vmatpush.bf16.msra.mxu0 %v2945
        %5860 = vmatmul.bf16.gmra.mxu0 %v359
        %v5861 = vpop.f32.mrf.mxu0
        %v5862 = vadd.f32 %v5813, %v5861
        %v5863 = vpop.f32.mrf.mxu0
        %v5864 = vadd.f32 %v5815, %v5863
        %5865 = vmatmul.bf16.gmra.mxu0 %v362
        %v5866 = vpop.f32.mrf.mxu0
        %v5867 = vadd.f32 %v5818, %v5866
        %v5868 = vpop.f32.mrf.mxu0
        %v5869 = vadd.f32 %v5820, %v5868
        %5870 = vmatmul.bf16.gmra.mxu0 %v365
        %v5871 = vpop.f32.mrf.mxu0
        %v5872 = vadd.f32 %v5823, %v5871
        %v5873 = vpop.f32.mrf.mxu0
        %v5874 = vadd.f32 %v5825, %v5873
        %5875 = vmatmul.bf16.gmra.mxu0 %v368
        %v5876 = vpop.f32.mrf.mxu0
        %v5877 = vadd.f32 %v5828, %v5876
        %v5878 = vpop.f32.mrf.mxu0
        %v5879 = vadd.f32 %v5830, %v5878
        %5880 = vmatmul.bf16.gmra.mxu0 %v371
        %v5881 = vpop.f32.mrf.mxu0
        %v5882 = vadd.f32 %v5833, %v5881
        %v5883 = vpop.f32.mrf.mxu0
        %v5884 = vadd.f32 %v5835, %v5883
        %5885 = vmatmul.bf16.gmra.mxu0 %v374
        %v5886 = vpop.f32.mrf.mxu0
        %v5887 = vadd.f32 %v5838, %v5886
        %v5888 = vpop.f32.mrf.mxu0
        %v5889 = vadd.f32 %v5840, %v5888
        %5890 = vmatmul.bf16.gmra.mxu0 %v377
        %v5891 = vpop.f32.mrf.mxu0
        %v5892 = vadd.f32 %v5843, %v5891
        %v5893 = vpop.f32.mrf.mxu0
        %v5894 = vadd.f32 %v5845, %v5893
        %5895 = vmatmul.bf16.gmra.mxu0 %v380
        %v5896 = vpop.f32.mrf.mxu0
        %v5897 = vadd.f32 %v5848, %v5896
        %v5898 = vpop.f32.mrf.mxu0
        %v5899 = vadd.f32 %v5850, %v5898
        %5900 = vdwg.mxu0
        %5901 = vmatpush.bf16.msra.mxu0 %v3305
        %5902 = vmatpush.bf16.msra.mxu0 %v3281
        %5903 = vmatpush.bf16.msra.mxu0 %v3257
        %5904 = vmatpush.bf16.msra.mxu0 %v3233
        %5905 = vmatpush.bf16.msra.mxu0 %v3209
        %5906 = vmatpush.bf16.msra.mxu0 %v3185
        %5907 = vmatpush.bf16.msra.mxu0 %v3161
        %5908 = vmatpush.bf16.msra.mxu0 %v3137
        %5909 = vmatmul.bf16.gmra.mxu0 %v360
        %v5910 = vpop.f32.mrf.mxu0
        %v5911 = vadd.f32 %v5862, %v5910
        %v5912 = vpop.f32.mrf.mxu0
        %v5913 = vadd.f32 %v5864, %v5912
        %5914 = vmatmul.bf16.gmra.mxu0 %v363
        %v5915 = vpop.f32.mrf.mxu0
        %v5916 = vadd.f32 %v5867, %v5915
        %v5917 = vpop.f32.mrf.mxu0
        %v5918 = vadd.f32 %v5869, %v5917
        %5919 = vmatmul.bf16.gmra.mxu0 %v366
        %v5920 = vpop.f32.mrf.mxu0
        %v5921 = vadd.f32 %v5872, %v5920
        %v5922 = vpop.f32.mrf.mxu0
        %v5923 = vadd.f32 %v5874, %v5922
        %5924 = vmatmul.bf16.gmra.mxu0 %v369
        %v5925 = vpop.f32.mrf.mxu0
        %v5926 = vadd.f32 %v5877, %v5925
        %v5927 = vpop.f32.mrf.mxu0
        %v5928 = vadd.f32 %v5879, %v5927
        %5929 = vmatmul.bf16.gmra.mxu0 %v372
        %v5930 = vpop.f32.mrf.mxu0
        %v5931 = vadd.f32 %v5882, %v5930
        %v5932 = vpop.f32.mrf.mxu0
        %v5933 = vadd.f32 %v5884, %v5932
        %5934 = vmatmul.bf16.gmra.mxu0 %v375
        %v5935 = vpop.f32.mrf.mxu0
        %v5936 = vadd.f32 %v5887, %v5935
        %v5937 = vpop.f32.mrf.mxu0
        %v5938 = vadd.f32 %v5889, %v5937
        %5939 = vmatmul.bf16.gmra.mxu0 %v378
        %v5940 = vpop.f32.mrf.mxu0
        %v5941 = vadd.f32 %v5892, %v5940
        %v5942 = vpop.f32.mrf.mxu0
        %v5943 = vadd.f32 %v5894, %v5942
        %5944 = vmatmul.bf16.gmra.mxu0 %v381
        %v5945 = vpop.f32.mrf.mxu0
        %v5946 = vadd.f32 %v5897, %v5945
        %v5947 = vpop.f32.mrf.mxu0
        %v5948 = vadd.f32 %v5899, %v5947
        %5949 = vdwg.mxu0
        %5950 = vmatpush.bf16.msra.mxu0 %v2922
        %5951 = vmatpush.bf16.msra.mxu0 %v2898
        %5952 = vmatpush.bf16.msra.mxu0 %v2874
        %5953 = vmatpush.bf16.msra.mxu0 %v2850
        %5954 = vmatpush.bf16.msra.mxu0 %v2826
        %5955 = vmatpush.bf16.msra.mxu0 %v2802
        %5956 = vmatpush.bf16.msra.mxu0 %v2778
        %5957 = vmatpush.bf16.msra.mxu0 %v2754
        %5958 = vmatmul.bf16.gmra.mxu0 %v358
        %v5959 = vpop.f32.mrf.mxu0
        %v5960 = vadd.f32 %v978, %v5959
        %v5961 = vpop.f32.mrf.mxu0
        %v5962 = vadd.f32 %v978, %v5961
        %5963 = vmatmul.bf16.gmra.mxu0 %v361
        %v5964 = vpop.f32.mrf.mxu0
        %v5965 = vadd.f32 %v978, %v5964
        %v5966 = vpop.f32.mrf.mxu0
        %v5967 = vadd.f32 %v978, %v5966
        %5968 = vmatmul.bf16.gmra.mxu0 %v364
        %v5969 = vpop.f32.mrf.mxu0
        %v5970 = vadd.f32 %v978, %v5969
        %v5971 = vpop.f32.mrf.mxu0
        %v5972 = vadd.f32 %v978, %v5971
        %5973 = vmatmul.bf16.gmra.mxu0 %v367
        %v5974 = vpop.f32.mrf.mxu0
        %v5975 = vadd.f32 %v978, %v5974
        %v5976 = vpop.f32.mrf.mxu0
        %v5977 = vadd.f32 %v978, %v5976
        %5978 = vmatmul.bf16.gmra.mxu0 %v370
        %v5979 = vpop.f32.mrf.mxu0
        %v5980 = vadd.f32 %v978, %v5979
        %v5981 = vpop.f32.mrf.mxu0
        %v5982 = vadd.f32 %v978, %v5981
        %5983 = vmatmul.bf16.gmra.mxu0 %v373
        %v5984 = vpop.f32.mrf.mxu0
        %v5985 = vadd.f32 %v978, %v5984
        %v5986 = vpop.f32.mrf.mxu0
        %v5987 = vadd.f32 %v978, %v5986
        %5988 = vmatmul.bf16.gmra.mxu0 %v376
        %v5989 = vpop.f32.mrf.mxu0
        %v5990 = vadd.f32 %v978, %v5989
        %v5991 = vpop.f32.mrf.mxu0
        %v5992 = vadd.f32 %v978, %v5991
        %5993 = vmatmul.bf16.gmra.mxu0 %v379
        %v5994 = vpop.f32.mrf.mxu0
        %v5995 = vadd.f32 %v978, %v5994
        %v5996 = vpop.f32.mrf.mxu0
        %v5997 = vadd.f32 %v978, %v5996
        %5998 = vdwg.mxu0
        %5999 = vmatpush.bf16.msra.mxu0 %v3114
        %6000 = vmatpush.bf16.msra.mxu0 %v3090
        %6001 = vmatpush.bf16.msra.mxu0 %v3066
        %6002 = vmatpush.bf16.msra.mxu0 %v3042
        %6003 = vmatpush.bf16.msra.mxu0 %v3018
        %6004 = vmatpush.bf16.msra.mxu0 %v2994
        %6005 = vmatpush.bf16.msra.mxu0 %v2970
        %6006 = vmatpush.bf16.msra.mxu0 %v2946
        %6007 = vmatmul.bf16.gmra.mxu0 %v359
        %v6008 = vpop.f32.mrf.mxu0
        %v6009 = vadd.f32 %v5960, %v6008
        %v6010 = vpop.f32.mrf.mxu0
        %v6011 = vadd.f32 %v5962, %v6010
        %6012 = vmatmul.bf16.gmra.mxu0 %v362
        %v6013 = vpop.f32.mrf.mxu0
        %v6014 = vadd.f32 %v5965, %v6013
        %v6015 = vpop.f32.mrf.mxu0
        %v6016 = vadd.f32 %v5967, %v6015
        %6017 = vmatmul.bf16.gmra.mxu0 %v365
        %v6018 = vpop.f32.mrf.mxu0
        %v6019 = vadd.f32 %v5970, %v6018
        %v6020 = vpop.f32.mrf.mxu0
        %v6021 = vadd.f32 %v5972, %v6020
        %6022 = vmatmul.bf16.gmra.mxu0 %v368
        %v6023 = vpop.f32.mrf.mxu0
        %v6024 = vadd.f32 %v5975, %v6023
        %v6025 = vpop.f32.mrf.mxu0
        %v6026 = vadd.f32 %v5977, %v6025
        %6027 = vmatmul.bf16.gmra.mxu0 %v371
        %v6028 = vpop.f32.mrf.mxu0
        %v6029 = vadd.f32 %v5980, %v6028
        %v6030 = vpop.f32.mrf.mxu0
        %v6031 = vadd.f32 %v5982, %v6030
        %6032 = vmatmul.bf16.gmra.mxu0 %v374
        %v6033 = vpop.f32.mrf.mxu0
        %v6034 = vadd.f32 %v5985, %v6033
        %v6035 = vpop.f32.mrf.mxu0
        %v6036 = vadd.f32 %v5987, %v6035
        %6037 = vmatmul.bf16.gmra.mxu0 %v377
        %v6038 = vpop.f32.mrf.mxu0
        %v6039 = vadd.f32 %v5990, %v6038
        %v6040 = vpop.f32.mrf.mxu0
        %v6041 = vadd.f32 %v5992, %v6040
        %6042 = vmatmul.bf16.gmra.mxu0 %v380
        %v6043 = vpop.f32.mrf.mxu0
        %v6044 = vadd.f32 %v5995, %v6043
        %v6045 = vpop.f32.mrf.mxu0
        %v6046 = vadd.f32 %v5997, %v6045
        %6047 = vdwg.mxu0
        %6048 = vmatpush.bf16.msra.mxu0 %v3306
        %6049 = vmatpush.bf16.msra.mxu0 %v3282
        %6050 = vmatpush.bf16.msra.mxu0 %v3258
        %6051 = vmatpush.bf16.msra.mxu0 %v3234
        %6052 = vmatpush.bf16.msra.mxu0 %v3210
        %6053 = vmatpush.bf16.msra.mxu0 %v3186
        %6054 = vmatpush.bf16.msra.mxu0 %v3162
        %6055 = vmatpush.bf16.msra.mxu0 %v3138
        %6056 = vmatmul.bf16.gmra.mxu0 %v360
        %v6057 = vpop.f32.mrf.mxu0
        %v6058 = vadd.f32 %v6009, %v6057
        %v6059 = vpop.f32.mrf.mxu0
        %v6060 = vadd.f32 %v6011, %v6059
        %6061 = vmatmul.bf16.gmra.mxu0 %v363
        %v6062 = vpop.f32.mrf.mxu0
        %v6063 = vadd.f32 %v6014, %v6062
        %v6064 = vpop.f32.mrf.mxu0
        %v6065 = vadd.f32 %v6016, %v6064
        %6066 = vmatmul.bf16.gmra.mxu0 %v366
        %v6067 = vpop.f32.mrf.mxu0
        %v6068 = vadd.f32 %v6019, %v6067
        %v6069 = vpop.f32.mrf.mxu0
        %v6070 = vadd.f32 %v6021, %v6069
        %6071 = vmatmul.bf16.gmra.mxu0 %v369
        %v6072 = vpop.f32.mrf.mxu0
        %v6073 = vadd.f32 %v6024, %v6072
        %v6074 = vpop.f32.mrf.mxu0
        %v6075 = vadd.f32 %v6026, %v6074
        %6076 = vmatmul.bf16.gmra.mxu0 %v372
        %v6077 = vpop.f32.mrf.mxu0
        %v6078 = vadd.f32 %v6029, %v6077
        %v6079 = vpop.f32.mrf.mxu0
        %v6080 = vadd.f32 %v6031, %v6079
        %6081 = vmatmul.bf16.gmra.mxu0 %v375
        %v6082 = vpop.f32.mrf.mxu0
        %v6083 = vadd.f32 %v6034, %v6082
        %v6084 = vpop.f32.mrf.mxu0
        %v6085 = vadd.f32 %v6036, %v6084
        %6086 = vmatmul.bf16.gmra.mxu0 %v378
        %v6087 = vpop.f32.mrf.mxu0
        %v6088 = vadd.f32 %v6039, %v6087
        %v6089 = vpop.f32.mrf.mxu0
        %v6090 = vadd.f32 %v6041, %v6089
        %6091 = vmatmul.bf16.gmra.mxu0 %v381
        %v6092 = vpop.f32.mrf.mxu0
        %v6093 = vadd.f32 %v6044, %v6092
        %v6094 = vpop.f32.mrf.mxu0
        %v6095 = vadd.f32 %v6046, %v6094
        %6096 = vdwg.mxu0
        %6097 = vmatpush.bf16.msra.mxu0 %v2923
        %6098 = vmatpush.bf16.msra.mxu0 %v2899
        %6099 = vmatpush.bf16.msra.mxu0 %v2875
        %6100 = vmatpush.bf16.msra.mxu0 %v2851
        %6101 = vmatpush.bf16.msra.mxu0 %v2827
        %6102 = vmatpush.bf16.msra.mxu0 %v2803
        %6103 = vmatpush.bf16.msra.mxu0 %v2779
        %6104 = vmatpush.bf16.msra.mxu0 %v2755
        %6105 = vmatmul.bf16.gmra.mxu0 %v358
        %v6106 = vpop.f32.mrf.mxu0
        %v6107 = vadd.f32 %v979, %v6106
        %v6108 = vpop.f32.mrf.mxu0
        %v6109 = vadd.f32 %v979, %v6108
        %6110 = vmatmul.bf16.gmra.mxu0 %v361
        %v6111 = vpop.f32.mrf.mxu0
        %v6112 = vadd.f32 %v979, %v6111
        %v6113 = vpop.f32.mrf.mxu0
        %v6114 = vadd.f32 %v979, %v6113
        %6115 = vmatmul.bf16.gmra.mxu0 %v364
        %v6116 = vpop.f32.mrf.mxu0
        %v6117 = vadd.f32 %v979, %v6116
        %v6118 = vpop.f32.mrf.mxu0
        %v6119 = vadd.f32 %v979, %v6118
        %6120 = vmatmul.bf16.gmra.mxu0 %v367
        %v6121 = vpop.f32.mrf.mxu0
        %v6122 = vadd.f32 %v979, %v6121
        %v6123 = vpop.f32.mrf.mxu0
        %v6124 = vadd.f32 %v979, %v6123
        %6125 = vmatmul.bf16.gmra.mxu0 %v370
        %v6126 = vpop.f32.mrf.mxu0
        %v6127 = vadd.f32 %v979, %v6126
        %v6128 = vpop.f32.mrf.mxu0
        %v6129 = vadd.f32 %v979, %v6128
        %6130 = vmatmul.bf16.gmra.mxu0 %v373
        %v6131 = vpop.f32.mrf.mxu0
        %v6132 = vadd.f32 %v979, %v6131
        %v6133 = vpop.f32.mrf.mxu0
        %v6134 = vadd.f32 %v979, %v6133
        %6135 = vmatmul.bf16.gmra.mxu0 %v376
        %v6136 = vpop.f32.mrf.mxu0
        %v6137 = vadd.f32 %v979, %v6136
        %v6138 = vpop.f32.mrf.mxu0
        %v6139 = vadd.f32 %v979, %v6138
        %6140 = vmatmul.bf16.gmra.mxu0 %v379
        %v6141 = vpop.f32.mrf.mxu0
        %v6142 = vadd.f32 %v979, %v6141
        %v6143 = vpop.f32.mrf.mxu0
        %v6144 = vadd.f32 %v979, %v6143
        %6145 = vdwg.mxu0
        %6146 = vmatpush.bf16.msra.mxu0 %v3115
        %6147 = vmatpush.bf16.msra.mxu0 %v3091
        %6148 = vmatpush.bf16.msra.mxu0 %v3067
        %6149 = vmatpush.bf16.msra.mxu0 %v3043
        %6150 = vmatpush.bf16.msra.mxu0 %v3019
        %6151 = vmatpush.bf16.msra.mxu0 %v2995
        %6152 = vmatpush.bf16.msra.mxu0 %v2971
        %6153 = vmatpush.bf16.msra.mxu0 %v2947
        %6154 = vmatmul.bf16.gmra.mxu0 %v359
        %v6155 = vpop.f32.mrf.mxu0
        %v6156 = vadd.f32 %v6107, %v6155
        %v6157 = vpop.f32.mrf.mxu0
        %v6158 = vadd.f32 %v6109, %v6157
        %6159 = vmatmul.bf16.gmra.mxu0 %v362
        %v6160 = vpop.f32.mrf.mxu0
        %v6161 = vadd.f32 %v6112, %v6160
        %v6162 = vpop.f32.mrf.mxu0
        %v6163 = vadd.f32 %v6114, %v6162
        %6164 = vmatmul.bf16.gmra.mxu0 %v365
        %v6165 = vpop.f32.mrf.mxu0
        %v6166 = vadd.f32 %v6117, %v6165
        %v6167 = vpop.f32.mrf.mxu0
        %v6168 = vadd.f32 %v6119, %v6167
        %6169 = vmatmul.bf16.gmra.mxu0 %v368
        %v6170 = vpop.f32.mrf.mxu0
        %v6171 = vadd.f32 %v6122, %v6170
        %v6172 = vpop.f32.mrf.mxu0
        %v6173 = vadd.f32 %v6124, %v6172
        %6174 = vmatmul.bf16.gmra.mxu0 %v371
        %v6175 = vpop.f32.mrf.mxu0
        %v6176 = vadd.f32 %v6127, %v6175
        %v6177 = vpop.f32.mrf.mxu0
        %v6178 = vadd.f32 %v6129, %v6177
        %6179 = vmatmul.bf16.gmra.mxu0 %v374
        %v6180 = vpop.f32.mrf.mxu0
        %v6181 = vadd.f32 %v6132, %v6180
        %v6182 = vpop.f32.mrf.mxu0
        %v6183 = vadd.f32 %v6134, %v6182
        %6184 = vmatmul.bf16.gmra.mxu0 %v377
        %v6185 = vpop.f32.mrf.mxu0
        %v6186 = vadd.f32 %v6137, %v6185
        %v6187 = vpop.f32.mrf.mxu0
        %v6188 = vadd.f32 %v6139, %v6187
        %6189 = vmatmul.bf16.gmra.mxu0 %v380
        %v6190 = vpop.f32.mrf.mxu0
        %v6191 = vadd.f32 %v6142, %v6190
        %v6192 = vpop.f32.mrf.mxu0
        %v6193 = vadd.f32 %v6144, %v6192
        %6194 = vdwg.mxu0
        %6195 = vmatpush.bf16.msra.mxu0 %v3307
        %6196 = vmatpush.bf16.msra.mxu0 %v3283
        %6197 = vmatpush.bf16.msra.mxu0 %v3259
        %6198 = vmatpush.bf16.msra.mxu0 %v3235
        %6199 = vmatpush.bf16.msra.mxu0 %v3211
        %6200 = vmatpush.bf16.msra.mxu0 %v3187
        %6201 = vmatpush.bf16.msra.mxu0 %v3163
        %6202 = vmatpush.bf16.msra.mxu0 %v3139
        %6203 = vmatmul.bf16.gmra.mxu0 %v360
        %v6204 = vpop.f32.mrf.mxu0
        %v6205 = vadd.f32 %v6156, %v6204
        %v6206 = vpop.f32.mrf.mxu0
        %v6207 = vadd.f32 %v6158, %v6206
        %6208 = vmatmul.bf16.gmra.mxu0 %v363
        %v6209 = vpop.f32.mrf.mxu0
        %v6210 = vadd.f32 %v6161, %v6209
        %v6211 = vpop.f32.mrf.mxu0
        %v6212 = vadd.f32 %v6163, %v6211
        %6213 = vmatmul.bf16.gmra.mxu0 %v366
        %v6214 = vpop.f32.mrf.mxu0
        %v6215 = vadd.f32 %v6166, %v6214
        %v6216 = vpop.f32.mrf.mxu0
        %v6217 = vadd.f32 %v6168, %v6216
        %6218 = vmatmul.bf16.gmra.mxu0 %v369
        %v6219 = vpop.f32.mrf.mxu0
        %v6220 = vadd.f32 %v6171, %v6219
        %v6221 = vpop.f32.mrf.mxu0
        %v6222 = vadd.f32 %v6173, %v6221
        %6223 = vmatmul.bf16.gmra.mxu0 %v372
        %v6224 = vpop.f32.mrf.mxu0
        %v6225 = vadd.f32 %v6176, %v6224
        %v6226 = vpop.f32.mrf.mxu0
        %v6227 = vadd.f32 %v6178, %v6226
        %6228 = vmatmul.bf16.gmra.mxu0 %v375
        %v6229 = vpop.f32.mrf.mxu0
        %v6230 = vadd.f32 %v6181, %v6229
        %v6231 = vpop.f32.mrf.mxu0
        %v6232 = vadd.f32 %v6183, %v6231
        %6233 = vmatmul.bf16.gmra.mxu0 %v378
        %v6234 = vpop.f32.mrf.mxu0
        %v6235 = vadd.f32 %v6186, %v6234
        %v6236 = vpop.f32.mrf.mxu0
        %v6237 = vadd.f32 %v6188, %v6236
        %6238 = vmatmul.bf16.gmra.mxu0 %v381
        %v6239 = vpop.f32.mrf.mxu0
        %v6240 = vadd.f32 %v6191, %v6239
        %v6241 = vpop.f32.mrf.mxu0
        %v6242 = vadd.f32 %v6193, %v6241
        %6243 = vdwg.mxu0
        %6244 = vmatpush.bf16.msra.mxu0 %v2924
        %6245 = vmatpush.bf16.msra.mxu0 %v2900
        %6246 = vmatpush.bf16.msra.mxu0 %v2876
        %6247 = vmatpush.bf16.msra.mxu0 %v2852
        %6248 = vmatpush.bf16.msra.mxu0 %v2828
        %6249 = vmatpush.bf16.msra.mxu0 %v2804
        %6250 = vmatpush.bf16.msra.mxu0 %v2780
        %6251 = vmatpush.bf16.msra.mxu0 %v2756
        %6252 = vmatmul.bf16.gmra.mxu0 %v358
        %v6253 = vpop.f32.mrf.mxu0
        %v6254 = vadd.f32 %v980, %v6253
        %v6255 = vpop.f32.mrf.mxu0
        %v6256 = vadd.f32 %v980, %v6255
        %6257 = vmatmul.bf16.gmra.mxu0 %v361
        %v6258 = vpop.f32.mrf.mxu0
        %v6259 = vadd.f32 %v980, %v6258
        %v6260 = vpop.f32.mrf.mxu0
        %v6261 = vadd.f32 %v980, %v6260
        %6262 = vmatmul.bf16.gmra.mxu0 %v364
        %v6263 = vpop.f32.mrf.mxu0
        %v6264 = vadd.f32 %v980, %v6263
        %v6265 = vpop.f32.mrf.mxu0
        %v6266 = vadd.f32 %v980, %v6265
        %6267 = vmatmul.bf16.gmra.mxu0 %v367
        %v6268 = vpop.f32.mrf.mxu0
        %v6269 = vadd.f32 %v980, %v6268
        %v6270 = vpop.f32.mrf.mxu0
        %v6271 = vadd.f32 %v980, %v6270
        %6272 = vmatmul.bf16.gmra.mxu0 %v370
        %v6273 = vpop.f32.mrf.mxu0
        %v6274 = vadd.f32 %v980, %v6273
        %v6275 = vpop.f32.mrf.mxu0
        %v6276 = vadd.f32 %v980, %v6275
        %6277 = vmatmul.bf16.gmra.mxu0 %v373
        %v6278 = vpop.f32.mrf.mxu0
        %v6279 = vadd.f32 %v980, %v6278
        %v6280 = vpop.f32.mrf.mxu0
        %v6281 = vadd.f32 %v980, %v6280
        %6282 = vmatmul.bf16.gmra.mxu0 %v376
        %v6283 = vpop.f32.mrf.mxu0
        %v6284 = vadd.f32 %v980, %v6283
        %v6285 = vpop.f32.mrf.mxu0
        %v6286 = vadd.f32 %v980, %v6285
        %6287 = vmatmul.bf16.gmra.mxu0 %v379
        %v6288 = vpop.f32.mrf.mxu0
        %v6289 = vadd.f32 %v980, %v6288
        %v6290 = vpop.f32.mrf.mxu0
        %v6291 = vadd.f32 %v980, %v6290
        %6292 = vdwg.mxu0
        %6293 = vmatpush.bf16.msra.mxu0 %v3116
        %6294 = vmatpush.bf16.msra.mxu0 %v3092
        %6295 = vmatpush.bf16.msra.mxu0 %v3068
        %6296 = vmatpush.bf16.msra.mxu0 %v3044
        %6297 = vmatpush.bf16.msra.mxu0 %v3020
        %6298 = vmatpush.bf16.msra.mxu0 %v2996
        %6299 = vmatpush.bf16.msra.mxu0 %v2972
        %6300 = vmatpush.bf16.msra.mxu0 %v2948
        %6301 = vmatmul.bf16.gmra.mxu0 %v359
        %v6302 = vpop.f32.mrf.mxu0
        %v6303 = vadd.f32 %v6254, %v6302
        %v6304 = vpop.f32.mrf.mxu0
        %v6305 = vadd.f32 %v6256, %v6304
        %6306 = vmatmul.bf16.gmra.mxu0 %v362
        %v6307 = vpop.f32.mrf.mxu0
        %v6308 = vadd.f32 %v6259, %v6307
        %v6309 = vpop.f32.mrf.mxu0
        %v6310 = vadd.f32 %v6261, %v6309
        %6311 = vmatmul.bf16.gmra.mxu0 %v365
        %v6312 = vpop.f32.mrf.mxu0
        %v6313 = vadd.f32 %v6264, %v6312
        %v6314 = vpop.f32.mrf.mxu0
        %v6315 = vadd.f32 %v6266, %v6314
        %6316 = vmatmul.bf16.gmra.mxu0 %v368
        %v6317 = vpop.f32.mrf.mxu0
        %v6318 = vadd.f32 %v6269, %v6317
        %v6319 = vpop.f32.mrf.mxu0
        %v6320 = vadd.f32 %v6271, %v6319
        %6321 = vmatmul.bf16.gmra.mxu0 %v371
        %v6322 = vpop.f32.mrf.mxu0
        %v6323 = vadd.f32 %v6274, %v6322
        %v6324 = vpop.f32.mrf.mxu0
        %v6325 = vadd.f32 %v6276, %v6324
        %6326 = vmatmul.bf16.gmra.mxu0 %v374
        %v6327 = vpop.f32.mrf.mxu0
        %v6328 = vadd.f32 %v6279, %v6327
        %v6329 = vpop.f32.mrf.mxu0
        %v6330 = vadd.f32 %v6281, %v6329
        %6331 = vmatmul.bf16.gmra.mxu0 %v377
        %v6332 = vpop.f32.mrf.mxu0
        %v6333 = vadd.f32 %v6284, %v6332
        %v6334 = vpop.f32.mrf.mxu0
        %v6335 = vadd.f32 %v6286, %v6334
        %6336 = vmatmul.bf16.gmra.mxu0 %v380
        %v6337 = vpop.f32.mrf.mxu0
        %v6338 = vadd.f32 %v6289, %v6337
        %v6339 = vpop.f32.mrf.mxu0
        %v6340 = vadd.f32 %v6291, %v6339
        %6341 = vdwg.mxu0
        %6342 = vmatpush.bf16.msra.mxu0 %v3308
        %6343 = vmatpush.bf16.msra.mxu0 %v3284
        %6344 = vmatpush.bf16.msra.mxu0 %v3260
        %6345 = vmatpush.bf16.msra.mxu0 %v3236
        %6346 = vmatpush.bf16.msra.mxu0 %v3212
        %6347 = vmatpush.bf16.msra.mxu0 %v3188
        %6348 = vmatpush.bf16.msra.mxu0 %v3164
        %6349 = vmatpush.bf16.msra.mxu0 %v3140
        %6350 = vmatmul.bf16.gmra.mxu0 %v360
        %v6351 = vpop.f32.mrf.mxu0
        %v6352 = vadd.f32 %v6303, %v6351
        %v6353 = vpop.f32.mrf.mxu0
        %v6354 = vadd.f32 %v6305, %v6353
        %6355 = vmatmul.bf16.gmra.mxu0 %v363
        %v6356 = vpop.f32.mrf.mxu0
        %v6357 = vadd.f32 %v6308, %v6356
        %v6358 = vpop.f32.mrf.mxu0
        %v6359 = vadd.f32 %v6310, %v6358
        %6360 = vmatmul.bf16.gmra.mxu0 %v366
        %v6361 = vpop.f32.mrf.mxu0
        %v6362 = vadd.f32 %v6313, %v6361
        %v6363 = vpop.f32.mrf.mxu0
        %v6364 = vadd.f32 %v6315, %v6363
        %6365 = vmatmul.bf16.gmra.mxu0 %v369
        %v6366 = vpop.f32.mrf.mxu0
        %v6367 = vadd.f32 %v6318, %v6366
        %v6368 = vpop.f32.mrf.mxu0
        %v6369 = vadd.f32 %v6320, %v6368
        %6370 = vmatmul.bf16.gmra.mxu0 %v372
        %v6371 = vpop.f32.mrf.mxu0
        %v6372 = vadd.f32 %v6323, %v6371
        %v6373 = vpop.f32.mrf.mxu0
        %v6374 = vadd.f32 %v6325, %v6373
        %6375 = vmatmul.bf16.gmra.mxu0 %v375
        %v6376 = vpop.f32.mrf.mxu0
        %v6377 = vadd.f32 %v6328, %v6376
        %v6378 = vpop.f32.mrf.mxu0
        %v6379 = vadd.f32 %v6330, %v6378
        %6380 = vmatmul.bf16.gmra.mxu0 %v378
        %v6381 = vpop.f32.mrf.mxu0
        %v6382 = vadd.f32 %v6333, %v6381
        %v6383 = vpop.f32.mrf.mxu0
        %v6384 = vadd.f32 %v6335, %v6383
        %6385 = vmatmul.bf16.gmra.mxu0 %v381
        %v6386 = vpop.f32.mrf.mxu0
        %v6387 = vadd.f32 %v6338, %v6386
        %v6388 = vpop.f32.mrf.mxu0
        %v6389 = vadd.f32 %v6340, %v6388
        %6390 = vdwg.mxu0
        %6391 = vmatpush.bf16.msra.mxu0 %v2925
        %6392 = vmatpush.bf16.msra.mxu0 %v2901
        %6393 = vmatpush.bf16.msra.mxu0 %v2877
        %6394 = vmatpush.bf16.msra.mxu0 %v2853
        %6395 = vmatpush.bf16.msra.mxu0 %v2829
        %6396 = vmatpush.bf16.msra.mxu0 %v2805
        %6397 = vmatpush.bf16.msra.mxu0 %v2781
        %6398 = vmatpush.bf16.msra.mxu0 %v2757
        %6399 = vmatmul.bf16.gmra.mxu0 %v358
        %v6400 = vpop.f32.mrf.mxu0
        %v6401 = vadd.f32 %v981, %v6400
        %v6402 = vpop.f32.mrf.mxu0
        %v6403 = vadd.f32 %v981, %v6402
        %6404 = vmatmul.bf16.gmra.mxu0 %v361
        %v6405 = vpop.f32.mrf.mxu0
        %v6406 = vadd.f32 %v981, %v6405
        %v6407 = vpop.f32.mrf.mxu0
        %v6408 = vadd.f32 %v981, %v6407
        %6409 = vmatmul.bf16.gmra.mxu0 %v364
        %v6410 = vpop.f32.mrf.mxu0
        %v6411 = vadd.f32 %v981, %v6410
        %v6412 = vpop.f32.mrf.mxu0
        %v6413 = vadd.f32 %v981, %v6412
        %6414 = vmatmul.bf16.gmra.mxu0 %v367
        %v6415 = vpop.f32.mrf.mxu0
        %v6416 = vadd.f32 %v981, %v6415
        %v6417 = vpop.f32.mrf.mxu0
        %v6418 = vadd.f32 %v981, %v6417
        %6419 = vmatmul.bf16.gmra.mxu0 %v370
        %v6420 = vpop.f32.mrf.mxu0
        %v6421 = vadd.f32 %v981, %v6420
        %v6422 = vpop.f32.mrf.mxu0
        %v6423 = vadd.f32 %v981, %v6422
        %6424 = vmatmul.bf16.gmra.mxu0 %v373
        %v6425 = vpop.f32.mrf.mxu0
        %v6426 = vadd.f32 %v981, %v6425
        %v6427 = vpop.f32.mrf.mxu0
        %v6428 = vadd.f32 %v981, %v6427
        %6429 = vmatmul.bf16.gmra.mxu0 %v376
        %v6430 = vpop.f32.mrf.mxu0
        %v6431 = vadd.f32 %v981, %v6430
        %v6432 = vpop.f32.mrf.mxu0
        %v6433 = vadd.f32 %v981, %v6432
        %6434 = vmatmul.bf16.gmra.mxu0 %v379
        %v6435 = vpop.f32.mrf.mxu0
        %v6436 = vadd.f32 %v981, %v6435
        %v6437 = vpop.f32.mrf.mxu0
        %v6438 = vadd.f32 %v981, %v6437
        %6439 = vdwg.mxu0
        %6440 = vmatpush.bf16.msra.mxu0 %v3117
        %6441 = vmatpush.bf16.msra.mxu0 %v3093
        %6442 = vmatpush.bf16.msra.mxu0 %v3069
        %6443 = vmatpush.bf16.msra.mxu0 %v3045
        %6444 = vmatpush.bf16.msra.mxu0 %v3021
        %6445 = vmatpush.bf16.msra.mxu0 %v2997
        %6446 = vmatpush.bf16.msra.mxu0 %v2973
        %6447 = vmatpush.bf16.msra.mxu0 %v2949
        %6448 = vmatmul.bf16.gmra.mxu0 %v359
        %v6449 = vpop.f32.mrf.mxu0
        %v6450 = vadd.f32 %v6401, %v6449
        %v6451 = vpop.f32.mrf.mxu0
        %v6452 = vadd.f32 %v6403, %v6451
        %6453 = vmatmul.bf16.gmra.mxu0 %v362
        %v6454 = vpop.f32.mrf.mxu0
        %v6455 = vadd.f32 %v6406, %v6454
        %v6456 = vpop.f32.mrf.mxu0
        %v6457 = vadd.f32 %v6408, %v6456
        %6458 = vmatmul.bf16.gmra.mxu0 %v365
        %v6459 = vpop.f32.mrf.mxu0
        %v6460 = vadd.f32 %v6411, %v6459
        %v6461 = vpop.f32.mrf.mxu0
        %v6462 = vadd.f32 %v6413, %v6461
        %6463 = vmatmul.bf16.gmra.mxu0 %v368
        %v6464 = vpop.f32.mrf.mxu0
        %v6465 = vadd.f32 %v6416, %v6464
        %v6466 = vpop.f32.mrf.mxu0
        %v6467 = vadd.f32 %v6418, %v6466
        %6468 = vmatmul.bf16.gmra.mxu0 %v371
        %v6469 = vpop.f32.mrf.mxu0
        %v6470 = vadd.f32 %v6421, %v6469
        %v6471 = vpop.f32.mrf.mxu0
        %v6472 = vadd.f32 %v6423, %v6471
        %6473 = vmatmul.bf16.gmra.mxu0 %v374
        %v6474 = vpop.f32.mrf.mxu0
        %v6475 = vadd.f32 %v6426, %v6474
        %v6476 = vpop.f32.mrf.mxu0
        %v6477 = vadd.f32 %v6428, %v6476
        %6478 = vmatmul.bf16.gmra.mxu0 %v377
        %v6479 = vpop.f32.mrf.mxu0
        %v6480 = vadd.f32 %v6431, %v6479
        %v6481 = vpop.f32.mrf.mxu0
        %v6482 = vadd.f32 %v6433, %v6481
        %6483 = vmatmul.bf16.gmra.mxu0 %v380
        %v6484 = vpop.f32.mrf.mxu0
        %v6485 = vadd.f32 %v6436, %v6484
        %v6486 = vpop.f32.mrf.mxu0
        %v6487 = vadd.f32 %v6438, %v6486
        %6488 = vdwg.mxu0
        %6489 = vmatpush.bf16.msra.mxu0 %v3309
        %6490 = vmatpush.bf16.msra.mxu0 %v3285
        %6491 = vmatpush.bf16.msra.mxu0 %v3261
        %6492 = vmatpush.bf16.msra.mxu0 %v3237
        %6493 = vmatpush.bf16.msra.mxu0 %v3213
        %6494 = vmatpush.bf16.msra.mxu0 %v3189
        %6495 = vmatpush.bf16.msra.mxu0 %v3165
        %6496 = vmatpush.bf16.msra.mxu0 %v3141
        %6497 = vmatmul.bf16.gmra.mxu0 %v360
        %v6498 = vpop.f32.mrf.mxu0
        %v6499 = vadd.f32 %v6450, %v6498
        %v6500 = vpop.f32.mrf.mxu0
        %v6501 = vadd.f32 %v6452, %v6500
        %6502 = vmatmul.bf16.gmra.mxu0 %v363
        %v6503 = vpop.f32.mrf.mxu0
        %v6504 = vadd.f32 %v6455, %v6503
        %v6505 = vpop.f32.mrf.mxu0
        %v6506 = vadd.f32 %v6457, %v6505
        %6507 = vmatmul.bf16.gmra.mxu0 %v366
        %v6508 = vpop.f32.mrf.mxu0
        %v6509 = vadd.f32 %v6460, %v6508
        %v6510 = vpop.f32.mrf.mxu0
        %v6511 = vadd.f32 %v6462, %v6510
        %6512 = vmatmul.bf16.gmra.mxu0 %v369
        %v6513 = vpop.f32.mrf.mxu0
        %v6514 = vadd.f32 %v6465, %v6513
        %v6515 = vpop.f32.mrf.mxu0
        %v6516 = vadd.f32 %v6467, %v6515
        %6517 = vmatmul.bf16.gmra.mxu0 %v372
        %v6518 = vpop.f32.mrf.mxu0
        %v6519 = vadd.f32 %v6470, %v6518
        %v6520 = vpop.f32.mrf.mxu0
        %v6521 = vadd.f32 %v6472, %v6520
        %6522 = vmatmul.bf16.gmra.mxu0 %v375
        %v6523 = vpop.f32.mrf.mxu0
        %v6524 = vadd.f32 %v6475, %v6523
        %v6525 = vpop.f32.mrf.mxu0
        %v6526 = vadd.f32 %v6477, %v6525
        %6527 = vmatmul.bf16.gmra.mxu0 %v378
        %v6528 = vpop.f32.mrf.mxu0
        %v6529 = vadd.f32 %v6480, %v6528
        %v6530 = vpop.f32.mrf.mxu0
        %v6531 = vadd.f32 %v6482, %v6530
        %6532 = vmatmul.bf16.gmra.mxu0 %v381
        %v6533 = vpop.f32.mrf.mxu0
        %v6534 = vadd.f32 %v6485, %v6533
        %v6535 = vpop.f32.mrf.mxu0
        %v6536 = vadd.f32 %v6487, %v6535
        %6537 = vdwg.mxu0
        %6538 = vmatpush.bf16.msra.mxu0 %v2926
        %6539 = vmatpush.bf16.msra.mxu0 %v2902
        %6540 = vmatpush.bf16.msra.mxu0 %v2878
        %6541 = vmatpush.bf16.msra.mxu0 %v2854
        %6542 = vmatpush.bf16.msra.mxu0 %v2830
        %6543 = vmatpush.bf16.msra.mxu0 %v2806
        %6544 = vmatpush.bf16.msra.mxu0 %v2782
        %6545 = vmatpush.bf16.msra.mxu0 %v2758
        %6546 = vmatmul.bf16.gmra.mxu0 %v358
        %v6547 = vpop.f32.mrf.mxu0
        %v6548 = vadd.f32 %v982, %v6547
        %v6549 = vpop.f32.mrf.mxu0
        %v6550 = vadd.f32 %v982, %v6549
        %6551 = vmatmul.bf16.gmra.mxu0 %v361
        %v6552 = vpop.f32.mrf.mxu0
        %v6553 = vadd.f32 %v982, %v6552
        %v6554 = vpop.f32.mrf.mxu0
        %v6555 = vadd.f32 %v982, %v6554
        %6556 = vmatmul.bf16.gmra.mxu0 %v364
        %v6557 = vpop.f32.mrf.mxu0
        %v6558 = vadd.f32 %v982, %v6557
        %v6559 = vpop.f32.mrf.mxu0
        %v6560 = vadd.f32 %v982, %v6559
        %6561 = vmatmul.bf16.gmra.mxu0 %v367
        %v6562 = vpop.f32.mrf.mxu0
        %v6563 = vadd.f32 %v982, %v6562
        %v6564 = vpop.f32.mrf.mxu0
        %v6565 = vadd.f32 %v982, %v6564
        %6566 = vmatmul.bf16.gmra.mxu0 %v370
        %v6567 = vpop.f32.mrf.mxu0
        %v6568 = vadd.f32 %v982, %v6567
        %v6569 = vpop.f32.mrf.mxu0
        %v6570 = vadd.f32 %v982, %v6569
        %6571 = vmatmul.bf16.gmra.mxu0 %v373
        %v6572 = vpop.f32.mrf.mxu0
        %v6573 = vadd.f32 %v982, %v6572
        %v6574 = vpop.f32.mrf.mxu0
        %v6575 = vadd.f32 %v982, %v6574
        %6576 = vmatmul.bf16.gmra.mxu0 %v376
        %v6577 = vpop.f32.mrf.mxu0
        %v6578 = vadd.f32 %v982, %v6577
        %v6579 = vpop.f32.mrf.mxu0
        %v6580 = vadd.f32 %v982, %v6579
        %6581 = vmatmul.bf16.gmra.mxu0 %v379
        %v6582 = vpop.f32.mrf.mxu0
        %v6583 = vadd.f32 %v982, %v6582
        %v6584 = vpop.f32.mrf.mxu0
        %v6585 = vadd.f32 %v982, %v6584
        %6586 = vdwg.mxu0
        %6587 = vmatpush.bf16.msra.mxu0 %v3118
        %6588 = vmatpush.bf16.msra.mxu0 %v3094
        %6589 = vmatpush.bf16.msra.mxu0 %v3070
        %6590 = vmatpush.bf16.msra.mxu0 %v3046
        %6591 = vmatpush.bf16.msra.mxu0 %v3022
        %6592 = vmatpush.bf16.msra.mxu0 %v2998
        %6593 = vmatpush.bf16.msra.mxu0 %v2974
        %6594 = vmatpush.bf16.msra.mxu0 %v2950
        %6595 = vmatmul.bf16.gmra.mxu0 %v359
        %v6596 = vpop.f32.mrf.mxu0
        %v6597 = vadd.f32 %v6548, %v6596
        %v6598 = vpop.f32.mrf.mxu0
        %v6599 = vadd.f32 %v6550, %v6598
        %6600 = vmatmul.bf16.gmra.mxu0 %v362
        %v6601 = vpop.f32.mrf.mxu0
        %v6602 = vadd.f32 %v6553, %v6601
        %v6603 = vpop.f32.mrf.mxu0
        %v6604 = vadd.f32 %v6555, %v6603
        %6605 = vmatmul.bf16.gmra.mxu0 %v365
        %v6606 = vpop.f32.mrf.mxu0
        %v6607 = vadd.f32 %v6558, %v6606
        %v6608 = vpop.f32.mrf.mxu0
        %v6609 = vadd.f32 %v6560, %v6608
        %6610 = vmatmul.bf16.gmra.mxu0 %v368
        %v6611 = vpop.f32.mrf.mxu0
        %v6612 = vadd.f32 %v6563, %v6611
        %v6613 = vpop.f32.mrf.mxu0
        %v6614 = vadd.f32 %v6565, %v6613
        %6615 = vmatmul.bf16.gmra.mxu0 %v371
        %v6616 = vpop.f32.mrf.mxu0
        %v6617 = vadd.f32 %v6568, %v6616
        %v6618 = vpop.f32.mrf.mxu0
        %v6619 = vadd.f32 %v6570, %v6618
        %6620 = vmatmul.bf16.gmra.mxu0 %v374
        %v6621 = vpop.f32.mrf.mxu0
        %v6622 = vadd.f32 %v6573, %v6621
        %v6623 = vpop.f32.mrf.mxu0
        %v6624 = vadd.f32 %v6575, %v6623
        %6625 = vmatmul.bf16.gmra.mxu0 %v377
        %v6626 = vpop.f32.mrf.mxu0
        %v6627 = vadd.f32 %v6578, %v6626
        %v6628 = vpop.f32.mrf.mxu0
        %v6629 = vadd.f32 %v6580, %v6628
        %6630 = vmatmul.bf16.gmra.mxu0 %v380
        %v6631 = vpop.f32.mrf.mxu0
        %v6632 = vadd.f32 %v6583, %v6631
        %v6633 = vpop.f32.mrf.mxu0
        %v6634 = vadd.f32 %v6585, %v6633
        %6635 = vdwg.mxu0
        %6636 = vmatpush.bf16.msra.mxu0 %v3310
        %6637 = vmatpush.bf16.msra.mxu0 %v3286
        %6638 = vmatpush.bf16.msra.mxu0 %v3262
        %6639 = vmatpush.bf16.msra.mxu0 %v3238
        %6640 = vmatpush.bf16.msra.mxu0 %v3214
        %6641 = vmatpush.bf16.msra.mxu0 %v3190
        %6642 = vmatpush.bf16.msra.mxu0 %v3166
        %6643 = vmatpush.bf16.msra.mxu0 %v3142
        %6644 = vmatmul.bf16.gmra.mxu0 %v360
        %v6645 = vpop.f32.mrf.mxu0
        %v6646 = vadd.f32 %v6597, %v6645
        %v6647 = vpop.f32.mrf.mxu0
        %v6648 = vadd.f32 %v6599, %v6647
        %6649 = vmatmul.bf16.gmra.mxu0 %v363
        %v6650 = vpop.f32.mrf.mxu0
        %v6651 = vadd.f32 %v6602, %v6650
        %v6652 = vpop.f32.mrf.mxu0
        %v6653 = vadd.f32 %v6604, %v6652
        %6654 = vmatmul.bf16.gmra.mxu0 %v366
        %v6655 = vpop.f32.mrf.mxu0
        %v6656 = vadd.f32 %v6607, %v6655
        %v6657 = vpop.f32.mrf.mxu0
        %v6658 = vadd.f32 %v6609, %v6657
        %6659 = vmatmul.bf16.gmra.mxu0 %v369
        %v6660 = vpop.f32.mrf.mxu0
        %v6661 = vadd.f32 %v6612, %v6660
        %v6662 = vpop.f32.mrf.mxu0
        %v6663 = vadd.f32 %v6614, %v6662
        %6664 = vmatmul.bf16.gmra.mxu0 %v372
        %v6665 = vpop.f32.mrf.mxu0
        %v6666 = vadd.f32 %v6617, %v6665
        %v6667 = vpop.f32.mrf.mxu0
        %v6668 = vadd.f32 %v6619, %v6667
        %6669 = vmatmul.bf16.gmra.mxu0 %v375
        %v6670 = vpop.f32.mrf.mxu0
        %v6671 = vadd.f32 %v6622, %v6670
        %v6672 = vpop.f32.mrf.mxu0
        %v6673 = vadd.f32 %v6624, %v6672
        %6674 = vmatmul.bf16.gmra.mxu0 %v378
        %v6675 = vpop.f32.mrf.mxu0
        %v6676 = vadd.f32 %v6627, %v6675
        %v6677 = vpop.f32.mrf.mxu0
        %v6678 = vadd.f32 %v6629, %v6677
        %6679 = vmatmul.bf16.gmra.mxu0 %v381
        %v6680 = vpop.f32.mrf.mxu0
        %v6681 = vadd.f32 %v6632, %v6680
        %v6682 = vpop.f32.mrf.mxu0
        %v6683 = vadd.f32 %v6634, %v6682
        %6684 = vdwg.mxu0
        %6685 = vmatpush.bf16.msra.mxu0 %v2927
        %6686 = vmatpush.bf16.msra.mxu0 %v2903
        %6687 = vmatpush.bf16.msra.mxu0 %v2879
        %6688 = vmatpush.bf16.msra.mxu0 %v2855
        %6689 = vmatpush.bf16.msra.mxu0 %v2831
        %6690 = vmatpush.bf16.msra.mxu0 %v2807
        %6691 = vmatpush.bf16.msra.mxu0 %v2783
        %6692 = vmatpush.bf16.msra.mxu0 %v2759
        %6693 = vmatmul.bf16.gmra.mxu0 %v358
        %v6694 = vpop.f32.mrf.mxu0
        %v6695 = vadd.f32 %v983, %v6694
        %v6696 = vpop.f32.mrf.mxu0
        %v6697 = vadd.f32 %v983, %v6696
        %6698 = vmatmul.bf16.gmra.mxu0 %v361
        %v6699 = vpop.f32.mrf.mxu0
        %v6700 = vadd.f32 %v983, %v6699
        %v6701 = vpop.f32.mrf.mxu0
        %v6702 = vadd.f32 %v983, %v6701
        %6703 = vmatmul.bf16.gmra.mxu0 %v364
        %v6704 = vpop.f32.mrf.mxu0
        %v6705 = vadd.f32 %v983, %v6704
        %v6706 = vpop.f32.mrf.mxu0
        %v6707 = vadd.f32 %v983, %v6706
        %6708 = vmatmul.bf16.gmra.mxu0 %v367
        %v6709 = vpop.f32.mrf.mxu0
        %v6710 = vadd.f32 %v983, %v6709
        %v6711 = vpop.f32.mrf.mxu0
        %v6712 = vadd.f32 %v983, %v6711
        %6713 = vmatmul.bf16.gmra.mxu0 %v370
        %v6714 = vpop.f32.mrf.mxu0
        %v6715 = vadd.f32 %v983, %v6714
        %v6716 = vpop.f32.mrf.mxu0
        %v6717 = vadd.f32 %v983, %v6716
        %6718 = vmatmul.bf16.gmra.mxu0 %v373
        %v6719 = vpop.f32.mrf.mxu0
        %v6720 = vadd.f32 %v983, %v6719
        %v6721 = vpop.f32.mrf.mxu0
        %v6722 = vadd.f32 %v983, %v6721
        %6723 = vmatmul.bf16.gmra.mxu0 %v376
        %v6724 = vpop.f32.mrf.mxu0
        %v6725 = vadd.f32 %v983, %v6724
        %v6726 = vpop.f32.mrf.mxu0
        %v6727 = vadd.f32 %v983, %v6726
        %6728 = vmatmul.bf16.gmra.mxu0 %v379
        %v6729 = vpop.f32.mrf.mxu0
        %v6730 = vadd.f32 %v983, %v6729
        %v6731 = vpop.f32.mrf.mxu0
        %v6732 = vadd.f32 %v983, %v6731
        %6733 = vdwg.mxu0
        %6734 = vmatpush.bf16.msra.mxu0 %v3119
        %6735 = vmatpush.bf16.msra.mxu0 %v3095
        %6736 = vmatpush.bf16.msra.mxu0 %v3071
        %6737 = vmatpush.bf16.msra.mxu0 %v3047
        %6738 = vmatpush.bf16.msra.mxu0 %v3023
        %6739 = vmatpush.bf16.msra.mxu0 %v2999
        %6740 = vmatpush.bf16.msra.mxu0 %v2975
        %6741 = vmatpush.bf16.msra.mxu0 %v2951
        %6742 = vmatmul.bf16.gmra.mxu0 %v359
        %v6743 = vpop.f32.mrf.mxu0
        %v6744 = vadd.f32 %v6695, %v6743
        %v6745 = vpop.f32.mrf.mxu0
        %v6746 = vadd.f32 %v6697, %v6745
        %6747 = vmatmul.bf16.gmra.mxu0 %v362
        %v6748 = vpop.f32.mrf.mxu0
        %v6749 = vadd.f32 %v6700, %v6748
        %v6750 = vpop.f32.mrf.mxu0
        %v6751 = vadd.f32 %v6702, %v6750
        %6752 = vmatmul.bf16.gmra.mxu0 %v365
        %v6753 = vpop.f32.mrf.mxu0
        %v6754 = vadd.f32 %v6705, %v6753
        %v6755 = vpop.f32.mrf.mxu0
        %v6756 = vadd.f32 %v6707, %v6755
        %6757 = vmatmul.bf16.gmra.mxu0 %v368
        %v6758 = vpop.f32.mrf.mxu0
        %v6759 = vadd.f32 %v6710, %v6758
        %v6760 = vpop.f32.mrf.mxu0
        %v6761 = vadd.f32 %v6712, %v6760
        %6762 = vmatmul.bf16.gmra.mxu0 %v371
        %v6763 = vpop.f32.mrf.mxu0
        %v6764 = vadd.f32 %v6715, %v6763
        %v6765 = vpop.f32.mrf.mxu0
        %v6766 = vadd.f32 %v6717, %v6765
        %6767 = vmatmul.bf16.gmra.mxu0 %v374
        %v6768 = vpop.f32.mrf.mxu0
        %v6769 = vadd.f32 %v6720, %v6768
        %v6770 = vpop.f32.mrf.mxu0
        %v6771 = vadd.f32 %v6722, %v6770
        %6772 = vmatmul.bf16.gmra.mxu0 %v377
        %v6773 = vpop.f32.mrf.mxu0
        %v6774 = vadd.f32 %v6725, %v6773
        %v6775 = vpop.f32.mrf.mxu0
        %v6776 = vadd.f32 %v6727, %v6775
        %6777 = vmatmul.bf16.gmra.mxu0 %v380
        %v6778 = vpop.f32.mrf.mxu0
        %v6779 = vadd.f32 %v6730, %v6778
        %v6780 = vpop.f32.mrf.mxu0
        %v6781 = vadd.f32 %v6732, %v6780
        %6782 = vdwg.mxu0
        %6783 = vmatpush.bf16.msra.mxu0 %v3311
        %6784 = vmatpush.bf16.msra.mxu0 %v3287
        %6785 = vmatpush.bf16.msra.mxu0 %v3263
        %6786 = vmatpush.bf16.msra.mxu0 %v3239
        %6787 = vmatpush.bf16.msra.mxu0 %v3215
        %6788 = vmatpush.bf16.msra.mxu0 %v3191
        %6789 = vmatpush.bf16.msra.mxu0 %v3167
        %6790 = vmatpush.bf16.msra.mxu0 %v3143
        %6791 = vmatmul.bf16.gmra.mxu0 %v360
        %v6792 = vpop.f32.mrf.mxu0
        %v6793 = vadd.f32 %v6744, %v6792
        %v6794 = vpop.f32.mrf.mxu0
        %v6795 = vadd.f32 %v6746, %v6794
        %6796 = vmatmul.bf16.gmra.mxu0 %v363
        %v6797 = vpop.f32.mrf.mxu0
        %v6798 = vadd.f32 %v6749, %v6797
        %v6799 = vpop.f32.mrf.mxu0
        %v6800 = vadd.f32 %v6751, %v6799
        %6801 = vmatmul.bf16.gmra.mxu0 %v366
        %v6802 = vpop.f32.mrf.mxu0
        %v6803 = vadd.f32 %v6754, %v6802
        %v6804 = vpop.f32.mrf.mxu0
        %v6805 = vadd.f32 %v6756, %v6804
        %6806 = vmatmul.bf16.gmra.mxu0 %v369
        %v6807 = vpop.f32.mrf.mxu0
        %v6808 = vadd.f32 %v6759, %v6807
        %v6809 = vpop.f32.mrf.mxu0
        %v6810 = vadd.f32 %v6761, %v6809
        %6811 = vmatmul.bf16.gmra.mxu0 %v372
        %v6812 = vpop.f32.mrf.mxu0
        %v6813 = vadd.f32 %v6764, %v6812
        %v6814 = vpop.f32.mrf.mxu0
        %v6815 = vadd.f32 %v6766, %v6814
        %6816 = vmatmul.bf16.gmra.mxu0 %v375
        %v6817 = vpop.f32.mrf.mxu0
        %v6818 = vadd.f32 %v6769, %v6817
        %v6819 = vpop.f32.mrf.mxu0
        %v6820 = vadd.f32 %v6771, %v6819
        %6821 = vmatmul.bf16.gmra.mxu0 %v378
        %v6822 = vpop.f32.mrf.mxu0
        %v6823 = vadd.f32 %v6774, %v6822
        %v6824 = vpop.f32.mrf.mxu0
        %v6825 = vadd.f32 %v6776, %v6824
        %6826 = vmatmul.bf16.gmra.mxu0 %v381
        %v6827 = vpop.f32.mrf.mxu0
        %v6828 = vadd.f32 %v6779, %v6827
        %v6829 = vpop.f32.mrf.mxu0
        %v6830 = vadd.f32 %v6781, %v6829
        %6831 = vdwg.mxu0
        %6832 = vmatpush.bf16.msra.mxu0 %v2928
        %6833 = vmatpush.bf16.msra.mxu0 %v2904
        %6834 = vmatpush.bf16.msra.mxu0 %v2880
        %6835 = vmatpush.bf16.msra.mxu0 %v2856
        %6836 = vmatpush.bf16.msra.mxu0 %v2832
        %6837 = vmatpush.bf16.msra.mxu0 %v2808
        %6838 = vmatpush.bf16.msra.mxu0 %v2784
        %6839 = vmatpush.bf16.msra.mxu0 %v2760
        %6840 = vmatmul.bf16.gmra.mxu0 %v358
        %v6841 = vpop.f32.mrf.mxu0
        %v6842 = vadd.f32 %v984, %v6841
        %v6843 = vpop.f32.mrf.mxu0
        %v6844 = vadd.f32 %v984, %v6843
        %6845 = vmatmul.bf16.gmra.mxu0 %v361
        %v6846 = vpop.f32.mrf.mxu0
        %v6847 = vadd.f32 %v984, %v6846
        %v6848 = vpop.f32.mrf.mxu0
        %v6849 = vadd.f32 %v984, %v6848
        %6850 = vmatmul.bf16.gmra.mxu0 %v364
        %v6851 = vpop.f32.mrf.mxu0
        %v6852 = vadd.f32 %v984, %v6851
        %v6853 = vpop.f32.mrf.mxu0
        %v6854 = vadd.f32 %v984, %v6853
        %6855 = vmatmul.bf16.gmra.mxu0 %v367
        %v6856 = vpop.f32.mrf.mxu0
        %v6857 = vadd.f32 %v984, %v6856
        %v6858 = vpop.f32.mrf.mxu0
        %v6859 = vadd.f32 %v984, %v6858
        %6860 = vmatmul.bf16.gmra.mxu0 %v370
        %v6861 = vpop.f32.mrf.mxu0
        %v6862 = vadd.f32 %v984, %v6861
        %v6863 = vpop.f32.mrf.mxu0
        %v6864 = vadd.f32 %v984, %v6863
        %6865 = vmatmul.bf16.gmra.mxu0 %v373
        %v6866 = vpop.f32.mrf.mxu0
        %v6867 = vadd.f32 %v984, %v6866
        %v6868 = vpop.f32.mrf.mxu0
        %v6869 = vadd.f32 %v984, %v6868
        %6870 = vmatmul.bf16.gmra.mxu0 %v376
        %v6871 = vpop.f32.mrf.mxu0
        %v6872 = vadd.f32 %v984, %v6871
        %v6873 = vpop.f32.mrf.mxu0
        %v6874 = vadd.f32 %v984, %v6873
        %6875 = vmatmul.bf16.gmra.mxu0 %v379
        %v6876 = vpop.f32.mrf.mxu0
        %v6877 = vadd.f32 %v984, %v6876
        %v6878 = vpop.f32.mrf.mxu0
        %v6879 = vadd.f32 %v984, %v6878
        %6880 = vdwg.mxu0
        %6881 = vmatpush.bf16.msra.mxu0 %v3120
        %6882 = vmatpush.bf16.msra.mxu0 %v3096
        %6883 = vmatpush.bf16.msra.mxu0 %v3072
        %6884 = vmatpush.bf16.msra.mxu0 %v3048
        %6885 = vmatpush.bf16.msra.mxu0 %v3024
        %6886 = vmatpush.bf16.msra.mxu0 %v3000
        %6887 = vmatpush.bf16.msra.mxu0 %v2976
        %6888 = vmatpush.bf16.msra.mxu0 %v2952
        %6889 = vmatmul.bf16.gmra.mxu0 %v359
        %v6890 = vpop.f32.mrf.mxu0
        %v6891 = vadd.f32 %v6842, %v6890
        %v6892 = vpop.f32.mrf.mxu0
        %v6893 = vadd.f32 %v6844, %v6892
        %6894 = vmatmul.bf16.gmra.mxu0 %v362
        %v6895 = vpop.f32.mrf.mxu0
        %v6896 = vadd.f32 %v6847, %v6895
        %v6897 = vpop.f32.mrf.mxu0
        %v6898 = vadd.f32 %v6849, %v6897
        %6899 = vmatmul.bf16.gmra.mxu0 %v365
        %v6900 = vpop.f32.mrf.mxu0
        %v6901 = vadd.f32 %v6852, %v6900
        %v6902 = vpop.f32.mrf.mxu0
        %v6903 = vadd.f32 %v6854, %v6902
        %6904 = vmatmul.bf16.gmra.mxu0 %v368
        %v6905 = vpop.f32.mrf.mxu0
        %v6906 = vadd.f32 %v6857, %v6905
        %v6907 = vpop.f32.mrf.mxu0
        %v6908 = vadd.f32 %v6859, %v6907
        %6909 = vmatmul.bf16.gmra.mxu0 %v371
        %v6910 = vpop.f32.mrf.mxu0
        %v6911 = vadd.f32 %v6862, %v6910
        %v6912 = vpop.f32.mrf.mxu0
        %v6913 = vadd.f32 %v6864, %v6912
        %6914 = vmatmul.bf16.gmra.mxu0 %v374
        %v6915 = vpop.f32.mrf.mxu0
        %v6916 = vadd.f32 %v6867, %v6915
        %v6917 = vpop.f32.mrf.mxu0
        %v6918 = vadd.f32 %v6869, %v6917
        %6919 = vmatmul.bf16.gmra.mxu0 %v377
        %v6920 = vpop.f32.mrf.mxu0
        %v6921 = vadd.f32 %v6872, %v6920
        %v6922 = vpop.f32.mrf.mxu0
        %v6923 = vadd.f32 %v6874, %v6922
        %6924 = vmatmul.bf16.gmra.mxu0 %v380
        %v6925 = vpop.f32.mrf.mxu0
        %v6926 = vadd.f32 %v6877, %v6925
        %v6927 = vpop.f32.mrf.mxu0
        %v6928 = vadd.f32 %v6879, %v6927
        %6929 = vdwg.mxu0
        %6930 = vmatpush.bf16.msra.mxu0 %v3312
        %6931 = vmatpush.bf16.msra.mxu0 %v3288
        %6932 = vmatpush.bf16.msra.mxu0 %v3264
        %6933 = vmatpush.bf16.msra.mxu0 %v3240
        %6934 = vmatpush.bf16.msra.mxu0 %v3216
        %6935 = vmatpush.bf16.msra.mxu0 %v3192
        %6936 = vmatpush.bf16.msra.mxu0 %v3168
        %6937 = vmatpush.bf16.msra.mxu0 %v3144
        %6938 = vmatmul.bf16.gmra.mxu0 %v360
        %v6939 = vpop.f32.mrf.mxu0
        %v6940 = vadd.f32 %v6891, %v6939
        %v6941 = vpop.f32.mrf.mxu0
        %v6942 = vadd.f32 %v6893, %v6941
        %6943 = vmatmul.bf16.gmra.mxu0 %v363
        %v6944 = vpop.f32.mrf.mxu0
        %v6945 = vadd.f32 %v6896, %v6944
        %v6946 = vpop.f32.mrf.mxu0
        %v6947 = vadd.f32 %v6898, %v6946
        %6948 = vmatmul.bf16.gmra.mxu0 %v366
        %v6949 = vpop.f32.mrf.mxu0
        %v6950 = vadd.f32 %v6901, %v6949
        %v6951 = vpop.f32.mrf.mxu0
        %v6952 = vadd.f32 %v6903, %v6951
        %6953 = vmatmul.bf16.gmra.mxu0 %v369
        %v6954 = vpop.f32.mrf.mxu0
        %v6955 = vadd.f32 %v6906, %v6954
        %v6956 = vpop.f32.mrf.mxu0
        %v6957 = vadd.f32 %v6908, %v6956
        %6958 = vmatmul.bf16.gmra.mxu0 %v372
        %v6959 = vpop.f32.mrf.mxu0
        %v6960 = vadd.f32 %v6911, %v6959
        %v6961 = vpop.f32.mrf.mxu0
        %v6962 = vadd.f32 %v6913, %v6961
        %6963 = vmatmul.bf16.gmra.mxu0 %v375
        %v6964 = vpop.f32.mrf.mxu0
        %v6965 = vadd.f32 %v6916, %v6964
        %v6966 = vpop.f32.mrf.mxu0
        %v6967 = vadd.f32 %v6918, %v6966
        %6968 = vmatmul.bf16.gmra.mxu0 %v378
        %v6969 = vpop.f32.mrf.mxu0
        %v6970 = vadd.f32 %v6921, %v6969
        %v6971 = vpop.f32.mrf.mxu0
        %v6972 = vadd.f32 %v6923, %v6971
        %6973 = vmatmul.bf16.gmra.mxu0 %v381
        %v6974 = vpop.f32.mrf.mxu0
        %v6975 = vadd.f32 %v6926, %v6974
        %v6976 = vpop.f32.mrf.mxu0
        %v6977 = vadd.f32 %v6928, %v6976
        %6978 = vdwg.mxu0
        %6979 = vmatpush.bf16.msra.mxu0 %v2929
        %6980 = vmatpush.bf16.msra.mxu0 %v2905
        %6981 = vmatpush.bf16.msra.mxu0 %v2881
        %6982 = vmatpush.bf16.msra.mxu0 %v2857
        %6983 = vmatpush.bf16.msra.mxu0 %v2833
        %6984 = vmatpush.bf16.msra.mxu0 %v2809
        %6985 = vmatpush.bf16.msra.mxu0 %v2785
        %6986 = vmatpush.bf16.msra.mxu0 %v2761
        %6987 = vmatmul.bf16.gmra.mxu0 %v358
        %v6988 = vpop.f32.mrf.mxu0
        %v6989 = vadd.f32 %v985, %v6988
        %v6990 = vpop.f32.mrf.mxu0
        %v6991 = vadd.f32 %v985, %v6990
        %6992 = vmatmul.bf16.gmra.mxu0 %v361
        %v6993 = vpop.f32.mrf.mxu0
        %v6994 = vadd.f32 %v985, %v6993
        %v6995 = vpop.f32.mrf.mxu0
        %v6996 = vadd.f32 %v985, %v6995
        %6997 = vmatmul.bf16.gmra.mxu0 %v364
        %v6998 = vpop.f32.mrf.mxu0
        %v6999 = vadd.f32 %v985, %v6998
        %v7000 = vpop.f32.mrf.mxu0
        %v7001 = vadd.f32 %v985, %v7000
        %7002 = vmatmul.bf16.gmra.mxu0 %v367
        %v7003 = vpop.f32.mrf.mxu0
        %v7004 = vadd.f32 %v985, %v7003
        %v7005 = vpop.f32.mrf.mxu0
        %v7006 = vadd.f32 %v985, %v7005
        %7007 = vmatmul.bf16.gmra.mxu0 %v370
        %v7008 = vpop.f32.mrf.mxu0
        %v7009 = vadd.f32 %v985, %v7008
        %v7010 = vpop.f32.mrf.mxu0
        %v7011 = vadd.f32 %v985, %v7010
        %7012 = vmatmul.bf16.gmra.mxu0 %v373
        %v7013 = vpop.f32.mrf.mxu0
        %v7014 = vadd.f32 %v985, %v7013
        %v7015 = vpop.f32.mrf.mxu0
        %v7016 = vadd.f32 %v985, %v7015
        %7017 = vmatmul.bf16.gmra.mxu0 %v376
        %v7018 = vpop.f32.mrf.mxu0
        %v7019 = vadd.f32 %v985, %v7018
        %v7020 = vpop.f32.mrf.mxu0
        %v7021 = vadd.f32 %v985, %v7020
        %7022 = vmatmul.bf16.gmra.mxu0 %v379
        %v7023 = vpop.f32.mrf.mxu0
        %v7024 = vadd.f32 %v985, %v7023
        %v7025 = vpop.f32.mrf.mxu0
        %v7026 = vadd.f32 %v985, %v7025
        %7027 = vdwg.mxu0
        %7028 = vmatpush.bf16.msra.mxu0 %v3121
        %7029 = vmatpush.bf16.msra.mxu0 %v3097
        %7030 = vmatpush.bf16.msra.mxu0 %v3073
        %7031 = vmatpush.bf16.msra.mxu0 %v3049
        %7032 = vmatpush.bf16.msra.mxu0 %v3025
        %7033 = vmatpush.bf16.msra.mxu0 %v3001
        %7034 = vmatpush.bf16.msra.mxu0 %v2977
        %7035 = vmatpush.bf16.msra.mxu0 %v2953
        %7036 = vmatmul.bf16.gmra.mxu0 %v359
        %v7037 = vpop.f32.mrf.mxu0
        %v7038 = vadd.f32 %v6989, %v7037
        %v7039 = vpop.f32.mrf.mxu0
        %v7040 = vadd.f32 %v6991, %v7039
        %7041 = vmatmul.bf16.gmra.mxu0 %v362
        %v7042 = vpop.f32.mrf.mxu0
        %v7043 = vadd.f32 %v6994, %v7042
        %v7044 = vpop.f32.mrf.mxu0
        %v7045 = vadd.f32 %v6996, %v7044
        %7046 = vmatmul.bf16.gmra.mxu0 %v365
        %v7047 = vpop.f32.mrf.mxu0
        %v7048 = vadd.f32 %v6999, %v7047
        %v7049 = vpop.f32.mrf.mxu0
        %v7050 = vadd.f32 %v7001, %v7049
        %7051 = vmatmul.bf16.gmra.mxu0 %v368
        %v7052 = vpop.f32.mrf.mxu0
        %v7053 = vadd.f32 %v7004, %v7052
        %v7054 = vpop.f32.mrf.mxu0
        %v7055 = vadd.f32 %v7006, %v7054
        %7056 = vmatmul.bf16.gmra.mxu0 %v371
        %v7057 = vpop.f32.mrf.mxu0
        %v7058 = vadd.f32 %v7009, %v7057
        %v7059 = vpop.f32.mrf.mxu0
        %v7060 = vadd.f32 %v7011, %v7059
        %7061 = vmatmul.bf16.gmra.mxu0 %v374
        %v7062 = vpop.f32.mrf.mxu0
        %v7063 = vadd.f32 %v7014, %v7062
        %v7064 = vpop.f32.mrf.mxu0
        %v7065 = vadd.f32 %v7016, %v7064
        %7066 = vmatmul.bf16.gmra.mxu0 %v377
        %v7067 = vpop.f32.mrf.mxu0
        %v7068 = vadd.f32 %v7019, %v7067
        %v7069 = vpop.f32.mrf.mxu0
        %v7070 = vadd.f32 %v7021, %v7069
        %7071 = vmatmul.bf16.gmra.mxu0 %v380
        %v7072 = vpop.f32.mrf.mxu0
        %v7073 = vadd.f32 %v7024, %v7072
        %v7074 = vpop.f32.mrf.mxu0
        %v7075 = vadd.f32 %v7026, %v7074
        %7076 = vdwg.mxu0
        %7077 = vmatpush.bf16.msra.mxu0 %v3313
        %7078 = vmatpush.bf16.msra.mxu0 %v3289
        %7079 = vmatpush.bf16.msra.mxu0 %v3265
        %7080 = vmatpush.bf16.msra.mxu0 %v3241
        %7081 = vmatpush.bf16.msra.mxu0 %v3217
        %7082 = vmatpush.bf16.msra.mxu0 %v3193
        %7083 = vmatpush.bf16.msra.mxu0 %v3169
        %7084 = vmatpush.bf16.msra.mxu0 %v3145
        %7085 = vmatmul.bf16.gmra.mxu0 %v360
        %v7086 = vpop.f32.mrf.mxu0
        %v7087 = vadd.f32 %v7038, %v7086
        %v7088 = vpop.f32.mrf.mxu0
        %v7089 = vadd.f32 %v7040, %v7088
        %7090 = vmatmul.bf16.gmra.mxu0 %v363
        %v7091 = vpop.f32.mrf.mxu0
        %v7092 = vadd.f32 %v7043, %v7091
        %v7093 = vpop.f32.mrf.mxu0
        %v7094 = vadd.f32 %v7045, %v7093
        %7095 = vmatmul.bf16.gmra.mxu0 %v366
        %v7096 = vpop.f32.mrf.mxu0
        %v7097 = vadd.f32 %v7048, %v7096
        %v7098 = vpop.f32.mrf.mxu0
        %v7099 = vadd.f32 %v7050, %v7098
        %7100 = vmatmul.bf16.gmra.mxu0 %v369
        %v7101 = vpop.f32.mrf.mxu0
        %v7102 = vadd.f32 %v7053, %v7101
        %v7103 = vpop.f32.mrf.mxu0
        %v7104 = vadd.f32 %v7055, %v7103
        %7105 = vmatmul.bf16.gmra.mxu0 %v372
        %v7106 = vpop.f32.mrf.mxu0
        %v7107 = vadd.f32 %v7058, %v7106
        %v7108 = vpop.f32.mrf.mxu0
        %v7109 = vadd.f32 %v7060, %v7108
        %7110 = vmatmul.bf16.gmra.mxu0 %v375
        %v7111 = vpop.f32.mrf.mxu0
        %v7112 = vadd.f32 %v7063, %v7111
        %v7113 = vpop.f32.mrf.mxu0
        %v7114 = vadd.f32 %v7065, %v7113
        %7115 = vmatmul.bf16.gmra.mxu0 %v378
        %v7116 = vpop.f32.mrf.mxu0
        %v7117 = vadd.f32 %v7068, %v7116
        %v7118 = vpop.f32.mrf.mxu0
        %v7119 = vadd.f32 %v7070, %v7118
        %7120 = vmatmul.bf16.gmra.mxu0 %v381
        %v7121 = vpop.f32.mrf.mxu0
        %v7122 = vadd.f32 %v7073, %v7121
        %v7123 = vpop.f32.mrf.mxu0
        %v7124 = vadd.f32 %v7075, %v7123
        %7125 = vdwg.mxu0
        %7126 = vmatpush.bf16.msra.mxu0 %v2930
        %7127 = vmatpush.bf16.msra.mxu0 %v2906
        %7128 = vmatpush.bf16.msra.mxu0 %v2882
        %7129 = vmatpush.bf16.msra.mxu0 %v2858
        %7130 = vmatpush.bf16.msra.mxu0 %v2834
        %7131 = vmatpush.bf16.msra.mxu0 %v2810
        %7132 = vmatpush.bf16.msra.mxu0 %v2786
        %7133 = vmatpush.bf16.msra.mxu0 %v2762
        %7134 = vmatmul.bf16.gmra.mxu0 %v358
        %v7135 = vpop.f32.mrf.mxu0
        %v7136 = vadd.f32 %v986, %v7135
        %v7137 = vpop.f32.mrf.mxu0
        %v7138 = vadd.f32 %v986, %v7137
        %7139 = vmatmul.bf16.gmra.mxu0 %v361
        %v7140 = vpop.f32.mrf.mxu0
        %v7141 = vadd.f32 %v986, %v7140
        %v7142 = vpop.f32.mrf.mxu0
        %v7143 = vadd.f32 %v986, %v7142
        %7144 = vmatmul.bf16.gmra.mxu0 %v364
        %v7145 = vpop.f32.mrf.mxu0
        %v7146 = vadd.f32 %v986, %v7145
        %v7147 = vpop.f32.mrf.mxu0
        %v7148 = vadd.f32 %v986, %v7147
        %7149 = vmatmul.bf16.gmra.mxu0 %v367
        %v7150 = vpop.f32.mrf.mxu0
        %v7151 = vadd.f32 %v986, %v7150
        %v7152 = vpop.f32.mrf.mxu0
        %v7153 = vadd.f32 %v986, %v7152
        %7154 = vmatmul.bf16.gmra.mxu0 %v370
        %v7155 = vpop.f32.mrf.mxu0
        %v7156 = vadd.f32 %v986, %v7155
        %v7157 = vpop.f32.mrf.mxu0
        %v7158 = vadd.f32 %v986, %v7157
        %7159 = vmatmul.bf16.gmra.mxu0 %v373
        %v7160 = vpop.f32.mrf.mxu0
        %v7161 = vadd.f32 %v986, %v7160
        %v7162 = vpop.f32.mrf.mxu0
        %v7163 = vadd.f32 %v986, %v7162
        %7164 = vmatmul.bf16.gmra.mxu0 %v376
        %v7165 = vpop.f32.mrf.mxu0
        %v7166 = vadd.f32 %v986, %v7165
        %v7167 = vpop.f32.mrf.mxu0
        %v7168 = vadd.f32 %v986, %v7167
        %7169 = vmatmul.bf16.gmra.mxu0 %v379
        %v7170 = vpop.f32.mrf.mxu0
        %v7171 = vadd.f32 %v986, %v7170
        %v7172 = vpop.f32.mrf.mxu0
        %v7173 = vadd.f32 %v986, %v7172
        %7174 = vdwg.mxu0
        %7175 = vmatpush.bf16.msra.mxu0 %v3122
        %7176 = vmatpush.bf16.msra.mxu0 %v3098
        %7177 = vmatpush.bf16.msra.mxu0 %v3074
        %7178 = vmatpush.bf16.msra.mxu0 %v3050
        %7179 = vmatpush.bf16.msra.mxu0 %v3026
        %7180 = vmatpush.bf16.msra.mxu0 %v3002
        %7181 = vmatpush.bf16.msra.mxu0 %v2978
        %7182 = vmatpush.bf16.msra.mxu0 %v2954
        %7183 = vmatmul.bf16.gmra.mxu0 %v359
        %v7184 = vpop.f32.mrf.mxu0
        %v7185 = vadd.f32 %v7136, %v7184
        %v7186 = vpop.f32.mrf.mxu0
        %v7187 = vadd.f32 %v7138, %v7186
        %7188 = vmatmul.bf16.gmra.mxu0 %v362
        %v7189 = vpop.f32.mrf.mxu0
        %v7190 = vadd.f32 %v7141, %v7189
        %v7191 = vpop.f32.mrf.mxu0
        %v7192 = vadd.f32 %v7143, %v7191
        %7193 = vmatmul.bf16.gmra.mxu0 %v365
        %v7194 = vpop.f32.mrf.mxu0
        %v7195 = vadd.f32 %v7146, %v7194
        %v7196 = vpop.f32.mrf.mxu0
        %v7197 = vadd.f32 %v7148, %v7196
        %7198 = vmatmul.bf16.gmra.mxu0 %v368
        %v7199 = vpop.f32.mrf.mxu0
        %v7200 = vadd.f32 %v7151, %v7199
        %v7201 = vpop.f32.mrf.mxu0
        %v7202 = vadd.f32 %v7153, %v7201
        %7203 = vmatmul.bf16.gmra.mxu0 %v371
        %v7204 = vpop.f32.mrf.mxu0
        %v7205 = vadd.f32 %v7156, %v7204
        %v7206 = vpop.f32.mrf.mxu0
        %v7207 = vadd.f32 %v7158, %v7206
        %7208 = vmatmul.bf16.gmra.mxu0 %v374
        %v7209 = vpop.f32.mrf.mxu0
        %v7210 = vadd.f32 %v7161, %v7209
        %v7211 = vpop.f32.mrf.mxu0
        %v7212 = vadd.f32 %v7163, %v7211
        %7213 = vmatmul.bf16.gmra.mxu0 %v377
        %v7214 = vpop.f32.mrf.mxu0
        %v7215 = vadd.f32 %v7166, %v7214
        %v7216 = vpop.f32.mrf.mxu0
        %v7217 = vadd.f32 %v7168, %v7216
        %7218 = vmatmul.bf16.gmra.mxu0 %v380
        %v7219 = vpop.f32.mrf.mxu0
        %v7220 = vadd.f32 %v7171, %v7219
        %v7221 = vpop.f32.mrf.mxu0
        %v7222 = vadd.f32 %v7173, %v7221
        %7223 = vdwg.mxu0
        %7224 = vmatpush.bf16.msra.mxu0 %v3314
        %7225 = vmatpush.bf16.msra.mxu0 %v3290
        %7226 = vmatpush.bf16.msra.mxu0 %v3266
        %7227 = vmatpush.bf16.msra.mxu0 %v3242
        %7228 = vmatpush.bf16.msra.mxu0 %v3218
        %7229 = vmatpush.bf16.msra.mxu0 %v3194
        %7230 = vmatpush.bf16.msra.mxu0 %v3170
        %7231 = vmatpush.bf16.msra.mxu0 %v3146
        %7232 = vmatmul.bf16.gmra.mxu0 %v360
        %v7233 = vpop.f32.mrf.mxu0
        %v7234 = vadd.f32 %v7185, %v7233
        %v7235 = vpop.f32.mrf.mxu0
        %v7236 = vadd.f32 %v7187, %v7235
        %7237 = vmatmul.bf16.gmra.mxu0 %v363
        %v7238 = vpop.f32.mrf.mxu0
        %v7239 = vadd.f32 %v7190, %v7238
        %v7240 = vpop.f32.mrf.mxu0
        %v7241 = vadd.f32 %v7192, %v7240
        %7242 = vmatmul.bf16.gmra.mxu0 %v366
        %v7243 = vpop.f32.mrf.mxu0
        %v7244 = vadd.f32 %v7195, %v7243
        %v7245 = vpop.f32.mrf.mxu0
        %v7246 = vadd.f32 %v7197, %v7245
        %7247 = vmatmul.bf16.gmra.mxu0 %v369
        %v7248 = vpop.f32.mrf.mxu0
        %v7249 = vadd.f32 %v7200, %v7248
        %v7250 = vpop.f32.mrf.mxu0
        %v7251 = vadd.f32 %v7202, %v7250
        %7252 = vmatmul.bf16.gmra.mxu0 %v372
        %v7253 = vpop.f32.mrf.mxu0
        %v7254 = vadd.f32 %v7205, %v7253
        %v7255 = vpop.f32.mrf.mxu0
        %v7256 = vadd.f32 %v7207, %v7255
        %7257 = vmatmul.bf16.gmra.mxu0 %v375
        %v7258 = vpop.f32.mrf.mxu0
        %v7259 = vadd.f32 %v7210, %v7258
        %v7260 = vpop.f32.mrf.mxu0
        %v7261 = vadd.f32 %v7212, %v7260
        %7262 = vmatmul.bf16.gmra.mxu0 %v378
        %v7263 = vpop.f32.mrf.mxu0
        %v7264 = vadd.f32 %v7215, %v7263
        %v7265 = vpop.f32.mrf.mxu0
        %v7266 = vadd.f32 %v7217, %v7265
        %7267 = vmatmul.bf16.gmra.mxu0 %v381
        %v7268 = vpop.f32.mrf.mxu0
        %v7269 = vadd.f32 %v7220, %v7268
        %v7270 = vpop.f32.mrf.mxu0
        %v7271 = vadd.f32 %v7222, %v7270
        %7272 = vdwg.mxu0
        %7273 = vmatpush.bf16.msra.mxu0 %v2931
        %7274 = vmatpush.bf16.msra.mxu0 %v2907
        %7275 = vmatpush.bf16.msra.mxu0 %v2883
        %7276 = vmatpush.bf16.msra.mxu0 %v2859
        %7277 = vmatpush.bf16.msra.mxu0 %v2835
        %7278 = vmatpush.bf16.msra.mxu0 %v2811
        %7279 = vmatpush.bf16.msra.mxu0 %v2787
        %7280 = vmatpush.bf16.msra.mxu0 %v2763
        %7281 = vmatmul.bf16.gmra.mxu0 %v358
        %v7282 = vpop.f32.mrf.mxu0
        %v7283 = vadd.f32 %v987, %v7282
        %v7284 = vpop.f32.mrf.mxu0
        %v7285 = vadd.f32 %v987, %v7284
        %7286 = vmatmul.bf16.gmra.mxu0 %v361
        %v7287 = vpop.f32.mrf.mxu0
        %v7288 = vadd.f32 %v987, %v7287
        %v7289 = vpop.f32.mrf.mxu0
        %v7290 = vadd.f32 %v987, %v7289
        %7291 = vmatmul.bf16.gmra.mxu0 %v364
        %v7292 = vpop.f32.mrf.mxu0
        %v7293 = vadd.f32 %v987, %v7292
        %v7294 = vpop.f32.mrf.mxu0
        %v7295 = vadd.f32 %v987, %v7294
        %7296 = vmatmul.bf16.gmra.mxu0 %v367
        %v7297 = vpop.f32.mrf.mxu0
        %v7298 = vadd.f32 %v987, %v7297
        %v7299 = vpop.f32.mrf.mxu0
        %v7300 = vadd.f32 %v987, %v7299
        %7301 = vmatmul.bf16.gmra.mxu0 %v370
        %v7302 = vpop.f32.mrf.mxu0
        %v7303 = vadd.f32 %v987, %v7302
        %v7304 = vpop.f32.mrf.mxu0
        %v7305 = vadd.f32 %v987, %v7304
        %7306 = vmatmul.bf16.gmra.mxu0 %v373
        %v7307 = vpop.f32.mrf.mxu0
        %v7308 = vadd.f32 %v987, %v7307
        %v7309 = vpop.f32.mrf.mxu0
        %v7310 = vadd.f32 %v987, %v7309
        %7311 = vmatmul.bf16.gmra.mxu0 %v376
        %v7312 = vpop.f32.mrf.mxu0
        %v7313 = vadd.f32 %v987, %v7312
        %v7314 = vpop.f32.mrf.mxu0
        %v7315 = vadd.f32 %v987, %v7314
        %7316 = vmatmul.bf16.gmra.mxu0 %v379
        %v7317 = vpop.f32.mrf.mxu0
        %v7318 = vadd.f32 %v987, %v7317
        %v7319 = vpop.f32.mrf.mxu0
        %v7320 = vadd.f32 %v987, %v7319
        %7321 = vdwg.mxu0
        %7322 = vmatpush.bf16.msra.mxu0 %v3123
        %7323 = vmatpush.bf16.msra.mxu0 %v3099
        %7324 = vmatpush.bf16.msra.mxu0 %v3075
        %7325 = vmatpush.bf16.msra.mxu0 %v3051
        %7326 = vmatpush.bf16.msra.mxu0 %v3027
        %7327 = vmatpush.bf16.msra.mxu0 %v3003
        %7328 = vmatpush.bf16.msra.mxu0 %v2979
        %7329 = vmatpush.bf16.msra.mxu0 %v2955
        %7330 = vmatmul.bf16.gmra.mxu0 %v359
        %v7331 = vpop.f32.mrf.mxu0
        %v7332 = vadd.f32 %v7283, %v7331
        %v7333 = vpop.f32.mrf.mxu0
        %v7334 = vadd.f32 %v7285, %v7333
        %7335 = vmatmul.bf16.gmra.mxu0 %v362
        %v7336 = vpop.f32.mrf.mxu0
        %v7337 = vadd.f32 %v7288, %v7336
        %v7338 = vpop.f32.mrf.mxu0
        %v7339 = vadd.f32 %v7290, %v7338
        %7340 = vmatmul.bf16.gmra.mxu0 %v365
        %v7341 = vpop.f32.mrf.mxu0
        %v7342 = vadd.f32 %v7293, %v7341
        %v7343 = vpop.f32.mrf.mxu0
        %v7344 = vadd.f32 %v7295, %v7343
        %7345 = vmatmul.bf16.gmra.mxu0 %v368
        %v7346 = vpop.f32.mrf.mxu0
        %v7347 = vadd.f32 %v7298, %v7346
        %v7348 = vpop.f32.mrf.mxu0
        %v7349 = vadd.f32 %v7300, %v7348
        %7350 = vmatmul.bf16.gmra.mxu0 %v371
        %v7351 = vpop.f32.mrf.mxu0
        %v7352 = vadd.f32 %v7303, %v7351
        %v7353 = vpop.f32.mrf.mxu0
        %v7354 = vadd.f32 %v7305, %v7353
        %7355 = vmatmul.bf16.gmra.mxu0 %v374
        %v7356 = vpop.f32.mrf.mxu0
        %v7357 = vadd.f32 %v7308, %v7356
        %v7358 = vpop.f32.mrf.mxu0
        %v7359 = vadd.f32 %v7310, %v7358
        %7360 = vmatmul.bf16.gmra.mxu0 %v377
        %v7361 = vpop.f32.mrf.mxu0
        %v7362 = vadd.f32 %v7313, %v7361
        %v7363 = vpop.f32.mrf.mxu0
        %v7364 = vadd.f32 %v7315, %v7363
        %7365 = vmatmul.bf16.gmra.mxu0 %v380
        %v7366 = vpop.f32.mrf.mxu0
        %v7367 = vadd.f32 %v7318, %v7366
        %v7368 = vpop.f32.mrf.mxu0
        %v7369 = vadd.f32 %v7320, %v7368
        %7370 = vdwg.mxu0
        %7371 = vmatpush.bf16.msra.mxu0 %v3315
        %7372 = vmatpush.bf16.msra.mxu0 %v3291
        %7373 = vmatpush.bf16.msra.mxu0 %v3267
        %7374 = vmatpush.bf16.msra.mxu0 %v3243
        %7375 = vmatpush.bf16.msra.mxu0 %v3219
        %7376 = vmatpush.bf16.msra.mxu0 %v3195
        %7377 = vmatpush.bf16.msra.mxu0 %v3171
        %7378 = vmatpush.bf16.msra.mxu0 %v3147
        %7379 = vmatmul.bf16.gmra.mxu0 %v360
        %v7380 = vpop.f32.mrf.mxu0
        %v7381 = vadd.f32 %v7332, %v7380
        %v7382 = vpop.f32.mrf.mxu0
        %v7383 = vadd.f32 %v7334, %v7382
        %7384 = vmatmul.bf16.gmra.mxu0 %v363
        %v7385 = vpop.f32.mrf.mxu0
        %v7386 = vadd.f32 %v7337, %v7385
        %v7387 = vpop.f32.mrf.mxu0
        %v7388 = vadd.f32 %v7339, %v7387
        %7389 = vmatmul.bf16.gmra.mxu0 %v366
        %v7390 = vpop.f32.mrf.mxu0
        %v7391 = vadd.f32 %v7342, %v7390
        %v7392 = vpop.f32.mrf.mxu0
        %v7393 = vadd.f32 %v7344, %v7392
        %7394 = vmatmul.bf16.gmra.mxu0 %v369
        %v7395 = vpop.f32.mrf.mxu0
        %v7396 = vadd.f32 %v7347, %v7395
        %v7397 = vpop.f32.mrf.mxu0
        %v7398 = vadd.f32 %v7349, %v7397
        %7399 = vmatmul.bf16.gmra.mxu0 %v372
        %v7400 = vpop.f32.mrf.mxu0
        %v7401 = vadd.f32 %v7352, %v7400
        %v7402 = vpop.f32.mrf.mxu0
        %v7403 = vadd.f32 %v7354, %v7402
        %7404 = vmatmul.bf16.gmra.mxu0 %v375
        %v7405 = vpop.f32.mrf.mxu0
        %v7406 = vadd.f32 %v7357, %v7405
        %v7407 = vpop.f32.mrf.mxu0
        %v7408 = vadd.f32 %v7359, %v7407
        %7409 = vmatmul.bf16.gmra.mxu0 %v378
        %v7410 = vpop.f32.mrf.mxu0
        %v7411 = vadd.f32 %v7362, %v7410
        %v7412 = vpop.f32.mrf.mxu0
        %v7413 = vadd.f32 %v7364, %v7412
        %7414 = vmatmul.bf16.gmra.mxu0 %v381
        %v7415 = vpop.f32.mrf.mxu0
        %v7416 = vadd.f32 %v7367, %v7415
        %v7417 = vpop.f32.mrf.mxu0
        %v7418 = vadd.f32 %v7369, %v7417
        %7419 = vdwg.mxu0
        %v7420 = vmax.f32 %v4000, 0.0
        %v7421 = vmax.f32 %v4147, 0.0
        %v7422 = vmax.f32 %v4294, 0.0
        %v7423 = vmax.f32 %v4441, 0.0
        %v7424 = vmax.f32 %v4588, 0.0
        %v7425 = vmax.f32 %v4735, 0.0
        %v7426 = vmax.f32 %v4882, 0.0
        %v7427 = vmax.f32 %v5029, 0.0
        %v7428 = vmax.f32 %v5176, 0.0
        %v7429 = vmax.f32 %v5323, 0.0
        %v7430 = vmax.f32 %v5470, 0.0
        %v7431 = vmax.f32 %v5617, 0.0
        %v7432 = vmax.f32 %v4002, 0.0
        %v7433 = vmax.f32 %v4149, 0.0
        %v7434 = vmax.f32 %v4296, 0.0
        %v7435 = vmax.f32 %v4443, 0.0
        %v7436 = vmax.f32 %v4590, 0.0
        %v7437 = vmax.f32 %v4737, 0.0
        %v7438 = vmax.f32 %v4884, 0.0
        %v7439 = vmax.f32 %v5031, 0.0
        %v7440 = vmax.f32 %v5178, 0.0
        %v7441 = vmax.f32 %v5325, 0.0
        %v7442 = vmax.f32 %v5472, 0.0
        %v7443 = vmax.f32 %v5619, 0.0
        %v7444 = vmax.f32 %v4005, 0.0
        %v7445 = vmax.f32 %v4152, 0.0
        %v7446 = vmax.f32 %v4299, 0.0
        %v7447 = vmax.f32 %v4446, 0.0
        %v7448 = vmax.f32 %v4593, 0.0
        %v7449 = vmax.f32 %v4740, 0.0
        %v7450 = vmax.f32 %v4887, 0.0
        %v7451 = vmax.f32 %v5034, 0.0
        %v7452 = vmax.f32 %v5181, 0.0
        %v7453 = vmax.f32 %v5328, 0.0
        %v7454 = vmax.f32 %v5475, 0.0
        %v7455 = vmax.f32 %v5622, 0.0
        %v7456 = vmax.f32 %v4007, 0.0
        %v7457 = vmax.f32 %v4154, 0.0
        %v7458 = vmax.f32 %v4301, 0.0
        %v7459 = vmax.f32 %v4448, 0.0
        %v7460 = vmax.f32 %v4595, 0.0
        %v7461 = vmax.f32 %v4742, 0.0
        %v7462 = vmax.f32 %v4889, 0.0
        %v7463 = vmax.f32 %v5036, 0.0
        %v7464 = vmax.f32 %v5183, 0.0
        %v7465 = vmax.f32 %v5330, 0.0
        %v7466 = vmax.f32 %v5477, 0.0
        %v7467 = vmax.f32 %v5624, 0.0
        %v7468 = vmax.f32 %v4010, 0.0
        %v7469 = vmax.f32 %v4157, 0.0
        %v7470 = vmax.f32 %v4304, 0.0
        %v7471 = vmax.f32 %v4451, 0.0
        %v7472 = vmax.f32 %v4598, 0.0
        %v7473 = vmax.f32 %v4745, 0.0
        %v7474 = vmax.f32 %v4892, 0.0
        %v7475 = vmax.f32 %v5039, 0.0
        %v7476 = vmax.f32 %v5186, 0.0
        %v7477 = vmax.f32 %v5333, 0.0
        %v7478 = vmax.f32 %v5480, 0.0
        %v7479 = vmax.f32 %v5627, 0.0
        %v7480 = vmax.f32 %v4012, 0.0
        %v7481 = vmax.f32 %v4159, 0.0
        %v7482 = vmax.f32 %v4306, 0.0
        %v7483 = vmax.f32 %v4453, 0.0
        %v7484 = vmax.f32 %v4600, 0.0
        %v7485 = vmax.f32 %v4747, 0.0
        %v7486 = vmax.f32 %v4894, 0.0
        %v7487 = vmax.f32 %v5041, 0.0
        %v7488 = vmax.f32 %v5188, 0.0
        %v7489 = vmax.f32 %v5335, 0.0
        %v7490 = vmax.f32 %v5482, 0.0
        %v7491 = vmax.f32 %v5629, 0.0
        %v7492 = vmax.f32 %v4015, 0.0
        %v7493 = vmax.f32 %v4162, 0.0
        %v7494 = vmax.f32 %v4309, 0.0
        %v7495 = vmax.f32 %v4456, 0.0
        %v7496 = vmax.f32 %v4603, 0.0
        %v7497 = vmax.f32 %v4750, 0.0
        %v7498 = vmax.f32 %v4897, 0.0
        %v7499 = vmax.f32 %v5044, 0.0
        %v7500 = vmax.f32 %v5191, 0.0
        %v7501 = vmax.f32 %v5338, 0.0
        %v7502 = vmax.f32 %v5485, 0.0
        %v7503 = vmax.f32 %v5632, 0.0
        %v7504 = vmax.f32 %v4017, 0.0
        %v7505 = vmax.f32 %v4164, 0.0
        %v7506 = vmax.f32 %v4311, 0.0
        %v7507 = vmax.f32 %v4458, 0.0
        %v7508 = vmax.f32 %v4605, 0.0
        %v7509 = vmax.f32 %v4752, 0.0
        %v7510 = vmax.f32 %v4899, 0.0
        %v7511 = vmax.f32 %v5046, 0.0
        %v7512 = vmax.f32 %v5193, 0.0
        %v7513 = vmax.f32 %v5340, 0.0
        %v7514 = vmax.f32 %v5487, 0.0
        %v7515 = vmax.f32 %v5634, 0.0
        %v7516 = vmax.f32 %v4020, 0.0
        %v7517 = vmax.f32 %v4167, 0.0
        %v7518 = vmax.f32 %v4314, 0.0
        %v7519 = vmax.f32 %v4461, 0.0
        %v7520 = vmax.f32 %v4608, 0.0
        %v7521 = vmax.f32 %v4755, 0.0
        %v7522 = vmax.f32 %v4902, 0.0
        %v7523 = vmax.f32 %v5049, 0.0
        %v7524 = vmax.f32 %v5196, 0.0
        %v7525 = vmax.f32 %v5343, 0.0
        %v7526 = vmax.f32 %v5490, 0.0
        %v7527 = vmax.f32 %v5637, 0.0
        %v7528 = vmax.f32 %v4022, 0.0
        %v7529 = vmax.f32 %v4169, 0.0
        %v7530 = vmax.f32 %v4316, 0.0
        %v7531 = vmax.f32 %v4463, 0.0
        %v7532 = vmax.f32 %v4610, 0.0
        %v7533 = vmax.f32 %v4757, 0.0
        %v7534 = vmax.f32 %v4904, 0.0
        %v7535 = vmax.f32 %v5051, 0.0
        %v7536 = vmax.f32 %v5198, 0.0
        %v7537 = vmax.f32 %v5345, 0.0
        %v7538 = vmax.f32 %v5492, 0.0
        %v7539 = vmax.f32 %v5639, 0.0
        %v7540 = vmax.f32 %v4025, 0.0
        %v7541 = vmax.f32 %v4172, 0.0
        %v7542 = vmax.f32 %v4319, 0.0
        %v7543 = vmax.f32 %v4466, 0.0
        %v7544 = vmax.f32 %v4613, 0.0
        %v7545 = vmax.f32 %v4760, 0.0
        %v7546 = vmax.f32 %v4907, 0.0
        %v7547 = vmax.f32 %v5054, 0.0
        %v7548 = vmax.f32 %v5201, 0.0
        %v7549 = vmax.f32 %v5348, 0.0
        %v7550 = vmax.f32 %v5495, 0.0
        %v7551 = vmax.f32 %v5642, 0.0
        %v7552 = vmax.f32 %v4027, 0.0
        %v7553 = vmax.f32 %v4174, 0.0
        %v7554 = vmax.f32 %v4321, 0.0
        %v7555 = vmax.f32 %v4468, 0.0
        %v7556 = vmax.f32 %v4615, 0.0
        %v7557 = vmax.f32 %v4762, 0.0
        %v7558 = vmax.f32 %v4909, 0.0
        %v7559 = vmax.f32 %v5056, 0.0
        %v7560 = vmax.f32 %v5203, 0.0
        %v7561 = vmax.f32 %v5350, 0.0
        %v7562 = vmax.f32 %v5497, 0.0
        %v7563 = vmax.f32 %v5644, 0.0
        %v7564 = vmax.f32 %v4030, 0.0
        %v7565 = vmax.f32 %v4177, 0.0
        %v7566 = vmax.f32 %v4324, 0.0
        %v7567 = vmax.f32 %v4471, 0.0
        %v7568 = vmax.f32 %v4618, 0.0
        %v7569 = vmax.f32 %v4765, 0.0
        %v7570 = vmax.f32 %v4912, 0.0
        %v7571 = vmax.f32 %v5059, 0.0
        %v7572 = vmax.f32 %v5206, 0.0
        %v7573 = vmax.f32 %v5353, 0.0
        %v7574 = vmax.f32 %v5500, 0.0
        %v7575 = vmax.f32 %v5647, 0.0
        %v7576 = vmax.f32 %v4032, 0.0
        %v7577 = vmax.f32 %v4179, 0.0
        %v7578 = vmax.f32 %v4326, 0.0
        %v7579 = vmax.f32 %v4473, 0.0
        %v7580 = vmax.f32 %v4620, 0.0
        %v7581 = vmax.f32 %v4767, 0.0
        %v7582 = vmax.f32 %v4914, 0.0
        %v7583 = vmax.f32 %v5061, 0.0
        %v7584 = vmax.f32 %v5208, 0.0
        %v7585 = vmax.f32 %v5355, 0.0
        %v7586 = vmax.f32 %v5502, 0.0
        %v7587 = vmax.f32 %v5649, 0.0
        %v7588 = vmax.f32 %v4035, 0.0
        %v7589 = vmax.f32 %v4182, 0.0
        %v7590 = vmax.f32 %v4329, 0.0
        %v7591 = vmax.f32 %v4476, 0.0
        %v7592 = vmax.f32 %v4623, 0.0
        %v7593 = vmax.f32 %v4770, 0.0
        %v7594 = vmax.f32 %v4917, 0.0
        %v7595 = vmax.f32 %v5064, 0.0
        %v7596 = vmax.f32 %v5211, 0.0
        %v7597 = vmax.f32 %v5358, 0.0
        %v7598 = vmax.f32 %v5505, 0.0
        %v7599 = vmax.f32 %v5652, 0.0
        %v7600 = vmax.f32 %v4037, 0.0
        %v7601 = vmax.f32 %v4184, 0.0
        %v7602 = vmax.f32 %v4331, 0.0
        %v7603 = vmax.f32 %v4478, 0.0
        %v7604 = vmax.f32 %v4625, 0.0
        %v7605 = vmax.f32 %v4772, 0.0
        %v7606 = vmax.f32 %v4919, 0.0
        %v7607 = vmax.f32 %v5066, 0.0
        %v7608 = vmax.f32 %v5213, 0.0
        %v7609 = vmax.f32 %v5360, 0.0
        %v7610 = vmax.f32 %v5507, 0.0
        %v7611 = vmax.f32 %v5654, 0.0
        %v7612 = vmul.f32 %v7420, %v5764
        %v7613 = vmul.f32 %v7421, %v5911
        %v7614 = vmul.f32 %v7422, %v6058
        %v7615 = vmul.f32 %v7423, %v6205
        %v7616 = vmul.f32 %v7424, %v6352
        %v7617 = vmul.f32 %v7425, %v6499
        %v7618 = vmul.f32 %v7426, %v6646
        %v7619 = vmul.f32 %v7427, %v6793
        %v7620 = vmul.f32 %v7428, %v6940
        %v7621 = vmul.f32 %v7429, %v7087
        %v7622 = vmul.f32 %v7430, %v7234
        %v7623 = vmul.f32 %v7431, %v7381
        %v7624 = vmul.f32 %v7432, %v5766
        %v7625 = vmul.f32 %v7433, %v5913
        %v7626 = vmul.f32 %v7434, %v6060
        %v7627 = vmul.f32 %v7435, %v6207
        %v7628 = vmul.f32 %v7436, %v6354
        %v7629 = vmul.f32 %v7437, %v6501
        %v7630 = vmul.f32 %v7438, %v6648
        %v7631 = vmul.f32 %v7439, %v6795
        %v7632 = vmul.f32 %v7440, %v6942
        %v7633 = vmul.f32 %v7441, %v7089
        %v7634 = vmul.f32 %v7442, %v7236
        %v7635 = vmul.f32 %v7443, %v7383
        %v7636 = vmul.f32 %v7444, %v5769
        %v7637 = vmul.f32 %v7445, %v5916
        %v7638 = vmul.f32 %v7446, %v6063
        %v7639 = vmul.f32 %v7447, %v6210
        %v7640 = vmul.f32 %v7448, %v6357
        %v7641 = vmul.f32 %v7449, %v6504
        %v7642 = vmul.f32 %v7450, %v6651
        %v7643 = vmul.f32 %v7451, %v6798
        %v7644 = vmul.f32 %v7452, %v6945
        %v7645 = vmul.f32 %v7453, %v7092
        %v7646 = vmul.f32 %v7454, %v7239
        %v7647 = vmul.f32 %v7455, %v7386
        %v7648 = vmul.f32 %v7456, %v5771
        %v7649 = vmul.f32 %v7457, %v5918
        %v7650 = vmul.f32 %v7458, %v6065
        %v7651 = vmul.f32 %v7459, %v6212
        %v7652 = vmul.f32 %v7460, %v6359
        %v7653 = vmul.f32 %v7461, %v6506
        %v7654 = vmul.f32 %v7462, %v6653
        %v7655 = vmul.f32 %v7463, %v6800
        %v7656 = vmul.f32 %v7464, %v6947
        %v7657 = vmul.f32 %v7465, %v7094
        %v7658 = vmul.f32 %v7466, %v7241
        %v7659 = vmul.f32 %v7467, %v7388
        %v7660 = vmul.f32 %v7468, %v5774
        %v7661 = vmul.f32 %v7469, %v5921
        %v7662 = vmul.f32 %v7470, %v6068
        %v7663 = vmul.f32 %v7471, %v6215
        %v7664 = vmul.f32 %v7472, %v6362
        %v7665 = vmul.f32 %v7473, %v6509
        %v7666 = vmul.f32 %v7474, %v6656
        %v7667 = vmul.f32 %v7475, %v6803
        %v7668 = vmul.f32 %v7476, %v6950
        %v7669 = vmul.f32 %v7477, %v7097
        %v7670 = vmul.f32 %v7478, %v7244
        %v7671 = vmul.f32 %v7479, %v7391
        %v7672 = vmul.f32 %v7480, %v5776
        %v7673 = vmul.f32 %v7481, %v5923
        %v7674 = vmul.f32 %v7482, %v6070
        %v7675 = vmul.f32 %v7483, %v6217
        %v7676 = vmul.f32 %v7484, %v6364
        %v7677 = vmul.f32 %v7485, %v6511
        %v7678 = vmul.f32 %v7486, %v6658
        %v7679 = vmul.f32 %v7487, %v6805
        %v7680 = vmul.f32 %v7488, %v6952
        %v7681 = vmul.f32 %v7489, %v7099
        %v7682 = vmul.f32 %v7490, %v7246
        %v7683 = vmul.f32 %v7491, %v7393
        %v7684 = vmul.f32 %v7492, %v5779
        %v7685 = vmul.f32 %v7493, %v5926
        %v7686 = vmul.f32 %v7494, %v6073
        %v7687 = vmul.f32 %v7495, %v6220
        %v7688 = vmul.f32 %v7496, %v6367
        %v7689 = vmul.f32 %v7497, %v6514
        %v7690 = vmul.f32 %v7498, %v6661
        %v7691 = vmul.f32 %v7499, %v6808
        %v7692 = vmul.f32 %v7500, %v6955
        %v7693 = vmul.f32 %v7501, %v7102
        %v7694 = vmul.f32 %v7502, %v7249
        %v7695 = vmul.f32 %v7503, %v7396
        %v7696 = vmul.f32 %v7504, %v5781
        %v7697 = vmul.f32 %v7505, %v5928
        %v7698 = vmul.f32 %v7506, %v6075
        %v7699 = vmul.f32 %v7507, %v6222
        %v7700 = vmul.f32 %v7508, %v6369
        %v7701 = vmul.f32 %v7509, %v6516
        %v7702 = vmul.f32 %v7510, %v6663
        %v7703 = vmul.f32 %v7511, %v6810
        %v7704 = vmul.f32 %v7512, %v6957
        %v7705 = vmul.f32 %v7513, %v7104
        %v7706 = vmul.f32 %v7514, %v7251
        %v7707 = vmul.f32 %v7515, %v7398
        %v7708 = vmul.f32 %v7516, %v5784
        %v7709 = vmul.f32 %v7517, %v5931
        %v7710 = vmul.f32 %v7518, %v6078
        %v7711 = vmul.f32 %v7519, %v6225
        %v7712 = vmul.f32 %v7520, %v6372
        %v7713 = vmul.f32 %v7521, %v6519
        %v7714 = vmul.f32 %v7522, %v6666
        %v7715 = vmul.f32 %v7523, %v6813
        %v7716 = vmul.f32 %v7524, %v6960
        %v7717 = vmul.f32 %v7525, %v7107
        %v7718 = vmul.f32 %v7526, %v7254
        %v7719 = vmul.f32 %v7527, %v7401
        %v7720 = vmul.f32 %v7528, %v5786
        %v7721 = vmul.f32 %v7529, %v5933
        %v7722 = vmul.f32 %v7530, %v6080
        %v7723 = vmul.f32 %v7531, %v6227
        %v7724 = vmul.f32 %v7532, %v6374
        %v7725 = vmul.f32 %v7533, %v6521
        %v7726 = vmul.f32 %v7534, %v6668
        %v7727 = vmul.f32 %v7535, %v6815
        %v7728 = vmul.f32 %v7536, %v6962
        %v7729 = vmul.f32 %v7537, %v7109
        %v7730 = vmul.f32 %v7538, %v7256
        %v7731 = vmul.f32 %v7539, %v7403
        %v7732 = vmul.f32 %v7540, %v5789
        %v7733 = vmul.f32 %v7541, %v5936
        %v7734 = vmul.f32 %v7542, %v6083
        %v7735 = vmul.f32 %v7543, %v6230
        %v7736 = vmul.f32 %v7544, %v6377
        %v7737 = vmul.f32 %v7545, %v6524
        %v7738 = vmul.f32 %v7546, %v6671
        %v7739 = vmul.f32 %v7547, %v6818
        %v7740 = vmul.f32 %v7548, %v6965
        %v7741 = vmul.f32 %v7549, %v7112
        %v7742 = vmul.f32 %v7550, %v7259
        %v7743 = vmul.f32 %v7551, %v7406
        %v7744 = vmul.f32 %v7552, %v5791
        %v7745 = vmul.f32 %v7553, %v5938
        %v7746 = vmul.f32 %v7554, %v6085
        %v7747 = vmul.f32 %v7555, %v6232
        %v7748 = vmul.f32 %v7556, %v6379
        %v7749 = vmul.f32 %v7557, %v6526
        %v7750 = vmul.f32 %v7558, %v6673
        %v7751 = vmul.f32 %v7559, %v6820
        %v7752 = vmul.f32 %v7560, %v6967
        %v7753 = vmul.f32 %v7561, %v7114
        %v7754 = vmul.f32 %v7562, %v7261
        %v7755 = vmul.f32 %v7563, %v7408
        %v7756 = vmul.f32 %v7564, %v5794
        %v7757 = vmul.f32 %v7565, %v5941
        %v7758 = vmul.f32 %v7566, %v6088
        %v7759 = vmul.f32 %v7567, %v6235
        %v7760 = vmul.f32 %v7568, %v6382
        %v7761 = vmul.f32 %v7569, %v6529
        %v7762 = vmul.f32 %v7570, %v6676
        %v7763 = vmul.f32 %v7571, %v6823
        %v7764 = vmul.f32 %v7572, %v6970
        %v7765 = vmul.f32 %v7573, %v7117
        %v7766 = vmul.f32 %v7574, %v7264
        %v7767 = vmul.f32 %v7575, %v7411
        %v7768 = vmul.f32 %v7576, %v5796
        %v7769 = vmul.f32 %v7577, %v5943
        %v7770 = vmul.f32 %v7578, %v6090
        %v7771 = vmul.f32 %v7579, %v6237
        %v7772 = vmul.f32 %v7580, %v6384
        %v7773 = vmul.f32 %v7581, %v6531
        %v7774 = vmul.f32 %v7582, %v6678
        %v7775 = vmul.f32 %v7583, %v6825
        %v7776 = vmul.f32 %v7584, %v6972
        %v7777 = vmul.f32 %v7585, %v7119
        %v7778 = vmul.f32 %v7586, %v7266
        %v7779 = vmul.f32 %v7587, %v7413
        %v7780 = vmul.f32 %v7588, %v5799
        %v7781 = vmul.f32 %v7589, %v5946
        %v7782 = vmul.f32 %v7590, %v6093
        %v7783 = vmul.f32 %v7591, %v6240
        %v7784 = vmul.f32 %v7592, %v6387
        %v7785 = vmul.f32 %v7593, %v6534
        %v7786 = vmul.f32 %v7594, %v6681
        %v7787 = vmul.f32 %v7595, %v6828
        %v7788 = vmul.f32 %v7596, %v6975
        %v7789 = vmul.f32 %v7597, %v7122
        %v7790 = vmul.f32 %v7598, %v7269
        %v7791 = vmul.f32 %v7599, %v7416
        %v7792 = vmul.f32 %v7600, %v5801
        %v7793 = vmul.f32 %v7601, %v5948
        %v7794 = vmul.f32 %v7602, %v6095
        %v7795 = vmul.f32 %v7603, %v6242
        %v7796 = vmul.f32 %v7604, %v6389
        %v7797 = vmul.f32 %v7605, %v6536
        %v7798 = vmul.f32 %v7606, %v6683
        %v7799 = vmul.f32 %v7607, %v6830
        %v7800 = vmul.f32 %v7608, %v6977
        %v7801 = vmul.f32 %v7609, %v7124
        %v7802 = vmul.f32 %v7610, %v7271
        %v7803 = vmul.f32 %v7611, %v7418
        %v7804 = vpack.c.bf16 %v7624, %v7612
        %v7805 = vpack.c.bf16 %v7625, %v7613
        %v7806 = vpack.c.bf16 %v7626, %v7614
        %v7807 = vpack.c.bf16 %v7627, %v7615
        %v7808 = vpack.c.bf16 %v7628, %v7616
        %v7809 = vpack.c.bf16 %v7629, %v7617
        %v7810 = vpack.c.bf16 %v7630, %v7618
        %v7811 = vpack.c.bf16 %v7631, %v7619
        %v7812 = vpack.c.bf16 %v7632, %v7620
        %v7813 = vpack.c.bf16 %v7633, %v7621
        %v7814 = vpack.c.bf16 %v7634, %v7622
        %v7815 = vpack.c.bf16 %v7635, %v7623
        %v7816 = vpack.c.bf16 %v7648, %v7636
        %v7817 = vpack.c.bf16 %v7649, %v7637
        %v7818 = vpack.c.bf16 %v7650, %v7638
        %v7819 = vpack.c.bf16 %v7651, %v7639
        %v7820 = vpack.c.bf16 %v7652, %v7640
        %v7821 = vpack.c.bf16 %v7653, %v7641
        %v7822 = vpack.c.bf16 %v7654, %v7642
        %v7823 = vpack.c.bf16 %v7655, %v7643
        %v7824 = vpack.c.bf16 %v7656, %v7644
        %v7825 = vpack.c.bf16 %v7657, %v7645
        %v7826 = vpack.c.bf16 %v7658, %v7646
        %v7827 = vpack.c.bf16 %v7659, %v7647
        %v7828 = vpack.c.bf16 %v7672, %v7660
        %v7829 = vpack.c.bf16 %v7673, %v7661
        %v7830 = vpack.c.bf16 %v7674, %v7662
        %v7831 = vpack.c.bf16 %v7675, %v7663
        %v7832 = vpack.c.bf16 %v7676, %v7664
        %v7833 = vpack.c.bf16 %v7677, %v7665
        %v7834 = vpack.c.bf16 %v7678, %v7666
        %v7835 = vpack.c.bf16 %v7679, %v7667
        %v7836 = vpack.c.bf16 %v7680, %v7668
        %v7837 = vpack.c.bf16 %v7681, %v7669
        %v7838 = vpack.c.bf16 %v7682, %v7670
        %v7839 = vpack.c.bf16 %v7683, %v7671
        %v7840 = vpack.c.bf16 %v7696, %v7684
        %v7841 = vpack.c.bf16 %v7697, %v7685
        %v7842 = vpack.c.bf16 %v7698, %v7686
        %v7843 = vpack.c.bf16 %v7699, %v7687
        %v7844 = vpack.c.bf16 %v7700, %v7688
        %v7845 = vpack.c.bf16 %v7701, %v7689
        %v7846 = vpack.c.bf16 %v7702, %v7690
        %v7847 = vpack.c.bf16 %v7703, %v7691
        %v7848 = vpack.c.bf16 %v7704, %v7692
        %v7849 = vpack.c.bf16 %v7705, %v7693
        %v7850 = vpack.c.bf16 %v7706, %v7694
        %v7851 = vpack.c.bf16 %v7707, %v7695
        %v7852 = vpack.c.bf16 %v7720, %v7708
        %v7853 = vpack.c.bf16 %v7721, %v7709
        %v7854 = vpack.c.bf16 %v7722, %v7710
        %v7855 = vpack.c.bf16 %v7723, %v7711
        %v7856 = vpack.c.bf16 %v7724, %v7712
        %v7857 = vpack.c.bf16 %v7725, %v7713
        %v7858 = vpack.c.bf16 %v7726, %v7714
        %v7859 = vpack.c.bf16 %v7727, %v7715
        %v7860 = vpack.c.bf16 %v7728, %v7716
        %v7861 = vpack.c.bf16 %v7729, %v7717
        %v7862 = vpack.c.bf16 %v7730, %v7718
        %v7863 = vpack.c.bf16 %v7731, %v7719
        %v7864 = vpack.c.bf16 %v7744, %v7732
        %v7865 = vpack.c.bf16 %v7745, %v7733
        %v7866 = vpack.c.bf16 %v7746, %v7734
        %v7867 = vpack.c.bf16 %v7747, %v7735
        %v7868 = vpack.c.bf16 %v7748, %v7736
        %v7869 = vpack.c.bf16 %v7749, %v7737
        %v7870 = vpack.c.bf16 %v7750, %v7738
        %v7871 = vpack.c.bf16 %v7751, %v7739
        %v7872 = vpack.c.bf16 %v7752, %v7740
        %v7873 = vpack.c.bf16 %v7753, %v7741
        %v7874 = vpack.c.bf16 %v7754, %v7742
        %v7875 = vpack.c.bf16 %v7755, %v7743
        %v7876 = vpack.c.bf16 %v7768, %v7756
        %v7877 = vpack.c.bf16 %v7769, %v7757
        %v7878 = vpack.c.bf16 %v7770, %v7758
        %v7879 = vpack.c.bf16 %v7771, %v7759
        %v7880 = vpack.c.bf16 %v7772, %v7760
        %v7881 = vpack.c.bf16 %v7773, %v7761
        %v7882 = vpack.c.bf16 %v7774, %v7762
        %v7883 = vpack.c.bf16 %v7775, %v7763
        %v7884 = vpack.c.bf16 %v7776, %v7764
        %v7885 = vpack.c.bf16 %v7777, %v7765
        %v7886 = vpack.c.bf16 %v7778, %v7766
        %v7887 = vpack.c.bf16 %v7779, %v7767
        %v7888 = vpack.c.bf16 %v7792, %v7780
        %v7889 = vpack.c.bf16 %v7793, %v7781
        %v7890 = vpack.c.bf16 %v7794, %v7782
        %v7891 = vpack.c.bf16 %v7795, %v7783
        %v7892 = vpack.c.bf16 %v7796, %v7784
        %v7893 = vpack.c.bf16 %v7797, %v7785
        %v7894 = vpack.c.bf16 %v7798, %v7786
        %v7895 = vpack.c.bf16 %v7799, %v7787
        %v7896 = vpack.c.bf16 %v7800, %v7788
        %v7897 = vpack.c.bf16 %v7801, %v7789
        %v7898 = vpack.c.bf16 %v7802, %v7790
        %v7899 = vpack.c.bf16 %v7803, %v7791
        %v7900 = vld [vmem:[#allocation8] sm:$0xff]
        %v7901 = vld [vmem:[#allocation8 + $0x8] sm:$0xf]
        %v7902 = vld [vmem:[#allocation8 + $0xc] sm:$0xff]
        %v7903 = vld [vmem:[#allocation8 + $0x14] sm:$0xf]
        %v7904 = vld [vmem:[#allocation8 + $0x18] sm:$0xff]
        %v7905 = vld [vmem:[#allocation8 + $0x20] sm:$0xf]
        %v7906 = vld [vmem:[#allocation8 + $0x24] sm:$0xff]
        %v7907 = vld [vmem:[#allocation8 + $0x2c] sm:$0xf]
        %v7908 = vld [vmem:[#allocation8 + $0x30] sm:$0xff]
        %v7909 = vld [vmem:[#allocation8 + $0x38] sm:$0xf]
        %v7910 = vld [vmem:[#allocation8 + $0x3c] sm:$0xff]
        %v7911 = vld [vmem:[#allocation8 + $0x44] sm:$0xf]
        %v7912 = vld [vmem:[#allocation8 + $0x48] sm:$0xff]
        %v7913 = vld [vmem:[#allocation8 + $0x50] sm:$0xf]
        %v7914 = vld [vmem:[#allocation8 + $0x54] sm:$0xff]
        %v7915 = vld [vmem:[#allocation8 + $0x5c] sm:$0xf]
        %v7916 = vld [vmem:[#allocation8 + $0x60] sm:$0xff]
        %v7917 = vld [vmem:[#allocation8 + $0x68] sm:$0xf]
        %v7918 = vld [vmem:[#allocation8 + $0x6c] sm:$0xff]
        %v7919 = vld [vmem:[#allocation8 + $0x74] sm:$0xf]
        %v7920 = vld [vmem:[#allocation8 + $0x78] sm:$0xff]
        %v7921 = vld [vmem:[#allocation8 + $0x80] sm:$0xf]
        %v7922 = vld [vmem:[#allocation8 + $0x84] sm:$0xff]
        %v7923 = vld [vmem:[#allocation8 + $0x8c] sm:$0xf]
        %v7924 = vld [vmem:[#allocation8 + $0x90] sm:$0xff]
        %v7925 = vld [vmem:[#allocation8 + $0x98] sm:$0xf]
        %v7926 = vld [vmem:[#allocation8 + $0x9c] sm:$0xff]
        %v7927 = vld [vmem:[#allocation8 + $0xa4] sm:$0xf]
        %v7928 = vld [vmem:[#allocation8 + $0xa8] sm:$0xff]
        %v7929 = vld [vmem:[#allocation8 + $0xb0] sm:$0xf]
        %v7930 = vld [vmem:[#allocation8 + $0xb4] sm:$0xff]
        %v7931 = vld [vmem:[#allocation8 + $0xbc] sm:$0xf]
        %v7932 = vld [vmem:[#allocation8 + $0xc0] sm:$0xff]
        %v7933 = vld [vmem:[#allocation8 + $0xc8] sm:$0xf]
        %v7934 = vld [vmem:[#allocation8 + $0xcc] sm:$0xff]
        %v7935 = vld [vmem:[#allocation8 + $0xd4] sm:$0xf]
        %v7936 = vld [vmem:[#allocation8 + $0xd8] sm:$0xff]
        %v7937 = vld [vmem:[#allocation8 + $0xe0] sm:$0xf]
        %v7938 = vld [vmem:[#allocation8 + $0xe4] sm:$0xff]
        %v7939 = vld [vmem:[#allocation8 + $0xec] sm:$0xf]
        %v7940 = vld [vmem:[#allocation8 + $0xf0] sm:$0xff]
        %v7941 = vld [vmem:[#allocation8 + $0xf8] sm:$0xf]
        %v7942 = vld [vmem:[#allocation8 + $0xfc] sm:$0xff]
        %v7943 = vld [vmem:[#allocation8 + $0x104] sm:$0xf]
        %v7944 = vld [vmem:[#allocation8 + $0x108] sm:$0xff]
        %v7945 = vld [vmem:[#allocation8 + $0x110] sm:$0xf]
        %v7946 = vld [vmem:[#allocation8 + $0x114] sm:$0xff]
        %v7947 = vld [vmem:[#allocation8 + $0x11c] sm:$0xf]
        %v7948 = vld [vmem:[#allocation8 + $0x120] sm:$0xff]
        %v7949 = vld [vmem:[#allocation8 + $0x128] sm:$0xf]
        %v7950 = vld [vmem:[#allocation8 + $0x12c] sm:$0xff]
        %v7951 = vld [vmem:[#allocation8 + $0x134] sm:$0xf]
        %v7952 = vld [vmem:[#allocation8 + $0x138] sm:$0xff]
        %v7953 = vld [vmem:[#allocation8 + $0x140] sm:$0xf]
        %v7954 = vld [vmem:[#allocation8 + $0x144] sm:$0xff]
        %v7955 = vld [vmem:[#allocation8 + $0x14c] sm:$0xf]
        %v7956 = vld [vmem:[#allocation8 + $0x150] sm:$0xff]
        %v7957 = vld [vmem:[#allocation8 + $0x158] sm:$0xf]
        %v7958 = vld [vmem:[#allocation8 + $0x15c] sm:$0xff]
        %v7959 = vld [vmem:[#allocation8 + $0x164] sm:$0xf]
        %v7960 = vld [vmem:[#allocation8 + $0x168] sm:$0xff]
        %v7961 = vld [vmem:[#allocation8 + $0x170] sm:$0xf]
        %v7962 = vld [vmem:[#allocation8 + $0x174] sm:$0xff]
        %v7963 = vld [vmem:[#allocation8 + $0x17c] sm:$0xf]
        %v7964 = vld [vmem:[#allocation8 + $0x180] sm:$0xff]
        %v7965 = vld [vmem:[#allocation8 + $0x188] sm:$0xf]
        %v7966 = vld [vmem:[#allocation8 + $0x18c] sm:$0xff]
        %v7967 = vld [vmem:[#allocation8 + $0x194] sm:$0xf]
        %v7968 = vld [vmem:[#allocation8 + $0x198] sm:$0xff]
        %v7969 = vld [vmem:[#allocation8 + $0x1a0] sm:$0xf]
        %v7970 = vld [vmem:[#allocation8 + $0x1a4] sm:$0xff]
        %v7971 = vld [vmem:[#allocation8 + $0x1ac] sm:$0xf]
        %v7972 = vld [vmem:[#allocation8 + $0x1b0] sm:$0xff]
        %v7973 = vld [vmem:[#allocation8 + $0x1b8] sm:$0xf]
        %v7974 = vld [vmem:[#allocation8 + $0x1bc] sm:$0xff]
        %v7975 = vld [vmem:[#allocation8 + $0x1c4] sm:$0xf]
        %v7976 = vld [vmem:[#allocation8 + $0x1c8] sm:$0xff]
        %v7977 = vld [vmem:[#allocation8 + $0x1d0] sm:$0xf]
        %v7978 = vld [vmem:[#allocation8 + $0x1d4] sm:$0xff]
        %v7979 = vld [vmem:[#allocation8 + $0x1dc] sm:$0xf]
        %v7980 = vld [vmem:[#allocation8 + $0x1e0] sm:$0xff]
        %v7981 = vld [vmem:[#allocation8 + $0x1e8] sm:$0xf]
        %v7982 = vld [vmem:[#allocation8 + $0x1ec] sm:$0xff]
        %v7983 = vld [vmem:[#allocation8 + $0x1f4] sm:$0xf]
        %v7984 = vld [vmem:[#allocation8 + $0x1f8] sm:$0xff]
        %v7985 = vld [vmem:[#allocation8 + $0x200] sm:$0xf]
        %v7986 = vld [vmem:[#allocation8 + $0x204] sm:$0xff]
        %v7987 = vld [vmem:[#allocation8 + $0x20c] sm:$0xf]
        %v7988 = vld [vmem:[#allocation8 + $0x210] sm:$0xff]
        %v7989 = vld [vmem:[#allocation8 + $0x218] sm:$0xf]
        %v7990 = vld [vmem:[#allocation8 + $0x21c] sm:$0xff]
        %v7991 = vld [vmem:[#allocation8 + $0x224] sm:$0xf]
        %v7992 = vld [vmem:[#allocation8 + $0x228] sm:$0xff]
        %v7993 = vld [vmem:[#allocation8 + $0x230] sm:$0xf]
        %v7994 = vld [vmem:[#allocation8 + $0x234] sm:$0xff]
        %v7995 = vld [vmem:[#allocation8 + $0x23c] sm:$0xf]
        %v7996 = vld [vmem:[#allocation8 + $0x240] sm:$0xff]
        %v7997 = vld [vmem:[#allocation8 + $0x248] sm:$0xf]
        %v7998 = vld [vmem:[#allocation8 + $0x24c] sm:$0xff]
        %v7999 = vld [vmem:[#allocation8 + $0x254] sm:$0xf]
        %v8000 = vld [vmem:[#allocation8 + $0x258] sm:$0xff]
        %v8001 = vld [vmem:[#allocation8 + $0x260] sm:$0xf]
        %v8002 = vld [vmem:[#allocation8 + $0x264] sm:$0xff]
        %v8003 = vld [vmem:[#allocation8 + $0x26c] sm:$0xf]
        %v8004 = vld [vmem:[#allocation8 + $0x270] sm:$0xff]
        %v8005 = vld [vmem:[#allocation8 + $0x278] sm:$0xf]
        %v8006 = vld [vmem:[#allocation8 + $0x27c] sm:$0xff]
        %v8007 = vld [vmem:[#allocation8 + $0x284] sm:$0xf]
        %v8008 = vld [vmem:[#allocation8 + $0x288] sm:$0xff]
        %v8009 = vld [vmem:[#allocation8 + $0x290] sm:$0xf]
        %v8010 = vld [vmem:[#allocation8 + $0x294] sm:$0xff]
        %v8011 = vld [vmem:[#allocation8 + $0x29c] sm:$0xf]
        %v8012 = vld [vmem:[#allocation8 + $0x2a0] sm:$0xff]
        %v8013 = vld [vmem:[#allocation8 + $0x2a8] sm:$0xf]
        %v8014 = vld [vmem:[#allocation8 + $0x2ac] sm:$0xff]
        %v8015 = vld [vmem:[#allocation8 + $0x2b4] sm:$0xf]
        %v8016 = vld [vmem:[#allocation8 + $0x2b8] sm:$0xff]
        %v8017 = vld [vmem:[#allocation8 + $0x2c0] sm:$0xf]
        %v8018 = vld [vmem:[#allocation8 + $0x2c4] sm:$0xff]
        %v8019 = vld [vmem:[#allocation8 + $0x2cc] sm:$0xf]
        %v8020 = vld [vmem:[#allocation8 + $0x2d0] sm:$0xff]
        %v8021 = vld [vmem:[#allocation8 + $0x2d8] sm:$0xf]
        %v8022 = vld [vmem:[#allocation8 + $0x2dc] sm:$0xff]
        %v8023 = vld [vmem:[#allocation8 + $0x2e4] sm:$0xf]
        %v8024 = vld [vmem:[#allocation8 + $0x2e8] sm:$0xff]
        %v8025 = vld [vmem:[#allocation8 + $0x2f0] sm:$0xf]
        %v8026 = vld [vmem:[#allocation8 + $0x2f4] sm:$0xff]
        %v8027 = vld [vmem:[#allocation8 + $0x2fc] sm:$0xf]
        %v8028 = vld [vmem:[#allocation8 + $0x300] sm:$0xff]
        %v8029 = vld [vmem:[#allocation8 + $0x308] sm:$0xf]
        %v8030 = vld [vmem:[#allocation8 + $0x30c] sm:$0xff]
        %v8031 = vld [vmem:[#allocation8 + $0x314] sm:$0xf]
        %v8032 = vld [vmem:[#allocation8 + $0x318] sm:$0xff]
        %v8033 = vld [vmem:[#allocation8 + $0x320] sm:$0xf]
        %v8034 = vld [vmem:[#allocation8 + $0x324] sm:$0xff]
        %v8035 = vld [vmem:[#allocation8 + $0x32c] sm:$0xf]
        %v8036 = vld [vmem:[#allocation8 + $0x330] sm:$0xff]
        %v8037 = vld [vmem:[#allocation8 + $0x338] sm:$0xf]
        %v8038 = vld [vmem:[#allocation8 + $0x33c] sm:$0xff]
        %v8039 = vld [vmem:[#allocation8 + $0x344] sm:$0xf]
        %v8040 = vld [vmem:[#allocation8 + $0x348] sm:$0xff]
        %v8041 = vld [vmem:[#allocation8 + $0x350] sm:$0xf]
        %v8042 = vld [vmem:[#allocation8 + $0x354] sm:$0xff]
        %v8043 = vld [vmem:[#allocation8 + $0x35c] sm:$0xf]
        %v8044 = vld [vmem:[#allocation8 + $0x360] sm:$0xff]
        %v8045 = vld [vmem:[#allocation8 + $0x368] sm:$0xf]
        %v8046 = vld [vmem:[#allocation8 + $0x36c] sm:$0xff]
        %v8047 = vld [vmem:[#allocation8 + $0x374] sm:$0xf]
        %v8048 = vld [vmem:[#allocation8 + $0x378] sm:$0xff]
        %v8049 = vld [vmem:[#allocation8 + $0x380] sm:$0xf]
        %v8050 = vld [vmem:[#allocation8 + $0x384] sm:$0xff]
        %v8051 = vld [vmem:[#allocation8 + $0x38c] sm:$0xf]
        %v8052 = vld [vmem:[#allocation8 + $0x390] sm:$0xff]
        %v8053 = vld [vmem:[#allocation8 + $0x398] sm:$0xf]
        %v8054 = vld [vmem:[#allocation8 + $0x39c] sm:$0xff]
        %v8055 = vld [vmem:[#allocation8 + $0x3a4] sm:$0xf]
        %v8056 = vld [vmem:[#allocation8 + $0x3a8] sm:$0xff]
        %v8057 = vld [vmem:[#allocation8 + $0x3b0] sm:$0xf]
        %v8058 = vld [vmem:[#allocation8 + $0x3b4] sm:$0xff]
        %v8059 = vld [vmem:[#allocation8 + $0x3bc] sm:$0xf]
        %v8060 = vld [vmem:[#allocation8 + $0x3c0] sm:$0xff]
        %v8061 = vld [vmem:[#allocation8 + $0x3c8] sm:$0xf]
        %v8062 = vld [vmem:[#allocation8 + $0x3cc] sm:$0xff]
        %v8063 = vld [vmem:[#allocation8 + $0x3d4] sm:$0xf]
        %v8064 = vld [vmem:[#allocation8 + $0x3d8] sm:$0xff]
        %v8065 = vld [vmem:[#allocation8 + $0x3e0] sm:$0xf]
        %v8066 = vld [vmem:[#allocation8 + $0x3e4] sm:$0xff]
        %v8067 = vld [vmem:[#allocation8 + $0x3ec] sm:$0xf]
        %v8068 = vld [vmem:[#allocation8 + $0x3f0] sm:$0xff]
        %v8069 = vld [vmem:[#allocation8 + $0x3f8] sm:$0xf]
        %v8070 = vld [vmem:[#allocation8 + $0x3fc] sm:$0xff]
        %v8071 = vld [vmem:[#allocation8 + $0x404] sm:$0xf]
        %v8072 = vld [vmem:[#allocation8 + $0x408] sm:$0xff]
        %v8073 = vld [vmem:[#allocation8 + $0x410] sm:$0xf]
        %v8074 = vld [vmem:[#allocation8 + $0x414] sm:$0xff]
        %v8075 = vld [vmem:[#allocation8 + $0x41c] sm:$0xf]
        %v8076 = vld [vmem:[#allocation8 + $0x420] sm:$0xff]
        %v8077 = vld [vmem:[#allocation8 + $0x428] sm:$0xf]
        %v8078 = vld [vmem:[#allocation8 + $0x42c] sm:$0xff]
        %v8079 = vld [vmem:[#allocation8 + $0x434] sm:$0xf]
        %v8080 = vld [vmem:[#allocation8 + $0x438] sm:$0xff]
        %v8081 = vld [vmem:[#allocation8 + $0x440] sm:$0xf]
        %v8082 = vld [vmem:[#allocation8 + $0x444] sm:$0xff]
        %v8083 = vld [vmem:[#allocation8 + $0x44c] sm:$0xf]
        %v8084 = vld [vmem:[#allocation8 + $0x450] sm:$0xff]
        %v8085 = vld [vmem:[#allocation8 + $0x458] sm:$0xf]
        %v8086 = vld [vmem:[#allocation8 + $0x45c] sm:$0xff]
        %v8087 = vld [vmem:[#allocation8 + $0x464] sm:$0xf]
        %v8088 = vld [vmem:[#allocation8 + $0x468] sm:$0xff]
        %v8089 = vld [vmem:[#allocation8 + $0x470] sm:$0xf]
        %v8090 = vld [vmem:[#allocation8 + $0x474] sm:$0xff]
        %v8091 = vld [vmem:[#allocation8 + $0x47c] sm:$0xf]
        %v8092 = vld [vmem:[#allocation8 + $0x480] sm:$0xff]
        %v8093 = vld [vmem:[#allocation8 + $0x488] sm:$0xf]
        %v8094 = vld [vmem:[#allocation8 + $0x48c] sm:$0xff]
        %v8095 = vld [vmem:[#allocation8 + $0x494] sm:$0xf]
        %v8096 = vld [vmem:[#allocation8 + $0x498] sm:$0xff]
        %v8097 = vld [vmem:[#allocation8 + $0x4a0] sm:$0xf]
        %v8098 = vld [vmem:[#allocation8 + $0x4a4] sm:$0xff]
        %v8099 = vld [vmem:[#allocation8 + $0x4ac] sm:$0xf]
        %v8100 = vld [vmem:[#allocation8 + $0x4b0] sm:$0xff]
        %v8101 = vld [vmem:[#allocation8 + $0x4b8] sm:$0xf]
        %v8102 = vld [vmem:[#allocation8 + $0x4bc] sm:$0xff]
        %v8103 = vld [vmem:[#allocation8 + $0x4c4] sm:$0xf]
        %v8104 = vld [vmem:[#allocation8 + $0x4c8] sm:$0xff]
        %v8105 = vld [vmem:[#allocation8 + $0x4d0] sm:$0xf]
        %v8106 = vld [vmem:[#allocation8 + $0x4d4] sm:$0xff]
        %v8107 = vld [vmem:[#allocation8 + $0x4dc] sm:$0xf]
        %v8108 = vld [vmem:[#allocation8 + $0x4e0] sm:$0xff]
        %v8109 = vld [vmem:[#allocation8 + $0x4e8] sm:$0xf]
        %v8110 = vld [vmem:[#allocation8 + $0x4ec] sm:$0xff]
        %v8111 = vld [vmem:[#allocation8 + $0x4f4] sm:$0xf]
        %v8112 = vld [vmem:[#allocation8 + $0x4f8] sm:$0xff]
        %v8113 = vld [vmem:[#allocation8 + $0x500] sm:$0xf]
        %v8114 = vld [vmem:[#allocation8 + $0x504] sm:$0xff]
        %v8115 = vld [vmem:[#allocation8 + $0x50c] sm:$0xf]
        %v8116 = vld [vmem:[#allocation8 + $0x510] sm:$0xff]
        %v8117 = vld [vmem:[#allocation8 + $0x518] sm:$0xf]
        %v8118 = vld [vmem:[#allocation8 + $0x51c] sm:$0xff]
        %v8119 = vld [vmem:[#allocation8 + $0x524] sm:$0xf]
        %v8120 = vld [vmem:[#allocation8 + $0x528] sm:$0xff]
        %v8121 = vld [vmem:[#allocation8 + $0x530] sm:$0xf]
        %v8122 = vld [vmem:[#allocation8 + $0x534] sm:$0xff]
        %v8123 = vld [vmem:[#allocation8 + $0x53c] sm:$0xf]
        %v8124 = vld [vmem:[#allocation8 + $0x540] sm:$0xff]
        %v8125 = vld [vmem:[#allocation8 + $0x548] sm:$0xf]
        %v8126 = vld [vmem:[#allocation8 + $0x54c] sm:$0xff]
        %v8127 = vld [vmem:[#allocation8 + $0x554] sm:$0xf]
        %v8128 = vld [vmem:[#allocation8 + $0x558] sm:$0xff]
        %v8129 = vld [vmem:[#allocation8 + $0x560] sm:$0xf]
        %v8130 = vld [vmem:[#allocation8 + $0x564] sm:$0xff]
        %v8131 = vld [vmem:[#allocation8 + $0x56c] sm:$0xf]
        %v8132 = vld [vmem:[#allocation8 + $0x570] sm:$0xff]
        %v8133 = vld [vmem:[#allocation8 + $0x578] sm:$0xf]
        %v8134 = vld [vmem:[#allocation8 + $0x57c] sm:$0xff]
        %v8135 = vld [vmem:[#allocation8 + $0x584] sm:$0xf]
        %v8136 = vld [vmem:[#allocation8 + $0x588] sm:$0xff]
        %v8137 = vld [vmem:[#allocation8 + $0x590] sm:$0xf]
        %v8138 = vld [vmem:[#allocation8 + $0x594] sm:$0xff]
        %v8139 = vld [vmem:[#allocation8 + $0x59c] sm:$0xf]
        %v8140 = vld [vmem:[#allocation8 + $0x5a0] sm:$0xff]
        %v8141 = vld [vmem:[#allocation8 + $0x5a8] sm:$0xf]
        %v8142 = vld [vmem:[#allocation8 + $0x5ac] sm:$0xff]
        %v8143 = vld [vmem:[#allocation8 + $0x5b4] sm:$0xf]
        %v8144 = vld [vmem:[#allocation8 + $0x5b8] sm:$0xff]
        %v8145 = vld [vmem:[#allocation8 + $0x5c0] sm:$0xf]
        %v8146 = vld [vmem:[#allocation8 + $0x5c4] sm:$0xff]
        %v8147 = vld [vmem:[#allocation8 + $0x5cc] sm:$0xf]
        %v8148 = vld [vmem:[#allocation8 + $0x5d0] sm:$0xff]
        %v8149 = vld [vmem:[#allocation8 + $0x5d8] sm:$0xf]
        %v8150 = vld [vmem:[#allocation8 + $0x5dc] sm:$0xff]
        %v8151 = vld [vmem:[#allocation8 + $0x5e4] sm:$0xf]
        %v8152 = vld [vmem:[#allocation8 + $0x5e8] sm:$0xff]
        %v8153 = vld [vmem:[#allocation8 + $0x5f0] sm:$0xf]
        %v8154 = vld [vmem:[#allocation8 + $0x5f4] sm:$0xff]
        %v8155 = vld [vmem:[#allocation8 + $0x5fc] sm:$0xf]
        %v8156 = vld [vmem:[#allocation8 + $0x600] sm:$0xff]
        %v8157 = vld [vmem:[#allocation8 + $0x608] sm:$0xf]
        %v8158 = vld [vmem:[#allocation8 + $0x60c] sm:$0xff]
        %v8159 = vld [vmem:[#allocation8 + $0x614] sm:$0xf]
        %v8160 = vld [vmem:[#allocation8 + $0x618] sm:$0xff]
        %v8161 = vld [vmem:[#allocation8 + $0x620] sm:$0xf]
        %v8162 = vld [vmem:[#allocation8 + $0x624] sm:$0xff]
        %v8163 = vld [vmem:[#allocation8 + $0x62c] sm:$0xf]
        %v8164 = vld [vmem:[#allocation8 + $0x630] sm:$0xff]
        %v8165 = vld [vmem:[#allocation8 + $0x638] sm:$0xf]
        %v8166 = vld [vmem:[#allocation8 + $0x63c] sm:$0xff]
        %v8167 = vld [vmem:[#allocation8 + $0x644] sm:$0xf]
        %v8168 = vld [vmem:[#allocation8 + $0x648] sm:$0xff]
        %v8169 = vld [vmem:[#allocation8 + $0x650] sm:$0xf]
        %v8170 = vld [vmem:[#allocation8 + $0x654] sm:$0xff]
        %v8171 = vld [vmem:[#allocation8 + $0x65c] sm:$0xf]
        %v8172 = vld [vmem:[#allocation8 + $0x660] sm:$0xff]
        %v8173 = vld [vmem:[#allocation8 + $0x668] sm:$0xf]
        %v8174 = vld [vmem:[#allocation8 + $0x66c] sm:$0xff]
        %v8175 = vld [vmem:[#allocation8 + $0x674] sm:$0xf]
        %v8176 = vld [vmem:[#allocation8 + $0x678] sm:$0xff]
        %v8177 = vld [vmem:[#allocation8 + $0x680] sm:$0xf]
        %v8178 = vld [vmem:[#allocation8 + $0x684] sm:$0xff]
        %v8179 = vld [vmem:[#allocation8 + $0x68c] sm:$0xf]
        %v8180 = vld [vmem:[#allocation8 + $0x690] sm:$0xff]
        %v8181 = vld [vmem:[#allocation8 + $0x698] sm:$0xf]
        %v8182 = vld [vmem:[#allocation8 + $0x69c] sm:$0xff]
        %v8183 = vld [vmem:[#allocation8 + $0x6a4] sm:$0xf]
        %v8184 = vld [vmem:[#allocation8 + $0x6a8] sm:$0xff]
        %v8185 = vld [vmem:[#allocation8 + $0x6b0] sm:$0xf]
        %v8186 = vld [vmem:[#allocation8 + $0x6b4] sm:$0xff]
        %v8187 = vld [vmem:[#allocation8 + $0x6bc] sm:$0xf]
        %v8188 = vld [vmem:[#allocation8 + $0x6c0] sm:$0xff]
        %v8189 = vld [vmem:[#allocation8 + $0x6c8] sm:$0xf]
        %v8190 = vld [vmem:[#allocation8 + $0x6cc] sm:$0xff]
        %v8191 = vld [vmem:[#allocation8 + $0x6d4] sm:$0xf]
        %v8192 = vld [vmem:[#allocation8 + $0x6d8] sm:$0xff]
        %v8193 = vld [vmem:[#allocation8 + $0x6e0] sm:$0xf]
        %v8194 = vld [vmem:[#allocation8 + $0x6e4] sm:$0xff]
        %v8195 = vld [vmem:[#allocation8 + $0x6ec] sm:$0xf]
        %v8196 = vld [vmem:[#allocation8 + $0x6f0] sm:$0xff]
        %v8197 = vld [vmem:[#allocation8 + $0x6f8] sm:$0xf]
        %v8198 = vld [vmem:[#allocation8 + $0x6fc] sm:$0xff]
        %v8199 = vld [vmem:[#allocation8 + $0x704] sm:$0xf]
        %v8200 = vld [vmem:[#allocation8 + $0x708] sm:$0xff]
        %v8201 = vld [vmem:[#allocation8 + $0x710] sm:$0xf]
        %v8202 = vld [vmem:[#allocation8 + $0x714] sm:$0xff]
        %v8203 = vld [vmem:[#allocation8 + $0x71c] sm:$0xf]
        %v8204 = vld [vmem:[#allocation8 + $0x720] sm:$0xff]
        %v8205 = vld [vmem:[#allocation8 + $0x728] sm:$0xf]
        %v8206 = vld [vmem:[#allocation8 + $0x72c] sm:$0xff]
        %v8207 = vld [vmem:[#allocation8 + $0x734] sm:$0xf]
        %v8208 = vld [vmem:[#allocation8 + $0x738] sm:$0xff]
        %v8209 = vld [vmem:[#allocation8 + $0x740] sm:$0xf]
        %v8210 = vld [vmem:[#allocation8 + $0x744] sm:$0xff]
        %v8211 = vld [vmem:[#allocation8 + $0x74c] sm:$0xf]
        %v8212 = vld [vmem:[#allocation8 + $0x750] sm:$0xff]
        %v8213 = vld [vmem:[#allocation8 + $0x758] sm:$0xf]
        %v8214 = vld [vmem:[#allocation8 + $0x75c] sm:$0xff]
        %v8215 = vld [vmem:[#allocation8 + $0x764] sm:$0xf]
        %v8216 = vld [vmem:[#allocation8 + $0x768] sm:$0xff]
        %v8217 = vld [vmem:[#allocation8 + $0x770] sm:$0xf]
        %v8218 = vld [vmem:[#allocation8 + $0x774] sm:$0xff]
        %v8219 = vld [vmem:[#allocation8 + $0x77c] sm:$0xf]
        %v8220 = vld [vmem:[#allocation8 + $0x780] sm:$0xff]
        %v8221 = vld [vmem:[#allocation8 + $0x788] sm:$0xf]
        %v8222 = vld [vmem:[#allocation8 + $0x78c] sm:$0xff]
        %v8223 = vld [vmem:[#allocation8 + $0x794] sm:$0xf]
        %v8224 = vld [vmem:[#allocation8 + $0x798] sm:$0xff]
        %v8225 = vld [vmem:[#allocation8 + $0x7a0] sm:$0xf]
        %v8226 = vld [vmem:[#allocation8 + $0x7a4] sm:$0xff]
        %v8227 = vld [vmem:[#allocation8 + $0x7ac] sm:$0xf]
        %v8228 = vld [vmem:[#allocation8 + $0x7b0] sm:$0xff]
        %v8229 = vld [vmem:[#allocation8 + $0x7b8] sm:$0xf]
        %v8230 = vld [vmem:[#allocation8 + $0x7bc] sm:$0xff]
        %v8231 = vld [vmem:[#allocation8 + $0x7c4] sm:$0xf]
        %v8232 = vld [vmem:[#allocation8 + $0x7c8] sm:$0xff]
        %v8233 = vld [vmem:[#allocation8 + $0x7d0] sm:$0xf]
        %v8234 = vld [vmem:[#allocation8 + $0x7d4] sm:$0xff]
        %v8235 = vld [vmem:[#allocation8 + $0x7dc] sm:$0xf]
        %v8236 = vld [vmem:[#allocation8 + $0x7e0] sm:$0xff]
        %v8237 = vld [vmem:[#allocation8 + $0x7e8] sm:$0xf]
        %v8238 = vld [vmem:[#allocation8 + $0x7ec] sm:$0xff]
        %v8239 = vld [vmem:[#allocation8 + $0x7f4] sm:$0xf]
        %v8240 = vld [vmem:[#allocation8 + $0x7f8] sm:$0xff]
        %v8241 = vld [vmem:[#allocation8 + $0x800] sm:$0xf]
        %v8242 = vld [vmem:[#allocation8 + $0x804] sm:$0xff]
        %v8243 = vld [vmem:[#allocation8 + $0x80c] sm:$0xf]
        %v8244 = vld [vmem:[#allocation8 + $0x810] sm:$0xff]
        %v8245 = vld [vmem:[#allocation8 + $0x818] sm:$0xf]
        %v8246 = vld [vmem:[#allocation8 + $0x81c] sm:$0xff]
        %v8247 = vld [vmem:[#allocation8 + $0x824] sm:$0xf]
        %v8248 = vld [vmem:[#allocation8 + $0x828] sm:$0xff]
        %v8249 = vld [vmem:[#allocation8 + $0x830] sm:$0xf]
        %v8250 = vld [vmem:[#allocation8 + $0x834] sm:$0xff]
        %v8251 = vld [vmem:[#allocation8 + $0x83c] sm:$0xf]
        %v8252 = vld [vmem:[#allocation8 + $0x840] sm:$0xff]
        %v8253 = vld [vmem:[#allocation8 + $0x848] sm:$0xf]
        %v8254 = vld [vmem:[#allocation8 + $0x84c] sm:$0xff]
        %v8255 = vld [vmem:[#allocation8 + $0x854] sm:$0xf]
        %v8256 = vld [vmem:[#allocation8 + $0x858] sm:$0xff]
        %v8257 = vld [vmem:[#allocation8 + $0x860] sm:$0xf]
        %v8258 = vld [vmem:[#allocation8 + $0x864] sm:$0xff]
        %v8259 = vld [vmem:[#allocation8 + $0x86c] sm:$0xf]
        %v8260 = vld [vmem:[#allocation8 + $0x870] sm:$0xff]
        %v8261 = vld [vmem:[#allocation8 + $0x878] sm:$0xf]
        %v8262 = vld [vmem:[#allocation8 + $0x87c] sm:$0xff]
        %v8263 = vld [vmem:[#allocation8 + $0x884] sm:$0xf]
        %v8264 = vld [vmem:[#allocation8 + $0x888] sm:$0xff]
        %v8265 = vld [vmem:[#allocation8 + $0x890] sm:$0xf]
        %v8266 = vld [vmem:[#allocation8 + $0x894] sm:$0xff]
        %v8267 = vld [vmem:[#allocation8 + $0x89c] sm:$0xf]
        %v8268 = vld [vmem:[#allocation8 + $0x8a0] sm:$0xff]
        %v8269 = vld [vmem:[#allocation8 + $0x8a8] sm:$0xf]
        %v8270 = vld [vmem:[#allocation8 + $0x8ac] sm:$0xff]
        %v8271 = vld [vmem:[#allocation8 + $0x8b4] sm:$0xf]
        %v8272 = vld [vmem:[#allocation8 + $0x8b8] sm:$0xff]
        %v8273 = vld [vmem:[#allocation8 + $0x8c0] sm:$0xf]
        %v8274 = vld [vmem:[#allocation8 + $0x8c4] sm:$0xff]
        %v8275 = vld [vmem:[#allocation8 + $0x8cc] sm:$0xf]
        %v8276 = vld [vmem:[#allocation8 + $0x8d0] sm:$0xff]
        %v8277 = vld [vmem:[#allocation8 + $0x8d8] sm:$0xf]
        %v8278 = vld [vmem:[#allocation8 + $0x8dc] sm:$0xff]
        %v8279 = vld [vmem:[#allocation8 + $0x8e4] sm:$0xf]
        %v8280 = vld [vmem:[#allocation8 + $0x8e8] sm:$0xff]
        %v8281 = vld [vmem:[#allocation8 + $0x8f0] sm:$0xf]
        %v8282 = vld [vmem:[#allocation8 + $0x8f4] sm:$0xff]
        %v8283 = vld [vmem:[#allocation8 + $0x8fc] sm:$0xf]
        %v8284 = vld [vmem:[#allocation10] sm:$0x7]
        %v8286 = vperm.slane %v8284, 0
        %v8287 = vperm.slane %v8284, 1
        %v8288 = vperm.slane %v8284, 2
        %v8676 = vunpack.c.l.b16 %v7900
        %v8677 = vunpack.c.h.b16 %v7900
        %v8678 = vunpack.c.l.b16 %v7901
        %v8679 = vunpack.c.l.b16 %v7902
        %v8680 = vunpack.c.h.b16 %v7902
        %v8681 = vunpack.c.l.b16 %v7903
        %v8682 = vunpack.c.l.b16 %v7904
        %v8683 = vunpack.c.h.b16 %v7904
        %v8684 = vunpack.c.l.b16 %v7905
        %v8685 = vunpack.c.l.b16 %v7906
        %v8686 = vunpack.c.h.b16 %v7906
        %v8687 = vunpack.c.l.b16 %v7907
        %v8688 = vunpack.c.l.b16 %v7908
        %v8689 = vunpack.c.h.b16 %v7908
        %v8690 = vunpack.c.l.b16 %v7909
        %v8691 = vunpack.c.l.b16 %v7910
        %v8692 = vunpack.c.h.b16 %v7910
        %v8693 = vunpack.c.l.b16 %v7911
        %v8694 = vunpack.c.l.b16 %v7912
        %v8695 = vunpack.c.h.b16 %v7912
        %v8696 = vunpack.c.l.b16 %v7913
        %v8697 = vunpack.c.l.b16 %v7914
        %v8698 = vunpack.c.h.b16 %v7914
        %v8699 = vunpack.c.l.b16 %v7915
        %v8700 = vunpack.c.l.b16 %v7916
        %v8701 = vunpack.c.h.b16 %v7916
        %v8702 = vunpack.c.l.b16 %v7917
        %v8703 = vunpack.c.l.b16 %v7918
        %v8704 = vunpack.c.h.b16 %v7918
        %v8705 = vunpack.c.l.b16 %v7919
        %v8706 = vunpack.c.l.b16 %v7920
        %v8707 = vunpack.c.h.b16 %v7920
        %v8708 = vunpack.c.l.b16 %v7921
        %v8709 = vunpack.c.l.b16 %v7922
        %v8710 = vunpack.c.h.b16 %v7922
        %v8711 = vunpack.c.l.b16 %v7923
        %v8712 = vunpack.c.l.b16 %v7924
        %v8713 = vunpack.c.h.b16 %v7924
        %v8714 = vunpack.c.l.b16 %v7925
        %v8715 = vunpack.c.l.b16 %v7926
        %v8716 = vunpack.c.h.b16 %v7926
        %v8717 = vunpack.c.l.b16 %v7927
        %v8718 = vunpack.c.l.b16 %v7928
        %v8719 = vunpack.c.h.b16 %v7928
        %v8720 = vunpack.c.l.b16 %v7929
        %v8721 = vunpack.c.l.b16 %v7930
        %v8722 = vunpack.c.h.b16 %v7930
        %v8723 = vunpack.c.l.b16 %v7931
        %v8724 = vunpack.c.l.b16 %v7932
        %v8725 = vunpack.c.h.b16 %v7932
        %v8726 = vunpack.c.l.b16 %v7933
        %v8727 = vunpack.c.l.b16 %v7934
        %v8728 = vunpack.c.h.b16 %v7934
        %v8729 = vunpack.c.l.b16 %v7935
        %v8730 = vunpack.c.l.b16 %v7936
        %v8731 = vunpack.c.h.b16 %v7936
        %v8732 = vunpack.c.l.b16 %v7937
        %v8733 = vunpack.c.l.b16 %v7938
        %v8734 = vunpack.c.h.b16 %v7938
        %v8735 = vunpack.c.l.b16 %v7939
        %v8736 = vunpack.c.l.b16 %v7940
        %v8737 = vunpack.c.h.b16 %v7940
        %v8738 = vunpack.c.l.b16 %v7941
        %v8739 = vunpack.c.l.b16 %v7942
        %v8740 = vunpack.c.h.b16 %v7942
        %v8741 = vunpack.c.l.b16 %v7943
        %v8742 = vunpack.c.l.b16 %v7944
        %v8743 = vunpack.c.h.b16 %v7944
        %v8744 = vunpack.c.l.b16 %v7945
        %v8745 = vunpack.c.l.b16 %v7946
        %v8746 = vunpack.c.h.b16 %v7946
        %v8747 = vunpack.c.l.b16 %v7947
        %v8748 = vunpack.c.l.b16 %v7948
        %v8749 = vunpack.c.h.b16 %v7948
        %v8750 = vunpack.c.l.b16 %v7949
        %v8751 = vunpack.c.l.b16 %v7950
        %v8752 = vunpack.c.h.b16 %v7950
        %v8753 = vunpack.c.l.b16 %v7951
        %v8754 = vunpack.c.l.b16 %v7952
        %v8755 = vunpack.c.h.b16 %v7952
        %v8756 = vunpack.c.l.b16 %v7953
        %v8757 = vunpack.c.l.b16 %v7954
        %v8758 = vunpack.c.h.b16 %v7954
        %v8759 = vunpack.c.l.b16 %v7955
        %v8760 = vunpack.c.l.b16 %v7956
        %v8761 = vunpack.c.h.b16 %v7956
        %v8762 = vunpack.c.l.b16 %v7957
        %v8763 = vunpack.c.l.b16 %v7958
        %v8764 = vunpack.c.h.b16 %v7958
        %v8765 = vunpack.c.l.b16 %v7959
        %v8766 = vunpack.c.l.b16 %v7960
        %v8767 = vunpack.c.h.b16 %v7960
        %v8768 = vunpack.c.l.b16 %v7961
        %v8769 = vunpack.c.l.b16 %v7962
        %v8770 = vunpack.c.h.b16 %v7962
        %v8771 = vunpack.c.l.b16 %v7963
        %v8772 = vunpack.c.l.b16 %v7964
        %v8773 = vunpack.c.h.b16 %v7964
        %v8774 = vunpack.c.l.b16 %v7965
        %v8775 = vunpack.c.l.b16 %v7966
        %v8776 = vunpack.c.h.b16 %v7966
        %v8777 = vunpack.c.l.b16 %v7967
        %v8778 = vunpack.c.l.b16 %v7968
        %v8779 = vunpack.c.h.b16 %v7968
        %v8780 = vunpack.c.l.b16 %v7969
        %v8781 = vunpack.c.l.b16 %v7970
        %v8782 = vunpack.c.h.b16 %v7970
        %v8783 = vunpack.c.l.b16 %v7971
        %v8784 = vunpack.c.l.b16 %v7972
        %v8785 = vunpack.c.h.b16 %v7972
        %v8786 = vunpack.c.l.b16 %v7973
        %v8787 = vunpack.c.l.b16 %v7974
        %v8788 = vunpack.c.h.b16 %v7974
        %v8789 = vunpack.c.l.b16 %v7975
        %v8790 = vunpack.c.l.b16 %v7976
        %v8791 = vunpack.c.h.b16 %v7976
        %v8792 = vunpack.c.l.b16 %v7977
        %v8793 = vunpack.c.l.b16 %v7978
        %v8794 = vunpack.c.h.b16 %v7978
        %v8795 = vunpack.c.l.b16 %v7979
        %v8796 = vunpack.c.l.b16 %v7980
        %v8797 = vunpack.c.h.b16 %v7980
        %v8798 = vunpack.c.l.b16 %v7981
        %v8799 = vunpack.c.l.b16 %v7982
        %v8800 = vunpack.c.h.b16 %v7982
        %v8801 = vunpack.c.l.b16 %v7983
        %v8802 = vunpack.c.l.b16 %v7984
        %v8803 = vunpack.c.h.b16 %v7984
        %v8804 = vunpack.c.l.b16 %v7985
        %v8805 = vunpack.c.l.b16 %v7986
        %v8806 = vunpack.c.h.b16 %v7986
        %v8807 = vunpack.c.l.b16 %v7987
        %v8808 = vunpack.c.l.b16 %v7988
        %v8809 = vunpack.c.h.b16 %v7988
        %v8810 = vunpack.c.l.b16 %v7989
        %v8811 = vunpack.c.l.b16 %v7990
        %v8812 = vunpack.c.h.b16 %v7990
        %v8813 = vunpack.c.l.b16 %v7991
        %v8814 = vunpack.c.l.b16 %v7992
        %v8815 = vunpack.c.h.b16 %v7992
        %v8816 = vunpack.c.l.b16 %v7993
        %v8817 = vunpack.c.l.b16 %v7994
        %v8818 = vunpack.c.h.b16 %v7994
        %v8819 = vunpack.c.l.b16 %v7995
        %v8820 = vunpack.c.l.b16 %v7996
        %v8821 = vunpack.c.h.b16 %v7996
        %v8822 = vunpack.c.l.b16 %v7997
        %v8823 = vunpack.c.l.b16 %v7998
        %v8824 = vunpack.c.h.b16 %v7998
        %v8825 = vunpack.c.l.b16 %v7999
        %v8826 = vunpack.c.l.b16 %v8000
        %v8827 = vunpack.c.h.b16 %v8000
        %v8828 = vunpack.c.l.b16 %v8001
        %v8829 = vunpack.c.l.b16 %v8002
        %v8830 = vunpack.c.h.b16 %v8002
        %v8831 = vunpack.c.l.b16 %v8003
        %v8832 = vunpack.c.l.b16 %v8004
        %v8833 = vunpack.c.h.b16 %v8004
        %v8834 = vunpack.c.l.b16 %v8005
        %v8835 = vunpack.c.l.b16 %v8006
        %v8836 = vunpack.c.h.b16 %v8006
        %v8837 = vunpack.c.l.b16 %v8007
        %v8838 = vunpack.c.l.b16 %v8008
        %v8839 = vunpack.c.h.b16 %v8008
        %v8840 = vunpack.c.l.b16 %v8009
        %v8841 = vunpack.c.l.b16 %v8010
        %v8842 = vunpack.c.h.b16 %v8010
        %v8843 = vunpack.c.l.b16 %v8011
        %v8844 = vunpack.c.l.b16 %v8012
        %v8845 = vunpack.c.h.b16 %v8012
        %v8846 = vunpack.c.l.b16 %v8013
        %v8847 = vunpack.c.l.b16 %v8014
        %v8848 = vunpack.c.h.b16 %v8014
        %v8849 = vunpack.c.l.b16 %v8015
        %v8850 = vunpack.c.l.b16 %v8016
        %v8851 = vunpack.c.h.b16 %v8016
        %v8852 = vunpack.c.l.b16 %v8017
        %v8853 = vunpack.c.l.b16 %v8018
        %v8854 = vunpack.c.h.b16 %v8018
        %v8855 = vunpack.c.l.b16 %v8019
        %v8856 = vunpack.c.l.b16 %v8020
        %v8857 = vunpack.c.h.b16 %v8020
        %v8858 = vunpack.c.l.b16 %v8021
        %v8859 = vunpack.c.l.b16 %v8022
        %v8860 = vunpack.c.h.b16 %v8022
        %v8861 = vunpack.c.l.b16 %v8023
        %v8862 = vunpack.c.l.b16 %v8024
        %v8863 = vunpack.c.h.b16 %v8024
        %v8864 = vunpack.c.l.b16 %v8025
        %v8865 = vunpack.c.l.b16 %v8026
        %v8866 = vunpack.c.h.b16 %v8026
        %v8867 = vunpack.c.l.b16 %v8027
        %v8868 = vunpack.c.l.b16 %v8028
        %v8869 = vunpack.c.h.b16 %v8028
        %v8870 = vunpack.c.l.b16 %v8029
        %v8871 = vunpack.c.l.b16 %v8030
        %v8872 = vunpack.c.h.b16 %v8030
        %v8873 = vunpack.c.l.b16 %v8031
        %v8874 = vunpack.c.l.b16 %v8032
        %v8875 = vunpack.c.h.b16 %v8032
        %v8876 = vunpack.c.l.b16 %v8033
        %v8877 = vunpack.c.l.b16 %v8034
        %v8878 = vunpack.c.h.b16 %v8034
        %v8879 = vunpack.c.l.b16 %v8035
        %v8880 = vunpack.c.l.b16 %v8036
        %v8881 = vunpack.c.h.b16 %v8036
        %v8882 = vunpack.c.l.b16 %v8037
        %v8883 = vunpack.c.l.b16 %v8038
        %v8884 = vunpack.c.h.b16 %v8038
        %v8885 = vunpack.c.l.b16 %v8039
        %v8886 = vunpack.c.l.b16 %v8040
        %v8887 = vunpack.c.h.b16 %v8040
        %v8888 = vunpack.c.l.b16 %v8041
        %v8889 = vunpack.c.l.b16 %v8042
        %v8890 = vunpack.c.h.b16 %v8042
        %v8891 = vunpack.c.l.b16 %v8043
        %v8892 = vunpack.c.l.b16 %v8044
        %v8893 = vunpack.c.h.b16 %v8044
        %v8894 = vunpack.c.l.b16 %v8045
        %v8895 = vunpack.c.l.b16 %v8046
        %v8896 = vunpack.c.h.b16 %v8046
        %v8897 = vunpack.c.l.b16 %v8047
        %v8898 = vunpack.c.l.b16 %v8048
        %v8899 = vunpack.c.h.b16 %v8048
        %v8900 = vunpack.c.l.b16 %v8049
        %v8901 = vunpack.c.l.b16 %v8050
        %v8902 = vunpack.c.h.b16 %v8050
        %v8903 = vunpack.c.l.b16 %v8051
        %v8904 = vunpack.c.l.b16 %v8052
        %v8905 = vunpack.c.h.b16 %v8052
        %v8906 = vunpack.c.l.b16 %v8053
        %v8907 = vunpack.c.l.b16 %v8054
        %v8908 = vunpack.c.h.b16 %v8054
        %v8909 = vunpack.c.l.b16 %v8055
        %v8910 = vunpack.c.l.b16 %v8056
        %v8911 = vunpack.c.h.b16 %v8056
        %v8912 = vunpack.c.l.b16 %v8057
        %v8913 = vunpack.c.l.b16 %v8058
        %v8914 = vunpack.c.h.b16 %v8058
        %v8915 = vunpack.c.l.b16 %v8059
        %v8916 = vunpack.c.l.b16 %v8060
        %v8917 = vunpack.c.h.b16 %v8060
        %v8918 = vunpack.c.l.b16 %v8061
        %v8919 = vunpack.c.l.b16 %v8062
        %v8920 = vunpack.c.h.b16 %v8062
        %v8921 = vunpack.c.l.b16 %v8063
        %v8922 = vunpack.c.l.b16 %v8064
        %v8923 = vunpack.c.h.b16 %v8064
        %v8924 = vunpack.c.l.b16 %v8065
        %v8925 = vunpack.c.l.b16 %v8066
        %v8926 = vunpack.c.h.b16 %v8066
        %v8927 = vunpack.c.l.b16 %v8067
        %v8928 = vunpack.c.l.b16 %v8068
        %v8929 = vunpack.c.h.b16 %v8068
        %v8930 = vunpack.c.l.b16 %v8069
        %v8931 = vunpack.c.l.b16 %v8070
        %v8932 = vunpack.c.h.b16 %v8070
        %v8933 = vunpack.c.l.b16 %v8071
        %v8934 = vunpack.c.l.b16 %v8072
        %v8935 = vunpack.c.h.b16 %v8072
        %v8936 = vunpack.c.l.b16 %v8073
        %v8937 = vunpack.c.l.b16 %v8074
        %v8938 = vunpack.c.h.b16 %v8074
        %v8939 = vunpack.c.l.b16 %v8075
        %v8940 = vunpack.c.l.b16 %v8076
        %v8941 = vunpack.c.h.b16 %v8076
        %v8942 = vunpack.c.l.b16 %v8077
        %v8943 = vunpack.c.l.b16 %v8078
        %v8944 = vunpack.c.h.b16 %v8078
        %v8945 = vunpack.c.l.b16 %v8079
        %v8946 = vunpack.c.l.b16 %v8080
        %v8947 = vunpack.c.h.b16 %v8080
        %v8948 = vunpack.c.l.b16 %v8081
        %v8949 = vunpack.c.l.b16 %v8082
        %v8950 = vunpack.c.h.b16 %v8082
        %v8951 = vunpack.c.l.b16 %v8083
        %v8952 = vunpack.c.l.b16 %v8084
        %v8953 = vunpack.c.h.b16 %v8084
        %v8954 = vunpack.c.l.b16 %v8085
        %v8955 = vunpack.c.l.b16 %v8086
        %v8956 = vunpack.c.h.b16 %v8086
        %v8957 = vunpack.c.l.b16 %v8087
        %v8958 = vunpack.c.l.b16 %v8088
        %v8959 = vunpack.c.h.b16 %v8088
        %v8960 = vunpack.c.l.b16 %v8089
        %v8961 = vunpack.c.l.b16 %v8090
        %v8962 = vunpack.c.h.b16 %v8090
        %v8963 = vunpack.c.l.b16 %v8091
        %v8964 = vunpack.c.l.b16 %v8092
        %v8965 = vunpack.c.h.b16 %v8092
        %v8966 = vunpack.c.l.b16 %v8093
        %v8967 = vunpack.c.l.b16 %v8094
        %v8968 = vunpack.c.h.b16 %v8094
        %v8969 = vunpack.c.l.b16 %v8095
        %v8970 = vunpack.c.l.b16 %v8096
        %v8971 = vunpack.c.h.b16 %v8096
        %v8972 = vunpack.c.l.b16 %v8097
        %v8973 = vunpack.c.l.b16 %v8098
        %v8974 = vunpack.c.h.b16 %v8098
        %v8975 = vunpack.c.l.b16 %v8099
        %v8976 = vunpack.c.l.b16 %v8100
        %v8977 = vunpack.c.h.b16 %v8100
        %v8978 = vunpack.c.l.b16 %v8101
        %v8979 = vunpack.c.l.b16 %v8102
        %v8980 = vunpack.c.h.b16 %v8102
        %v8981 = vunpack.c.l.b16 %v8103
        %v8982 = vunpack.c.l.b16 %v8104
        %v8983 = vunpack.c.h.b16 %v8104
        %v8984 = vunpack.c.l.b16 %v8105
        %v8985 = vunpack.c.l.b16 %v8106
        %v8986 = vunpack.c.h.b16 %v8106
        %v8987 = vunpack.c.l.b16 %v8107
        %v8988 = vunpack.c.l.b16 %v8108
        %v8989 = vunpack.c.h.b16 %v8108
        %v8990 = vunpack.c.l.b16 %v8109
        %v8991 = vunpack.c.l.b16 %v8110
        %v8992 = vunpack.c.h.b16 %v8110
        %v8993 = vunpack.c.l.b16 %v8111
        %v8994 = vunpack.c.l.b16 %v8112
        %v8995 = vunpack.c.h.b16 %v8112
        %v8996 = vunpack.c.l.b16 %v8113
        %v8997 = vunpack.c.l.b16 %v8114
        %v8998 = vunpack.c.h.b16 %v8114
        %v8999 = vunpack.c.l.b16 %v8115
        %v9000 = vunpack.c.l.b16 %v8116
        %v9001 = vunpack.c.h.b16 %v8116
        %v9002 = vunpack.c.l.b16 %v8117
        %v9003 = vunpack.c.l.b16 %v8118
        %v9004 = vunpack.c.h.b16 %v8118
        %v9005 = vunpack.c.l.b16 %v8119
        %v9006 = vunpack.c.l.b16 %v8120
        %v9007 = vunpack.c.h.b16 %v8120
        %v9008 = vunpack.c.l.b16 %v8121
        %v9009 = vunpack.c.l.b16 %v8122
        %v9010 = vunpack.c.h.b16 %v8122
        %v9011 = vunpack.c.l.b16 %v8123
        %v9012 = vunpack.c.l.b16 %v8124
        %v9013 = vunpack.c.h.b16 %v8124
        %v9014 = vunpack.c.l.b16 %v8125
        %v9015 = vunpack.c.l.b16 %v8126
        %v9016 = vunpack.c.h.b16 %v8126
        %v9017 = vunpack.c.l.b16 %v8127
        %v9018 = vunpack.c.l.b16 %v8128
        %v9019 = vunpack.c.h.b16 %v8128
        %v9020 = vunpack.c.l.b16 %v8129
        %v9021 = vunpack.c.l.b16 %v8130
        %v9022 = vunpack.c.h.b16 %v8130
        %v9023 = vunpack.c.l.b16 %v8131
        %v9024 = vunpack.c.l.b16 %v8132
        %v9025 = vunpack.c.h.b16 %v8132
        %v9026 = vunpack.c.l.b16 %v8133
        %v9027 = vunpack.c.l.b16 %v8134
        %v9028 = vunpack.c.h.b16 %v8134
        %v9029 = vunpack.c.l.b16 %v8135
        %v9030 = vunpack.c.l.b16 %v8136
        %v9031 = vunpack.c.h.b16 %v8136
        %v9032 = vunpack.c.l.b16 %v8137
        %v9033 = vunpack.c.l.b16 %v8138
        %v9034 = vunpack.c.h.b16 %v8138
        %v9035 = vunpack.c.l.b16 %v8139
        %v9036 = vunpack.c.l.b16 %v8140
        %v9037 = vunpack.c.h.b16 %v8140
        %v9038 = vunpack.c.l.b16 %v8141
        %v9039 = vunpack.c.l.b16 %v8142
        %v9040 = vunpack.c.h.b16 %v8142
        %v9041 = vunpack.c.l.b16 %v8143
        %v9042 = vunpack.c.l.b16 %v8144
        %v9043 = vunpack.c.h.b16 %v8144
        %v9044 = vunpack.c.l.b16 %v8145
        %v9045 = vunpack.c.l.b16 %v8146
        %v9046 = vunpack.c.h.b16 %v8146
        %v9047 = vunpack.c.l.b16 %v8147
        %v9048 = vunpack.c.l.b16 %v8148
        %v9049 = vunpack.c.h.b16 %v8148
        %v9050 = vunpack.c.l.b16 %v8149
        %v9051 = vunpack.c.l.b16 %v8150
        %v9052 = vunpack.c.h.b16 %v8150
        %v9053 = vunpack.c.l.b16 %v8151
        %v9054 = vunpack.c.l.b16 %v8152
        %v9055 = vunpack.c.h.b16 %v8152
        %v9056 = vunpack.c.l.b16 %v8153
        %v9057 = vunpack.c.l.b16 %v8154
        %v9058 = vunpack.c.h.b16 %v8154
        %v9059 = vunpack.c.l.b16 %v8155
        %v9060 = vunpack.c.l.b16 %v8156
        %v9061 = vunpack.c.h.b16 %v8156
        %v9062 = vunpack.c.l.b16 %v8157
        %v9063 = vunpack.c.l.b16 %v8158
        %v9064 = vunpack.c.h.b16 %v8158
        %v9065 = vunpack.c.l.b16 %v8159
        %v9066 = vunpack.c.l.b16 %v8160
        %v9067 = vunpack.c.h.b16 %v8160
        %v9068 = vunpack.c.l.b16 %v8161
        %v9069 = vunpack.c.l.b16 %v8162
        %v9070 = vunpack.c.h.b16 %v8162
        %v9071 = vunpack.c.l.b16 %v8163
        %v9072 = vunpack.c.l.b16 %v8164
        %v9073 = vunpack.c.h.b16 %v8164
        %v9074 = vunpack.c.l.b16 %v8165
        %v9075 = vunpack.c.l.b16 %v8166
        %v9076 = vunpack.c.h.b16 %v8166
        %v9077 = vunpack.c.l.b16 %v8167
        %v9078 = vunpack.c.l.b16 %v8168
        %v9079 = vunpack.c.h.b16 %v8168
        %v9080 = vunpack.c.l.b16 %v8169
        %v9081 = vunpack.c.l.b16 %v8170
        %v9082 = vunpack.c.h.b16 %v8170
        %v9083 = vunpack.c.l.b16 %v8171
        %v9084 = vunpack.c.l.b16 %v8172
        %v9085 = vunpack.c.h.b16 %v8172
        %v9086 = vunpack.c.l.b16 %v8173
        %v9087 = vunpack.c.l.b16 %v8174
        %v9088 = vunpack.c.h.b16 %v8174
        %v9089 = vunpack.c.l.b16 %v8175
        %v9090 = vunpack.c.l.b16 %v8176
        %v9091 = vunpack.c.h.b16 %v8176
        %v9092 = vunpack.c.l.b16 %v8177
        %v9093 = vunpack.c.l.b16 %v8178
        %v9094 = vunpack.c.h.b16 %v8178
        %v9095 = vunpack.c.l.b16 %v8179
        %v9096 = vunpack.c.l.b16 %v8180
        %v9097 = vunpack.c.h.b16 %v8180
        %v9098 = vunpack.c.l.b16 %v8181
        %v9099 = vunpack.c.l.b16 %v8182
        %v9100 = vunpack.c.h.b16 %v8182
        %v9101 = vunpack.c.l.b16 %v8183
        %v9102 = vunpack.c.l.b16 %v8184
        %v9103 = vunpack.c.h.b16 %v8184
        %v9104 = vunpack.c.l.b16 %v8185
        %v9105 = vunpack.c.l.b16 %v8186
        %v9106 = vunpack.c.h.b16 %v8186
        %v9107 = vunpack.c.l.b16 %v8187
        %v9108 = vunpack.c.l.b16 %v8188
        %v9109 = vunpack.c.h.b16 %v8188
        %v9110 = vunpack.c.l.b16 %v8189
        %v9111 = vunpack.c.l.b16 %v8190
        %v9112 = vunpack.c.h.b16 %v8190
        %v9113 = vunpack.c.l.b16 %v8191
        %v9114 = vunpack.c.l.b16 %v8192
        %v9115 = vunpack.c.h.b16 %v8192
        %v9116 = vunpack.c.l.b16 %v8193
        %v9117 = vunpack.c.l.b16 %v8194
        %v9118 = vunpack.c.h.b16 %v8194
        %v9119 = vunpack.c.l.b16 %v8195
        %v9120 = vunpack.c.l.b16 %v8196
        %v9121 = vunpack.c.h.b16 %v8196
        %v9122 = vunpack.c.l.b16 %v8197
        %v9123 = vunpack.c.l.b16 %v8198
        %v9124 = vunpack.c.h.b16 %v8198
        %v9125 = vunpack.c.l.b16 %v8199
        %v9126 = vunpack.c.l.b16 %v8200
        %v9127 = vunpack.c.h.b16 %v8200
        %v9128 = vunpack.c.l.b16 %v8201
        %v9129 = vunpack.c.l.b16 %v8202
        %v9130 = vunpack.c.h.b16 %v8202
        %v9131 = vunpack.c.l.b16 %v8203
        %v9132 = vunpack.c.l.b16 %v8204
        %v9133 = vunpack.c.h.b16 %v8204
        %v9134 = vunpack.c.l.b16 %v8205
        %v9135 = vunpack.c.l.b16 %v8206
        %v9136 = vunpack.c.h.b16 %v8206
        %v9137 = vunpack.c.l.b16 %v8207
        %v9138 = vunpack.c.l.b16 %v8208
        %v9139 = vunpack.c.h.b16 %v8208
        %v9140 = vunpack.c.l.b16 %v8209
        %v9141 = vunpack.c.l.b16 %v8210
        %v9142 = vunpack.c.h.b16 %v8210
        %v9143 = vunpack.c.l.b16 %v8211
        %v9144 = vunpack.c.l.b16 %v8212
        %v9145 = vunpack.c.h.b16 %v8212
        %v9146 = vunpack.c.l.b16 %v8213
        %v9147 = vunpack.c.l.b16 %v8214
        %v9148 = vunpack.c.h.b16 %v8214
        %v9149 = vunpack.c.l.b16 %v8215
        %v9150 = vunpack.c.l.b16 %v8216
        %v9151 = vunpack.c.h.b16 %v8216
        %v9152 = vunpack.c.l.b16 %v8217
        %v9153 = vunpack.c.l.b16 %v8218
        %v9154 = vunpack.c.h.b16 %v8218
        %v9155 = vunpack.c.l.b16 %v8219
        %v9156 = vunpack.c.l.b16 %v8220
        %v9157 = vunpack.c.h.b16 %v8220
        %v9158 = vunpack.c.l.b16 %v8221
        %v9159 = vunpack.c.l.b16 %v8222
        %v9160 = vunpack.c.h.b16 %v8222
        %v9161 = vunpack.c.l.b16 %v8223
        %v9162 = vunpack.c.l.b16 %v8224
        %v9163 = vunpack.c.h.b16 %v8224
        %v9164 = vunpack.c.l.b16 %v8225
        %v9165 = vunpack.c.l.b16 %v8226
        %v9166 = vunpack.c.h.b16 %v8226
        %v9167 = vunpack.c.l.b16 %v8227
        %v9168 = vunpack.c.l.b16 %v8228
        %v9169 = vunpack.c.h.b16 %v8228
        %v9170 = vunpack.c.l.b16 %v8229
        %v9171 = vunpack.c.l.b16 %v8230
        %v9172 = vunpack.c.h.b16 %v8230
        %v9173 = vunpack.c.l.b16 %v8231
        %v9174 = vunpack.c.l.b16 %v8232
        %v9175 = vunpack.c.h.b16 %v8232
        %v9176 = vunpack.c.l.b16 %v8233
        %v9177 = vunpack.c.l.b16 %v8234
        %v9178 = vunpack.c.h.b16 %v8234
        %v9179 = vunpack.c.l.b16 %v8235
        %v9180 = vunpack.c.l.b16 %v8236
        %v9181 = vunpack.c.h.b16 %v8236
        %v9182 = vunpack.c.l.b16 %v8237
        %v9183 = vunpack.c.l.b16 %v8238
        %v9184 = vunpack.c.h.b16 %v8238
        %v9185 = vunpack.c.l.b16 %v8239
        %v9186 = vunpack.c.l.b16 %v8240
        %v9187 = vunpack.c.h.b16 %v8240
        %v9188 = vunpack.c.l.b16 %v8241
        %v9189 = vunpack.c.l.b16 %v8242
        %v9190 = vunpack.c.h.b16 %v8242
        %v9191 = vunpack.c.l.b16 %v8243
        %v9192 = vunpack.c.l.b16 %v8244
        %v9193 = vunpack.c.h.b16 %v8244
        %v9194 = vunpack.c.l.b16 %v8245
        %v9195 = vunpack.c.l.b16 %v8246
        %v9196 = vunpack.c.h.b16 %v8246
        %v9197 = vunpack.c.l.b16 %v8247
        %v9198 = vunpack.c.l.b16 %v8248
        %v9199 = vunpack.c.h.b16 %v8248
        %v9200 = vunpack.c.l.b16 %v8249
        %v9201 = vunpack.c.l.b16 %v8250
        %v9202 = vunpack.c.h.b16 %v8250
        %v9203 = vunpack.c.l.b16 %v8251
        %v9204 = vunpack.c.l.b16 %v8252
        %v9205 = vunpack.c.h.b16 %v8252
        %v9206 = vunpack.c.l.b16 %v8253
        %v9207 = vunpack.c.l.b16 %v8254
        %v9208 = vunpack.c.h.b16 %v8254
        %v9209 = vunpack.c.l.b16 %v8255
        %v9210 = vunpack.c.l.b16 %v8256
        %v9211 = vunpack.c.h.b16 %v8256
        %v9212 = vunpack.c.l.b16 %v8257
        %v9213 = vunpack.c.l.b16 %v8258
        %v9214 = vunpack.c.h.b16 %v8258
        %v9215 = vunpack.c.l.b16 %v8259
        %v9216 = vunpack.c.l.b16 %v8260
        %v9217 = vunpack.c.h.b16 %v8260
        %v9218 = vunpack.c.l.b16 %v8261
        %v9219 = vunpack.c.l.b16 %v8262
        %v9220 = vunpack.c.h.b16 %v8262
        %v9221 = vunpack.c.l.b16 %v8263
        %v9222 = vunpack.c.l.b16 %v8264
        %v9223 = vunpack.c.h.b16 %v8264
        %v9224 = vunpack.c.l.b16 %v8265
        %v9225 = vunpack.c.l.b16 %v8266
        %v9226 = vunpack.c.h.b16 %v8266
        %v9227 = vunpack.c.l.b16 %v8267
        %v9228 = vunpack.c.l.b16 %v8268
        %v9229 = vunpack.c.h.b16 %v8268
        %v9230 = vunpack.c.l.b16 %v8269
        %v9231 = vunpack.c.l.b16 %v8270
        %v9232 = vunpack.c.h.b16 %v8270
        %v9233 = vunpack.c.l.b16 %v8271
        %v9234 = vunpack.c.l.b16 %v8272
        %v9235 = vunpack.c.h.b16 %v8272
        %v9236 = vunpack.c.l.b16 %v8273
        %v9237 = vunpack.c.l.b16 %v8274
        %v9238 = vunpack.c.h.b16 %v8274
        %v9239 = vunpack.c.l.b16 %v8275
        %v9240 = vunpack.c.l.b16 %v8276
        %v9241 = vunpack.c.h.b16 %v8276
        %v9242 = vunpack.c.l.b16 %v8277
        %v9243 = vunpack.c.l.b16 %v8278
        %v9244 = vunpack.c.h.b16 %v8278
        %v9245 = vunpack.c.l.b16 %v8279
        %v9246 = vunpack.c.l.b16 %v8280
        %v9247 = vunpack.c.h.b16 %v8280
        %v9248 = vunpack.c.l.b16 %v8281
        %v9249 = vunpack.c.l.b16 %v8282
        %v9250 = vunpack.c.h.b16 %v8282
        %v9251 = vunpack.c.l.b16 %v8283
        %v9252 = vpack.c.b16 %v8679, %v8676
        %v9253 = vpack.c.b16 %v8680, %v8677
        %v9254 = vpack.c.b16 %v8681, %v8678
        %v9255 = vpack.c.b16 %v8685, %v8682
        %v9256 = vpack.c.b16 %v8686, %v8683
        %v9257 = vpack.c.b16 %v8687, %v8684
        %v9258 = vpack.c.b16 %v8691, %v8688
        %v9259 = vpack.c.b16 %v8692, %v8689
        %v9260 = vpack.c.b16 %v8693, %v8690
        %v9261 = vpack.c.b16 %v8697, %v8694
        %v9262 = vpack.c.b16 %v8698, %v8695
        %v9263 = vpack.c.b16 %v8699, %v8696
        %v9264 = vpack.c.b16 %v8703, %v8700
        %v9265 = vpack.c.b16 %v8704, %v8701
        %v9266 = vpack.c.b16 %v8705, %v8702
        %v9267 = vpack.c.b16 %v8709, %v8706
        %v9268 = vpack.c.b16 %v8710, %v8707
        %v9269 = vpack.c.b16 %v8711, %v8708
        %v9270 = vpack.c.b16 %v8715, %v8712
        %v9271 = vpack.c.b16 %v8716, %v8713
        %v9272 = vpack.c.b16 %v8717, %v8714
        %v9273 = vpack.c.b16 %v8721, %v8718
        %v9274 = vpack.c.b16 %v8722, %v8719
        %v9275 = vpack.c.b16 %v8723, %v8720
        %v9276 = vpack.c.b16 %v8727, %v8724
        %v9277 = vpack.c.b16 %v8728, %v8725
        %v9278 = vpack.c.b16 %v8729, %v8726
        %v9279 = vpack.c.b16 %v8733, %v8730
        %v9280 = vpack.c.b16 %v8734, %v8731
        %v9281 = vpack.c.b16 %v8735, %v8732
        %v9282 = vpack.c.b16 %v8739, %v8736
        %v9283 = vpack.c.b16 %v8740, %v8737
        %v9284 = vpack.c.b16 %v8741, %v8738
        %v9285 = vpack.c.b16 %v8745, %v8742
        %v9286 = vpack.c.b16 %v8746, %v8743
        %v9287 = vpack.c.b16 %v8747, %v8744
        %v9288 = vpack.c.b16 %v8751, %v8748
        %v9289 = vpack.c.b16 %v8752, %v8749
        %v9290 = vpack.c.b16 %v8753, %v8750
        %v9291 = vpack.c.b16 %v8757, %v8754
        %v9292 = vpack.c.b16 %v8758, %v8755
        %v9293 = vpack.c.b16 %v8759, %v8756
        %v9294 = vpack.c.b16 %v8763, %v8760
        %v9295 = vpack.c.b16 %v8764, %v8761
        %v9296 = vpack.c.b16 %v8765, %v8762
        %v9297 = vpack.c.b16 %v8769, %v8766
        %v9298 = vpack.c.b16 %v8770, %v8767
        %v9299 = vpack.c.b16 %v8771, %v8768
        %v9300 = vpack.c.b16 %v8775, %v8772
        %v9301 = vpack.c.b16 %v8776, %v8773
        %v9302 = vpack.c.b16 %v8777, %v8774
        %v9303 = vpack.c.b16 %v8781, %v8778
        %v9304 = vpack.c.b16 %v8782, %v8779
        %v9305 = vpack.c.b16 %v8783, %v8780
        %v9306 = vpack.c.b16 %v8787, %v8784
        %v9307 = vpack.c.b16 %v8788, %v8785
        %v9308 = vpack.c.b16 %v8789, %v8786
        %v9309 = vpack.c.b16 %v8793, %v8790
        %v9310 = vpack.c.b16 %v8794, %v8791
        %v9311 = vpack.c.b16 %v8795, %v8792
        %v9312 = vpack.c.b16 %v8799, %v8796
        %v9313 = vpack.c.b16 %v8800, %v8797
        %v9314 = vpack.c.b16 %v8801, %v8798
        %v9315 = vpack.c.b16 %v8805, %v8802
        %v9316 = vpack.c.b16 %v8806, %v8803
        %v9317 = vpack.c.b16 %v8807, %v8804
        %v9318 = vpack.c.b16 %v8811, %v8808
        %v9319 = vpack.c.b16 %v8812, %v8809
        %v9320 = vpack.c.b16 %v8813, %v8810
        %v9321 = vpack.c.b16 %v8817, %v8814
        %v9322 = vpack.c.b16 %v8818, %v8815
        %v9323 = vpack.c.b16 %v8819, %v8816
        %v9324 = vpack.c.b16 %v8823, %v8820
        %v9325 = vpack.c.b16 %v8824, %v8821
        %v9326 = vpack.c.b16 %v8825, %v8822
        %v9327 = vpack.c.b16 %v8829, %v8826
        %v9328 = vpack.c.b16 %v8830, %v8827
        %v9329 = vpack.c.b16 %v8831, %v8828
        %v9330 = vpack.c.b16 %v8835, %v8832
        %v9331 = vpack.c.b16 %v8836, %v8833
        %v9332 = vpack.c.b16 %v8837, %v8834
        %v9333 = vpack.c.b16 %v8841, %v8838
        %v9334 = vpack.c.b16 %v8842, %v8839
        %v9335 = vpack.c.b16 %v8843, %v8840
        %v9336 = vpack.c.b16 %v8847, %v8844
        %v9337 = vpack.c.b16 %v8848, %v8845
        %v9338 = vpack.c.b16 %v8849, %v8846
        %v9339 = vpack.c.b16 %v8853, %v8850
        %v9340 = vpack.c.b16 %v8854, %v8851
        %v9341 = vpack.c.b16 %v8855, %v8852
        %v9342 = vpack.c.b16 %v8859, %v8856
        %v9343 = vpack.c.b16 %v8860, %v8857
        %v9344 = vpack.c.b16 %v8861, %v8858
        %v9345 = vpack.c.b16 %v8865, %v8862
        %v9346 = vpack.c.b16 %v8866, %v8863
        %v9347 = vpack.c.b16 %v8867, %v8864
        %v9348 = vpack.c.b16 %v8871, %v8868
        %v9349 = vpack.c.b16 %v8872, %v8869
        %v9350 = vpack.c.b16 %v8873, %v8870
        %v9351 = vpack.c.b16 %v8877, %v8874
        %v9352 = vpack.c.b16 %v8878, %v8875
        %v9353 = vpack.c.b16 %v8879, %v8876
        %v9354 = vpack.c.b16 %v8883, %v8880
        %v9355 = vpack.c.b16 %v8884, %v8881
        %v9356 = vpack.c.b16 %v8885, %v8882
        %v9357 = vpack.c.b16 %v8889, %v8886
        %v9358 = vpack.c.b16 %v8890, %v8887
        %v9359 = vpack.c.b16 %v8891, %v8888
        %v9360 = vpack.c.b16 %v8895, %v8892
        %v9361 = vpack.c.b16 %v8896, %v8893
        %v9362 = vpack.c.b16 %v8897, %v8894
        %v9363 = vpack.c.b16 %v8901, %v8898
        %v9364 = vpack.c.b16 %v8902, %v8899
        %v9365 = vpack.c.b16 %v8903, %v8900
        %v9366 = vpack.c.b16 %v8907, %v8904
        %v9367 = vpack.c.b16 %v8908, %v8905
        %v9368 = vpack.c.b16 %v8909, %v8906
        %v9369 = vpack.c.b16 %v8913, %v8910
        %v9370 = vpack.c.b16 %v8914, %v8911
        %v9371 = vpack.c.b16 %v8915, %v8912
        %v9372 = vpack.c.b16 %v8919, %v8916
        %v9373 = vpack.c.b16 %v8920, %v8917
        %v9374 = vpack.c.b16 %v8921, %v8918
        %v9375 = vpack.c.b16 %v8925, %v8922
        %v9376 = vpack.c.b16 %v8926, %v8923
        %v9377 = vpack.c.b16 %v8927, %v8924
        %v9378 = vpack.c.b16 %v8931, %v8928
        %v9379 = vpack.c.b16 %v8932, %v8929
        %v9380 = vpack.c.b16 %v8933, %v8930
        %v9381 = vpack.c.b16 %v8937, %v8934
        %v9382 = vpack.c.b16 %v8938, %v8935
        %v9383 = vpack.c.b16 %v8939, %v8936
        %v9384 = vpack.c.b16 %v8943, %v8940
        %v9385 = vpack.c.b16 %v8944, %v8941
        %v9386 = vpack.c.b16 %v8945, %v8942
        %v9387 = vpack.c.b16 %v8949, %v8946
        %v9388 = vpack.c.b16 %v8950, %v8947
        %v9389 = vpack.c.b16 %v8951, %v8948
        %v9390 = vpack.c.b16 %v8955, %v8952
        %v9391 = vpack.c.b16 %v8956, %v8953
        %v9392 = vpack.c.b16 %v8957, %v8954
        %v9393 = vpack.c.b16 %v8961, %v8958
        %v9394 = vpack.c.b16 %v8962, %v8959
        %v9395 = vpack.c.b16 %v8963, %v8960
        %v9396 = vpack.c.b16 %v8967, %v8964
        %v9397 = vpack.c.b16 %v8968, %v8965
        %v9398 = vpack.c.b16 %v8969, %v8966
        %v9399 = vpack.c.b16 %v8973, %v8970
        %v9400 = vpack.c.b16 %v8974, %v8971
        %v9401 = vpack.c.b16 %v8975, %v8972
        %v9402 = vpack.c.b16 %v8979, %v8976
        %v9403 = vpack.c.b16 %v8980, %v8977
        %v9404 = vpack.c.b16 %v8981, %v8978
        %v9405 = vpack.c.b16 %v8985, %v8982
        %v9406 = vpack.c.b16 %v8986, %v8983
        %v9407 = vpack.c.b16 %v8987, %v8984
        %v9408 = vpack.c.b16 %v8991, %v8988
        %v9409 = vpack.c.b16 %v8992, %v8989
        %v9410 = vpack.c.b16 %v8993, %v8990
        %v9411 = vpack.c.b16 %v8997, %v8994
        %v9412 = vpack.c.b16 %v8998, %v8995
        %v9413 = vpack.c.b16 %v8999, %v8996
        %v9414 = vpack.c.b16 %v9003, %v9000
        %v9415 = vpack.c.b16 %v9004, %v9001
        %v9416 = vpack.c.b16 %v9005, %v9002
        %v9417 = vpack.c.b16 %v9009, %v9006
        %v9418 = vpack.c.b16 %v9010, %v9007
        %v9419 = vpack.c.b16 %v9011, %v9008
        %v9420 = vpack.c.b16 %v9015, %v9012
        %v9421 = vpack.c.b16 %v9016, %v9013
        %v9422 = vpack.c.b16 %v9017, %v9014
        %v9423 = vpack.c.b16 %v9021, %v9018
        %v9424 = vpack.c.b16 %v9022, %v9019
        %v9425 = vpack.c.b16 %v9023, %v9020
        %v9426 = vpack.c.b16 %v9027, %v9024
        %v9427 = vpack.c.b16 %v9028, %v9025
        %v9428 = vpack.c.b16 %v9029, %v9026
        %v9429 = vpack.c.b16 %v9033, %v9030
        %v9430 = vpack.c.b16 %v9034, %v9031
        %v9431 = vpack.c.b16 %v9035, %v9032
        %v9432 = vpack.c.b16 %v9039, %v9036
        %v9433 = vpack.c.b16 %v9040, %v9037
        %v9434 = vpack.c.b16 %v9041, %v9038
        %v9435 = vpack.c.b16 %v9045, %v9042
        %v9436 = vpack.c.b16 %v9046, %v9043
        %v9437 = vpack.c.b16 %v9047, %v9044
        %v9438 = vpack.c.b16 %v9051, %v9048
        %v9439 = vpack.c.b16 %v9052, %v9049
        %v9440 = vpack.c.b16 %v9053, %v9050
        %v9441 = vpack.c.b16 %v9057, %v9054
        %v9442 = vpack.c.b16 %v9058, %v9055
        %v9443 = vpack.c.b16 %v9059, %v9056
        %v9444 = vpack.c.b16 %v9063, %v9060
        %v9445 = vpack.c.b16 %v9064, %v9061
        %v9446 = vpack.c.b16 %v9065, %v9062
        %v9447 = vpack.c.b16 %v9069, %v9066
        %v9448 = vpack.c.b16 %v9070, %v9067
        %v9449 = vpack.c.b16 %v9071, %v9068
        %v9450 = vpack.c.b16 %v9075, %v9072
        %v9451 = vpack.c.b16 %v9076, %v9073
        %v9452 = vpack.c.b16 %v9077, %v9074
        %v9453 = vpack.c.b16 %v9081, %v9078
        %v9454 = vpack.c.b16 %v9082, %v9079
        %v9455 = vpack.c.b16 %v9083, %v9080
        %v9456 = vpack.c.b16 %v9087, %v9084
        %v9457 = vpack.c.b16 %v9088, %v9085
        %v9458 = vpack.c.b16 %v9089, %v9086
        %v9459 = vpack.c.b16 %v9093, %v9090
        %v9460 = vpack.c.b16 %v9094, %v9091
        %v9461 = vpack.c.b16 %v9095, %v9092
        %v9462 = vpack.c.b16 %v9099, %v9096
        %v9463 = vpack.c.b16 %v9100, %v9097
        %v9464 = vpack.c.b16 %v9101, %v9098
        %v9465 = vpack.c.b16 %v9105, %v9102
        %v9466 = vpack.c.b16 %v9106, %v9103
        %v9467 = vpack.c.b16 %v9107, %v9104
        %v9468 = vpack.c.b16 %v9111, %v9108
        %v9469 = vpack.c.b16 %v9112, %v9109
        %v9470 = vpack.c.b16 %v9113, %v9110
        %v9471 = vpack.c.b16 %v9117, %v9114
        %v9472 = vpack.c.b16 %v9118, %v9115
        %v9473 = vpack.c.b16 %v9119, %v9116
        %v9474 = vpack.c.b16 %v9123, %v9120
        %v9475 = vpack.c.b16 %v9124, %v9121
        %v9476 = vpack.c.b16 %v9125, %v9122
        %v9477 = vpack.c.b16 %v9129, %v9126
        %v9478 = vpack.c.b16 %v9130, %v9127
        %v9479 = vpack.c.b16 %v9131, %v9128
        %v9480 = vpack.c.b16 %v9135, %v9132
        %v9481 = vpack.c.b16 %v9136, %v9133
        %v9482 = vpack.c.b16 %v9137, %v9134
        %v9483 = vpack.c.b16 %v9141, %v9138
        %v9484 = vpack.c.b16 %v9142, %v9139
        %v9485 = vpack.c.b16 %v9143, %v9140
        %v9486 = vpack.c.b16 %v9147, %v9144
        %v9487 = vpack.c.b16 %v9148, %v9145
        %v9488 = vpack.c.b16 %v9149, %v9146
        %v9489 = vpack.c.b16 %v9153, %v9150
        %v9490 = vpack.c.b16 %v9154, %v9151
        %v9491 = vpack.c.b16 %v9155, %v9152
        %v9492 = vpack.c.b16 %v9159, %v9156
        %v9493 = vpack.c.b16 %v9160, %v9157
        %v9494 = vpack.c.b16 %v9161, %v9158
        %v9495 = vpack.c.b16 %v9165, %v9162
        %v9496 = vpack.c.b16 %v9166, %v9163
        %v9497 = vpack.c.b16 %v9167, %v9164
        %v9498 = vpack.c.b16 %v9171, %v9168
        %v9499 = vpack.c.b16 %v9172, %v9169
        %v9500 = vpack.c.b16 %v9173, %v9170
        %v9501 = vpack.c.b16 %v9177, %v9174
        %v9502 = vpack.c.b16 %v9178, %v9175
        %v9503 = vpack.c.b16 %v9179, %v9176
        %v9504 = vpack.c.b16 %v9183, %v9180
        %v9505 = vpack.c.b16 %v9184, %v9181
        %v9506 = vpack.c.b16 %v9185, %v9182
        %v9507 = vpack.c.b16 %v9189, %v9186
        %v9508 = vpack.c.b16 %v9190, %v9187
        %v9509 = vpack.c.b16 %v9191, %v9188
        %v9510 = vpack.c.b16 %v9195, %v9192
        %v9511 = vpack.c.b16 %v9196, %v9193
        %v9512 = vpack.c.b16 %v9197, %v9194
        %v9513 = vpack.c.b16 %v9201, %v9198
        %v9514 = vpack.c.b16 %v9202, %v9199
        %v9515 = vpack.c.b16 %v9203, %v9200
        %v9516 = vpack.c.b16 %v9207, %v9204
        %v9517 = vpack.c.b16 %v9208, %v9205
        %v9518 = vpack.c.b16 %v9209, %v9206
        %v9519 = vpack.c.b16 %v9213, %v9210
        %v9520 = vpack.c.b16 %v9214, %v9211
        %v9521 = vpack.c.b16 %v9215, %v9212
        %v9522 = vpack.c.b16 %v9219, %v9216
        %v9523 = vpack.c.b16 %v9220, %v9217
        %v9524 = vpack.c.b16 %v9221, %v9218
        %v9525 = vpack.c.b16 %v9225, %v9222
        %v9526 = vpack.c.b16 %v9226, %v9223
        %v9527 = vpack.c.b16 %v9227, %v9224
        %v9528 = vpack.c.b16 %v9231, %v9228
        %v9529 = vpack.c.b16 %v9232, %v9229
        %v9530 = vpack.c.b16 %v9233, %v9230
        %v9531 = vpack.c.b16 %v9237, %v9234
        %v9532 = vpack.c.b16 %v9238, %v9235
        %v9533 = vpack.c.b16 %v9239, %v9236
        %v9534 = vpack.c.b16 %v9243, %v9240
        %v9535 = vpack.c.b16 %v9244, %v9241
        %v9536 = vpack.c.b16 %v9245, %v9242
        %v9537 = vpack.c.b16 %v9249, %v9246
        %v9538 = vpack.c.b16 %v9250, %v9247
        %v9539 = vpack.c.b16 %v9251, %v9248
        %9828 = vmatpush.bf16.msra.mxu0 %v9273
        %9829 = vmatpush.bf16.msra.mxu0 %v9270
        %9830 = vmatpush.bf16.msra.mxu0 %v9267
        %9831 = vmatpush.bf16.msra.mxu0 %v9264
        %9832 = vmatpush.bf16.msra.mxu0 %v9261
        %9833 = vmatpush.bf16.msra.mxu0 %v9258
        %9834 = vmatpush.bf16.msra.mxu0 %v9255
        %9835 = vmatpush.bf16.msra.mxu0 %v9252
        %9836 = vmatmul.bf16.gmra.mxu0 %v7804
        %v9837 = vpop.f32.mrf.mxu0
        %v9838 = vadd.f32 %v8286, %v9837
        %v9839 = vpop.f32.mrf.mxu0
        %v9840 = vadd.f32 %v8286, %v9839
        %9841 = vmatmul.bf16.gmra.mxu0 %v7816
        %v9842 = vpop.f32.mrf.mxu0
        %v9843 = vadd.f32 %v8286, %v9842
        %v9844 = vpop.f32.mrf.mxu0
        %v9845 = vadd.f32 %v8286, %v9844
        %9846 = vmatmul.bf16.gmra.mxu0 %v7828
        %v9847 = vpop.f32.mrf.mxu0
        %v9848 = vadd.f32 %v8286, %v9847
        %v9849 = vpop.f32.mrf.mxu0
        %v9850 = vadd.f32 %v8286, %v9849
        %9851 = vmatmul.bf16.gmra.mxu0 %v7840
        %v9852 = vpop.f32.mrf.mxu0
        %v9853 = vadd.f32 %v8286, %v9852
        %v9854 = vpop.f32.mrf.mxu0
        %v9855 = vadd.f32 %v8286, %v9854
        %9856 = vmatmul.bf16.gmra.mxu0 %v7852
        %v9857 = vpop.f32.mrf.mxu0
        %v9858 = vadd.f32 %v8286, %v9857
        %v9859 = vpop.f32.mrf.mxu0
        %v9860 = vadd.f32 %v8286, %v9859
        %9861 = vmatmul.bf16.gmra.mxu0 %v7864
        %v9862 = vpop.f32.mrf.mxu0
        %v9863 = vadd.f32 %v8286, %v9862
        %v9864 = vpop.f32.mrf.mxu0
        %v9865 = vadd.f32 %v8286, %v9864
        %9866 = vmatmul.bf16.gmra.mxu0 %v7876
        %v9867 = vpop.f32.mrf.mxu0
        %v9868 = vadd.f32 %v8286, %v9867
        %v9869 = vpop.f32.mrf.mxu0
        %v9870 = vadd.f32 %v8286, %v9869
        %9871 = vmatmul.bf16.gmra.mxu0 %v7888
        %v9872 = vpop.f32.mrf.mxu0
        %v9873 = vadd.f32 %v8286, %v9872
        %v9874 = vpop.f32.mrf.mxu0
        %v9875 = vadd.f32 %v8286, %v9874
        %9876 = vdwg.mxu0
        %9877 = vmatpush.bf16.msra.mxu0 %v9297
        %9878 = vmatpush.bf16.msra.mxu0 %v9294
        %9879 = vmatpush.bf16.msra.mxu0 %v9291
        %9880 = vmatpush.bf16.msra.mxu0 %v9288
        %9881 = vmatpush.bf16.msra.mxu0 %v9285
        %9882 = vmatpush.bf16.msra.mxu0 %v9282
        %9883 = vmatpush.bf16.msra.mxu0 %v9279
        %9884 = vmatpush.bf16.msra.mxu0 %v9276
        %9885 = vmatmul.bf16.gmra.mxu0 %v7805
        %v9886 = vpop.f32.mrf.mxu0
        %v9887 = vadd.f32 %v9838, %v9886
        %v9888 = vpop.f32.mrf.mxu0
        %v9889 = vadd.f32 %v9840, %v9888
        %9890 = vmatmul.bf16.gmra.mxu0 %v7817
        %v9891 = vpop.f32.mrf.mxu0
        %v9892 = vadd.f32 %v9843, %v9891
        %v9893 = vpop.f32.mrf.mxu0
        %v9894 = vadd.f32 %v9845, %v9893
        %9895 = vmatmul.bf16.gmra.mxu0 %v7829
        %v9896 = vpop.f32.mrf.mxu0
        %v9897 = vadd.f32 %v9848, %v9896
        %v9898 = vpop.f32.mrf.mxu0
        %v9899 = vadd.f32 %v9850, %v9898
        %9900 = vmatmul.bf16.gmra.mxu0 %v7841
        %v9901 = vpop.f32.mrf.mxu0
        %v9902 = vadd.f32 %v9853, %v9901
        %v9903 = vpop.f32.mrf.mxu0
        %v9904 = vadd.f32 %v9855, %v9903
        %9905 = vmatmul.bf16.gmra.mxu0 %v7853
        %v9906 = vpop.f32.mrf.mxu0
        %v9907 = vadd.f32 %v9858, %v9906
        %v9908 = vpop.f32.mrf.mxu0
        %v9909 = vadd.f32 %v9860, %v9908
        %9910 = vmatmul.bf16.gmra.mxu0 %v7865
        %v9911 = vpop.f32.mrf.mxu0
        %v9912 = vadd.f32 %v9863, %v9911
        %v9913 = vpop.f32.mrf.mxu0
        %v9914 = vadd.f32 %v9865, %v9913
        %9915 = vmatmul.bf16.gmra.mxu0 %v7877
        %v9916 = vpop.f32.mrf.mxu0
        %v9917 = vadd.f32 %v9868, %v9916
        %v9918 = vpop.f32.mrf.mxu0
        %v9919 = vadd.f32 %v9870, %v9918
        %9920 = vmatmul.bf16.gmra.mxu0 %v7889
        %v9921 = vpop.f32.mrf.mxu0
        %v9922 = vadd.f32 %v9873, %v9921
        %v9923 = vpop.f32.mrf.mxu0
        %v9924 = vadd.f32 %v9875, %v9923
        %9925 = vdwg.mxu0
        %9926 = vmatpush.bf16.msra.mxu0 %v9321
        %9927 = vmatpush.bf16.msra.mxu0 %v9318
        %9928 = vmatpush.bf16.msra.mxu0 %v9315
        %9929 = vmatpush.bf16.msra.mxu0 %v9312
        %9930 = vmatpush.bf16.msra.mxu0 %v9309
        %9931 = vmatpush.bf16.msra.mxu0 %v9306
        %9932 = vmatpush.bf16.msra.mxu0 %v9303
        %9933 = vmatpush.bf16.msra.mxu0 %v9300
        %9934 = vmatmul.bf16.gmra.mxu0 %v7806
        %v9935 = vpop.f32.mrf.mxu0
        %v9936 = vadd.f32 %v9887, %v9935
        %v9937 = vpop.f32.mrf.mxu0
        %v9938 = vadd.f32 %v9889, %v9937
        %9939 = vmatmul.bf16.gmra.mxu0 %v7818
        %v9940 = vpop.f32.mrf.mxu0
        %v9941 = vadd.f32 %v9892, %v9940
        %v9942 = vpop.f32.mrf.mxu0
        %v9943 = vadd.f32 %v9894, %v9942
        %9944 = vmatmul.bf16.gmra.mxu0 %v7830
        %v9945 = vpop.f32.mrf.mxu0
        %v9946 = vadd.f32 %v9897, %v9945
        %v9947 = vpop.f32.mrf.mxu0
        %v9948 = vadd.f32 %v9899, %v9947
        %9949 = vmatmul.bf16.gmra.mxu0 %v7842
        %v9950 = vpop.f32.mrf.mxu0
        %v9951 = vadd.f32 %v9902, %v9950
        %v9952 = vpop.f32.mrf.mxu0
        %v9953 = vadd.f32 %v9904, %v9952
        %9954 = vmatmul.bf16.gmra.mxu0 %v7854
        %v9955 = vpop.f32.mrf.mxu0
        %v9956 = vadd.f32 %v9907, %v9955
        %v9957 = vpop.f32.mrf.mxu0
        %v9958 = vadd.f32 %v9909, %v9957
        %9959 = vmatmul.bf16.gmra.mxu0 %v7866
        %v9960 = vpop.f32.mrf.mxu0
        %v9961 = vadd.f32 %v9912, %v9960
        %v9962 = vpop.f32.mrf.mxu0
        %v9963 = vadd.f32 %v9914, %v9962
        %9964 = vmatmul.bf16.gmra.mxu0 %v7878
        %v9965 = vpop.f32.mrf.mxu0
        %v9966 = vadd.f32 %v9917, %v9965
        %v9967 = vpop.f32.mrf.mxu0
        %v9968 = vadd.f32 %v9919, %v9967
        %9969 = vmatmul.bf16.gmra.mxu0 %v7890
        %v9970 = vpop.f32.mrf.mxu0
        %v9971 = vadd.f32 %v9922, %v9970
        %v9972 = vpop.f32.mrf.mxu0
        %v9973 = vadd.f32 %v9924, %v9972
        %9974 = vdwg.mxu0
        %9975 = vmatpush.bf16.msra.mxu0 %v9345
        %9976 = vmatpush.bf16.msra.mxu0 %v9342
        %9977 = vmatpush.bf16.msra.mxu0 %v9339
        %9978 = vmatpush.bf16.msra.mxu0 %v9336
        %9979 = vmatpush.bf16.msra.mxu0 %v9333
        %9980 = vmatpush.bf16.msra.mxu0 %v9330
        %9981 = vmatpush.bf16.msra.mxu0 %v9327
        %9982 = vmatpush.bf16.msra.mxu0 %v9324
        %9983 = vmatmul.bf16.gmra.mxu0 %v7807
        %v9984 = vpop.f32.mrf.mxu0
        %v9985 = vadd.f32 %v9936, %v9984
        %v9986 = vpop.f32.mrf.mxu0
        %v9987 = vadd.f32 %v9938, %v9986
        %9988 = vmatmul.bf16.gmra.mxu0 %v7819
        %v9989 = vpop.f32.mrf.mxu0
        %v9990 = vadd.f32 %v9941, %v9989
        %v9991 = vpop.f32.mrf.mxu0
        %v9992 = vadd.f32 %v9943, %v9991
        %9993 = vmatmul.bf16.gmra.mxu0 %v7831
        %v9994 = vpop.f32.mrf.mxu0
        %v9995 = vadd.f32 %v9946, %v9994
        %v9996 = vpop.f32.mrf.mxu0
        %v9997 = vadd.f32 %v9948, %v9996
        %9998 = vmatmul.bf16.gmra.mxu0 %v7843
        %v9999 = vpop.f32.mrf.mxu0
        %v10000 = vadd.f32 %v9951, %v9999
        %v10001 = vpop.f32.mrf.mxu0
        %v10002 = vadd.f32 %v9953, %v10001
        %10003 = vmatmul.bf16.gmra.mxu0 %v7855
        %v10004 = vpop.f32.mrf.mxu0
        %v10005 = vadd.f32 %v9956, %v10004
        %v10006 = vpop.f32.mrf.mxu0
        %v10007 = vadd.f32 %v9958, %v10006
        %10008 = vmatmul.bf16.gmra.mxu0 %v7867
        %v10009 = vpop.f32.mrf.mxu0
        %v10010 = vadd.f32 %v9961, %v10009
        %v10011 = vpop.f32.mrf.mxu0
        %v10012 = vadd.f32 %v9963, %v10011
        %10013 = vmatmul.bf16.gmra.mxu0 %v7879
        %v10014 = vpop.f32.mrf.mxu0
        %v10015 = vadd.f32 %v9966, %v10014
        %v10016 = vpop.f32.mrf.mxu0
        %v10017 = vadd.f32 %v9968, %v10016
        %10018 = vmatmul.bf16.gmra.mxu0 %v7891
        %v10019 = vpop.f32.mrf.mxu0
        %v10020 = vadd.f32 %v9971, %v10019
        %v10021 = vpop.f32.mrf.mxu0
        %v10022 = vadd.f32 %v9973, %v10021
        %10023 = vdwg.mxu0
        %10024 = vmatpush.bf16.msra.mxu0 %v9369
        %10025 = vmatpush.bf16.msra.mxu0 %v9366
        %10026 = vmatpush.bf16.msra.mxu0 %v9363
        %10027 = vmatpush.bf16.msra.mxu0 %v9360
        %10028 = vmatpush.bf16.msra.mxu0 %v9357
        %10029 = vmatpush.bf16.msra.mxu0 %v9354
        %10030 = vmatpush.bf16.msra.mxu0 %v9351
        %10031 = vmatpush.bf16.msra.mxu0 %v9348
        %10032 = vmatmul.bf16.gmra.mxu0 %v7808
        %v10033 = vpop.f32.mrf.mxu0
        %v10034 = vadd.f32 %v9985, %v10033
        %v10035 = vpop.f32.mrf.mxu0
        %v10036 = vadd.f32 %v9987, %v10035
        %10037 = vmatmul.bf16.gmra.mxu0 %v7820
        %v10038 = vpop.f32.mrf.mxu0
        %v10039 = vadd.f32 %v9990, %v10038
        %v10040 = vpop.f32.mrf.mxu0
        %v10041 = vadd.f32 %v9992, %v10040
        %10042 = vmatmul.bf16.gmra.mxu0 %v7832
        %v10043 = vpop.f32.mrf.mxu0
        %v10044 = vadd.f32 %v9995, %v10043
        %v10045 = vpop.f32.mrf.mxu0
        %v10046 = vadd.f32 %v9997, %v10045
        %10047 = vmatmul.bf16.gmra.mxu0 %v7844
        %v10048 = vpop.f32.mrf.mxu0
        %v10049 = vadd.f32 %v10000, %v10048
        %v10050 = vpop.f32.mrf.mxu0
        %v10051 = vadd.f32 %v10002, %v10050
        %10052 = vmatmul.bf16.gmra.mxu0 %v7856
        %v10053 = vpop.f32.mrf.mxu0
        %v10054 = vadd.f32 %v10005, %v10053
        %v10055 = vpop.f32.mrf.mxu0
        %v10056 = vadd.f32 %v10007, %v10055
        %10057 = vmatmul.bf16.gmra.mxu0 %v7868
        %v10058 = vpop.f32.mrf.mxu0
        %v10059 = vadd.f32 %v10010, %v10058
        %v10060 = vpop.f32.mrf.mxu0
        %v10061 = vadd.f32 %v10012, %v10060
        %10062 = vmatmul.bf16.gmra.mxu0 %v7880
        %v10063 = vpop.f32.mrf.mxu0
        %v10064 = vadd.f32 %v10015, %v10063
        %v10065 = vpop.f32.mrf.mxu0
        %v10066 = vadd.f32 %v10017, %v10065
        %10067 = vmatmul.bf16.gmra.mxu0 %v7892
        %v10068 = vpop.f32.mrf.mxu0
        %v10069 = vadd.f32 %v10020, %v10068
        %v10070 = vpop.f32.mrf.mxu0
        %v10071 = vadd.f32 %v10022, %v10070
        %10072 = vdwg.mxu0
        %10073 = vmatpush.bf16.msra.mxu0 %v9393
        %10074 = vmatpush.bf16.msra.mxu0 %v9390
        %10075 = vmatpush.bf16.msra.mxu0 %v9387
        %10076 = vmatpush.bf16.msra.mxu0 %v9384
        %10077 = vmatpush.bf16.msra.mxu0 %v9381
        %10078 = vmatpush.bf16.msra.mxu0 %v9378
        %10079 = vmatpush.bf16.msra.mxu0 %v9375
        %10080 = vmatpush.bf16.msra.mxu0 %v9372
        %10081 = vmatmul.bf16.gmra.mxu0 %v7809
        %v10082 = vpop.f32.mrf.mxu0
        %v10083 = vadd.f32 %v10034, %v10082
        %v10084 = vpop.f32.mrf.mxu0
        %v10085 = vadd.f32 %v10036, %v10084
        %10086 = vmatmul.bf16.gmra.mxu0 %v7821
        %v10087 = vpop.f32.mrf.mxu0
        %v10088 = vadd.f32 %v10039, %v10087
        %v10089 = vpop.f32.mrf.mxu0
        %v10090 = vadd.f32 %v10041, %v10089
        %10091 = vmatmul.bf16.gmra.mxu0 %v7833
        %v10092 = vpop.f32.mrf.mxu0
        %v10093 = vadd.f32 %v10044, %v10092
        %v10094 = vpop.f32.mrf.mxu0
        %v10095 = vadd.f32 %v10046, %v10094
        %10096 = vmatmul.bf16.gmra.mxu0 %v7845
        %v10097 = vpop.f32.mrf.mxu0
        %v10098 = vadd.f32 %v10049, %v10097
        %v10099 = vpop.f32.mrf.mxu0
        %v10100 = vadd.f32 %v10051, %v10099
        %10101 = vmatmul.bf16.gmra.mxu0 %v7857
        %v10102 = vpop.f32.mrf.mxu0
        %v10103 = vadd.f32 %v10054, %v10102
        %v10104 = vpop.f32.mrf.mxu0
        %v10105 = vadd.f32 %v10056, %v10104
        %10106 = vmatmul.bf16.gmra.mxu0 %v7869
        %v10107 = vpop.f32.mrf.mxu0
        %v10108 = vadd.f32 %v10059, %v10107
        %v10109 = vpop.f32.mrf.mxu0
        %v10110 = vadd.f32 %v10061, %v10109
        %10111 = vmatmul.bf16.gmra.mxu0 %v7881
        %v10112 = vpop.f32.mrf.mxu0
        %v10113 = vadd.f32 %v10064, %v10112
        %v10114 = vpop.f32.mrf.mxu0
        %v10115 = vadd.f32 %v10066, %v10114
        %10116 = vmatmul.bf16.gmra.mxu0 %v7893
        %v10117 = vpop.f32.mrf.mxu0
        %v10118 = vadd.f32 %v10069, %v10117
        %v10119 = vpop.f32.mrf.mxu0
        %v10120 = vadd.f32 %v10071, %v10119
        %10121 = vdwg.mxu0
        %10122 = vmatpush.bf16.msra.mxu0 %v9417
        %10123 = vmatpush.bf16.msra.mxu0 %v9414
        %10124 = vmatpush.bf16.msra.mxu0 %v9411
        %10125 = vmatpush.bf16.msra.mxu0 %v9408
        %10126 = vmatpush.bf16.msra.mxu0 %v9405
        %10127 = vmatpush.bf16.msra.mxu0 %v9402
        %10128 = vmatpush.bf16.msra.mxu0 %v9399
        %10129 = vmatpush.bf16.msra.mxu0 %v9396
        %10130 = vmatmul.bf16.gmra.mxu0 %v7810
        %v10131 = vpop.f32.mrf.mxu0
        %v10132 = vadd.f32 %v10083, %v10131
        %v10133 = vpop.f32.mrf.mxu0
        %v10134 = vadd.f32 %v10085, %v10133
        %10135 = vmatmul.bf16.gmra.mxu0 %v7822
        %v10136 = vpop.f32.mrf.mxu0
        %v10137 = vadd.f32 %v10088, %v10136
        %v10138 = vpop.f32.mrf.mxu0
        %v10139 = vadd.f32 %v10090, %v10138
        %10140 = vmatmul.bf16.gmra.mxu0 %v7834
        %v10141 = vpop.f32.mrf.mxu0
        %v10142 = vadd.f32 %v10093, %v10141
        %v10143 = vpop.f32.mrf.mxu0
        %v10144 = vadd.f32 %v10095, %v10143
        %10145 = vmatmul.bf16.gmra.mxu0 %v7846
        %v10146 = vpop.f32.mrf.mxu0
        %v10147 = vadd.f32 %v10098, %v10146
        %v10148 = vpop.f32.mrf.mxu0
        %v10149 = vadd.f32 %v10100, %v10148
        %10150 = vmatmul.bf16.gmra.mxu0 %v7858
        %v10151 = vpop.f32.mrf.mxu0
        %v10152 = vadd.f32 %v10103, %v10151
        %v10153 = vpop.f32.mrf.mxu0
        %v10154 = vadd.f32 %v10105, %v10153
        %10155 = vmatmul.bf16.gmra.mxu0 %v7870
        %v10156 = vpop.f32.mrf.mxu0
        %v10157 = vadd.f32 %v10108, %v10156
        %v10158 = vpop.f32.mrf.mxu0
        %v10159 = vadd.f32 %v10110, %v10158
        %10160 = vmatmul.bf16.gmra.mxu0 %v7882
        %v10161 = vpop.f32.mrf.mxu0
        %v10162 = vadd.f32 %v10113, %v10161
        %v10163 = vpop.f32.mrf.mxu0
        %v10164 = vadd.f32 %v10115, %v10163
        %10165 = vmatmul.bf16.gmra.mxu0 %v7894
        %v10166 = vpop.f32.mrf.mxu0
        %v10167 = vadd.f32 %v10118, %v10166
        %v10168 = vpop.f32.mrf.mxu0
        %v10169 = vadd.f32 %v10120, %v10168
        %10170 = vdwg.mxu0
        %10171 = vmatpush.bf16.msra.mxu0 %v9441
        %10172 = vmatpush.bf16.msra.mxu0 %v9438
        %10173 = vmatpush.bf16.msra.mxu0 %v9435
        %10174 = vmatpush.bf16.msra.mxu0 %v9432
        %10175 = vmatpush.bf16.msra.mxu0 %v9429
        %10176 = vmatpush.bf16.msra.mxu0 %v9426
        %10177 = vmatpush.bf16.msra.mxu0 %v9423
        %10178 = vmatpush.bf16.msra.mxu0 %v9420
        %10179 = vmatmul.bf16.gmra.mxu0 %v7811
        %v10180 = vpop.f32.mrf.mxu0
        %v10181 = vadd.f32 %v10132, %v10180
        %v10182 = vpop.f32.mrf.mxu0
        %v10183 = vadd.f32 %v10134, %v10182
        %10184 = vmatmul.bf16.gmra.mxu0 %v7823
        %v10185 = vpop.f32.mrf.mxu0
        %v10186 = vadd.f32 %v10137, %v10185
        %v10187 = vpop.f32.mrf.mxu0
        %v10188 = vadd.f32 %v10139, %v10187
        %10189 = vmatmul.bf16.gmra.mxu0 %v7835
        %v10190 = vpop.f32.mrf.mxu0
        %v10191 = vadd.f32 %v10142, %v10190
        %v10192 = vpop.f32.mrf.mxu0
        %v10193 = vadd.f32 %v10144, %v10192
        %10194 = vmatmul.bf16.gmra.mxu0 %v7847
        %v10195 = vpop.f32.mrf.mxu0
        %v10196 = vadd.f32 %v10147, %v10195
        %v10197 = vpop.f32.mrf.mxu0
        %v10198 = vadd.f32 %v10149, %v10197
        %10199 = vmatmul.bf16.gmra.mxu0 %v7859
        %v10200 = vpop.f32.mrf.mxu0
        %v10201 = vadd.f32 %v10152, %v10200
        %v10202 = vpop.f32.mrf.mxu0
        %v10203 = vadd.f32 %v10154, %v10202
        %10204 = vmatmul.bf16.gmra.mxu0 %v7871
        %v10205 = vpop.f32.mrf.mxu0
        %v10206 = vadd.f32 %v10157, %v10205
        %v10207 = vpop.f32.mrf.mxu0
        %v10208 = vadd.f32 %v10159, %v10207
        %10209 = vmatmul.bf16.gmra.mxu0 %v7883
        %v10210 = vpop.f32.mrf.mxu0
        %v10211 = vadd.f32 %v10162, %v10210
        %v10212 = vpop.f32.mrf.mxu0
        %v10213 = vadd.f32 %v10164, %v10212
        %10214 = vmatmul.bf16.gmra.mxu0 %v7895
        %v10215 = vpop.f32.mrf.mxu0
        %v10216 = vadd.f32 %v10167, %v10215
        %v10217 = vpop.f32.mrf.mxu0
        %v10218 = vadd.f32 %v10169, %v10217
        %10219 = vdwg.mxu0
        %10220 = vmatpush.bf16.msra.mxu0 %v9465
        %10221 = vmatpush.bf16.msra.mxu0 %v9462
        %10222 = vmatpush.bf16.msra.mxu0 %v9459
        %10223 = vmatpush.bf16.msra.mxu0 %v9456
        %10224 = vmatpush.bf16.msra.mxu0 %v9453
        %10225 = vmatpush.bf16.msra.mxu0 %v9450
        %10226 = vmatpush.bf16.msra.mxu0 %v9447
        %10227 = vmatpush.bf16.msra.mxu0 %v9444
        %10228 = vmatmul.bf16.gmra.mxu0 %v7812
        %v10229 = vpop.f32.mrf.mxu0
        %v10230 = vadd.f32 %v10181, %v10229
        %v10231 = vpop.f32.mrf.mxu0
        %v10232 = vadd.f32 %v10183, %v10231
        %10233 = vmatmul.bf16.gmra.mxu0 %v7824
        %v10234 = vpop.f32.mrf.mxu0
        %v10235 = vadd.f32 %v10186, %v10234
        %v10236 = vpop.f32.mrf.mxu0
        %v10237 = vadd.f32 %v10188, %v10236
        %10238 = vmatmul.bf16.gmra.mxu0 %v7836
        %v10239 = vpop.f32.mrf.mxu0
        %v10240 = vadd.f32 %v10191, %v10239
        %v10241 = vpop.f32.mrf.mxu0
        %v10242 = vadd.f32 %v10193, %v10241
        %10243 = vmatmul.bf16.gmra.mxu0 %v7848
        %v10244 = vpop.f32.mrf.mxu0
        %v10245 = vadd.f32 %v10196, %v10244
        %v10246 = vpop.f32.mrf.mxu0
        %v10247 = vadd.f32 %v10198, %v10246
        %10248 = vmatmul.bf16.gmra.mxu0 %v7860
        %v10249 = vpop.f32.mrf.mxu0
        %v10250 = vadd.f32 %v10201, %v10249
        %v10251 = vpop.f32.mrf.mxu0
        %v10252 = vadd.f32 %v10203, %v10251
        %10253 = vmatmul.bf16.gmra.mxu0 %v7872
        %v10254 = vpop.f32.mrf.mxu0
        %v10255 = vadd.f32 %v10206, %v10254
        %v10256 = vpop.f32.mrf.mxu0
        %v10257 = vadd.f32 %v10208, %v10256
        %10258 = vmatmul.bf16.gmra.mxu0 %v7884
        %v10259 = vpop.f32.mrf.mxu0
        %v10260 = vadd.f32 %v10211, %v10259
        %v10261 = vpop.f32.mrf.mxu0
        %v10262 = vadd.f32 %v10213, %v10261
        %10263 = vmatmul.bf16.gmra.mxu0 %v7896
        %v10264 = vpop.f32.mrf.mxu0
        %v10265 = vadd.f32 %v10216, %v10264
        %v10266 = vpop.f32.mrf.mxu0
        %v10267 = vadd.f32 %v10218, %v10266
        %10268 = vdwg.mxu0
        %10269 = vmatpush.bf16.msra.mxu0 %v9489
        %10270 = vmatpush.bf16.msra.mxu0 %v9486
        %10271 = vmatpush.bf16.msra.mxu0 %v9483
        %10272 = vmatpush.bf16.msra.mxu0 %v9480
        %10273 = vmatpush.bf16.msra.mxu0 %v9477
        %10274 = vmatpush.bf16.msra.mxu0 %v9474
        %10275 = vmatpush.bf16.msra.mxu0 %v9471
        %10276 = vmatpush.bf16.msra.mxu0 %v9468
        %10277 = vmatmul.bf16.gmra.mxu0 %v7813
        %v10278 = vpop.f32.mrf.mxu0
        %v10279 = vadd.f32 %v10230, %v10278
        %v10280 = vpop.f32.mrf.mxu0
        %v10281 = vadd.f32 %v10232, %v10280
        %10282 = vmatmul.bf16.gmra.mxu0 %v7825
        %v10283 = vpop.f32.mrf.mxu0
        %v10284 = vadd.f32 %v10235, %v10283
        %v10285 = vpop.f32.mrf.mxu0
        %v10286 = vadd.f32 %v10237, %v10285
        %10287 = vmatmul.bf16.gmra.mxu0 %v7837
        %v10288 = vpop.f32.mrf.mxu0
        %v10289 = vadd.f32 %v10240, %v10288
        %v10290 = vpop.f32.mrf.mxu0
        %v10291 = vadd.f32 %v10242, %v10290
        %10292 = vmatmul.bf16.gmra.mxu0 %v7849
        %v10293 = vpop.f32.mrf.mxu0
        %v10294 = vadd.f32 %v10245, %v10293
        %v10295 = vpop.f32.mrf.mxu0
        %v10296 = vadd.f32 %v10247, %v10295
        %10297 = vmatmul.bf16.gmra.mxu0 %v7861
        %v10298 = vpop.f32.mrf.mxu0
        %v10299 = vadd.f32 %v10250, %v10298
        %v10300 = vpop.f32.mrf.mxu0
        %v10301 = vadd.f32 %v10252, %v10300
        %10302 = vmatmul.bf16.gmra.mxu0 %v7873
        %v10303 = vpop.f32.mrf.mxu0
        %v10304 = vadd.f32 %v10255, %v10303
        %v10305 = vpop.f32.mrf.mxu0
        %v10306 = vadd.f32 %v10257, %v10305
        %10307 = vmatmul.bf16.gmra.mxu0 %v7885
        %v10308 = vpop.f32.mrf.mxu0
        %v10309 = vadd.f32 %v10260, %v10308
        %v10310 = vpop.f32.mrf.mxu0
        %v10311 = vadd.f32 %v10262, %v10310
        %10312 = vmatmul.bf16.gmra.mxu0 %v7897
        %v10313 = vpop.f32.mrf.mxu0
        %v10314 = vadd.f32 %v10265, %v10313
        %v10315 = vpop.f32.mrf.mxu0
        %v10316 = vadd.f32 %v10267, %v10315
        %10317 = vdwg.mxu0
        %10318 = vmatpush.bf16.msra.mxu0 %v9513
        %10319 = vmatpush.bf16.msra.mxu0 %v9510
        %10320 = vmatpush.bf16.msra.mxu0 %v9507
        %10321 = vmatpush.bf16.msra.mxu0 %v9504
        %10322 = vmatpush.bf16.msra.mxu0 %v9501
        %10323 = vmatpush.bf16.msra.mxu0 %v9498
        %10324 = vmatpush.bf16.msra.mxu0 %v9495
        %10325 = vmatpush.bf16.msra.mxu0 %v9492
        %10326 = vmatmul.bf16.gmra.mxu0 %v7814
        %v10327 = vpop.f32.mrf.mxu0
        %v10328 = vadd.f32 %v10279, %v10327
        %v10329 = vpop.f32.mrf.mxu0
        %v10330 = vadd.f32 %v10281, %v10329
        %10331 = vmatmul.bf16.gmra.mxu0 %v7826
        %v10332 = vpop.f32.mrf.mxu0
        %v10333 = vadd.f32 %v10284, %v10332
        %v10334 = vpop.f32.mrf.mxu0
        %v10335 = vadd.f32 %v10286, %v10334
        %10336 = vmatmul.bf16.gmra.mxu0 %v7838
        %v10337 = vpop.f32.mrf.mxu0
        %v10338 = vadd.f32 %v10289, %v10337
        %v10339 = vpop.f32.mrf.mxu0
        %v10340 = vadd.f32 %v10291, %v10339
        %10341 = vmatmul.bf16.gmra.mxu0 %v7850
        %v10342 = vpop.f32.mrf.mxu0
        %v10343 = vadd.f32 %v10294, %v10342
        %v10344 = vpop.f32.mrf.mxu0
        %v10345 = vadd.f32 %v10296, %v10344
        %10346 = vmatmul.bf16.gmra.mxu0 %v7862
        %v10347 = vpop.f32.mrf.mxu0
        %v10348 = vadd.f32 %v10299, %v10347
        %v10349 = vpop.f32.mrf.mxu0
        %v10350 = vadd.f32 %v10301, %v10349
        %10351 = vmatmul.bf16.gmra.mxu0 %v7874
        %v10352 = vpop.f32.mrf.mxu0
        %v10353 = vadd.f32 %v10304, %v10352
        %v10354 = vpop.f32.mrf.mxu0
        %v10355 = vadd.f32 %v10306, %v10354
        %10356 = vmatmul.bf16.gmra.mxu0 %v7886
        %v10357 = vpop.f32.mrf.mxu0
        %v10358 = vadd.f32 %v10309, %v10357
        %v10359 = vpop.f32.mrf.mxu0
        %v10360 = vadd.f32 %v10311, %v10359
        %10361 = vmatmul.bf16.gmra.mxu0 %v7898
        %v10362 = vpop.f32.mrf.mxu0
        %v10363 = vadd.f32 %v10314, %v10362
        %v10364 = vpop.f32.mrf.mxu0
        %v10365 = vadd.f32 %v10316, %v10364
        %10366 = vdwg.mxu0
        %10367 = vmatpush.bf16.msra.mxu0 %v9537
        %10368 = vmatpush.bf16.msra.mxu0 %v9534
        %10369 = vmatpush.bf16.msra.mxu0 %v9531
        %10370 = vmatpush.bf16.msra.mxu0 %v9528
        %10371 = vmatpush.bf16.msra.mxu0 %v9525
        %10372 = vmatpush.bf16.msra.mxu0 %v9522
        %10373 = vmatpush.bf16.msra.mxu0 %v9519
        %10374 = vmatpush.bf16.msra.mxu0 %v9516
        %10375 = vmatmul.bf16.gmra.mxu0 %v7815
        %v10376 = vpop.f32.mrf.mxu0
        %v10377 = vadd.f32 %v10328, %v10376
        %v10378 = vpop.f32.mrf.mxu0
        %v10379 = vadd.f32 %v10330, %v10378
        %10380 = vmatmul.bf16.gmra.mxu0 %v7827
        %v10381 = vpop.f32.mrf.mxu0
        %v10382 = vadd.f32 %v10333, %v10381
        %v10383 = vpop.f32.mrf.mxu0
        %v10384 = vadd.f32 %v10335, %v10383
        %10385 = vmatmul.bf16.gmra.mxu0 %v7839
        %v10386 = vpop.f32.mrf.mxu0
        %v10387 = vadd.f32 %v10338, %v10386
        %v10388 = vpop.f32.mrf.mxu0
        %v10389 = vadd.f32 %v10340, %v10388
        %10390 = vmatmul.bf16.gmra.mxu0 %v7851
        %v10391 = vpop.f32.mrf.mxu0
        %v10392 = vadd.f32 %v10343, %v10391
        %v10393 = vpop.f32.mrf.mxu0
        %v10394 = vadd.f32 %v10345, %v10393
        %10395 = vmatmul.bf16.gmra.mxu0 %v7863
        %v10396 = vpop.f32.mrf.mxu0
        %v10397 = vadd.f32 %v10348, %v10396
        %v10398 = vpop.f32.mrf.mxu0
        %v10399 = vadd.f32 %v10350, %v10398
        %10400 = vmatmul.bf16.gmra.mxu0 %v7875
        %v10401 = vpop.f32.mrf.mxu0
        %v10402 = vadd.f32 %v10353, %v10401
        %v10403 = vpop.f32.mrf.mxu0
        %v10404 = vadd.f32 %v10355, %v10403
        %10405 = vmatmul.bf16.gmra.mxu0 %v7887
        %v10406 = vpop.f32.mrf.mxu0
        %v10407 = vadd.f32 %v10358, %v10406
        %v10408 = vpop.f32.mrf.mxu0
        %v10409 = vadd.f32 %v10360, %v10408
        %10410 = vmatmul.bf16.gmra.mxu0 %v7899
        %v10411 = vpop.f32.mrf.mxu0
        %v10412 = vadd.f32 %v10363, %v10411
        %v10413 = vpop.f32.mrf.mxu0
        %v10414 = vadd.f32 %v10365, %v10413
        %10415 = vdwg.mxu0
        %10416 = vmatpush.bf16.msra.mxu0 %v9274
        %10417 = vmatpush.bf16.msra.mxu0 %v9271
        %10418 = vmatpush.bf16.msra.mxu0 %v9268
        %10419 = vmatpush.bf16.msra.mxu0 %v9265
        %10420 = vmatpush.bf16.msra.mxu0 %v9262
        %10421 = vmatpush.bf16.msra.mxu0 %v9259
        %10422 = vmatpush.bf16.msra.mxu0 %v9256
        %10423 = vmatpush.bf16.msra.mxu0 %v9253
        %10424 = vmatmul.bf16.gmra.mxu0 %v7804
        %v10425 = vpop.f32.mrf.mxu0
        %v10426 = vadd.f32 %v8287, %v10425
        %v10427 = vpop.f32.mrf.mxu0
        %v10428 = vadd.f32 %v8287, %v10427
        %10429 = vmatmul.bf16.gmra.mxu0 %v7816
        %v10430 = vpop.f32.mrf.mxu0
        %v10431 = vadd.f32 %v8287, %v10430
        %v10432 = vpop.f32.mrf.mxu0
        %v10433 = vadd.f32 %v8287, %v10432
        %10434 = vmatmul.bf16.gmra.mxu0 %v7828
        %v10435 = vpop.f32.mrf.mxu0
        %v10436 = vadd.f32 %v8287, %v10435
        %v10437 = vpop.f32.mrf.mxu0
        %v10438 = vadd.f32 %v8287, %v10437
        %10439 = vmatmul.bf16.gmra.mxu0 %v7840
        %v10440 = vpop.f32.mrf.mxu0
        %v10441 = vadd.f32 %v8287, %v10440
        %v10442 = vpop.f32.mrf.mxu0
        %v10443 = vadd.f32 %v8287, %v10442
        %10444 = vmatmul.bf16.gmra.mxu0 %v7852
        %v10445 = vpop.f32.mrf.mxu0
        %v10446 = vadd.f32 %v8287, %v10445
        %v10447 = vpop.f32.mrf.mxu0
        %v10448 = vadd.f32 %v8287, %v10447
        %10449 = vmatmul.bf16.gmra.mxu0 %v7864
        %v10450 = vpop.f32.mrf.mxu0
        %v10451 = vadd.f32 %v8287, %v10450
        %v10452 = vpop.f32.mrf.mxu0
        %v10453 = vadd.f32 %v8287, %v10452
        %10454 = vmatmul.bf16.gmra.mxu0 %v7876
        %v10455 = vpop.f32.mrf.mxu0
        %v10456 = vadd.f32 %v8287, %v10455
        %v10457 = vpop.f32.mrf.mxu0
        %v10458 = vadd.f32 %v8287, %v10457
        %10459 = vmatmul.bf16.gmra.mxu0 %v7888
        %v10460 = vpop.f32.mrf.mxu0
        %v10461 = vadd.f32 %v8287, %v10460
        %v10462 = vpop.f32.mrf.mxu0
        %v10463 = vadd.f32 %v8287, %v10462
        %10464 = vdwg.mxu0
        %10465 = vmatpush.bf16.msra.mxu0 %v9298
        %10466 = vmatpush.bf16.msra.mxu0 %v9295
        %10467 = vmatpush.bf16.msra.mxu0 %v9292
        %10468 = vmatpush.bf16.msra.mxu0 %v9289
        %10469 = vmatpush.bf16.msra.mxu0 %v9286
        %10470 = vmatpush.bf16.msra.mxu0 %v9283
        %10471 = vmatpush.bf16.msra.mxu0 %v9280
        %10472 = vmatpush.bf16.msra.mxu0 %v9277
        %10473 = vmatmul.bf16.gmra.mxu0 %v7805
        %v10474 = vpop.f32.mrf.mxu0
        %v10475 = vadd.f32 %v10426, %v10474
        %v10476 = vpop.f32.mrf.mxu0
        %v10477 = vadd.f32 %v10428, %v10476
        %10478 = vmatmul.bf16.gmra.mxu0 %v7817
        %v10479 = vpop.f32.mrf.mxu0
        %v10480 = vadd.f32 %v10431, %v10479
        %v10481 = vpop.f32.mrf.mxu0
        %v10482 = vadd.f32 %v10433, %v10481
        %10483 = vmatmul.bf16.gmra.mxu0 %v7829
        %v10484 = vpop.f32.mrf.mxu0
        %v10485 = vadd.f32 %v10436, %v10484
        %v10486 = vpop.f32.mrf.mxu0
        %v10487 = vadd.f32 %v10438, %v10486
        %10488 = vmatmul.bf16.gmra.mxu0 %v7841
        %v10489 = vpop.f32.mrf.mxu0
        %v10490 = vadd.f32 %v10441, %v10489
        %v10491 = vpop.f32.mrf.mxu0
        %v10492 = vadd.f32 %v10443, %v10491
        %10493 = vmatmul.bf16.gmra.mxu0 %v7853
        %v10494 = vpop.f32.mrf.mxu0
        %v10495 = vadd.f32 %v10446, %v10494
        %v10496 = vpop.f32.mrf.mxu0
        %v10497 = vadd.f32 %v10448, %v10496
        %10498 = vmatmul.bf16.gmra.mxu0 %v7865
        %v10499 = vpop.f32.mrf.mxu0
        %v10500 = vadd.f32 %v10451, %v10499
        %v10501 = vpop.f32.mrf.mxu0
        %v10502 = vadd.f32 %v10453, %v10501
        %10503 = vmatmul.bf16.gmra.mxu0 %v7877
        %v10504 = vpop.f32.mrf.mxu0
        %v10505 = vadd.f32 %v10456, %v10504
        %v10506 = vpop.f32.mrf.mxu0
        %v10507 = vadd.f32 %v10458, %v10506
        %10508 = vmatmul.bf16.gmra.mxu0 %v7889
        %v10509 = vpop.f32.mrf.mxu0
        %v10510 = vadd.f32 %v10461, %v10509
        %v10511 = vpop.f32.mrf.mxu0
        %v10512 = vadd.f32 %v10463, %v10511
        %10513 = vdwg.mxu0
        %10514 = vmatpush.bf16.msra.mxu0 %v9322
        %10515 = vmatpush.bf16.msra.mxu0 %v9319
        %10516 = vmatpush.bf16.msra.mxu0 %v9316
        %10517 = vmatpush.bf16.msra.mxu0 %v9313
        %10518 = vmatpush.bf16.msra.mxu0 %v9310
        %10519 = vmatpush.bf16.msra.mxu0 %v9307
        %10520 = vmatpush.bf16.msra.mxu0 %v9304
        %10521 = vmatpush.bf16.msra.mxu0 %v9301
        %10522 = vmatmul.bf16.gmra.mxu0 %v7806
        %v10523 = vpop.f32.mrf.mxu0
        %v10524 = vadd.f32 %v10475, %v10523
        %v10525 = vpop.f32.mrf.mxu0
        %v10526 = vadd.f32 %v10477, %v10525
        %10527 = vmatmul.bf16.gmra.mxu0 %v7818
        %v10528 = vpop.f32.mrf.mxu0
        %v10529 = vadd.f32 %v10480, %v10528
        %v10530 = vpop.f32.mrf.mxu0
        %v10531 = vadd.f32 %v10482, %v10530
        %10532 = vmatmul.bf16.gmra.mxu0 %v7830
        %v10533 = vpop.f32.mrf.mxu0
        %v10534 = vadd.f32 %v10485, %v10533
        %v10535 = vpop.f32.mrf.mxu0
        %v10536 = vadd.f32 %v10487, %v10535
        %10537 = vmatmul.bf16.gmra.mxu0 %v7842
        %v10538 = vpop.f32.mrf.mxu0
        %v10539 = vadd.f32 %v10490, %v10538
        %v10540 = vpop.f32.mrf.mxu0
        %v10541 = vadd.f32 %v10492, %v10540
        %10542 = vmatmul.bf16.gmra.mxu0 %v7854
        %v10543 = vpop.f32.mrf.mxu0
        %v10544 = vadd.f32 %v10495, %v10543
        %v10545 = vpop.f32.mrf.mxu0
        %v10546 = vadd.f32 %v10497, %v10545
        %10547 = vmatmul.bf16.gmra.mxu0 %v7866
        %v10548 = vpop.f32.mrf.mxu0
        %v10549 = vadd.f32 %v10500, %v10548
        %v10550 = vpop.f32.mrf.mxu0
        %v10551 = vadd.f32 %v10502, %v10550
        %10552 = vmatmul.bf16.gmra.mxu0 %v7878
        %v10553 = vpop.f32.mrf.mxu0
        %v10554 = vadd.f32 %v10505, %v10553
        %v10555 = vpop.f32.mrf.mxu0
        %v10556 = vadd.f32 %v10507, %v10555
        %10557 = vmatmul.bf16.gmra.mxu0 %v7890
        %v10558 = vpop.f32.mrf.mxu0
        %v10559 = vadd.f32 %v10510, %v10558
        %v10560 = vpop.f32.mrf.mxu0
        %v10561 = vadd.f32 %v10512, %v10560
        %10562 = vdwg.mxu0
        %10563 = vmatpush.bf16.msra.mxu0 %v9346
        %10564 = vmatpush.bf16.msra.mxu0 %v9343
        %10565 = vmatpush.bf16.msra.mxu0 %v9340
        %10566 = vmatpush.bf16.msra.mxu0 %v9337
        %10567 = vmatpush.bf16.msra.mxu0 %v9334
        %10568 = vmatpush.bf16.msra.mxu0 %v9331
        %10569 = vmatpush.bf16.msra.mxu0 %v9328
        %10570 = vmatpush.bf16.msra.mxu0 %v9325
        %10571 = vmatmul.bf16.gmra.mxu0 %v7807
        %v10572 = vpop.f32.mrf.mxu0
        %v10573 = vadd.f32 %v10524, %v10572
        %v10574 = vpop.f32.mrf.mxu0
        %v10575 = vadd.f32 %v10526, %v10574
        %10576 = vmatmul.bf16.gmra.mxu0 %v7819
        %v10577 = vpop.f32.mrf.mxu0
        %v10578 = vadd.f32 %v10529, %v10577
        %v10579 = vpop.f32.mrf.mxu0
        %v10580 = vadd.f32 %v10531, %v10579
        %10581 = vmatmul.bf16.gmra.mxu0 %v7831
        %v10582 = vpop.f32.mrf.mxu0
        %v10583 = vadd.f32 %v10534, %v10582
        %v10584 = vpop.f32.mrf.mxu0
        %v10585 = vadd.f32 %v10536, %v10584
        %10586 = vmatmul.bf16.gmra.mxu0 %v7843
        %v10587 = vpop.f32.mrf.mxu0
        %v10588 = vadd.f32 %v10539, %v10587
        %v10589 = vpop.f32.mrf.mxu0
        %v10590 = vadd.f32 %v10541, %v10589
        %10591 = vmatmul.bf16.gmra.mxu0 %v7855
        %v10592 = vpop.f32.mrf.mxu0
        %v10593 = vadd.f32 %v10544, %v10592
        %v10594 = vpop.f32.mrf.mxu0
        %v10595 = vadd.f32 %v10546, %v10594
        %10596 = vmatmul.bf16.gmra.mxu0 %v7867
        %v10597 = vpop.f32.mrf.mxu0
        %v10598 = vadd.f32 %v10549, %v10597
        %v10599 = vpop.f32.mrf.mxu0
        %v10600 = vadd.f32 %v10551, %v10599
        %10601 = vmatmul.bf16.gmra.mxu0 %v7879
        %v10602 = vpop.f32.mrf.mxu0
        %v10603 = vadd.f32 %v10554, %v10602
        %v10604 = vpop.f32.mrf.mxu0
        %v10605 = vadd.f32 %v10556, %v10604
        %10606 = vmatmul.bf16.gmra.mxu0 %v7891
        %v10607 = vpop.f32.mrf.mxu0
        %v10608 = vadd.f32 %v10559, %v10607
        %v10609 = vpop.f32.mrf.mxu0
        %v10610 = vadd.f32 %v10561, %v10609
        %10611 = vdwg.mxu0
        %10612 = vmatpush.bf16.msra.mxu0 %v9370
        %10613 = vmatpush.bf16.msra.mxu0 %v9367
        %10614 = vmatpush.bf16.msra.mxu0 %v9364
        %10615 = vmatpush.bf16.msra.mxu0 %v9361
        %10616 = vmatpush.bf16.msra.mxu0 %v9358
        %10617 = vmatpush.bf16.msra.mxu0 %v9355
        %10618 = vmatpush.bf16.msra.mxu0 %v9352
        %10619 = vmatpush.bf16.msra.mxu0 %v9349
        %10620 = vmatmul.bf16.gmra.mxu0 %v7808
        %v10621 = vpop.f32.mrf.mxu0
        %v10622 = vadd.f32 %v10573, %v10621
        %v10623 = vpop.f32.mrf.mxu0
        %v10624 = vadd.f32 %v10575, %v10623
        %10625 = vmatmul.bf16.gmra.mxu0 %v7820
        %v10626 = vpop.f32.mrf.mxu0
        %v10627 = vadd.f32 %v10578, %v10626
        %v10628 = vpop.f32.mrf.mxu0
        %v10629 = vadd.f32 %v10580, %v10628
        %10630 = vmatmul.bf16.gmra.mxu0 %v7832
        %v10631 = vpop.f32.mrf.mxu0
        %v10632 = vadd.f32 %v10583, %v10631
        %v10633 = vpop.f32.mrf.mxu0
        %v10634 = vadd.f32 %v10585, %v10633
        %10635 = vmatmul.bf16.gmra.mxu0 %v7844
        %v10636 = vpop.f32.mrf.mxu0
        %v10637 = vadd.f32 %v10588, %v10636
        %v10638 = vpop.f32.mrf.mxu0
        %v10639 = vadd.f32 %v10590, %v10638
        %10640 = vmatmul.bf16.gmra.mxu0 %v7856
        %v10641 = vpop.f32.mrf.mxu0
        %v10642 = vadd.f32 %v10593, %v10641
        %v10643 = vpop.f32.mrf.mxu0
        %v10644 = vadd.f32 %v10595, %v10643
        %10645 = vmatmul.bf16.gmra.mxu0 %v7868
        %v10646 = vpop.f32.mrf.mxu0
        %v10647 = vadd.f32 %v10598, %v10646
        %v10648 = vpop.f32.mrf.mxu0
        %v10649 = vadd.f32 %v10600, %v10648
        %10650 = vmatmul.bf16.gmra.mxu0 %v7880
        %v10651 = vpop.f32.mrf.mxu0
        %v10652 = vadd.f32 %v10603, %v10651
        %v10653 = vpop.f32.mrf.mxu0
        %v10654 = vadd.f32 %v10605, %v10653
        %10655 = vmatmul.bf16.gmra.mxu0 %v7892
        %v10656 = vpop.f32.mrf.mxu0
        %v10657 = vadd.f32 %v10608, %v10656
        %v10658 = vpop.f32.mrf.mxu0
        %v10659 = vadd.f32 %v10610, %v10658
        %10660 = vdwg.mxu0
        %10661 = vmatpush.bf16.msra.mxu0 %v9394
        %10662 = vmatpush.bf16.msra.mxu0 %v9391
        %10663 = vmatpush.bf16.msra.mxu0 %v9388
        %10664 = vmatpush.bf16.msra.mxu0 %v9385
        %10665 = vmatpush.bf16.msra.mxu0 %v9382
        %10666 = vmatpush.bf16.msra.mxu0 %v9379
        %10667 = vmatpush.bf16.msra.mxu0 %v9376
        %10668 = vmatpush.bf16.msra.mxu0 %v9373
        %10669 = vmatmul.bf16.gmra.mxu0 %v7809
        %v10670 = vpop.f32.mrf.mxu0
        %v10671 = vadd.f32 %v10622, %v10670
        %v10672 = vpop.f32.mrf.mxu0
        %v10673 = vadd.f32 %v10624, %v10672
        %10674 = vmatmul.bf16.gmra.mxu0 %v7821
        %v10675 = vpop.f32.mrf.mxu0
        %v10676 = vadd.f32 %v10627, %v10675
        %v10677 = vpop.f32.mrf.mxu0
        %v10678 = vadd.f32 %v10629, %v10677
        %10679 = vmatmul.bf16.gmra.mxu0 %v7833
        %v10680 = vpop.f32.mrf.mxu0
        %v10681 = vadd.f32 %v10632, %v10680
        %v10682 = vpop.f32.mrf.mxu0
        %v10683 = vadd.f32 %v10634, %v10682
        %10684 = vmatmul.bf16.gmra.mxu0 %v7845
        %v10685 = vpop.f32.mrf.mxu0
        %v10686 = vadd.f32 %v10637, %v10685
        %v10687 = vpop.f32.mrf.mxu0
        %v10688 = vadd.f32 %v10639, %v10687
        %10689 = vmatmul.bf16.gmra.mxu0 %v7857
        %v10690 = vpop.f32.mrf.mxu0
        %v10691 = vadd.f32 %v10642, %v10690
        %v10692 = vpop.f32.mrf.mxu0
        %v10693 = vadd.f32 %v10644, %v10692
        %10694 = vmatmul.bf16.gmra.mxu0 %v7869
        %v10695 = vpop.f32.mrf.mxu0
        %v10696 = vadd.f32 %v10647, %v10695
        %v10697 = vpop.f32.mrf.mxu0
        %v10698 = vadd.f32 %v10649, %v10697
        %10699 = vmatmul.bf16.gmra.mxu0 %v7881
        %v10700 = vpop.f32.mrf.mxu0
        %v10701 = vadd.f32 %v10652, %v10700
        %v10702 = vpop.f32.mrf.mxu0
        %v10703 = vadd.f32 %v10654, %v10702
        %10704 = vmatmul.bf16.gmra.mxu0 %v7893
        %v10705 = vpop.f32.mrf.mxu0
        %v10706 = vadd.f32 %v10657, %v10705
        %v10707 = vpop.f32.mrf.mxu0
        %v10708 = vadd.f32 %v10659, %v10707
        %10709 = vdwg.mxu0
        %10710 = vmatpush.bf16.msra.mxu0 %v9418
        %10711 = vmatpush.bf16.msra.mxu0 %v9415
        %10712 = vmatpush.bf16.msra.mxu0 %v9412
        %10713 = vmatpush.bf16.msra.mxu0 %v9409
        %10714 = vmatpush.bf16.msra.mxu0 %v9406
        %10715 = vmatpush.bf16.msra.mxu0 %v9403
        %10716 = vmatpush.bf16.msra.mxu0 %v9400
        %10717 = vmatpush.bf16.msra.mxu0 %v9397
        %10718 = vmatmul.bf16.gmra.mxu0 %v7810
        %v10719 = vpop.f32.mrf.mxu0
        %v10720 = vadd.f32 %v10671, %v10719
        %v10721 = vpop.f32.mrf.mxu0
        %v10722 = vadd.f32 %v10673, %v10721
        %10723 = vmatmul.bf16.gmra.mxu0 %v7822
        %v10724 = vpop.f32.mrf.mxu0
        %v10725 = vadd.f32 %v10676, %v10724
        %v10726 = vpop.f32.mrf.mxu0
        %v10727 = vadd.f32 %v10678, %v10726
        %10728 = vmatmul.bf16.gmra.mxu0 %v7834
        %v10729 = vpop.f32.mrf.mxu0
        %v10730 = vadd.f32 %v10681, %v10729
        %v10731 = vpop.f32.mrf.mxu0
        %v10732 = vadd.f32 %v10683, %v10731
        %10733 = vmatmul.bf16.gmra.mxu0 %v7846
        %v10734 = vpop.f32.mrf.mxu0
        %v10735 = vadd.f32 %v10686, %v10734
        %v10736 = vpop.f32.mrf.mxu0
        %v10737 = vadd.f32 %v10688, %v10736
        %10738 = vmatmul.bf16.gmra.mxu0 %v7858
        %v10739 = vpop.f32.mrf.mxu0
        %v10740 = vadd.f32 %v10691, %v10739
        %v10741 = vpop.f32.mrf.mxu0
        %v10742 = vadd.f32 %v10693, %v10741
        %10743 = vmatmul.bf16.gmra.mxu0 %v7870
        %v10744 = vpop.f32.mrf.mxu0
        %v10745 = vadd.f32 %v10696, %v10744
        %v10746 = vpop.f32.mrf.mxu0
        %v10747 = vadd.f32 %v10698, %v10746
        %10748 = vmatmul.bf16.gmra.mxu0 %v7882
        %v10749 = vpop.f32.mrf.mxu0
        %v10750 = vadd.f32 %v10701, %v10749
        %v10751 = vpop.f32.mrf.mxu0
        %v10752 = vadd.f32 %v10703, %v10751
        %10753 = vmatmul.bf16.gmra.mxu0 %v7894
        %v10754 = vpop.f32.mrf.mxu0
        %v10755 = vadd.f32 %v10706, %v10754
        %v10756 = vpop.f32.mrf.mxu0
        %v10757 = vadd.f32 %v10708, %v10756
        %10758 = vdwg.mxu0
        %10759 = vmatpush.bf16.msra.mxu0 %v9442
        %10760 = vmatpush.bf16.msra.mxu0 %v9439
        %10761 = vmatpush.bf16.msra.mxu0 %v9436
        %10762 = vmatpush.bf16.msra.mxu0 %v9433
        %10763 = vmatpush.bf16.msra.mxu0 %v9430
        %10764 = vmatpush.bf16.msra.mxu0 %v9427
        %10765 = vmatpush.bf16.msra.mxu0 %v9424
        %10766 = vmatpush.bf16.msra.mxu0 %v9421
        %10767 = vmatmul.bf16.gmra.mxu0 %v7811
        %v10768 = vpop.f32.mrf.mxu0
        %v10769 = vadd.f32 %v10720, %v10768
        %v10770 = vpop.f32.mrf.mxu0
        %v10771 = vadd.f32 %v10722, %v10770
        %10772 = vmatmul.bf16.gmra.mxu0 %v7823
        %v10773 = vpop.f32.mrf.mxu0
        %v10774 = vadd.f32 %v10725, %v10773
        %v10775 = vpop.f32.mrf.mxu0
        %v10776 = vadd.f32 %v10727, %v10775
        %10777 = vmatmul.bf16.gmra.mxu0 %v7835
        %v10778 = vpop.f32.mrf.mxu0
        %v10779 = vadd.f32 %v10730, %v10778
        %v10780 = vpop.f32.mrf.mxu0
        %v10781 = vadd.f32 %v10732, %v10780
        %10782 = vmatmul.bf16.gmra.mxu0 %v7847
        %v10783 = vpop.f32.mrf.mxu0
        %v10784 = vadd.f32 %v10735, %v10783
        %v10785 = vpop.f32.mrf.mxu0
        %v10786 = vadd.f32 %v10737, %v10785
        %10787 = vmatmul.bf16.gmra.mxu0 %v7859
        %v10788 = vpop.f32.mrf.mxu0
        %v10789 = vadd.f32 %v10740, %v10788
        %v10790 = vpop.f32.mrf.mxu0
        %v10791 = vadd.f32 %v10742, %v10790
        %10792 = vmatmul.bf16.gmra.mxu0 %v7871
        %v10793 = vpop.f32.mrf.mxu0
        %v10794 = vadd.f32 %v10745, %v10793
        %v10795 = vpop.f32.mrf.mxu0
        %v10796 = vadd.f32 %v10747, %v10795
        %10797 = vmatmul.bf16.gmra.mxu0 %v7883
        %v10798 = vpop.f32.mrf.mxu0
        %v10799 = vadd.f32 %v10750, %v10798
        %v10800 = vpop.f32.mrf.mxu0
        %v10801 = vadd.f32 %v10752, %v10800
        %10802 = vmatmul.bf16.gmra.mxu0 %v7895
        %v10803 = vpop.f32.mrf.mxu0
        %v10804 = vadd.f32 %v10755, %v10803
        %v10805 = vpop.f32.mrf.mxu0
        %v10806 = vadd.f32 %v10757, %v10805
        %10807 = vdwg.mxu0
        %10808 = vmatpush.bf16.msra.mxu0 %v9466
        %10809 = vmatpush.bf16.msra.mxu0 %v9463
        %10810 = vmatpush.bf16.msra.mxu0 %v9460
        %10811 = vmatpush.bf16.msra.mxu0 %v9457
        %10812 = vmatpush.bf16.msra.mxu0 %v9454
        %10813 = vmatpush.bf16.msra.mxu0 %v9451
        %10814 = vmatpush.bf16.msra.mxu0 %v9448
        %10815 = vmatpush.bf16.msra.mxu0 %v9445
        %10816 = vmatmul.bf16.gmra.mxu0 %v7812
        %v10817 = vpop.f32.mrf.mxu0
        %v10818 = vadd.f32 %v10769, %v10817
        %v10819 = vpop.f32.mrf.mxu0
        %v10820 = vadd.f32 %v10771, %v10819
        %10821 = vmatmul.bf16.gmra.mxu0 %v7824
        %v10822 = vpop.f32.mrf.mxu0
        %v10823 = vadd.f32 %v10774, %v10822
        %v10824 = vpop.f32.mrf.mxu0
        %v10825 = vadd.f32 %v10776, %v10824
        %10826 = vmatmul.bf16.gmra.mxu0 %v7836
        %v10827 = vpop.f32.mrf.mxu0
        %v10828 = vadd.f32 %v10779, %v10827
        %v10829 = vpop.f32.mrf.mxu0
        %v10830 = vadd.f32 %v10781, %v10829
        %10831 = vmatmul.bf16.gmra.mxu0 %v7848
        %v10832 = vpop.f32.mrf.mxu0
        %v10833 = vadd.f32 %v10784, %v10832
        %v10834 = vpop.f32.mrf.mxu0
        %v10835 = vadd.f32 %v10786, %v10834
        %10836 = vmatmul.bf16.gmra.mxu0 %v7860
        %v10837 = vpop.f32.mrf.mxu0
        %v10838 = vadd.f32 %v10789, %v10837
        %v10839 = vpop.f32.mrf.mxu0
        %v10840 = vadd.f32 %v10791, %v10839
        %10841 = vmatmul.bf16.gmra.mxu0 %v7872
        %v10842 = vpop.f32.mrf.mxu0
        %v10843 = vadd.f32 %v10794, %v10842
        %v10844 = vpop.f32.mrf.mxu0
        %v10845 = vadd.f32 %v10796, %v10844
        %10846 = vmatmul.bf16.gmra.mxu0 %v7884
        %v10847 = vpop.f32.mrf.mxu0
        %v10848 = vadd.f32 %v10799, %v10847
        %v10849 = vpop.f32.mrf.mxu0
        %v10850 = vadd.f32 %v10801, %v10849
        %10851 = vmatmul.bf16.gmra.mxu0 %v7896
        %v10852 = vpop.f32.mrf.mxu0
        %v10853 = vadd.f32 %v10804, %v10852
        %v10854 = vpop.f32.mrf.mxu0
        %v10855 = vadd.f32 %v10806, %v10854
        %10856 = vdwg.mxu0
        %10857 = vmatpush.bf16.msra.mxu0 %v9490
        %10858 = vmatpush.bf16.msra.mxu0 %v9487
        %10859 = vmatpush.bf16.msra.mxu0 %v9484
        %10860 = vmatpush.bf16.msra.mxu0 %v9481
        %10861 = vmatpush.bf16.msra.mxu0 %v9478
        %10862 = vmatpush.bf16.msra.mxu0 %v9475
        %10863 = vmatpush.bf16.msra.mxu0 %v9472
        %10864 = vmatpush.bf16.msra.mxu0 %v9469
        %10865 = vmatmul.bf16.gmra.mxu0 %v7813
        %v10866 = vpop.f32.mrf.mxu0
        %v10867 = vadd.f32 %v10818, %v10866
        %v10868 = vpop.f32.mrf.mxu0
        %v10869 = vadd.f32 %v10820, %v10868
        %10870 = vmatmul.bf16.gmra.mxu0 %v7825
        %v10871 = vpop.f32.mrf.mxu0
        %v10872 = vadd.f32 %v10823, %v10871
        %v10873 = vpop.f32.mrf.mxu0
        %v10874 = vadd.f32 %v10825, %v10873
        %10875 = vmatmul.bf16.gmra.mxu0 %v7837
        %v10876 = vpop.f32.mrf.mxu0
        %v10877 = vadd.f32 %v10828, %v10876
        %v10878 = vpop.f32.mrf.mxu0
        %v10879 = vadd.f32 %v10830, %v10878
        %10880 = vmatmul.bf16.gmra.mxu0 %v7849
        %v10881 = vpop.f32.mrf.mxu0
        %v10882 = vadd.f32 %v10833, %v10881
        %v10883 = vpop.f32.mrf.mxu0
        %v10884 = vadd.f32 %v10835, %v10883
        %10885 = vmatmul.bf16.gmra.mxu0 %v7861
        %v10886 = vpop.f32.mrf.mxu0
        %v10887 = vadd.f32 %v10838, %v10886
        %v10888 = vpop.f32.mrf.mxu0
        %v10889 = vadd.f32 %v10840, %v10888
        %10890 = vmatmul.bf16.gmra.mxu0 %v7873
        %v10891 = vpop.f32.mrf.mxu0
        %v10892 = vadd.f32 %v10843, %v10891
        %v10893 = vpop.f32.mrf.mxu0
        %v10894 = vadd.f32 %v10845, %v10893
        %10895 = vmatmul.bf16.gmra.mxu0 %v7885
        %v10896 = vpop.f32.mrf.mxu0
        %v10897 = vadd.f32 %v10848, %v10896
        %v10898 = vpop.f32.mrf.mxu0
        %v10899 = vadd.f32 %v10850, %v10898
        %10900 = vmatmul.bf16.gmra.mxu0 %v7897
        %v10901 = vpop.f32.mrf.mxu0
        %v10902 = vadd.f32 %v10853, %v10901
        %v10903 = vpop.f32.mrf.mxu0
        %v10904 = vadd.f32 %v10855, %v10903
        %10905 = vdwg.mxu0
        %10906 = vmatpush.bf16.msra.mxu0 %v9514
        %10907 = vmatpush.bf16.msra.mxu0 %v9511
        %10908 = vmatpush.bf16.msra.mxu0 %v9508
        %10909 = vmatpush.bf16.msra.mxu0 %v9505
        %10910 = vmatpush.bf16.msra.mxu0 %v9502
        %10911 = vmatpush.bf16.msra.mxu0 %v9499
        %10912 = vmatpush.bf16.msra.mxu0 %v9496
        %10913 = vmatpush.bf16.msra.mxu0 %v9493
        %10914 = vmatmul.bf16.gmra.mxu0 %v7814
        %v10915 = vpop.f32.mrf.mxu0
        %v10916 = vadd.f32 %v10867, %v10915
        %v10917 = vpop.f32.mrf.mxu0
        %v10918 = vadd.f32 %v10869, %v10917
        %10919 = vmatmul.bf16.gmra.mxu0 %v7826
        %v10920 = vpop.f32.mrf.mxu0
        %v10921 = vadd.f32 %v10872, %v10920
        %v10922 = vpop.f32.mrf.mxu0
        %v10923 = vadd.f32 %v10874, %v10922
        %10924 = vmatmul.bf16.gmra.mxu0 %v7838
        %v10925 = vpop.f32.mrf.mxu0
        %v10926 = vadd.f32 %v10877, %v10925
        %v10927 = vpop.f32.mrf.mxu0
        %v10928 = vadd.f32 %v10879, %v10927
        %10929 = vmatmul.bf16.gmra.mxu0 %v7850
        %v10930 = vpop.f32.mrf.mxu0
        %v10931 = vadd.f32 %v10882, %v10930
        %v10932 = vpop.f32.mrf.mxu0
        %v10933 = vadd.f32 %v10884, %v10932
        %10934 = vmatmul.bf16.gmra.mxu0 %v7862
        %v10935 = vpop.f32.mrf.mxu0
        %v10936 = vadd.f32 %v10887, %v10935
        %v10937 = vpop.f32.mrf.mxu0
        %v10938 = vadd.f32 %v10889, %v10937
        %10939 = vmatmul.bf16.gmra.mxu0 %v7874
        %v10940 = vpop.f32.mrf.mxu0
        %v10941 = vadd.f32 %v10892, %v10940
        %v10942 = vpop.f32.mrf.mxu0
        %v10943 = vadd.f32 %v10894, %v10942
        %10944 = vmatmul.bf16.gmra.mxu0 %v7886
        %v10945 = vpop.f32.mrf.mxu0
        %v10946 = vadd.f32 %v10897, %v10945
        %v10947 = vpop.f32.mrf.mxu0
        %v10948 = vadd.f32 %v10899, %v10947
        %10949 = vmatmul.bf16.gmra.mxu0 %v7898
        %v10950 = vpop.f32.mrf.mxu0
        %v10951 = vadd.f32 %v10902, %v10950
        %v10952 = vpop.f32.mrf.mxu0
        %v10953 = vadd.f32 %v10904, %v10952
        %10954 = vdwg.mxu0
        %10955 = vmatpush.bf16.msra.mxu0 %v9538
        %10956 = vmatpush.bf16.msra.mxu0 %v9535
        %10957 = vmatpush.bf16.msra.mxu0 %v9532
        %10958 = vmatpush.bf16.msra.mxu0 %v9529
        %10959 = vmatpush.bf16.msra.mxu0 %v9526
        %10960 = vmatpush.bf16.msra.mxu0 %v9523
        %10961 = vmatpush.bf16.msra.mxu0 %v9520
        %10962 = vmatpush.bf16.msra.mxu0 %v9517
        %10963 = vmatmul.bf16.gmra.mxu0 %v7815
        %v10964 = vpop.f32.mrf.mxu0
        %v10965 = vadd.f32 %v10916, %v10964
        %v10966 = vpop.f32.mrf.mxu0
        %v10967 = vadd.f32 %v10918, %v10966
        %10968 = vmatmul.bf16.gmra.mxu0 %v7827
        %v10969 = vpop.f32.mrf.mxu0
        %v10970 = vadd.f32 %v10921, %v10969
        %v10971 = vpop.f32.mrf.mxu0
        %v10972 = vadd.f32 %v10923, %v10971
        %10973 = vmatmul.bf16.gmra.mxu0 %v7839
        %v10974 = vpop.f32.mrf.mxu0
        %v10975 = vadd.f32 %v10926, %v10974
        %v10976 = vpop.f32.mrf.mxu0
        %v10977 = vadd.f32 %v10928, %v10976
        %10978 = vmatmul.bf16.gmra.mxu0 %v7851
        %v10979 = vpop.f32.mrf.mxu0
        %v10980 = vadd.f32 %v10931, %v10979
        %v10981 = vpop.f32.mrf.mxu0
        %v10982 = vadd.f32 %v10933, %v10981
        %10983 = vmatmul.bf16.gmra.mxu0 %v7863
        %v10984 = vpop.f32.mrf.mxu0
        %v10985 = vadd.f32 %v10936, %v10984
        %v10986 = vpop.f32.mrf.mxu0
        %v10987 = vadd.f32 %v10938, %v10986
        %10988 = vmatmul.bf16.gmra.mxu0 %v7875
        %v10989 = vpop.f32.mrf.mxu0
        %v10990 = vadd.f32 %v10941, %v10989
        %v10991 = vpop.f32.mrf.mxu0
        %v10992 = vadd.f32 %v10943, %v10991
        %10993 = vmatmul.bf16.gmra.mxu0 %v7887
        %v10994 = vpop.f32.mrf.mxu0
        %v10995 = vadd.f32 %v10946, %v10994
        %v10996 = vpop.f32.mrf.mxu0
        %v10997 = vadd.f32 %v10948, %v10996
        %10998 = vmatmul.bf16.gmra.mxu0 %v7899
        %v10999 = vpop.f32.mrf.mxu0
        %v11000 = vadd.f32 %v10951, %v10999
        %v11001 = vpop.f32.mrf.mxu0
        %v11002 = vadd.f32 %v10953, %v11001
        %11003 = vdwg.mxu0
        %11004 = vmatpush.bf16.msra.mxu0 %v9275
        %11005 = vmatpush.bf16.msra.mxu0 %v9272
        %11006 = vmatpush.bf16.msra.mxu0 %v9269
        %11007 = vmatpush.bf16.msra.mxu0 %v9266
        %11008 = vmatpush.bf16.msra.mxu0 %v9263
        %11009 = vmatpush.bf16.msra.mxu0 %v9260
        %11010 = vmatpush.bf16.msra.mxu0 %v9257
        %11011 = vmatpush.bf16.msra.mxu0 %v9254
        %11012 = vmatmul.bf16.gmra.mxu0 %v7804
        %v11013 = vpop.f32.mrf.mxu0
        %v11014 = vadd.f32 %v8288, %v11013
        %v11015 = vpop.f32.mrf.mxu0
        %v11016 = vadd.f32 %v8288, %v11015
        %11017 = vmatmul.bf16.gmra.mxu0 %v7816
        %v11018 = vpop.f32.mrf.mxu0
        %v11019 = vadd.f32 %v8288, %v11018
        %v11020 = vpop.f32.mrf.mxu0
        %v11021 = vadd.f32 %v8288, %v11020
        %11022 = vmatmul.bf16.gmra.mxu0 %v7828
        %v11023 = vpop.f32.mrf.mxu0
        %v11024 = vadd.f32 %v8288, %v11023
        %v11025 = vpop.f32.mrf.mxu0
        %v11026 = vadd.f32 %v8288, %v11025
        %11027 = vmatmul.bf16.gmra.mxu0 %v7840
        %v11028 = vpop.f32.mrf.mxu0
        %v11029 = vadd.f32 %v8288, %v11028
        %v11030 = vpop.f32.mrf.mxu0
        %v11031 = vadd.f32 %v8288, %v11030
        %11032 = vmatmul.bf16.gmra.mxu0 %v7852
        %v11033 = vpop.f32.mrf.mxu0
        %v11034 = vadd.f32 %v8288, %v11033
        %v11035 = vpop.f32.mrf.mxu0
        %v11036 = vadd.f32 %v8288, %v11035
        %11037 = vmatmul.bf16.gmra.mxu0 %v7864
        %v11038 = vpop.f32.mrf.mxu0
        %v11039 = vadd.f32 %v8288, %v11038
        %v11040 = vpop.f32.mrf.mxu0
        %v11041 = vadd.f32 %v8288, %v11040
        %11042 = vmatmul.bf16.gmra.mxu0 %v7876
        %v11043 = vpop.f32.mrf.mxu0
        %v11044 = vadd.f32 %v8288, %v11043
        %v11045 = vpop.f32.mrf.mxu0
        %v11046 = vadd.f32 %v8288, %v11045
        %11047 = vmatmul.bf16.gmra.mxu0 %v7888
        %v11048 = vpop.f32.mrf.mxu0
        %v11049 = vadd.f32 %v8288, %v11048
        %v11050 = vpop.f32.mrf.mxu0
        %v11051 = vadd.f32 %v8288, %v11050
        %11052 = vdwg.mxu0
        %11053 = vmatpush.bf16.msra.mxu0 %v9299
        %11054 = vmatpush.bf16.msra.mxu0 %v9296
        %11055 = vmatpush.bf16.msra.mxu0 %v9293
        %11056 = vmatpush.bf16.msra.mxu0 %v9290
        %11057 = vmatpush.bf16.msra.mxu0 %v9287
        %11058 = vmatpush.bf16.msra.mxu0 %v9284
        %11059 = vmatpush.bf16.msra.mxu0 %v9281
        %11060 = vmatpush.bf16.msra.mxu0 %v9278
        %11061 = vmatmul.bf16.gmra.mxu0 %v7805
        %v11062 = vpop.f32.mrf.mxu0
        %v11063 = vadd.f32 %v11014, %v11062
        %v11064 = vpop.f32.mrf.mxu0
        %v11065 = vadd.f32 %v11016, %v11064
        %11066 = vmatmul.bf16.gmra.mxu0 %v7817
        %v11067 = vpop.f32.mrf.mxu0
        %v11068 = vadd.f32 %v11019, %v11067
        %v11069 = vpop.f32.mrf.mxu0
        %v11070 = vadd.f32 %v11021, %v11069
        %11071 = vmatmul.bf16.gmra.mxu0 %v7829
        %v11072 = vpop.f32.mrf.mxu0
        %v11073 = vadd.f32 %v11024, %v11072
        %v11074 = vpop.f32.mrf.mxu0
        %v11075 = vadd.f32 %v11026, %v11074
        %11076 = vmatmul.bf16.gmra.mxu0 %v7841
        %v11077 = vpop.f32.mrf.mxu0
        %v11078 = vadd.f32 %v11029, %v11077
        %v11079 = vpop.f32.mrf.mxu0
        %v11080 = vadd.f32 %v11031, %v11079
        %11081 = vmatmul.bf16.gmra.mxu0 %v7853
        %v11082 = vpop.f32.mrf.mxu0
        %v11083 = vadd.f32 %v11034, %v11082
        %v11084 = vpop.f32.mrf.mxu0
        %v11085 = vadd.f32 %v11036, %v11084
        %11086 = vmatmul.bf16.gmra.mxu0 %v7865
        %v11087 = vpop.f32.mrf.mxu0
        %v11088 = vadd.f32 %v11039, %v11087
        %v11089 = vpop.f32.mrf.mxu0
        %v11090 = vadd.f32 %v11041, %v11089
        %11091 = vmatmul.bf16.gmra.mxu0 %v7877
        %v11092 = vpop.f32.mrf.mxu0
        %v11093 = vadd.f32 %v11044, %v11092
        %v11094 = vpop.f32.mrf.mxu0
        %v11095 = vadd.f32 %v11046, %v11094
        %11096 = vmatmul.bf16.gmra.mxu0 %v7889
        %v11097 = vpop.f32.mrf.mxu0
        %v11098 = vadd.f32 %v11049, %v11097
        %v11099 = vpop.f32.mrf.mxu0
        %v11100 = vadd.f32 %v11051, %v11099
        %11101 = vdwg.mxu0
        %11102 = vmatpush.bf16.msra.mxu0 %v9323
        %11103 = vmatpush.bf16.msra.mxu0 %v9320
        %11104 = vmatpush.bf16.msra.mxu0 %v9317
        %11105 = vmatpush.bf16.msra.mxu0 %v9314
        %11106 = vmatpush.bf16.msra.mxu0 %v9311
        %11107 = vmatpush.bf16.msra.mxu0 %v9308
        %11108 = vmatpush.bf16.msra.mxu0 %v9305
        %11109 = vmatpush.bf16.msra.mxu0 %v9302
        %11110 = vmatmul.bf16.gmra.mxu0 %v7806
        %v11111 = vpop.f32.mrf.mxu0
        %v11112 = vadd.f32 %v11063, %v11111
        %v11113 = vpop.f32.mrf.mxu0
        %v11114 = vadd.f32 %v11065, %v11113
        %11115 = vmatmul.bf16.gmra.mxu0 %v7818
        %v11116 = vpop.f32.mrf.mxu0
        %v11117 = vadd.f32 %v11068, %v11116
        %v11118 = vpop.f32.mrf.mxu0
        %v11119 = vadd.f32 %v11070, %v11118
        %11120 = vmatmul.bf16.gmra.mxu0 %v7830
        %v11121 = vpop.f32.mrf.mxu0
        %v11122 = vadd.f32 %v11073, %v11121
        %v11123 = vpop.f32.mrf.mxu0
        %v11124 = vadd.f32 %v11075, %v11123
        %11125 = vmatmul.bf16.gmra.mxu0 %v7842
        %v11126 = vpop.f32.mrf.mxu0
        %v11127 = vadd.f32 %v11078, %v11126
        %v11128 = vpop.f32.mrf.mxu0
        %v11129 = vadd.f32 %v11080, %v11128
        %11130 = vmatmul.bf16.gmra.mxu0 %v7854
        %v11131 = vpop.f32.mrf.mxu0
        %v11132 = vadd.f32 %v11083, %v11131
        %v11133 = vpop.f32.mrf.mxu0
        %v11134 = vadd.f32 %v11085, %v11133
        %11135 = vmatmul.bf16.gmra.mxu0 %v7866
        %v11136 = vpop.f32.mrf.mxu0
        %v11137 = vadd.f32 %v11088, %v11136
        %v11138 = vpop.f32.mrf.mxu0
        %v11139 = vadd.f32 %v11090, %v11138
        %11140 = vmatmul.bf16.gmra.mxu0 %v7878
        %v11141 = vpop.f32.mrf.mxu0
        %v11142 = vadd.f32 %v11093, %v11141
        %v11143 = vpop.f32.mrf.mxu0
        %v11144 = vadd.f32 %v11095, %v11143
        %11145 = vmatmul.bf16.gmra.mxu0 %v7890
        %v11146 = vpop.f32.mrf.mxu0
        %v11147 = vadd.f32 %v11098, %v11146
        %v11148 = vpop.f32.mrf.mxu0
        %v11149 = vadd.f32 %v11100, %v11148
        %11150 = vdwg.mxu0
        %11151 = vmatpush.bf16.msra.mxu0 %v9347
        %11152 = vmatpush.bf16.msra.mxu0 %v9344
        %11153 = vmatpush.bf16.msra.mxu0 %v9341
        %11154 = vmatpush.bf16.msra.mxu0 %v9338
        %11155 = vmatpush.bf16.msra.mxu0 %v9335
        %11156 = vmatpush.bf16.msra.mxu0 %v9332
        %11157 = vmatpush.bf16.msra.mxu0 %v9329
        %11158 = vmatpush.bf16.msra.mxu0 %v9326
        %11159 = vmatmul.bf16.gmra.mxu0 %v7807
        %v11160 = vpop.f32.mrf.mxu0
        %v11161 = vadd.f32 %v11112, %v11160
        %v11162 = vpop.f32.mrf.mxu0
        %v11163 = vadd.f32 %v11114, %v11162
        %11164 = vmatmul.bf16.gmra.mxu0 %v7819
        %v11165 = vpop.f32.mrf.mxu0
        %v11166 = vadd.f32 %v11117, %v11165
        %v11167 = vpop.f32.mrf.mxu0
        %v11168 = vadd.f32 %v11119, %v11167
        %11169 = vmatmul.bf16.gmra.mxu0 %v7831
        %v11170 = vpop.f32.mrf.mxu0
        %v11171 = vadd.f32 %v11122, %v11170
        %v11172 = vpop.f32.mrf.mxu0
        %v11173 = vadd.f32 %v11124, %v11172
        %11174 = vmatmul.bf16.gmra.mxu0 %v7843
        %v11175 = vpop.f32.mrf.mxu0
        %v11176 = vadd.f32 %v11127, %v11175
        %v11177 = vpop.f32.mrf.mxu0
        %v11178 = vadd.f32 %v11129, %v11177
        %11179 = vmatmul.bf16.gmra.mxu0 %v7855
        %v11180 = vpop.f32.mrf.mxu0
        %v11181 = vadd.f32 %v11132, %v11180
        %v11182 = vpop.f32.mrf.mxu0
        %v11183 = vadd.f32 %v11134, %v11182
        %11184 = vmatmul.bf16.gmra.mxu0 %v7867
        %v11185 = vpop.f32.mrf.mxu0
        %v11186 = vadd.f32 %v11137, %v11185
        %v11187 = vpop.f32.mrf.mxu0
        %v11188 = vadd.f32 %v11139, %v11187
        %11189 = vmatmul.bf16.gmra.mxu0 %v7879
        %v11190 = vpop.f32.mrf.mxu0
        %v11191 = vadd.f32 %v11142, %v11190
        %v11192 = vpop.f32.mrf.mxu0
        %v11193 = vadd.f32 %v11144, %v11192
        %11194 = vmatmul.bf16.gmra.mxu0 %v7891
        %v11195 = vpop.f32.mrf.mxu0
        %v11196 = vadd.f32 %v11147, %v11195
        %v11197 = vpop.f32.mrf.mxu0
        %v11198 = vadd.f32 %v11149, %v11197
        %11199 = vdwg.mxu0
        %11200 = vmatpush.bf16.msra.mxu0 %v9371
        %11201 = vmatpush.bf16.msra.mxu0 %v9368
        %11202 = vmatpush.bf16.msra.mxu0 %v9365
        %11203 = vmatpush.bf16.msra.mxu0 %v9362
        %11204 = vmatpush.bf16.msra.mxu0 %v9359
        %11205 = vmatpush.bf16.msra.mxu0 %v9356
        %11206 = vmatpush.bf16.msra.mxu0 %v9353
        %11207 = vmatpush.bf16.msra.mxu0 %v9350
        %11208 = vmatmul.bf16.gmra.mxu0 %v7808
        %v11209 = vpop.f32.mrf.mxu0
        %v11210 = vadd.f32 %v11161, %v11209
        %v11211 = vpop.f32.mrf.mxu0
        %v11212 = vadd.f32 %v11163, %v11211
        %11213 = vmatmul.bf16.gmra.mxu0 %v7820
        %v11214 = vpop.f32.mrf.mxu0
        %v11215 = vadd.f32 %v11166, %v11214
        %v11216 = vpop.f32.mrf.mxu0
        %v11217 = vadd.f32 %v11168, %v11216
        %11218 = vmatmul.bf16.gmra.mxu0 %v7832
        %v11219 = vpop.f32.mrf.mxu0
        %v11220 = vadd.f32 %v11171, %v11219
        %v11221 = vpop.f32.mrf.mxu0
        %v11222 = vadd.f32 %v11173, %v11221
        %11223 = vmatmul.bf16.gmra.mxu0 %v7844
        %v11224 = vpop.f32.mrf.mxu0
        %v11225 = vadd.f32 %v11176, %v11224
        %v11226 = vpop.f32.mrf.mxu0
        %v11227 = vadd.f32 %v11178, %v11226
        %11228 = vmatmul.bf16.gmra.mxu0 %v7856
        %v11229 = vpop.f32.mrf.mxu0
        %v11230 = vadd.f32 %v11181, %v11229
        %v11231 = vpop.f32.mrf.mxu0
        %v11232 = vadd.f32 %v11183, %v11231
        %11233 = vmatmul.bf16.gmra.mxu0 %v7868
        %v11234 = vpop.f32.mrf.mxu0
        %v11235 = vadd.f32 %v11186, %v11234
        %v11236 = vpop.f32.mrf.mxu0
        %v11237 = vadd.f32 %v11188, %v11236
        %11238 = vmatmul.bf16.gmra.mxu0 %v7880
        %v11239 = vpop.f32.mrf.mxu0
        %v11240 = vadd.f32 %v11191, %v11239
        %v11241 = vpop.f32.mrf.mxu0
        %v11242 = vadd.f32 %v11193, %v11241
        %11243 = vmatmul.bf16.gmra.mxu0 %v7892
        %v11244 = vpop.f32.mrf.mxu0
        %v11245 = vadd.f32 %v11196, %v11244
        %v11246 = vpop.f32.mrf.mxu0
        %v11247 = vadd.f32 %v11198, %v11246
        %11248 = vdwg.mxu0
        %11249 = vmatpush.bf16.msra.mxu0 %v9395
        %11250 = vmatpush.bf16.msra.mxu0 %v9392
        %11251 = vmatpush.bf16.msra.mxu0 %v9389
        %11252 = vmatpush.bf16.msra.mxu0 %v9386
        %11253 = vmatpush.bf16.msra.mxu0 %v9383
        %11254 = vmatpush.bf16.msra.mxu0 %v9380
        %11255 = vmatpush.bf16.msra.mxu0 %v9377
        %11256 = vmatpush.bf16.msra.mxu0 %v9374
        %11257 = vmatmul.bf16.gmra.mxu0 %v7809
        %v11258 = vpop.f32.mrf.mxu0
        %v11259 = vadd.f32 %v11210, %v11258
        %v11260 = vpop.f32.mrf.mxu0
        %v11261 = vadd.f32 %v11212, %v11260
        %11262 = vmatmul.bf16.gmra.mxu0 %v7821
        %v11263 = vpop.f32.mrf.mxu0
        %v11264 = vadd.f32 %v11215, %v11263
        %v11265 = vpop.f32.mrf.mxu0
        %v11266 = vadd.f32 %v11217, %v11265
        %11267 = vmatmul.bf16.gmra.mxu0 %v7833
        %v11268 = vpop.f32.mrf.mxu0
        %v11269 = vadd.f32 %v11220, %v11268
        %v11270 = vpop.f32.mrf.mxu0
        %v11271 = vadd.f32 %v11222, %v11270
        %11272 = vmatmul.bf16.gmra.mxu0 %v7845
        %v11273 = vpop.f32.mrf.mxu0
        %v11274 = vadd.f32 %v11225, %v11273
        %v11275 = vpop.f32.mrf.mxu0
        %v11276 = vadd.f32 %v11227, %v11275
        %11277 = vmatmul.bf16.gmra.mxu0 %v7857
        %v11278 = vpop.f32.mrf.mxu0
        %v11279 = vadd.f32 %v11230, %v11278
        %v11280 = vpop.f32.mrf.mxu0
        %v11281 = vadd.f32 %v11232, %v11280
        %11282 = vmatmul.bf16.gmra.mxu0 %v7869
        %v11283 = vpop.f32.mrf.mxu0
        %v11284 = vadd.f32 %v11235, %v11283
        %v11285 = vpop.f32.mrf.mxu0
        %v11286 = vadd.f32 %v11237, %v11285
        %11287 = vmatmul.bf16.gmra.mxu0 %v7881
        %v11288 = vpop.f32.mrf.mxu0
        %v11289 = vadd.f32 %v11240, %v11288
        %v11290 = vpop.f32.mrf.mxu0
        %v11291 = vadd.f32 %v11242, %v11290
        %11292 = vmatmul.bf16.gmra.mxu0 %v7893
        %v11293 = vpop.f32.mrf.mxu0
        %v11294 = vadd.f32 %v11245, %v11293
        %v11295 = vpop.f32.mrf.mxu0
        %v11296 = vadd.f32 %v11247, %v11295
        %11297 = vdwg.mxu0
        %11298 = vmatpush.bf16.msra.mxu0 %v9419
        %11299 = vmatpush.bf16.msra.mxu0 %v9416
        %11300 = vmatpush.bf16.msra.mxu0 %v9413
        %11301 = vmatpush.bf16.msra.mxu0 %v9410
        %11302 = vmatpush.bf16.msra.mxu0 %v9407
        %11303 = vmatpush.bf16.msra.mxu0 %v9404
        %11304 = vmatpush.bf16.msra.mxu0 %v9401
        %11305 = vmatpush.bf16.msra.mxu0 %v9398
        %11306 = vmatmul.bf16.gmra.mxu0 %v7810
        %v11307 = vpop.f32.mrf.mxu0
        %v11308 = vadd.f32 %v11259, %v11307
        %v11309 = vpop.f32.mrf.mxu0
        %v11310 = vadd.f32 %v11261, %v11309
        %11311 = vmatmul.bf16.gmra.mxu0 %v7822
        %v11312 = vpop.f32.mrf.mxu0
        %v11313 = vadd.f32 %v11264, %v11312
        %v11314 = vpop.f32.mrf.mxu0
        %v11315 = vadd.f32 %v11266, %v11314
        %11316 = vmatmul.bf16.gmra.mxu0 %v7834
        %v11317 = vpop.f32.mrf.mxu0
        %v11318 = vadd.f32 %v11269, %v11317
        %v11319 = vpop.f32.mrf.mxu0
        %v11320 = vadd.f32 %v11271, %v11319
        %11321 = vmatmul.bf16.gmra.mxu0 %v7846
        %v11322 = vpop.f32.mrf.mxu0
        %v11323 = vadd.f32 %v11274, %v11322
        %v11324 = vpop.f32.mrf.mxu0
        %v11325 = vadd.f32 %v11276, %v11324
        %11326 = vmatmul.bf16.gmra.mxu0 %v7858
        %v11327 = vpop.f32.mrf.mxu0
        %v11328 = vadd.f32 %v11279, %v11327
        %v11329 = vpop.f32.mrf.mxu0
        %v11330 = vadd.f32 %v11281, %v11329
        %11331 = vmatmul.bf16.gmra.mxu0 %v7870
        %v11332 = vpop.f32.mrf.mxu0
        %v11333 = vadd.f32 %v11284, %v11332
        %v11334 = vpop.f32.mrf.mxu0
        %v11335 = vadd.f32 %v11286, %v11334
        %11336 = vmatmul.bf16.gmra.mxu0 %v7882
        %v11337 = vpop.f32.mrf.mxu0
        %v11338 = vadd.f32 %v11289, %v11337
        %v11339 = vpop.f32.mrf.mxu0
        %v11340 = vadd.f32 %v11291, %v11339
        %11341 = vmatmul.bf16.gmra.mxu0 %v7894
        %v11342 = vpop.f32.mrf.mxu0
        %v11343 = vadd.f32 %v11294, %v11342
        %v11344 = vpop.f32.mrf.mxu0
        %v11345 = vadd.f32 %v11296, %v11344
        %11346 = vdwg.mxu0
        %11347 = vmatpush.bf16.msra.mxu0 %v9443
        %11348 = vmatpush.bf16.msra.mxu0 %v9440
        %11349 = vmatpush.bf16.msra.mxu0 %v9437
        %11350 = vmatpush.bf16.msra.mxu0 %v9434
        %11351 = vmatpush.bf16.msra.mxu0 %v9431
        %11352 = vmatpush.bf16.msra.mxu0 %v9428
        %11353 = vmatpush.bf16.msra.mxu0 %v9425
        %11354 = vmatpush.bf16.msra.mxu0 %v9422
        %11355 = vmatmul.bf16.gmra.mxu0 %v7811
        %v11356 = vpop.f32.mrf.mxu0
        %v11357 = vadd.f32 %v11308, %v11356
        %v11358 = vpop.f32.mrf.mxu0
        %v11359 = vadd.f32 %v11310, %v11358
        %11360 = vmatmul.bf16.gmra.mxu0 %v7823
        %v11361 = vpop.f32.mrf.mxu0
        %v11362 = vadd.f32 %v11313, %v11361
        %v11363 = vpop.f32.mrf.mxu0
        %v11364 = vadd.f32 %v11315, %v11363
        %11365 = vmatmul.bf16.gmra.mxu0 %v7835
        %v11366 = vpop.f32.mrf.mxu0
        %v11367 = vadd.f32 %v11318, %v11366
        %v11368 = vpop.f32.mrf.mxu0
        %v11369 = vadd.f32 %v11320, %v11368
        %11370 = vmatmul.bf16.gmra.mxu0 %v7847
        %v11371 = vpop.f32.mrf.mxu0
        %v11372 = vadd.f32 %v11323, %v11371
        %v11373 = vpop.f32.mrf.mxu0
        %v11374 = vadd.f32 %v11325, %v11373
        %11375 = vmatmul.bf16.gmra.mxu0 %v7859
        %v11376 = vpop.f32.mrf.mxu0
        %v11377 = vadd.f32 %v11328, %v11376
        %v11378 = vpop.f32.mrf.mxu0
        %v11379 = vadd.f32 %v11330, %v11378
        %11380 = vmatmul.bf16.gmra.mxu0 %v7871
        %v11381 = vpop.f32.mrf.mxu0
        %v11382 = vadd.f32 %v11333, %v11381
        %v11383 = vpop.f32.mrf.mxu0
        %v11384 = vadd.f32 %v11335, %v11383
        %11385 = vmatmul.bf16.gmra.mxu0 %v7883
        %v11386 = vpop.f32.mrf.mxu0
        %v11387 = vadd.f32 %v11338, %v11386
        %v11388 = vpop.f32.mrf.mxu0
        %v11389 = vadd.f32 %v11340, %v11388
        %11390 = vmatmul.bf16.gmra.mxu0 %v7895
        %v11391 = vpop.f32.mrf.mxu0
        %v11392 = vadd.f32 %v11343, %v11391
        %v11393 = vpop.f32.mrf.mxu0
        %v11394 = vadd.f32 %v11345, %v11393
        %11395 = vdwg.mxu0
        %11396 = vmatpush.bf16.msra.mxu0 %v9467
        %11397 = vmatpush.bf16.msra.mxu0 %v9464
        %11398 = vmatpush.bf16.msra.mxu0 %v9461
        %11399 = vmatpush.bf16.msra.mxu0 %v9458
        %11400 = vmatpush.bf16.msra.mxu0 %v9455
        %11401 = vmatpush.bf16.msra.mxu0 %v9452
        %11402 = vmatpush.bf16.msra.mxu0 %v9449
        %11403 = vmatpush.bf16.msra.mxu0 %v9446
        %11404 = vmatmul.bf16.gmra.mxu0 %v7812
        %v11405 = vpop.f32.mrf.mxu0
        %v11406 = vadd.f32 %v11357, %v11405
        %v11407 = vpop.f32.mrf.mxu0
        %v11408 = vadd.f32 %v11359, %v11407
        %11409 = vmatmul.bf16.gmra.mxu0 %v7824
        %v11410 = vpop.f32.mrf.mxu0
        %v11411 = vadd.f32 %v11362, %v11410
        %v11412 = vpop.f32.mrf.mxu0
        %v11413 = vadd.f32 %v11364, %v11412
        %11414 = vmatmul.bf16.gmra.mxu0 %v7836
        %v11415 = vpop.f32.mrf.mxu0
        %v11416 = vadd.f32 %v11367, %v11415
        %v11417 = vpop.f32.mrf.mxu0
        %v11418 = vadd.f32 %v11369, %v11417
        %11419 = vmatmul.bf16.gmra.mxu0 %v7848
        %v11420 = vpop.f32.mrf.mxu0
        %v11421 = vadd.f32 %v11372, %v11420
        %v11422 = vpop.f32.mrf.mxu0
        %v11423 = vadd.f32 %v11374, %v11422
        %11424 = vmatmul.bf16.gmra.mxu0 %v7860
        %v11425 = vpop.f32.mrf.mxu0
        %v11426 = vadd.f32 %v11377, %v11425
        %v11427 = vpop.f32.mrf.mxu0
        %v11428 = vadd.f32 %v11379, %v11427
        %11429 = vmatmul.bf16.gmra.mxu0 %v7872
        %v11430 = vpop.f32.mrf.mxu0
        %v11431 = vadd.f32 %v11382, %v11430
        %v11432 = vpop.f32.mrf.mxu0
        %v11433 = vadd.f32 %v11384, %v11432
        %11434 = vmatmul.bf16.gmra.mxu0 %v7884
        %v11435 = vpop.f32.mrf.mxu0
        %v11436 = vadd.f32 %v11387, %v11435
        %v11437 = vpop.f32.mrf.mxu0
        %v11438 = vadd.f32 %v11389, %v11437
        %11439 = vmatmul.bf16.gmra.mxu0 %v7896
        %v11440 = vpop.f32.mrf.mxu0
        %v11441 = vadd.f32 %v11392, %v11440
        %v11442 = vpop.f32.mrf.mxu0
        %v11443 = vadd.f32 %v11394, %v11442
        %11444 = vdwg.mxu0
        %11445 = vmatpush.bf16.msra.mxu0 %v9491
        %11446 = vmatpush.bf16.msra.mxu0 %v9488
        %11447 = vmatpush.bf16.msra.mxu0 %v9485
        %11448 = vmatpush.bf16.msra.mxu0 %v9482
        %11449 = vmatpush.bf16.msra.mxu0 %v9479
        %11450 = vmatpush.bf16.msra.mxu0 %v9476
        %11451 = vmatpush.bf16.msra.mxu0 %v9473
        %11452 = vmatpush.bf16.msra.mxu0 %v9470
        %11453 = vmatmul.bf16.gmra.mxu0 %v7813
        %v11454 = vpop.f32.mrf.mxu0
        %v11455 = vadd.f32 %v11406, %v11454
        %v11456 = vpop.f32.mrf.mxu0
        %v11457 = vadd.f32 %v11408, %v11456
        %11458 = vmatmul.bf16.gmra.mxu0 %v7825
        %v11459 = vpop.f32.mrf.mxu0
        %v11460 = vadd.f32 %v11411, %v11459
        %v11461 = vpop.f32.mrf.mxu0
        %v11462 = vadd.f32 %v11413, %v11461
        %11463 = vmatmul.bf16.gmra.mxu0 %v7837
        %v11464 = vpop.f32.mrf.mxu0
        %v11465 = vadd.f32 %v11416, %v11464
        %v11466 = vpop.f32.mrf.mxu0
        %v11467 = vadd.f32 %v11418, %v11466
        %11468 = vmatmul.bf16.gmra.mxu0 %v7849
        %v11469 = vpop.f32.mrf.mxu0
        %v11470 = vadd.f32 %v11421, %v11469
        %v11471 = vpop.f32.mrf.mxu0
        %v11472 = vadd.f32 %v11423, %v11471
        %11473 = vmatmul.bf16.gmra.mxu0 %v7861
        %v11474 = vpop.f32.mrf.mxu0
        %v11475 = vadd.f32 %v11426, %v11474
        %v11476 = vpop.f32.mrf.mxu0
        %v11477 = vadd.f32 %v11428, %v11476
        %11478 = vmatmul.bf16.gmra.mxu0 %v7873
        %v11479 = vpop.f32.mrf.mxu0
        %v11480 = vadd.f32 %v11431, %v11479
        %v11481 = vpop.f32.mrf.mxu0
        %v11482 = vadd.f32 %v11433, %v11481
        %11483 = vmatmul.bf16.gmra.mxu0 %v7885
        %v11484 = vpop.f32.mrf.mxu0
        %v11485 = vadd.f32 %v11436, %v11484
        %v11486 = vpop.f32.mrf.mxu0
        %v11487 = vadd.f32 %v11438, %v11486
        %11488 = vmatmul.bf16.gmra.mxu0 %v7897
        %v11489 = vpop.f32.mrf.mxu0
        %v11490 = vadd.f32 %v11441, %v11489
        %v11491 = vpop.f32.mrf.mxu0
        %v11492 = vadd.f32 %v11443, %v11491
        %11493 = vdwg.mxu0
        %11494 = vmatpush.bf16.msra.mxu0 %v9515
        %11495 = vmatpush.bf16.msra.mxu0 %v9512
        %11496 = vmatpush.bf16.msra.mxu0 %v9509
        %11497 = vmatpush.bf16.msra.mxu0 %v9506
        %11498 = vmatpush.bf16.msra.mxu0 %v9503
        %11499 = vmatpush.bf16.msra.mxu0 %v9500
        %11500 = vmatpush.bf16.msra.mxu0 %v9497
        %11501 = vmatpush.bf16.msra.mxu0 %v9494
        %11502 = vmatmul.bf16.gmra.mxu0 %v7814
        %v11503 = vpop.f32.mrf.mxu0
        %v11504 = vadd.f32 %v11455, %v11503
        %v11505 = vpop.f32.mrf.mxu0
        %v11506 = vadd.f32 %v11457, %v11505
        %11507 = vmatmul.bf16.gmra.mxu0 %v7826
        %v11508 = vpop.f32.mrf.mxu0
        %v11509 = vadd.f32 %v11460, %v11508
        %v11510 = vpop.f32.mrf.mxu0
        %v11511 = vadd.f32 %v11462, %v11510
        %11512 = vmatmul.bf16.gmra.mxu0 %v7838
        %v11513 = vpop.f32.mrf.mxu0
        %v11514 = vadd.f32 %v11465, %v11513
        %v11515 = vpop.f32.mrf.mxu0
        %v11516 = vadd.f32 %v11467, %v11515
        %11517 = vmatmul.bf16.gmra.mxu0 %v7850
        %v11518 = vpop.f32.mrf.mxu0
        %v11519 = vadd.f32 %v11470, %v11518
        %v11520 = vpop.f32.mrf.mxu0
        %v11521 = vadd.f32 %v11472, %v11520
        %11522 = vmatmul.bf16.gmra.mxu0 %v7862
        %v11523 = vpop.f32.mrf.mxu0
        %v11524 = vadd.f32 %v11475, %v11523
        %v11525 = vpop.f32.mrf.mxu0
        %v11526 = vadd.f32 %v11477, %v11525
        %11527 = vmatmul.bf16.gmra.mxu0 %v7874
        %v11528 = vpop.f32.mrf.mxu0
        %v11529 = vadd.f32 %v11480, %v11528
        %v11530 = vpop.f32.mrf.mxu0
        %v11531 = vadd.f32 %v11482, %v11530
        %11532 = vmatmul.bf16.gmra.mxu0 %v7886
        %v11533 = vpop.f32.mrf.mxu0
        %v11534 = vadd.f32 %v11485, %v11533
        %v11535 = vpop.f32.mrf.mxu0
        %v11536 = vadd.f32 %v11487, %v11535
        %11537 = vmatmul.bf16.gmra.mxu0 %v7898
        %v11538 = vpop.f32.mrf.mxu0
        %v11539 = vadd.f32 %v11490, %v11538
        %v11540 = vpop.f32.mrf.mxu0
        %v11541 = vadd.f32 %v11492, %v11540
        %11542 = vdwg.mxu0
        %11543 = vmatpush.bf16.msra.mxu0 %v9539
        %11544 = vmatpush.bf16.msra.mxu0 %v9536
        %11545 = vmatpush.bf16.msra.mxu0 %v9533
        %11546 = vmatpush.bf16.msra.mxu0 %v9530
        %11547 = vmatpush.bf16.msra.mxu0 %v9527
        %11548 = vmatpush.bf16.msra.mxu0 %v9524
        %11549 = vmatpush.bf16.msra.mxu0 %v9521
        %11550 = vmatpush.bf16.msra.mxu0 %v9518
        %11551 = vmatmul.bf16.gmra.mxu0 %v7815
        %v11552 = vpop.f32.mrf.mxu0
        %v11553 = vadd.f32 %v11504, %v11552
        %v11554 = vpop.f32.mrf.mxu0
        %v11555 = vadd.f32 %v11506, %v11554
        %11556 = vmatmul.bf16.gmra.mxu0 %v7827
        %v11557 = vpop.f32.mrf.mxu0
        %v11558 = vadd.f32 %v11509, %v11557
        %v11559 = vpop.f32.mrf.mxu0
        %v11560 = vadd.f32 %v11511, %v11559
        %11561 = vmatmul.bf16.gmra.mxu0 %v7839
        %v11562 = vpop.f32.mrf.mxu0
        %v11563 = vadd.f32 %v11514, %v11562
        %v11564 = vpop.f32.mrf.mxu0
        %v11565 = vadd.f32 %v11516, %v11564
        %11566 = vmatmul.bf16.gmra.mxu0 %v7851
        %v11567 = vpop.f32.mrf.mxu0
        %v11568 = vadd.f32 %v11519, %v11567
        %v11569 = vpop.f32.mrf.mxu0
        %v11570 = vadd.f32 %v11521, %v11569
        %11571 = vmatmul.bf16.gmra.mxu0 %v7863
        %v11572 = vpop.f32.mrf.mxu0
        %v11573 = vadd.f32 %v11524, %v11572
        %v11574 = vpop.f32.mrf.mxu0
        %v11575 = vadd.f32 %v11526, %v11574
        %11576 = vmatmul.bf16.gmra.mxu0 %v7875
        %v11577 = vpop.f32.mrf.mxu0
        %v11578 = vadd.f32 %v11529, %v11577
        %v11579 = vpop.f32.mrf.mxu0
        %v11580 = vadd.f32 %v11531, %v11579
        %11581 = vmatmul.bf16.gmra.mxu0 %v7887
        %v11582 = vpop.f32.mrf.mxu0
        %v11583 = vadd.f32 %v11534, %v11582
        %v11584 = vpop.f32.mrf.mxu0
        %v11585 = vadd.f32 %v11536, %v11584
        %11586 = vmatmul.bf16.gmra.mxu0 %v7899
        %v11587 = vpop.f32.mrf.mxu0
        %v11588 = vadd.f32 %v11539, %v11587
        %v11589 = vpop.f32.mrf.mxu0
        %v11590 = vadd.f32 %v11541, %v11589
        %11591 = vdwg.mxu0
        %11592 = vst [vmem:[%s307] sm:$0xff] %v10377
        %11593 = vst [vmem:[%s307 + $0x8] sm:$0xff] %v10965
        %11594 = vst [vmem:[%s307 + $0x10] sm:$0xff] %v11553
        %11595 = vst [vmem:[%s307 + $0x18] sm:$0xff] %v10379
        %11596 = vst [vmem:[%s307 + $0x20] sm:$0xff] %v10967
        %11597 = vst [vmem:[%s307 + $0x28] sm:$0xff] %v11555
        %11598 = vst [vmem:[%s307 + $0x30] sm:$0xff] %v10382
        %11599 = vst [vmem:[%s307 + $0x38] sm:$0xff] %v10970
        %11600 = vst [vmem:[%s307 + $0x40] sm:$0xff] %v11558
        %11601 = vst [vmem:[%s307 + $0x48] sm:$0xff] %v10384
        %11602 = vst [vmem:[%s307 + $0x50] sm:$0xff] %v10972
        %11603 = vst [vmem:[%s307 + $0x58] sm:$0xff] %v11560
        %11604 = vst [vmem:[%s307 + $0x60] sm:$0xff] %v10387
        %11605 = vst [vmem:[%s307 + $0x68] sm:$0xff] %v10975
        %11606 = vst [vmem:[%s307 + $0x70] sm:$0xff] %v11563
        %11607 = vst [vmem:[%s307 + $0x78] sm:$0xff] %v10389
        %11608 = vst [vmem:[%s307 + $0x80] sm:$0xff] %v10977
        %11609 = vst [vmem:[%s307 + $0x88] sm:$0xff] %v11565
        %11610 = vst [vmem:[%s307 + $0x90] sm:$0xff] %v10392
        %11611 = vst [vmem:[%s307 + $0x98] sm:$0xff] %v10980
        %11612 = vst [vmem:[%s307 + $0xa0] sm:$0xff] %v11568
        %11613 = vst [vmem:[%s307 + $0xa8] sm:$0xff] %v10394
        %11614 = vst [vmem:[%s307 + $0xb0] sm:$0xff] %v10982
        %11615 = vst [vmem:[%s307 + $0xb8] sm:$0xff] %v11570
        %11616 = vst [vmem:[%s307 + $0xc0] sm:$0xff] %v10397
        %11617 = vst [vmem:[%s307 + $0xc8] sm:$0xff] %v10985
        %11618 = vst [vmem:[%s307 + $0xd0] sm:$0xff] %v11573
        %11619 = vst [vmem:[%s307 + $0xd8] sm:$0xff] %v10399
        %11620 = vst [vmem:[%s307 + $0xe0] sm:$0xff] %v10987
        %11621 = vst [vmem:[%s307 + $0xe8] sm:$0xff] %v11575
        %11622 = vst [vmem:[%s307 + $0xf0] sm:$0xff] %v10402
        %11623 = vst [vmem:[%s307 + $0xf8] sm:$0xff] %v10990
        %11624 = vst [vmem:[%s307 + $0x100] sm:$0xff] %v11578
        %11625 = vst [vmem:[%s307 + $0x108] sm:$0xff] %v10404
        %11626 = vst [vmem:[%s307 + $0x110] sm:$0xff] %v10992
        %11627 = vst [vmem:[%s307 + $0x118] sm:$0xff] %v11580
        %11628 = vst [vmem:[%s307 + $0x120] sm:$0xff] %v10407
        %11629 = vst [vmem:[%s307 + $0x128] sm:$0xff] %v10995
        %11630 = vst [vmem:[%s307 + $0x130] sm:$0xff] %v11583
        %11631 = vst [vmem:[%s307 + $0x138] sm:$0xff] %v10409
        %11632 = vst [vmem:[%s307 + $0x140] sm:$0xff] %v10997
        %11633 = vst [vmem:[%s307 + $0x148] sm:$0xff] %v11585
        %11634 = vst [vmem:[%s307 + $0x150] sm:$0xff] %v10412
        %11635 = vst [vmem:[%s307 + $0x158] sm:$0xff] %v11000
        %11636 = vst [vmem:[%s307 + $0x160] sm:$0xff] %v11588
        %11637 = vst [vmem:[%s307 + $0x168] sm:$0xff] %v10414
        %11638 = vst [vmem:[%s307 + $0x170] sm:$0xff] %v11002
        %11639 = vst [vmem:[%s307 + $0x178] sm:$0xff] %v11590
        %s11640 = sand.u32 %s142, 1
        %s11641 = scalar_lea.sflag [#allocation4], %s11640
        %s11642 = sand.u32 %s142, 1
        %s11643 = smul.addr %s11642, 384
        %s11644 = scalar_lea.vmem [#allocation11], %s11643
        // Predicated region
        $region61: #{tpu_custom_call.1} parent=39 // pred_check
          %p11645 = pneg %p152
        $region62: #{tpu_custom_call.1} parent=39 // pred_check_branch
          %11647 = sbr.rel (%p11645) target = $region64
        $region63: #{tpu_custom_call.1} parent=39 // pred_region
          %s11648 = smul.u32 16, %s24
          %11650 = vsyncadd %s11641, 0
          %s11651 = smul.addr %s11648, 3
          %s11652 = smul.addr %s11651, 8
          %s11653 = scalar_lea.hbm %s5, %s11652
          %s11654 = sshll.u32 %s11644, 4
          %s11655 = int_to_ptr.vmem [resolvable:$true] %s11654
          %s11656 = sshll.u32 %s11653, 4
          %s11657 = int_to_ptr.hbm [resolvable:$true] %s11656
          %11662 = dma.vmem_to_hbm [thread:$0]  %s11655, 6144, %s11657, %s11641, 384, 384, 24
        $region64: #{tpu_custom_call.1} parent=39 // pred_fallthru
          _
      $region40: #{tpu_custom_call.1} parent=5 // pred_fallthru
        _
      %p11663 = scmp.le.s32.totalorder 2, %s19
      // Predicated region
      $region65: #{tpu_custom_call.1} parent=5 // pred_check
        %p11664 = pneg %p11663
      $region66: #{tpu_custom_call.1} parent=5 // pred_check_branch
        %11666 = sbr.rel (%p11664) target = $region68
      $region67: #{tpu_custom_call.1} parent=5 // pred_region
        %s11667 = ssub.s32 %s19, 2
        // Predicated region
        $region69: #{tpu_custom_call.1} parent=67 // pred_check
          %p11668 = pneg %p158
        $region70: #{tpu_custom_call.1} parent=67 // pred_check_branch
          %11670 = sbr.rel (%p11668) target = $region72
        $region71: #{tpu_custom_call.1} parent=67 // pred_region
          %s11671 = sand.u32 %s143, 1
          %s11672 = scalar_lea.sflag [#allocation4], %s11671
          %s11673 = sand.u32 %s143, 1
          %s11674 = smul.addr %s11673, 384
          %s11675 = scalar_lea.vmem [#allocation11], %s11674
          %11677 = dma.done %s11672, 6144
        $region72: #{tpu_custom_call.1} parent=67 // pred_fallthru
          _
      $region68: #{tpu_custom_call.1} parent=5 // pred_fallthru
        _
    $region6: #{tpu_custom_call.1} parent=1 // loop_footer
      %s23 = sadd.s32 1, %s19
    $region7: #{tpu_custom_call.1} parent=1 // loop_footer_branch
      %18 = sbr.rel target = $region3
    $region8: #{tpu_custom_call.1} parent=1 // loop_exit
      _
    %11678 = vsyncpa [#allocation3], 1
    %s11679 = scalar_lea.sflag [#allocation3], 1
    %11680 = vsyncpa %s11679, 1
    %11681 = vsyncpa [#allocation6], 1
    %11682 = vsyncpa [#allocation9], 1
    %11683 = vsyncpa [#allocation4], 1
    %s11684 = scalar_lea.sflag [#allocation4], 1
    %11685 = vsyncpa %s11684, 1

</llo_original>
